<compile_context>
chip_gen: v7x
topology: tpu7x:2x2x1
jax: 0.10.0
libtpu: 0.0.40
codegen_flags: <defaults>
</compile_context>

<pallas_src>
import functools

import numpy as np
import jax
import jax.numpy as jnp
from jax.experimental import pallas as pl
from jax.experimental.pallas import tpu as pltpu

C_PAD = 128  # every channel dimension is padded to one lane-dense width


def _round_up(x, m):
    return (x + m - 1) // m * m


@functools.lru_cache(maxsize=1)
def _vmem_limit_bytes():
    # Chip-aware VMEM cap: <= 64 MiB so it is valid on v7x as well as v5e/v6e.
    try:
        cap = pltpu.get_tpu_info().vmem_capacity_bytes
    except Exception:
        cap = 64 * 1024 * 1024
    return int(min(32 * 1024 * 1024, 0.8 * cap))


def _choose_tile_m(m_rows):
    """Output-row tile: multiple of 8; prefer >=2 tiles so both TensorCores of a
    v7x megacore also get work along the M axis."""
    m8 = _round_up(max(m_rows, 8), 8)
    hi = min(512, m8 // 2) if m8 >= 256 else m8
    hi -= hi % 8
    for tm in range(hi, 127, -8):
        if m8 % tm == 0:
            return tm
    return min(m8, 256)


# ----------------------------------------------------------------------------
# Pallas kernels
# ----------------------------------------------------------------------------
def _conv3x3_kernel(x_ref, w_ref, b_ref, o_ref, *, tm, taps):
    """One (image, row-tile) step of a 3x3 / stride-1 / pad-1 conv + bias + ReLU.

    x_ref : [1, R_in, C]  flat zero-padded frame (f32), row r = ih*Wp + iw
    w_ref : [9, C, C]     bf16 weights, tap-major (k = ki*3 + kj)
    b_ref : [1, C]        f32 bias
    o_ref : [1, tm, C]    f32 output rows p = oh*Wp + ow for this tile
    """
    m = pl.program_id(1)
    row0 = pl.multiple_of(m * tm, 8)
    acc = None
    for k, off in enumerate(taps):          # 9 taps, statically unrolled
        lhs = x_ref[0, pl.ds(row0 + off, tm), :].astype(jnp.bfloat16)
        t = jnp.dot(lhs, w_ref[k], preferred_element_type=jnp.float32)
        acc = t if acc is None else acc + t
    acc = jnp.maximum(acc + b_ref[...], 0.0)            # bias + ReLU epilogue (f32)
    o_ref[0] = acc.astype(o_ref.dtype)


def _maxpool2x2_kernel(x_ref, s_ref, o_ref):
    """2x2/stride-2 max pool: 4 one-hot selection matmuls + elementwise max."""
    x = x_ref[0]                                                    # [H*W, C] f32
    r = jnp.dot(s_ref[0], x, preferred_element_type=jnp.float32)
    for d in range(1, 4):
        r = jnp.maximum(r, jnp.dot(s_ref[d], x, preferred_element_type=jnp.float32))
    o_ref[0] = r


# ----------------------------------------------------------------------------
# Wrappers
# ----------------------------------------------------------------------------
def conv3x3_relu(x, wk, bk):
    """x: [N, H, W, C_PAD] f32 -> [N, H, W, C_PAD] f32 (3x3, s=1, p=1, bias, ReLU)."""
    N, H, W, C = x.shape
    assert C == C_PAD
    Hp, Wp = H + 2, W + 2
    tm = _choose_tile_m(H * Wp)
    m_grid = _round_up(H * Wp, tm)
    r_in = _round_up(m_grid + 2 * Wp + 2, 8)    # tail zeros so all tap reads stay in-bounds

    # Zero-padded frame, flattened; the only wrapper-side activation copy
    # (~1x the activation, replacing the 9x im2col materialisation).
    xf = jnp.pad(x, ((0, 0), (1, 1), (1, 1), (0, 0))).reshape(N, Hp * Wp, C)
    xf = jnp.pad(xf, ((0, 0), (0, r_in - Hp * Wp), (0, 0)))

    taps = tuple(ki * Wp + kj for ki in range(3) for kj in range(3))
    kernel = functools.partial(_conv3x3_kernel, tm=tm, taps=taps)

    y = pl.pallas_call(
        kernel,
        out_shape=jax.ShapeDtypeStruct((N, m_grid, C), jnp.float32),
        grid=(N, m_grid // tm),
        in_specs=[
            pl.BlockSpec((1, r_in, C), lambda n, m: (n, 0, 0)),  # whole image resident across m
            pl.BlockSpec((9, C, C), lambda n, m: (0, 0, 0)),     # weights fetched once
            pl.BlockSpec((1, C), lambda n, m: (0, 0)),
        ],
        out_specs=pl.BlockSpec((1, tm, C), lambda n, m: (n, m, 0)),
        compiler_params=pltpu.CompilerParams(
            dimension_semantics=("parallel", "parallel"),
            vmem_limit_bytes=_vmem_limit_bytes(),
        ),
    )(xf, wk, bk)

    # Drop the junk columns (ow in [W, Wp)) produced by the flat-frame trick.
    return y[:, : H * Wp, :].reshape(N, H, Wp, C)[:, :, :W, :]


def _pool_select(H, W):
    """One-hot selectors S[d, q, src] for the 4 positions of each 2x2 window."""
    Hq, Wq = H // 2, W // 2
    P = _round_up(Hq * Wq, 8)
    S = np.zeros((4, P, H * W), np.float32)
    for d, (di, dj) in enumerate(((0, 0), (0, 1), (1, 0), (1, 1))):
        for i in range(Hq):
            for j in range(Wq):
                S[d, i * Wq + j, (2 * i + di) * W + (2 * j + dj)] = 1.0
    return jnp.asarray(S)


def maxpool2x2(x):
    """x: [N, H, W, C_PAD] f32 -> [N, H//2, W//2, C_PAD] f32 (kernel=2, stride=2)."""
    N, H, W, C = x.shape
    assert H % 2 == 0 and W % 2 == 0 and C == C_PAD
    Hq, Wq = H // 2, W // 2
    sel = _pool_select(H, W)                       # compile-time constant
    P = sel.shape[1]
    xf = x.reshape(N, H * W, C)
    y = pl.pallas_call(
        _maxpool2x2_kernel,
        out_shape=jax.ShapeDtypeStruct((N, P, C), jnp.float32),
        grid=(N,),
        in_specs=[
            pl.BlockSpec((1, H * W, C), lambda n: (n, 0, 0)),
            pl.BlockSpec(sel.shape, lambda n: (0, 0, 0)),
        ],
        out_specs=pl.BlockSpec((1, P, C), lambda n: (n, 0, 0)),
        compiler_params=pltpu.CompilerParams(
            dimension_semantics=("parallel",),
            vmem_limit_bytes=_vmem_limit_bytes(),
        ),
    )(xf, sel)
    return y[:, : Hq * Wq, :].reshape(N, Hq, Wq, C)


# ----------------------------------------------------------------------------
# Parameters
# ----------------------------------------------------------------------------
def init_params(key):
    def conv_init(k, cin, cout):
        kw_, kb_ = jax.random.split(k)
        fan_in = 9 * cin
        w = jax.random.normal(kw_, (3, 3, cin, cout), jnp.float32) * jnp.sqrt(2.0 / fan_in)
        b = jax.random.normal(kb_, (cout,), jnp.float32) * 0.05
        return w, b

    k1, k2, k3, k4, k5 = jax.random.split(key, 5)
    p = {}
    p["w1"], p["b1"] = conv_init(k1, 3, 16)
    p["w2"], p["b2"] = conv_init(k2, 16, 16)
    p["w3"], p["b3"] = conv_init(k3, 16, 64)
    p["w4"], p["b4"] = conv_init(k4, 64, 64)
    kfw, kfb = jax.random.split(k5)
    p["fc_w"] = jax.random.normal(kfw, (64, 10), jnp.float32) / jnp.sqrt(64.0)
    p["fc_b"] = jax.random.normal(kfb, (10,), jnp.float32) * 0.05
    # NOTE: the PyTorch module defines conv5 but never uses it in forward().
    return p


def prepare_kernel_params(params):
    """One-time prep (perf review): pad channels to 128 lanes, pre-cast the MXU
    weight operand to bf16; bias stays f32 for the epilogue."""
    def prep(w, b):
        kh, kw_, cin, cout = w.shape
        wk = jnp.zeros((kh * kw_, C_PAD, C_PAD), jnp.bfloat16)
        wk = wk.at[:, :cin, :cout].set(w.reshape(kh * kw_, cin, cout).astype(jnp.bfloat16))
        bk = jnp.zeros((1, C_PAD), jnp.float32).at[0, :cout].set(b)
        return wk, bk

    kp = {}
    for i in (1, 2, 3, 4):
        kp[f"wk{i}"], kp[f"bk{i}"] = prep(params[f"w{i}"], params[f"b{i}"])
    kp["fc_w"] = params["fc_w"]
    kp["fc_b"] = params["fc_b"]
    return kp


# ----------------------------------------------------------------------------
# Forward passes
# ----------------------------------------------------------------------------
@jax.jit
def student_forward(kp, x_nchw):
    N, cin, H, W = x_nchw.shape
    x = jnp.transpose(x_nchw, (0, 2, 3, 1)).astype(jnp.float32)        # NCHW -> NHWC
    x = jnp.pad(x, ((0, 0), (0, 0), (0, 0), (0, C_PAD - cin)))          # lane-dense channels

    x = conv3x3_relu(x, kp["wk1"], kp["bk1"])
    x = conv3x3_relu(x, kp["wk2"], kp["bk2"])
    x = maxpool2x2(x)
    x = conv3x3_relu(x, kp["wk3"], kp["bk3"])
    x = conv3x3_relu(x, kp["wk4"], kp["bk4"])

    cam = jnp.transpose(x[..., :64], (0, 3, 1, 2))                      # NCHW, like self.cam

    # GAP + Linear in plain jnp (micro-ops: kernel launch overhead >> the work).
    pooled = jnp.mean(x[..., :64], axis=(1, 2))                         # [N, 64]
    logits = pooled @ kp["fc_w"] + kp["fc_b"]
    return logits, cam


def reference_forward(params, x_nchw):
    """Pure-lax reference with the same operand precision (bf16 in, f32 accum)."""
    x = jnp.transpose(x_nchw, (0, 2, 3, 1)).astype(jnp.float32)

    def conv(x, w, b):
        y = jax.lax.conv_general_dilated(
            x.astype(jnp.bfloat16), w.astype(jnp.bfloat16),
            window_strides=(1, 1), padding=[(1, 1), (1, 1)],
            dimension_numbers=("NHWC", "HWIO", "NHWC"),
            preferred_element_type=jnp.float32)
        return jnp.maximum(y + b, 0.0)

    x = conv(x, params["w1"], params["b1"])
    x = conv(x, params["w2"], params["b2"])
    N, H, W, C = x.shape
    x = x.reshape(N, H // 2, 2, W // 2, 2, C).max(axis=(2, 4))
    x = conv(x, params["w3"], params["b3"])
    x = conv(x, params["w4"], params["b4"])
    cam = jnp.transpose(x, (0, 3, 1, 2))
    pooled = jnp.mean(x, axis=(1, 2))
    logits = pooled @ params["fc_w"] + params["fc_b"]
    return logits, cam


# ----------------------------------------------------------------------------
if __name__ == "__main__":
    key = jax.random.PRNGKey(0)
    k_param, k_x = jax.random.split(key)

    params = init_params(k_param)
    kparams = prepare_kernel_params(params)       # one-time bf16 / 128-lane weight prep

    x = jax.random.normal(k_x, (2, 3, 32, 32), jnp.float32)   # NCHW, CIFAR-like

    logits, cam = student_forward(kparams, x)
    logits = jax.block_until_ready(logits)
    cam = jax.block_until_ready(cam)

    assert logits.shape == (2, 10), logits.shape
    assert cam.shape == (2, 64, 16, 16), cam.shape

    ref_logits, ref_cam = reference_forward(params, x)

    def _max_rel_err(a, b):
        return float(jnp.max(jnp.abs(a - b)) / (jnp.max(jnp.abs(b)) + 1e-6))

    assert _max_rel_err(cam, ref_cam) < 2e-2, _max_rel_err(cam, ref_cam)
    assert _max_rel_err(logits, ref_logits) < 2e-2, _max_rel_err(logits, ref_logits)

    print("KERNEL_OK")
</pallas_src>

<mosaic_0001>
module attributes {stable_mosaic.version = 11 : i64} {
  func.func @_conv3x3_kernel(%arg0: i32, %arg1: i32, %arg2: memref<1x1160x128xf32, #tpu.memory_space<vmem>>, %arg3: memref<9x128x128xbf16, #tpu.memory_space<vmem>>, %arg4: memref<1x128xf32, #tpu.memory_space<vmem>>, %arg5: memref<1x272x128xf32, #tpu.memory_space<vmem>>) attributes {dimension_semantics = [#tpu.dimension_semantics<parallel>, #tpu.dimension_semantics<parallel>], iteration_bounds = array<i64: 2, 4>, scalar_prefetch = 0 : i64, scratch_operands = 0 : i64, tpu.core_type = #tpu.core_type<tc>, window_params = [{transform_indices = @transform_0, window_bounds = array<i64: 1, 1160, 128>}, {pipeline_mode = #tpu.pipeline_mode<synchronous>, transform_indices = @transform_1, window_bounds = array<i64: 9, 128, 128>}, {pipeline_mode = #tpu.pipeline_mode<synchronous>, transform_indices = @transform_2, window_bounds = array<i64: 1, 128>}, {transform_indices = @transform_3, window_bounds = array<i64: 1, 272, 128>}]} {
    %c272_i32 = arith.constant 272 : i32
    %0 = arith.muli %arg1, %c272_i32 : i32
    %1 = tpu.assume_multiple %0, 8 : i32
    %c0_i32 = arith.constant 0 : i32
    %2 = arith.addi %1, %c0_i32 : i32
    %c0 = arith.constant 0 : index
    %3 = arith.index_cast %2 : i32 to index
    %c0_0 = arith.constant 0 : index
    %4 = vector.load %arg2[%c0, %3, %c0_0] : memref<1x1160x128xf32, #tpu.memory_space<vmem>>, vector<1x272x128xf32>
    %5 = vector.shape_cast %4 : vector<1x272x128xf32> to vector<272x128xf32>
    %6 = arith.truncf %5 : vector<272x128xf32> to vector<272x128xbf16>
    %c0_1 = arith.constant 0 : index
    %c0_2 = arith.constant 0 : index
    %c0_3 = arith.constant 0 : index
    %7 = vector.load %arg3[%c0_1, %c0_2, %c0_3] : memref<9x128x128xbf16, #tpu.memory_space<vmem>>, vector<1x128x128xbf16>
    %8 = vector.shape_cast %7 : vector<1x128x128xbf16> to vector<128x128xbf16>
    %cst = arith.constant dense<0.000000e+00> : vector<272x128xf32>
    %9 = tpu.matmul %6, %8, %cst {dimension_numbers = #tpu.dot_dimension_numbers<[1], [0], [0], [1], [0, 0, 1, 1], [], []>} : vector<272x128xbf16>, vector<128x128xbf16>, vector<272x128xf32> -> vector<272x128xf32>
    %c1_i32 = arith.constant 1 : i32
    %10 = arith.addi %1, %c1_i32 : i32
    %c0_4 = arith.constant 0 : index
    %11 = arith.index_cast %10 : i32 to index
    %c0_5 = arith.constant 0 : index
    %12 = vector.load %arg2[%c0_4, %11, %c0_5] : memref<1x1160x128xf32, #tpu.memory_space<vmem>>, vector<1x272x128xf32>
    %13 = vector.shape_cast %12 : vector<1x272x128xf32> to vector<272x128xf32>
    %14 = arith.truncf %13 : vector<272x128xf32> to vector<272x128xbf16>
    %c1 = arith.constant 1 : index
    %c0_6 = arith.constant 0 : index
    %c0_7 = arith.constant 0 : index
    %15 = vector.load %arg3[%c1, %c0_6, %c0_7] : memref<9x128x128xbf16, #tpu.memory_space<vmem>>, vector<1x128x128xbf16>
    %16 = vector.shape_cast %15 : vector<1x128x128xbf16> to vector<128x128xbf16>
    %cst_8 = arith.constant dense<0.000000e+00> : vector<272x128xf32>
    %17 = tpu.matmul %14, %16, %cst_8 {dimension_numbers = #tpu.dot_dimension_numbers<[1], [0], [0], [1], [0, 0, 1, 1], [], []>} : vector<272x128xbf16>, vector<128x128xbf16>, vector<272x128xf32> -> vector<272x128xf32>
    %18 = arith.addf %9, %17 : vector<272x128xf32>
    %c2_i32 = arith.constant 2 : i32
    %19 = arith.addi %1, %c2_i32 : i32
    %c0_9 = arith.constant 0 : index
    %20 = arith.index_cast %19 : i32 to index
    %c0_10 = arith.constant 0 : index
    %21 = vector.load %arg2[%c0_9, %20, %c0_10] : memref<1x1160x128xf32, #tpu.memory_space<vmem>>, vector<1x272x128xf32>
    %22 = vector.shape_cast %21 : vector<1x272x128xf32> to vector<272x128xf32>
    %23 = arith.truncf %22 : vector<272x128xf32> to vector<272x128xbf16>
    %c2 = arith.constant 2 : index
    %c0_11 = arith.constant 0 : index
    %c0_12 = arith.constant 0 : index
    %24 = vector.load %arg3[%c2, %c0_11, %c0_12] : memref<9x128x128xbf16, #tpu.memory_space<vmem>>, vector<1x128x128xbf16>
    %25 = vector.shape_cast %24 : vector<1x128x128xbf16> to vector<128x128xbf16>
    %cst_13 = arith.constant dense<0.000000e+00> : vector<272x128xf32>
    %26 = tpu.matmul %23, %25, %cst_13 {dimension_numbers = #tpu.dot_dimension_numbers<[1], [0], [0], [1], [0, 0, 1, 1], [], []>} : vector<272x128xbf16>, vector<128x128xbf16>, vector<272x128xf32> -> vector<272x128xf32>
    %27 = arith.addf %18, %26 : vector<272x128xf32>
    %c34_i32 = arith.constant 34 : i32
    %28 = arith.addi %1, %c34_i32 : i32
    %c0_14 = arith.constant 0 : index
    %29 = arith.index_cast %28 : i32 to index
    %c0_15 = arith.constant 0 : index
    %30 = vector.load %arg2[%c0_14, %29, %c0_15] : memref<1x1160x128xf32, #tpu.memory_space<vmem>>, vector<1x272x128xf32>
    %31 = vector.shape_cast %30 : vector<1x272x128xf32> to vector<272x128xf32>
    %32 = arith.truncf %31 : vector<272x128xf32> to vector<272x128xbf16>
    %c3 = arith.constant 3 : index
    %c0_16 = arith.constant 0 : index
    %c0_17 = arith.constant 0 : index
    %33 = vector.load %arg3[%c3, %c0_16, %c0_17] : memref<9x128x128xbf16, #tpu.memory_space<vmem>>, vector<1x128x128xbf16>
    %34 = vector.shape_cast %33 : vector<1x128x128xbf16> to vector<128x128xbf16>
    %cst_18 = arith.constant dense<0.000000e+00> : vector<272x128xf32>
    %35 = tpu.matmul %32, %34, %cst_18 {dimension_numbers = #tpu.dot_dimension_numbers<[1], [0], [0], [1], [0, 0, 1, 1], [], []>} : vector<272x128xbf16>, vector<128x128xbf16>, vector<272x128xf32> -> vector<272x128xf32>
    %36 = arith.addf %27, %35 : vector<272x128xf32>
    %c35_i32 = arith.constant 35 : i32
    %37 = arith.addi %1, %c35_i32 : i32
    %c0_19 = arith.constant 0 : index
    %38 = arith.index_cast %37 : i32 to index
    %c0_20 = arith.constant 0 : index
    %39 = vector.load %arg2[%c0_19, %38, %c0_20] : memref<1x1160x128xf32, #tpu.memory_space<vmem>>, vector<1x272x128xf32>
    %40 = vector.shape_cast %39 : vector<1x272x128xf32> to vector<272x128xf32>
    %41 = arith.truncf %40 : vector<272x128xf32> to vector<272x128xbf16>
    %c4 = arith.constant 4 : index
    %c0_21 = arith.constant 0 : index
    %c0_22 = arith.constant 0 : index
    %42 = vector.load %arg3[%c4, %c0_21, %c0_22] : memref<9x128x128xbf16, #tpu.memory_space<vmem>>, vector<1x128x128xbf16>
    %43 = vector.shape_cast %42 : vector<1x128x128xbf16> to vector<128x128xbf16>
    %cst_23 = arith.constant dense<0.000000e+00> : vector<272x128xf32>
    %44 = tpu.matmul %41, %43, %cst_23 {dimension_numbers = #tpu.dot_dimension_numbers<[1], [0], [0], [1], [0, 0, 1, 1], [], []>} : vector<272x128xbf16>, vector<128x128xbf16>, vector<272x128xf32> -> vector<272x128xf32>
    %45 = arith.addf %36, %44 : vector<272x128xf32>
    %c36_i32 = arith.constant 36 : i32
    %46 = arith.addi %1, %c36_i32 : i32
    %c0_24 = arith.constant 0 : index
    %47 = arith.index_cast %46 : i32 to index
    %c0_25 = arith.constant 0 : index
    %48 = vector.load %arg2[%c0_24, %47, %c0_25] : memref<1x1160x128xf32, #tpu.memory_space<vmem>>, vector<1x272x128xf32>
    %49 = vector.shape_cast %48 : vector<1x272x128xf32> to vector<272x128xf32>
    %50 = arith.truncf %49 : vector<272x128xf32> to vector<272x128xbf16>
    %c5 = arith.constant 5 : index
    %c0_26 = arith.constant 0 : index
    %c0_27 = arith.constant 0 : index
    %51 = vector.load %arg3[%c5, %c0_26, %c0_27] : memref<9x128x128xbf16, #tpu.memory_space<vmem>>, vector<1x128x128xbf16>
    %52 = vector.shape_cast %51 : vector<1x128x128xbf16> to vector<128x128xbf16>
    %cst_28 = arith.constant dense<0.000000e+00> : vector<272x128xf32>
    %53 = tpu.matmul %50, %52, %cst_28 {dimension_numbers = #tpu.dot_dimension_numbers<[1], [0], [0], [1], [0, 0, 1, 1], [], []>} : vector<272x128xbf16>, vector<128x128xbf16>, vector<272x128xf32> -> vector<272x128xf32>
    %54 = arith.addf %45, %53 : vector<272x128xf32>
    %c68_i32 = arith.constant 68 : i32
    %55 = arith.addi %1, %c68_i32 : i32
    %c0_29 = arith.constant 0 : index
    %56 = arith.index_cast %55 : i32 to index
    %c0_30 = arith.constant 0 : index
    %57 = vector.load %arg2[%c0_29, %56, %c0_30] : memref<1x1160x128xf32, #tpu.memory_space<vmem>>, vector<1x272x128xf32>
    %58 = vector.shape_cast %57 : vector<1x272x128xf32> to vector<272x128xf32>
    %59 = arith.truncf %58 : vector<272x128xf32> to vector<272x128xbf16>
    %c6 = arith.constant 6 : index
    %c0_31 = arith.constant 0 : index
    %c0_32 = arith.constant 0 : index
    %60 = vector.load %arg3[%c6, %c0_31, %c0_32] : memref<9x128x128xbf16, #tpu.memory_space<vmem>>, vector<1x128x128xbf16>
    %61 = vector.shape_cast %60 : vector<1x128x128xbf16> to vector<128x128xbf16>
    %cst_33 = arith.constant dense<0.000000e+00> : vector<272x128xf32>
    %62 = tpu.matmul %59, %61, %cst_33 {dimension_numbers = #tpu.dot_dimension_numbers<[1], [0], [0], [1], [0, 0, 1, 1], [], []>} : vector<272x128xbf16>, vector<128x128xbf16>, vector<272x128xf32> -> vector<272x128xf32>
    %63 = arith.addf %54, %62 : vector<272x128xf32>
    %c69_i32 = arith.constant 69 : i32
    %64 = arith.addi %1, %c69_i32 : i32
    %c0_34 = arith.constant 0 : index
    %65 = arith.index_cast %64 : i32 to index
    %c0_35 = arith.constant 0 : index
    %66 = vector.load %arg2[%c0_34, %65, %c0_35] : memref<1x1160x128xf32, #tpu.memory_space<vmem>>, vector<1x272x128xf32>
    %67 = vector.shape_cast %66 : vector<1x272x128xf32> to vector<272x128xf32>
    %68 = arith.truncf %67 : vector<272x128xf32> to vector<272x128xbf16>
    %c7 = arith.constant 7 : index
    %c0_36 = arith.constant 0 : index
    %c0_37 = arith.constant 0 : index
    %69 = vector.load %arg3[%c7, %c0_36, %c0_37] : memref<9x128x128xbf16, #tpu.memory_space<vmem>>, vector<1x128x128xbf16>
    %70 = vector.shape_cast %69 : vector<1x128x128xbf16> to vector<128x128xbf16>
    %cst_38 = arith.constant dense<0.000000e+00> : vector<272x128xf32>
    %71 = tpu.matmul %68, %70, %cst_38 {dimension_numbers = #tpu.dot_dimension_numbers<[1], [0], [0], [1], [0, 0, 1, 1], [], []>} : vector<272x128xbf16>, vector<128x128xbf16>, vector<272x128xf32> -> vector<272x128xf32>
    %72 = arith.addf %63, %71 : vector<272x128xf32>
    %c70_i32 = arith.constant 70 : i32
    %73 = arith.addi %1, %c70_i32 : i32
    %c0_39 = arith.constant 0 : index
    %74 = arith.index_cast %73 : i32 to index
    %c0_40 = arith.constant 0 : index
    %75 = vector.load %arg2[%c0_39, %74, %c0_40] : memref<1x1160x128xf32, #tpu.memory_space<vmem>>, vector<1x272x128xf32>
    %76 = vector.shape_cast %75 : vector<1x272x128xf32> to vector<272x128xf32>
    %77 = arith.truncf %76 : vector<272x128xf32> to vector<272x128xbf16>
    %c8 = arith.constant 8 : index
    %c0_41 = arith.constant 0 : index
    %c0_42 = arith.constant 0 : index
    %78 = vector.load %arg3[%c8, %c0_41, %c0_42] : memref<9x128x128xbf16, #tpu.memory_space<vmem>>, vector<1x128x128xbf16>
    %79 = vector.shape_cast %78 : vector<1x128x128xbf16> to vector<128x128xbf16>
    %cst_43 = arith.constant dense<0.000000e+00> : vector<272x128xf32>
    %80 = tpu.matmul %77, %79, %cst_43 {dimension_numbers = #tpu.dot_dimension_numbers<[1], [0], [0], [1], [0, 0, 1, 1], [], []>} : vector<272x128xbf16>, vector<128x128xbf16>, vector<272x128xf32> -> vector<272x128xf32>
    %81 = arith.addf %72, %80 : vector<272x128xf32>
    %c0_44 = arith.constant 0 : index
    %c0_45 = arith.constant 0 : index
    %82 = vector.load %arg4[%c0_44, %c0_45] : memref<1x128xf32, #tpu.memory_space<vmem>>, vector<1x128xf32>
    %83 = vector.broadcast %82 : vector<1x128xf32> to vector<272x128xf32>
    %84 = arith.addf %81, %83 : vector<272x128xf32>
    %cst_46 = arith.constant 0.000000e+00 : f32
    %85 = vector.broadcast %cst_46 : f32 to vector<272x128xf32>
    %86 = arith.maximumf %84, %85 : vector<272x128xf32>
    %c0_47 = arith.constant 0 : index
    %c0_48 = arith.constant 0 : index
    %c0_49 = arith.constant 0 : index
    %87 = vector.load %arg5[%c0_47, %c0_48, %c0_49] : memref<1x272x128xf32, #tpu.memory_space<vmem>>, vector<1x272x128xf32>
    %88 = vector.shape_cast %87 : vector<1x272x128xf32> to vector<272x128xf32>
    %89 = vector.shape_cast %86 : vector<272x128xf32> to vector<1x272x128xf32>
    tpu.vector_store %arg5[%c0_47, %c0_48, %c0_49], %89 {strides = array<i32>} : memref<1x272x128xf32, #tpu.memory_space<vmem>>, vector<1x272x128xf32>,
    return
  }
  func.func @transform_0(%arg0: i32, %arg1: i32) -> (i32, i32, i32) {
    %c0_i32 = arith.constant 0 : i32
    %c0_i32_0 = arith.constant 0 : i32
    %c0_i32_1 = arith.constant 0 : i32
    return %arg0, %c0_i32, %c0_i32_0 : i32, i32, i32
  }
  func.func @transform_1(%arg0: i32, %arg1: i32) -> (i32, i32, i32) {
    %c0_i32 = arith.constant 0 : i32
    %c0_i32_0 = arith.constant 0 : i32
    %c0_i32_1 = arith.constant 0 : i32
    %c0_i32_2 = arith.constant 0 : i32
    return %c0_i32, %c0_i32_0, %c0_i32_1 : i32, i32, i32
  }
  func.func @transform_2(%arg0: i32, %arg1: i32) -> (i32, i32) {
    %c0_i32 = arith.constant 0 : i32
    %c0_i32_0 = arith.constant 0 : i32
    %c0_i32_1 = arith.constant 0 : i32
    return %c0_i32, %c0_i32_0 : i32, i32
  }
  func.func @transform_3(%arg0: i32, %arg1: i32) -> (i32, i32, i32) {
    %c0_i32 = arith.constant 0 : i32
    %c0_i32_0 = arith.constant 0 : i32
    return %arg0, %arg1, %c0_i32 : i32, i32, i32
  }
}

module attributes {stable_mosaic.version = 11 : i64} {
  func.func @_maxpool2x2_kernel(%arg0: i32, %arg1: memref<1x1024x128xf32, #tpu.memory_space<vmem>>, %arg2: memref<4x256x1024xf32, #tpu.memory_space<vmem>>, %arg3: memref<1x256x128xf32, #tpu.memory_space<vmem>>) attributes {dimension_semantics = [#tpu.dimension_semantics<parallel>], iteration_bounds = array<i64: 2>, scalar_prefetch = 0 : i64, scratch_operands = 0 : i64, tpu.core_type = #tpu.core_type<tc>, window_params = [{transform_indices = @transform_0, window_bounds = array<i64: 1, 1024, 128>}, {pipeline_mode = #tpu.pipeline_mode<synchronous>, transform_indices = @transform_1, window_bounds = array<i64: 4, 256, 1024>}, {transform_indices = @transform_2, window_bounds = array<i64: 1, 256, 128>}]} {
    %c0 = arith.constant 0 : index
    %c0_0 = arith.constant 0 : index
    %c0_1 = arith.constant 0 : index
    %0 = vector.load %arg1[%c0, %c0_0, %c0_1] : memref<1x1024x128xf32, #tpu.memory_space<vmem>>, vector<1x1024x128xf32>
    %1 = vector.shape_cast %0 : vector<1x1024x128xf32> to vector<1024x128xf32>
    %c0_2 = arith.constant 0 : index
    %c0_3 = arith.constant 0 : index
    %c0_4 = arith.constant 0 : index
    %2 = vector.load %arg2[%c0_2, %c0_3, %c0_4] : memref<4x256x1024xf32, #tpu.memory_space<vmem>>, vector<1x256x1024xf32>
    %3 = vector.shape_cast %2 : vector<1x256x1024xf32> to vector<256x1024xf32>
    %cst = arith.constant dense<0.000000e+00> : vector<256x128xf32>
    %4 = tpu.matmul %3, %1, %cst {dimension_numbers = #tpu.dot_dimension_numbers<[1], [0], [0], [1], [0, 0, 1, 1], [], []>} : vector<256x1024xf32>, vector<1024x128xf32>, vector<256x128xf32> -> vector<256x128xf32>
    %c1 = arith.constant 1 : index
    %c0_5 = arith.constant 0 : index
    %c0_6 = arith.constant 0 : index
    %5 = vector.load %arg2[%c1, %c0_5, %c0_6] : memref<4x256x1024xf32, #tpu.memory_space<vmem>>, vector<1x256x1024xf32>
    %6 = vector.shape_cast %5 : vector<1x256x1024xf32> to vector<256x1024xf32>
    %cst_7 = arith.constant dense<0.000000e+00> : vector<256x128xf32>
    %7 = tpu.matmul %6, %1, %cst_7 {dimension_numbers = #tpu.dot_dimension_numbers<[1], [0], [0], [1], [0, 0, 1, 1], [], []>} : vector<256x1024xf32>, vector<1024x128xf32>, vector<256x128xf32> -> vector<256x128xf32>
    %8 = arith.maximumf %4, %7 : vector<256x128xf32>
    %c2 = arith.constant 2 : index
    %c0_8 = arith.constant 0 : index
    %c0_9 = arith.constant 0 : index
    %9 = vector.load %arg2[%c2, %c0_8, %c0_9] : memref<4x256x1024xf32, #tpu.memory_space<vmem>>, vector<1x256x1024xf32>
    %10 = vector.shape_cast %9 : vector<1x256x1024xf32> to vector<256x1024xf32>
    %cst_10 = arith.constant dense<0.000000e+00> : vector<256x128xf32>
    %11 = tpu.matmul %10, %1, %cst_10 {dimension_numbers = #tpu.dot_dimension_numbers<[1], [0], [0], [1], [0, 0, 1, 1], [], []>} : vector<256x1024xf32>, vector<1024x128xf32>, vector<256x128xf32> -> vector<256x128xf32>
    %12 = arith.maximumf %8, %11 : vector<256x128xf32>
    %c3 = arith.constant 3 : index
    %c0_11 = arith.constant 0 : index
    %c0_12 = arith.constant 0 : index
    %13 = vector.load %arg2[%c3, %c0_11, %c0_12] : memref<4x256x1024xf32, #tpu.memory_space<vmem>>, vector<1x256x1024xf32>
    %14 = vector.shape_cast %13 : vector<1x256x1024xf32> to vector<256x1024xf32>
    %cst_13 = arith.constant dense<0.000000e+00> : vector<256x128xf32>
    %15 = tpu.matmul %14, %1, %cst_13 {dimension_numbers = #tpu.dot_dimension_numbers<[1], [0], [0], [1], [0, 0, 1, 1], [], []>} : vector<256x1024xf32>, vector<1024x128xf32>, vector<256x128xf32> -> vector<256x128xf32>
    %16 = arith.maximumf %12, %15 : vector<256x128xf32>
    %c0_14 = arith.constant 0 : index
    %c0_15 = arith.constant 0 : index
    %c0_16 = arith.constant 0 : index
    %17 = vector.load %arg3[%c0_14, %c0_15, %c0_16] : memref<1x256x128xf32, #tpu.memory_space<vmem>>, vector<1x256x128xf32>
    %18 = vector.shape_cast %17 : vector<1x256x128xf32> to vector<256x128xf32>
    %19 = vector.shape_cast %16 : vector<256x128xf32> to vector<1x256x128xf32>
    tpu.vector_store %arg3[%c0_14, %c0_15, %c0_16], %19 {strides = array<i32>} : memref<1x256x128xf32, #tpu.memory_space<vmem>>, vector<1x256x128xf32>,
    return
  }
  func.func @transform_0(%arg0: i32) -> (i32, i32, i32) {
    %c0_i32 = arith.constant 0 : i32
    %c0_i32_0 = arith.constant 0 : i32
    %c0_i32_1 = arith.constant 0 : i32
    return %arg0, %c0_i32, %c0_i32_0 : i32, i32, i32
  }
  func.func @transform_1(%arg0: i32) -> (i32, i32, i32) {
    %c0_i32 = arith.constant 0 : i32
    %c0_i32_0 = arith.constant 0 : i32
    %c0_i32_1 = arith.constant 0 : i32
    %c0_i32_2 = arith.constant 0 : i32
    return %c0_i32, %c0_i32_0, %c0_i32_1 : i32, i32, i32
  }
  func.func @transform_2(%arg0: i32) -> (i32, i32, i32) {
    %c0_i32 = arith.constant 0 : i32
    %c0_i32_0 = arith.constant 0 : i32
    %c0_i32_1 = arith.constant 0 : i32
    return %arg0, %c0_i32, %c0_i32_0 : i32, i32, i32
  }
}

module attributes {stable_mosaic.version = 11 : i64} {
  func.func @_conv3x3_kernel(%arg0: i32, %arg1: i32, %arg2: memref<1x328x128xf32, #tpu.memory_space<vmem>>, %arg3: memref<9x128x128xbf16, #tpu.memory_space<vmem>>, %arg4: memref<1x128xf32, #tpu.memory_space<vmem>>, %arg5: memref<1x144x128xf32, #tpu.memory_space<vmem>>) attributes {dimension_semantics = [#tpu.dimension_semantics<parallel>, #tpu.dimension_semantics<parallel>], iteration_bounds = array<i64: 2, 2>, scalar_prefetch = 0 : i64, scratch_operands = 0 : i64, tpu.core_type = #tpu.core_type<tc>, window_params = [{transform_indices = @transform_0, window_bounds = array<i64: 1, 328, 128>}, {pipeline_mode = #tpu.pipeline_mode<synchronous>, transform_indices = @transform_1, window_bounds = array<i64: 9, 128, 128>}, {pipeline_mode = #tpu.pipeline_mode<synchronous>, transform_indices = @transform_2, window_bounds = array<i64: 1, 128>}, {transform_indices = @transform_3, window_bounds = array<i64: 1, 144, 128>}]} {
    %c144_i32 = arith.constant 144 : i32
    %0 = arith.muli %arg1, %c144_i32 : i32
    %1 = tpu.assume_multiple %0, 8 : i32
    %c0_i32 = arith.constant 0 : i32
    %2 = arith.addi %1, %c0_i32 : i32
    %c0 = arith.constant 0 : index
    %3 = arith.index_cast %2 : i32 to index
    %c0_0 = arith.constant 0 : index
    %4 = vector.load %arg2[%c0, %3, %c0_0] : memref<1x328x128xf32, #tpu.memory_space<vmem>>, vector<1x144x128xf32>
    %5 = vector.shape_cast %4 : vector<1x144x128xf32> to vector<144x128xf32>
    %6 = arith.truncf %5 : vector<144x128xf32> to vector<144x128xbf16>
    %c0_1 = arith.constant 0 : index
    %c0_2 = arith.constant 0 : index
    %c0_3 = arith.constant 0 : index
    %7 = vector.load %arg3[%c0_1, %c0_2, %c0_3] : memref<9x128x128xbf16, #tpu.memory_space<vmem>>, vector<1x128x128xbf16>
    %8 = vector.shape_cast %7 : vector<1x128x128xbf16> to vector<128x128xbf16>
    %cst = arith.constant dense<0.000000e+00> : vector<144x128xf32>
    %9 = tpu.matmul %6, %8, %cst {dimension_numbers = #tpu.dot_dimension_numbers<[1], [0], [0], [1], [0, 0, 1, 1], [], []>} : vector<144x128xbf16>, vector<128x128xbf16>, vector<144x128xf32> -> vector<144x128xf32>
    %c1_i32 = arith.constant 1 : i32
    %10 = arith.addi %1, %c1_i32 : i32
    %c0_4 = arith.constant 0 : index
    %11 = arith.index_cast %10 : i32 to index
    %c0_5 = arith.constant 0 : index
    %12 = vector.load %arg2[%c0_4, %11, %c0_5] : memref<1x328x128xf32, #tpu.memory_space<vmem>>, vector<1x144x128xf32>
    %13 = vector.shape_cast %12 : vector<1x144x128xf32> to vector<144x128xf32>
    %14 = arith.truncf %13 : vector<144x128xf32> to vector<144x128xbf16>
    %c1 = arith.constant 1 : index
    %c0_6 = arith.constant 0 : index
    %c0_7 = arith.constant 0 : index
    %15 = vector.load %arg3[%c1, %c0_6, %c0_7] : memref<9x128x128xbf16, #tpu.memory_space<vmem>>, vector<1x128x128xbf16>
    %16 = vector.shape_cast %15 : vector<1x128x128xbf16> to vector<128x128xbf16>
    %cst_8 = arith.constant dense<0.000000e+00> : vector<144x128xf32>
    %17 = tpu.matmul %14, %16, %cst_8 {dimension_numbers = #tpu.dot_dimension_numbers<[1], [0], [0], [1], [0, 0, 1, 1], [], []>} : vector<144x128xbf16>, vector<128x128xbf16>, vector<144x128xf32> -> vector<144x128xf32>
    %18 = arith.addf %9, %17 : vector<144x128xf32>
    %c2_i32 = arith.constant 2 : i32
    %19 = arith.addi %1, %c2_i32 : i32
    %c0_9 = arith.constant 0 : index
    %20 = arith.index_cast %19 : i32 to index
    %c0_10 = arith.constant 0 : index
    %21 = vector.load %arg2[%c0_9, %20, %c0_10] : memref<1x328x128xf32, #tpu.memory_space<vmem>>, vector<1x144x128xf32>
    %22 = vector.shape_cast %21 : vector<1x144x128xf32> to vector<144x128xf32>
    %23 = arith.truncf %22 : vector<144x128xf32> to vector<144x128xbf16>
    %c2 = arith.constant 2 : index
    %c0_11 = arith.constant 0 : index
    %c0_12 = arith.constant 0 : index
    %24 = vector.load %arg3[%c2, %c0_11, %c0_12] : memref<9x128x128xbf16, #tpu.memory_space<vmem>>, vector<1x128x128xbf16>
    %25 = vector.shape_cast %24 : vector<1x128x128xbf16> to vector<128x128xbf16>
    %cst_13 = arith.constant dense<0.000000e+00> : vector<144x128xf32>
    %26 = tpu.matmul %23, %25, %cst_13 {dimension_numbers = #tpu.dot_dimension_numbers<[1], [0], [0], [1], [0, 0, 1, 1], [], []>} : vector<144x128xbf16>, vector<128x128xbf16>, vector<144x128xf32> -> vector<144x128xf32>
    %27 = arith.addf %18, %26 : vector<144x128xf32>
    %c18_i32 = arith.constant 18 : i32
    %28 = arith.addi %1, %c18_i32 : i32
    %c0_14 = arith.constant 0 : index
    %29 = arith.index_cast %28 : i32 to index
    %c0_15 = arith.constant 0 : index
    %30 = vector.load %arg2[%c0_14, %29, %c0_15] : memref<1x328x128xf32, #tpu.memory_space<vmem>>, vector<1x144x128xf32>
    %31 = vector.shape_cast %30 : vector<1x144x128xf32> to vector<144x128xf32>
    %32 = arith.truncf %31 : vector<144x128xf32> to vector<144x128xbf16>
    %c3 = arith.constant 3 : index
    %c0_16 = arith.constant 0 : index
    %c0_17 = arith.constant 0 : index
    %33 = vector.load %arg3[%c3, %c0_16, %c0_17] : memref<9x128x128xbf16, #tpu.memory_space<vmem>>, vector<1x128x128xbf16>
    %34 = vector.shape_cast %33 : vector<1x128x128xbf16> to vector<128x128xbf16>
    %cst_18 = arith.constant dense<0.000000e+00> : vector<144x128xf32>
    %35 = tpu.matmul %32, %34, %cst_18 {dimension_numbers = #tpu.dot_dimension_numbers<[1], [0], [0], [1], [0, 0, 1, 1], [], []>} : vector<144x128xbf16>, vector<128x128xbf16>, vector<144x128xf32> -> vector<144x128xf32>
    %36 = arith.addf %27, %35 : vector<144x128xf32>
    %c19_i32 = arith.constant 19 : i32
    %37 = arith.addi %1, %c19_i32 : i32
    %c0_19 = arith.constant 0 : index
    %38 = arith.index_cast %37 : i32 to index
    %c0_20 = arith.constant 0 : index
    %39 = vector.load %arg2[%c0_19, %38, %c0_20] : memref<1x328x128xf32, #tpu.memory_space<vmem>>, vector<1x144x128xf32>
    %40 = vector.shape_cast %39 : vector<1x144x128xf32> to vector<144x128xf32>
    %41 = arith.truncf %40 : vector<144x128xf32> to vector<144x128xbf16>
    %c4 = arith.constant 4 : index
    %c0_21 = arith.constant 0 : index
    %c0_22 = arith.constant 0 : index
    %42 = vector.load %arg3[%c4, %c0_21, %c0_22] : memref<9x128x128xbf16, #tpu.memory_space<vmem>>, vector<1x128x128xbf16>
    %43 = vector.shape_cast %42 : vector<1x128x128xbf16> to vector<128x128xbf16>
    %cst_23 = arith.constant dense<0.000000e+00> : vector<144x128xf32>
    %44 = tpu.matmul %41, %43, %cst_23 {dimension_numbers = #tpu.dot_dimension_numbers<[1], [0], [0], [1], [0, 0, 1, 1], [], []>} : vector<144x128xbf16>, vector<128x128xbf16>, vector<144x128xf32> -> vector<144x128xf32>
    %45 = arith.addf %36, %44 : vector<144x128xf32>
    %c20_i32 = arith.constant 20 : i32
    %46 = arith.addi %1, %c20_i32 : i32
    %c0_24 = arith.constant 0 : index
    %47 = arith.index_cast %46 : i32 to index
    %c0_25 = arith.constant 0 : index
    %48 = vector.load %arg2[%c0_24, %47, %c0_25] : memref<1x328x128xf32, #tpu.memory_space<vmem>>, vector<1x144x128xf32>
    %49 = vector.shape_cast %48 : vector<1x144x128xf32> to vector<144x128xf32>
    %50 = arith.truncf %49 : vector<144x128xf32> to vector<144x128xbf16>
    %c5 = arith.constant 5 : index
    %c0_26 = arith.constant 0 : index
    %c0_27 = arith.constant 0 : index
    %51 = vector.load %arg3[%c5, %c0_26, %c0_27] : memref<9x128x128xbf16, #tpu.memory_space<vmem>>, vector<1x128x128xbf16>
    %52 = vector.shape_cast %51 : vector<1x128x128xbf16> to vector<128x128xbf16>
    %cst_28 = arith.constant dense<0.000000e+00> : vector<144x128xf32>
    %53 = tpu.matmul %50, %52, %cst_28 {dimension_numbers = #tpu.dot_dimension_numbers<[1], [0], [0], [1], [0, 0, 1, 1], [], []>} : vector<144x128xbf16>, vector<128x128xbf16>, vector<144x128xf32> -> vector<144x128xf32>
    %54 = arith.addf %45, %53 : vector<144x128xf32>
    %c36_i32 = arith.constant 36 : i32
    %55 = arith.addi %1, %c36_i32 : i32
    %c0_29 = arith.constant 0 : index
    %56 = arith.index_cast %55 : i32 to index
    %c0_30 = arith.constant 0 : index
    %57 = vector.load %arg2[%c0_29, %56, %c0_30] : memref<1x328x128xf32, #tpu.memory_space<vmem>>, vector<1x144x128xf32>
    %58 = vector.shape_cast %57 : vector<1x144x128xf32> to vector<144x128xf32>
    %59 = arith.truncf %58 : vector<144x128xf32> to vector<144x128xbf16>
    %c6 = arith.constant 6 : index
    %c0_31 = arith.constant 0 : index
    %c0_32 = arith.constant 0 : index
    %60 = vector.load %arg3[%c6, %c0_31, %c0_32] : memref<9x128x128xbf16, #tpu.memory_space<vmem>>, vector<1x128x128xbf16>
    %61 = vector.shape_cast %60 : vector<1x128x128xbf16> to vector<128x128xbf16>
    %cst_33 = arith.constant dense<0.000000e+00> : vector<144x128xf32>
    %62 = tpu.matmul %59, %61, %cst_33 {dimension_numbers = #tpu.dot_dimension_numbers<[1], [0], [0], [1], [0, 0, 1, 1], [], []>} : vector<144x128xbf16>, vector<128x128xbf16>, vector<144x128xf32> -> vector<144x128xf32>
    %63 = arith.addf %54, %62 : vector<144x128xf32>
    %c37_i32 = arith.constant 37 : i32
    %64 = arith.addi %1, %c37_i32 : i32
    %c0_34 = arith.constant 0 : index
    %65 = arith.index_cast %64 : i32 to index
    %c0_35 = arith.constant 0 : index
    %66 = vector.load %arg2[%c0_34, %65, %c0_35] : memref<1x328x128xf32, #tpu.memory_space<vmem>>, vector<1x144x128xf32>
    %67 = vector.shape_cast %66 : vector<1x144x128xf32> to vector<144x128xf32>
    %68 = arith.truncf %67 : vector<144x128xf32> to vector<144x128xbf16>
    %c7 = arith.constant 7 : index
    %c0_36 = arith.constant 0 : index
    %c0_37 = arith.constant 0 : index
    %69 = vector.load %arg3[%c7, %c0_36, %c0_37] : memref<9x128x128xbf16, #tpu.memory_space<vmem>>, vector<1x128x128xbf16>
    %70 = vector.shape_cast %69 : vector<1x128x128xbf16> to vector<128x128xbf16>
    %cst_38 = arith.constant dense<0.000000e+00> : vector<144x128xf32>
    %71 = tpu.matmul %68, %70, %cst_38 {dimension_numbers = #tpu.dot_dimension_numbers<[1], [0], [0], [1], [0, 0, 1, 1], [], []>} : vector<144x128xbf16>, vector<128x128xbf16>, vector<144x128xf32> -> vector<144x128xf32>
    %72 = arith.addf %63, %71 : vector<144x128xf32>
    %c38_i32 = arith.constant 38 : i32
    %73 = arith.addi %1, %c38_i32 : i32
    %c0_39 = arith.constant 0 : index
    %74 = arith.index_cast %73 : i32 to index
    %c0_40 = arith.constant 0 : index
    %75 = vector.load %arg2[%c0_39, %74, %c0_40] : memref<1x328x128xf32, #tpu.memory_space<vmem>>, vector<1x144x128xf32>
    %76 = vector.shape_cast %75 : vector<1x144x128xf32> to vector<144x128xf32>
    %77 = arith.truncf %76 : vector<144x128xf32> to vector<144x128xbf16>
    %c8 = arith.constant 8 : index
    %c0_41 = arith.constant 0 : index
    %c0_42 = arith.constant 0 : index
    %78 = vector.load %arg3[%c8, %c0_41, %c0_42] : memref<9x128x128xbf16, #tpu.memory_space<vmem>>, vector<1x128x128xbf16>
    %79 = vector.shape_cast %78 : vector<1x128x128xbf16> to vector<128x128xbf16>
    %cst_43 = arith.constant dense<0.000000e+00> : vector<144x128xf32>
    %80 = tpu.matmul %77, %79, %cst_43 {dimension_numbers = #tpu.dot_dimension_numbers<[1], [0], [0], [1], [0, 0, 1, 1], [], []>} : vector<144x128xbf16>, vector<128x128xbf16>, vector<144x128xf32> -> vector<144x128xf32>
    %81 = arith.addf %72, %80 : vector<144x128xf32>
    %c0_44 = arith.constant 0 : index
    %c0_45 = arith.constant 0 : index
    %82 = vector.load %arg4[%c0_44, %c0_45] : memref<1x128xf32, #tpu.memory_space<vmem>>, vector<1x128xf32>
    %83 = vector.broadcast %82 : vector<1x128xf32> to vector<144x128xf32>
    %84 = arith.addf %81, %83 : vector<144x128xf32>
    %cst_46 = arith.constant 0.000000e+00 : f32
    %85 = vector.broadcast %cst_46 : f32 to vector<144x128xf32>
    %86 = arith.maximumf %84, %85 : vector<144x128xf32>
    %c0_47 = arith.constant 0 : index
    %c0_48 = arith.constant 0 : index
    %c0_49 = arith.constant 0 : index
    %87 = vector.load %arg5[%c0_47, %c0_48, %c0_49] : memref<1x144x128xf32, #tpu.memory_space<vmem>>, vector<1x144x128xf32>
    %88 = vector.shape_cast %87 : vector<1x144x128xf32> to vector<144x128xf32>
    %89 = vector.shape_cast %86 : vector<144x128xf32> to vector<1x144x128xf32>
    tpu.vector_store %arg5[%c0_47, %c0_48, %c0_49], %89 {strides = array<i32>} : memref<1x144x128xf32, #tpu.memory_space<vmem>>, vector<1x144x128xf32>,
    return
  }
  func.func @transform_0(%arg0: i32, %arg1: i32) -> (i32, i32, i32) {
    %c0_i32 = arith.constant 0 : i32
    %c0_i32_0 = arith.constant 0 : i32
    %c0_i32_1 = arith.constant 0 : i32
    return %arg0, %c0_i32, %c0_i32_0 : i32, i32, i32
  }
  func.func @transform_1(%arg0: i32, %arg1: i32) -> (i32, i32, i32) {
    %c0_i32 = arith.constant 0 : i32
    %c0_i32_0 = arith.constant 0 : i32
    %c0_i32_1 = arith.constant 0 : i32
    %c0_i32_2 = arith.constant 0 : i32
    return %c0_i32, %c0_i32_0, %c0_i32_1 : i32, i32, i32
  }
  func.func @transform_2(%arg0: i32, %arg1: i32) -> (i32, i32) {
    %c0_i32 = arith.constant 0 : i32
    %c0_i32_0 = arith.constant 0 : i32
    %c0_i32_1 = arith.constant 0 : i32
    return %c0_i32, %c0_i32_0 : i32, i32
  }
  func.func @transform_3(%arg0: i32, %arg1: i32) -> (i32, i32, i32) {
    %c0_i32 = arith.constant 0 : i32
    %c0_i32_0 = arith.constant 0 : i32
    return %arg0, %arg1, %c0_i32 : i32, i32, i32
  }
}

</mosaic_0001>

<llo_original>
// kernel: student_forward.5
$region0: #{student_forward.5}
  #allocation0 [shape = 'u32[]', space=smem, size = 0x4, offset = 0x4, fixed_abs, tag = 'smem constant byte address 0x4 - core index']
  #allocation1 [shape = 'u32[144,128]{1,0:T(1,128)}', space=vmem, size = 0x12000, scoped, tag = 'internal scratch']
  %s0 = inlined_call_operand.vmem [shape: f32[2,1160,128], index: 0, kind: input, shape index: {}]
  %s1 = inlined_call_operand.vmem [shape: bf16[9,128,128], index: 1, kind: input, shape index: {}]
  %s2 = inlined_call_operand.vmem [shape: f32[1,128], index: 2, kind: input, shape index: {}]
  %s3 = inlined_call_operand.vmem [shape: f32[2,1088,128], index: 3, kind: output, shape index: {}]
  %s4 = sld [smem:[#allocation0]]
  $region45: #{student_forward.5} parent=0
    _
  %s6 = ssub.s32 1, %s4
  %s7 = scalar_select 0, %s6, %s4
  loop: start=0, step=1, limit=10
  $region2: #{student_forward.5} parent=0 // loop_pre_header
    _
  $region3: #{student_forward.5} parent=0 // loop_header
    %s9 = sphi 0, %s13
    %p10 = scmp.ge.s32.totalorder %s9, 10
    %s16 = sphi 0, %s28
    %s17 = sphi 0, %s24
    %s18 = sphi 0, %s16
    %s19 = sphi 0, %s17
    %s20 = sphi 0, %s18
    %s21 = sphi 0, %s19
    %s31 = sphi 0, %s33
    %s34 = sphi 0, %s31
    %s35 = sphi 0, %s34
    %s51 = sphi 0, %s35
    %s55 = sphi 0, %s55
    %s57 = sphi 0, %s55
    %s58 = sphi 0, %s57
    %s72 = sphi 0, %s58
    %s76 = sphi 0, %s76
    %s78 = sphi 0, %s76
    %s79 = sphi 0, %s78
    %s93 = sphi 0, %s79
    %s101 = sphi 0, %s103
    %s104 = sphi 0, %s101
    %s105 = sphi 0, %s104
    %s121 = sphi 0, %s105
  $region4: #{student_forward.5} parent=0 // loop_header_branch
    %12 = sbr.rel (%p10) target = $region8
  $region5: #{student_forward.5} parent=0 // loop_body
    %s14 = ssub.s32 %s9, 1
    %s15 = ssub.s32 %s9, 2
    %s22 = sadd.s32 1, %s17
    %p23 = scmp.ge.s32.totalorder %s22, 4
    %s24 = scalar_select %p23, 0, %s22
    %s25 = sadd.s32 1, %s16
    %s26 = scalar_select %p23, %s25, %s16
    %p27 = scmp.ge.s32.totalorder %s26, 2
    %s28 = scalar_select %p27, 0, %s26
    %s29 = ssub.s32 %s16, %s28
    %p30 = scmp.eq.s32.totalorder %s29, 0
    %s32 = sadd.s32 %s31, 1
    %s33 = scalar_select %p30, %s31, %s32
    %p36 = pneg %p30
    %p37 = scmp.eq.s32.totalorder %s9, 7
    %p38 = por %p36, %p37
    %p39 = scmp.ne.s32.totalorder %s31, %s34
    %p40 = scmp.eq.s32.totalorder %s9, 0
    %p41 = por %p39, %p40
    %p42 = scmp.ne.s32.totalorder %s31, %s34
    %p43 = scmp.eq.s32.totalorder %s14, 7
    %p44 = por %p42, %p43
    %p45 = scmp.ne.s32.totalorder %s34, %s35
    %p46 = scmp.eq.s32.totalorder %s14, 0
    %p47 = por %p45, %p46
    %p48 = scmp.ne.s32.totalorder %s34, %s35
    %p49 = scmp.eq.s32.totalorder %s15, 7
    %p50 = por %p48, %p49
    %p52 = scmp.ne.s32.totalorder %s35, %s51
    %p53 = scmp.eq.s32.totalorder %s15, 0
    %p54 = por %p52, %p53
    %s56 = sadd.s32 %s55, 1
    %p59 = scmp.eq.s32.totalorder %s9, 7
    %p60 = scmp.ne.s32.totalorder %s55, %s57
    %p61 = scmp.eq.s32.totalorder %s9, 0
    %p62 = por %p60, %p61
    %p63 = scmp.ne.s32.totalorder %s55, %s57
    %p64 = scmp.eq.s32.totalorder %s14, 7
    %p65 = por %p63, %p64
    %p66 = scmp.ne.s32.totalorder %s57, %s58
    %p67 = scmp.eq.s32.totalorder %s14, 0
    %p68 = por %p66, %p67
    %p69 = scmp.ne.s32.totalorder %s57, %s58
    %p70 = scmp.eq.s32.totalorder %s15, 7
    %p71 = por %p69, %p70
    %p73 = scmp.ne.s32.totalorder %s58, %s72
    %p74 = scmp.eq.s32.totalorder %s15, 0
    %p75 = por %p73, %p74
    %s77 = sadd.s32 %s76, 1
    %p80 = scmp.eq.s32.totalorder %s9, 7
    %p81 = scmp.ne.s32.totalorder %s76, %s78
    %p82 = scmp.eq.s32.totalorder %s9, 0
    %p83 = por %p81, %p82
    %p84 = scmp.ne.s32.totalorder %s76, %s78
    %p85 = scmp.eq.s32.totalorder %s14, 7
    %p86 = por %p84, %p85
    %p87 = scmp.ne.s32.totalorder %s78, %s79
    %p88 = scmp.eq.s32.totalorder %s14, 0
    %p89 = por %p87, %p88
    %p90 = scmp.ne.s32.totalorder %s78, %s79
    %p91 = scmp.eq.s32.totalorder %s15, 7
    %p92 = por %p90, %p91
    %p94 = scmp.ne.s32.totalorder %s79, %s93
    %p95 = scmp.eq.s32.totalorder %s15, 0
    %p96 = por %p94, %p95
    %s97 = ssub.s32 %s16, %s28
    %s98 = ssub.s32 %s17, %s24
    %s99 = sor.u32 %s97, %s98
    %p100 = scmp.eq.s32.totalorder %s99, 0
    %s102 = sadd.s32 %s101, 1
    %s103 = scalar_select %p100, %s101, %s102
    %p106 = pneg %p100
    %p107 = scmp.eq.s32.totalorder %s9, 7
    %p108 = por %p106, %p107
    %p109 = scmp.ne.s32.totalorder %s101, %s104
    %p110 = scmp.eq.s32.totalorder %s9, 0
    %p111 = por %p109, %p110
    %p112 = scmp.ne.s32.totalorder %s101, %s104
    %p113 = scmp.eq.s32.totalorder %s14, 7
    %p114 = por %p112, %p113
    %p115 = scmp.ne.s32.totalorder %s104, %s105
    %p116 = scmp.eq.s32.totalorder %s14, 0
    %p117 = por %p115, %p116
    %p118 = scmp.ne.s32.totalorder %s104, %s105
    %p119 = scmp.eq.s32.totalorder %s15, 7
    %p120 = por %p118, %p119
    %p122 = scmp.ne.s32.totalorder %s105, %s121
    %p123 = scmp.eq.s32.totalorder %s15, 0
    %p124 = por %p122, %p123
    %p125 = scmp.le.s32.totalorder 1, %s9
    %p126 = scmp.lt.s32.totalorder %s9, 9
    %p127 = pnand %p125, %p126
    %p128 = pneg %p127
    // Predicated region
    $region9: #{student_forward.5} parent=5 // pred_check
      _
    $region10: #{student_forward.5} parent=5 // pred_check_branch
      %130 = sbr.rel (%p127) target = $region12
    $region11: #{student_forward.5} parent=5 // pred_region
      %s131 = ssub.s32 %s9, 1
      // Predicated region
      $region13: #{student_forward.5} parent=11 // pred_check
        %p132 = pneg %p68
      $region14: #{student_forward.5} parent=11 // pred_check_branch
        %134 = sbr.rel (%p132) target = $region16
      $region15: #{student_forward.5} parent=11 // pred_region
        _
      $region16: #{student_forward.5} parent=11 // pred_fallthru
        _
      // Predicated region
      $region17: #{student_forward.5} parent=11 // pred_check
        %p135 = pneg %p89
      $region18: #{student_forward.5} parent=11 // pred_check_branch
        %137 = sbr.rel (%p135) target = $region20
      $region19: #{student_forward.5} parent=11 // pred_region
        _
      $region20: #{student_forward.5} parent=11 // pred_fallthru
        _
    $region12: #{student_forward.5} parent=5 // pred_fallthru
      _
    %p138 = scmp.lt.s32.totalorder %s9, 8
    // Predicated region
    $region21: #{student_forward.5} parent=5 // pred_check
      %p139 = pneg %p138
    $region22: #{student_forward.5} parent=5 // pred_check_branch
      %141 = sbr.rel (%p139) target = $region24
    $region23: #{student_forward.5} parent=5 // pred_region
      // Predicated region
      $region25: #{student_forward.5} parent=23 // pred_check
        %p142 = pneg %p41
      $region26: #{student_forward.5} parent=23 // pred_check_branch
        %144 = sbr.rel (%p142) target = $region28
      $region27: #{student_forward.5} parent=23 // pred_region
        %p145 = scmp.lt.s32.totalorder %s16, 1
        %s146 = scalar_select %p145, %s16, 1
        %s147 = smul.addr %s146, 145
        %s148 = smul.addr %s147, 8
        %s149 = scalar_lea.vmem %s0, %s148
      $region28: #{student_forward.5} parent=23 // pred_fallthru
        _
    $region24: #{student_forward.5} parent=5 // pred_fallthru
      _
    %p150 = scmp.le.s32.totalorder 1, %s9
    %p151 = scmp.lt.s32.totalorder %s9, 9
    %p152 = pnand %p150, %p151
    %p153 = pneg %p152
    // Predicated region
    $region29: #{student_forward.5} parent=5 // pred_check
      _
    $region30: #{student_forward.5} parent=5 // pred_check_branch
      %155 = sbr.rel (%p152) target = $region32
    $region31: #{student_forward.5} parent=5 // pred_region
      %s156 = ssub.s32 %s9, 1
      %p157 = scmp.lt.s32.totalorder %s18, 1
      %s158 = scalar_select %p157, %s18, 1
      %s159 = smul.addr %s158, 145
      %s160 = smul.addr %s159, 8
      %s161 = scalar_lea.vmem %s0, %s160
      %p162 = pneg %p47
      %p163 = pneg %p44
      %p164 = pneg %p68
      %p165 = pneg %p65
      %p166 = pneg %p89
      %p167 = pneg %p86
      %p168 = pneg %p117
      %p169 = pneg %p114
      %s170 = smul.u32 34, %s19
      %p171 = scmp.lt.s32.totalorder %s18, 1
      %s172 = scalar_select %p171, %s18, 1
      %p173 = scmp.lt.s32.totalorder %s170, 135
      %s174 = scalar_select %p173, %s170, 135
      %s175 = smul.addr %s172, 136
      %s176 = sadd.s32 %s174, %s175
      %s177 = smul.addr %s176, 8
      %s178 = scalar_lea.vmem %s3, %s177
      %p179 = scmp.lt.s32.totalorder %s18, 1
      %s180 = scalar_select %p179, %s18, 1
      %s181 = smul.addr %s180, 145
      %s182 = smul.addr %s181, 8
      %s183 = scalar_lea.vmem %s0, %s182
      %s184 = smul.u32 34, %s19
      %p185 = scmp.lt.s32.totalorder %s18, 1
      %s186 = scalar_select %p185, %s18, 1
      %p187 = scmp.lt.s32.totalorder %s184, 135
      %s188 = scalar_select %p187, %s184, 135
      %s189 = smul.addr %s186, 136
      %s190 = sadd.s32 %s188, %s189
      %s191 = smul.addr %s190, 8
      %s192 = scalar_lea.vmem %s3, %s191
      %s193 = smul.u32 34, %s19
      %s195 = smul.u32 %s19, 272
      %s196 = scalar_lea.vmem %s183, %s195
      %v197 = vld [vmem:[%s196] sm:$0xff]
      %v198 = vld [vmem:[%s196 + $0x8] sm:$0xff]
      %v199 = vld [vmem:[%s196 + $0x10] sm:$0xff]
      %v200 = vld [vmem:[%s196 + $0x18] sm:$0xff]
      %v201 = vld [vmem:[%s196 + $0x20] sm:$0xff]
      %v202 = vld [vmem:[%s196 + $0x28] sm:$0xff]
      %v203 = vld [vmem:[%s196 + $0x30] sm:$0xff]
      %v204 = vld [vmem:[%s196 + $0x38] sm:$0xff]
      %v205 = vld [vmem:[%s196 + $0x40] sm:$0xff]
      %v206 = vld [vmem:[%s196 + $0x48] sm:$0xff]
      %v207 = vld [vmem:[%s196 + $0x50] sm:$0xff]
      %v208 = vld [vmem:[%s196 + $0x58] sm:$0xff]
      %v209 = vld [vmem:[%s196 + $0x60] sm:$0xff]
      %v210 = vld [vmem:[%s196 + $0x68] sm:$0xff]
      %v211 = vld [vmem:[%s196 + $0x70] sm:$0xff]
      %v212 = vld [vmem:[%s196 + $0x78] sm:$0xff]
      %v213 = vld [vmem:[%s196 + $0x80] sm:$0xff]
      %v214 = vld [vmem:[%s196 + $0x88] sm:$0xff]
      %v215 = vld [vmem:[%s196 + $0x90] sm:$0xff]
      %v216 = vld [vmem:[%s196 + $0x98] sm:$0xff]
      %v217 = vld [vmem:[%s196 + $0xa0] sm:$0xff]
      %v218 = vld [vmem:[%s196 + $0xa8] sm:$0xff]
      %v219 = vld [vmem:[%s196 + $0xb0] sm:$0xff]
      %v220 = vld [vmem:[%s196 + $0xb8] sm:$0xff]
      %v221 = vld [vmem:[%s196 + $0xc0] sm:$0xff]
      %v222 = vld [vmem:[%s196 + $0xc8] sm:$0xff]
      %v223 = vld [vmem:[%s196 + $0xd0] sm:$0xff]
      %v224 = vld [vmem:[%s196 + $0xd8] sm:$0xff]
      %v225 = vld [vmem:[%s196 + $0xe0] sm:$0xff]
      %v226 = vld [vmem:[%s196 + $0xe8] sm:$0xff]
      %v227 = vld [vmem:[%s196 + $0xf0] sm:$0xff]
      %v228 = vld [vmem:[%s196 + $0xf8] sm:$0xff]
      %v229 = vld [vmem:[%s196 + $0x100] sm:$0xff]
      %v230 = vld [vmem:[%s196 + $0x108] sm:$0xff]
      %v231 = vpack.c.bf16 %v198, %v197
      %v232 = vpack.c.bf16 %v200, %v199
      %v233 = vpack.c.bf16 %v202, %v201
      %v234 = vpack.c.bf16 %v204, %v203
      %v235 = vpack.c.bf16 %v206, %v205
      %v236 = vpack.c.bf16 %v208, %v207
      %v237 = vpack.c.bf16 %v210, %v209
      %v238 = vpack.c.bf16 %v212, %v211
      %v239 = vpack.c.bf16 %v214, %v213
      %v240 = vpack.c.bf16 %v216, %v215
      %v241 = vpack.c.bf16 %v218, %v217
      %v242 = vpack.c.bf16 %v220, %v219
      %v243 = vpack.c.bf16 %v222, %v221
      %v244 = vpack.c.bf16 %v224, %v223
      %v245 = vpack.c.bf16 %v226, %v225
      %v246 = vpack.c.bf16 %v228, %v227
      %v247 = vpack.c.bf16 %v230, %v229
      %v248 = vld [vmem:[%s1] sm:$0xf]
      %v249 = vld [vmem:[%s1 + $0x4] sm:$0xf]
      %v250 = vld [vmem:[%s1 + $0x8] sm:$0xf]
      %v251 = vld [vmem:[%s1 + $0xc] sm:$0xf]
      %v252 = vld [vmem:[%s1 + $0x10] sm:$0xf]
      %v253 = vld [vmem:[%s1 + $0x14] sm:$0xf]
      %v254 = vld [vmem:[%s1 + $0x18] sm:$0xf]
      %v255 = vld [vmem:[%s1 + $0x1c] sm:$0xf]
      %v256 = vld [vmem:[%s1 + $0x20] sm:$0xf]
      %v257 = vld [vmem:[%s1 + $0x24] sm:$0xf]
      %v258 = vld [vmem:[%s1 + $0x28] sm:$0xf]
      %v259 = vld [vmem:[%s1 + $0x2c] sm:$0xf]
      %v260 = vld [vmem:[%s1 + $0x30] sm:$0xf]
      %v261 = vld [vmem:[%s1 + $0x34] sm:$0xf]
      %v262 = vld [vmem:[%s1 + $0x38] sm:$0xf]
      %v263 = vld [vmem:[%s1 + $0x3c] sm:$0xf]
      %s264 = sadd.s32 %s195, 1
      %s265 = scalar_lea.vmem %s183, %s264
      %v266 = vld [vmem:[%s265] sm:$0xff]
      %v267 = vld [vmem:[%s265 + $0x8] sm:$0xff]
      %v268 = vld [vmem:[%s265 + $0x10] sm:$0xff]
      %v269 = vld [vmem:[%s265 + $0x18] sm:$0xff]
      %v270 = vld [vmem:[%s265 + $0x20] sm:$0xff]
      %v271 = vld [vmem:[%s265 + $0x28] sm:$0xff]
      %v272 = vld [vmem:[%s265 + $0x30] sm:$0xff]
      %v273 = vld [vmem:[%s265 + $0x38] sm:$0xff]
      %v274 = vld [vmem:[%s265 + $0x40] sm:$0xff]
      %v275 = vld [vmem:[%s265 + $0x48] sm:$0xff]
      %v276 = vld [vmem:[%s265 + $0x50] sm:$0xff]
      %v277 = vld [vmem:[%s265 + $0x58] sm:$0xff]
      %v278 = vld [vmem:[%s265 + $0x60] sm:$0xff]
      %v279 = vld [vmem:[%s265 + $0x68] sm:$0xff]
      %v280 = vld [vmem:[%s265 + $0x70] sm:$0xff]
      %v281 = vld [vmem:[%s265 + $0x78] sm:$0xff]
      %v282 = vld [vmem:[%s265 + $0x80] sm:$0xff]
      %v283 = vld [vmem:[%s265 + $0x88] sm:$0xff]
      %v284 = vld [vmem:[%s265 + $0x90] sm:$0xff]
      %v285 = vld [vmem:[%s265 + $0x98] sm:$0xff]
      %v286 = vld [vmem:[%s265 + $0xa0] sm:$0xff]
      %v287 = vld [vmem:[%s265 + $0xa8] sm:$0xff]
      %v288 = vld [vmem:[%s265 + $0xb0] sm:$0xff]
      %v289 = vld [vmem:[%s265 + $0xb8] sm:$0xff]
      %v290 = vld [vmem:[%s265 + $0xc0] sm:$0xff]
      %v291 = vld [vmem:[%s265 + $0xc8] sm:$0xff]
      %v292 = vld [vmem:[%s265 + $0xd0] sm:$0xff]
      %v293 = vld [vmem:[%s265 + $0xd8] sm:$0xff]
      %v294 = vld [vmem:[%s265 + $0xe0] sm:$0xff]
      %v295 = vld [vmem:[%s265 + $0xe8] sm:$0xff]
      %v296 = vld [vmem:[%s265 + $0xf0] sm:$0xff]
      %v297 = vld [vmem:[%s265 + $0xf8] sm:$0xff]
      %v298 = vld [vmem:[%s265 + $0x100] sm:$0xff]
      %v299 = vld [vmem:[%s265 + $0x108] sm:$0xff]
      %v300 = vpack.c.bf16 %v267, %v266
      %v301 = vpack.c.bf16 %v269, %v268
      %v302 = vpack.c.bf16 %v271, %v270
      %v303 = vpack.c.bf16 %v273, %v272
      %v304 = vpack.c.bf16 %v275, %v274
      %v305 = vpack.c.bf16 %v277, %v276
      %v306 = vpack.c.bf16 %v279, %v278
      %v307 = vpack.c.bf16 %v281, %v280
      %v308 = vpack.c.bf16 %v283, %v282
      %v309 = vpack.c.bf16 %v285, %v284
      %v310 = vpack.c.bf16 %v287, %v286
      %v311 = vpack.c.bf16 %v289, %v288
      %v312 = vpack.c.bf16 %v291, %v290
      %v313 = vpack.c.bf16 %v293, %v292
      %v314 = vpack.c.bf16 %v295, %v294
      %v315 = vpack.c.bf16 %v297, %v296
      %v316 = vpack.c.bf16 %v299, %v298
      %s317 = scalar_lea.vmem %s1, 64
      %v318 = vld [vmem:[%s317] sm:$0xf]
      %v319 = vld [vmem:[%s317 + $0x4] sm:$0xf]
      %v320 = vld [vmem:[%s317 + $0x8] sm:$0xf]
      %v321 = vld [vmem:[%s317 + $0xc] sm:$0xf]
      %v322 = vld [vmem:[%s317 + $0x10] sm:$0xf]
      %v323 = vld [vmem:[%s317 + $0x14] sm:$0xf]
      %v324 = vld [vmem:[%s317 + $0x18] sm:$0xf]
      %v325 = vld [vmem:[%s317 + $0x1c] sm:$0xf]
      %v326 = vld [vmem:[%s317 + $0x20] sm:$0xf]
      %v327 = vld [vmem:[%s317 + $0x24] sm:$0xf]
      %v328 = vld [vmem:[%s317 + $0x28] sm:$0xf]
      %v329 = vld [vmem:[%s317 + $0x2c] sm:$0xf]
      %v330 = vld [vmem:[%s317 + $0x30] sm:$0xf]
      %v331 = vld [vmem:[%s317 + $0x34] sm:$0xf]
      %v332 = vld [vmem:[%s317 + $0x38] sm:$0xf]
      %v333 = vld [vmem:[%s317 + $0x3c] sm:$0xf]
      %v350 = vunpack.c.l.b16 %v318
      %v351 = vunpack.c.l.b16 %v319
      %v352 = vunpack.c.l.b16 %v320
      %v353 = vunpack.c.l.b16 %v321
      %v354 = vunpack.c.l.b16 %v322
      %v355 = vunpack.c.l.b16 %v323
      %v356 = vunpack.c.l.b16 %v324
      %v357 = vunpack.c.l.b16 %v325
      %v358 = vunpack.c.l.b16 %v326
      %v359 = vunpack.c.l.b16 %v327
      %v360 = vunpack.c.l.b16 %v328
      %v361 = vunpack.c.l.b16 %v329
      %v362 = vunpack.c.l.b16 %v330
      %v363 = vunpack.c.l.b16 %v331
      %v364 = vunpack.c.l.b16 %v332
      %v365 = vunpack.c.l.b16 %v333
      %v366 = vpack.c.b16 %v351, %v350
      %v367 = vpack.c.b16 %v353, %v352
      %v368 = vpack.c.b16 %v355, %v354
      %v369 = vpack.c.b16 %v357, %v356
      %v370 = vpack.c.b16 %v359, %v358
      %v371 = vpack.c.b16 %v361, %v360
      %v372 = vpack.c.b16 %v363, %v362
      %v373 = vpack.c.b16 %v365, %v364
      %382 = vmatprep.subr.bf16.mxu0 0
      %383 = vmatpush1.bf16.msra.mxu0 %v366
      %384 = vmatprep.subr.bf16.mxu0 0
      %385 = vmatpush1.bf16.msra.mxu0 %v367
      %386 = vmatprep.subr.bf16.mxu0 0
      %387 = vmatpush1.bf16.msra.mxu0 %v368
      %388 = vmatprep.subr.bf16.mxu0 0
      %389 = vmatpush1.bf16.msra.mxu0 %v369
      %390 = vmatprep.subr.bf16.mxu0 0
      %391 = vmatpush1.bf16.msra.mxu0 %v370
      %392 = vmatprep.subr.bf16.mxu0 0
      %393 = vmatpush1.bf16.msra.mxu0 %v371
      %394 = vmatprep.subr.bf16.mxu0 0
      %395 = vmatpush1.bf16.msra.mxu0 %v372
      %396 = vmatprep.subr.bf16.mxu0 0
      %397 = vmatpush1.bf16.msra.mxu0 %v373
      %398 = vmatprep.subr.bf16.mxu0 0
      %399 = vmatpush1.bf16.msra.mxu0 0
      %400 = vmatprep.subr.bf16.mxu0 0
      %401 = vmatpush1.bf16.msra.mxu0 0
      %402 = vmatprep.subr.bf16.mxu0 0
      %403 = vmatpush1.bf16.msra.mxu0 0
      %404 = vmatprep.subr.bf16.mxu0 0
      %405 = vmatpush1.bf16.msra.mxu0 0
      %406 = vmatprep.subr.bf16.mxu0 0
      %407 = vmatpush1.bf16.msra.mxu0 0
      %408 = vmatprep.subr.bf16.mxu0 0
      %409 = vmatpush1.bf16.msra.mxu0 0
      %410 = vmatprep.subr.bf16.mxu0 0
      %411 = vmatpush1.bf16.msra.mxu0 0
      %412 = vmatprep.subr.bf16.mxu0 0
      %413 = vmatpush1.bf16.msra.mxu0 0
      %414 = vmatprep.mubr.bf16.mxu0 0
      %415 = vmatmul.mubr.bf16.gmra.mrb[0].mxu0 %v300
      %v416 = vpop.f32.mrb[0].mxu0
      %v417 = vadd.f32 0.0, %v416
      %v418 = vpop.f32.mrb[0].mxu0
      %v419 = vpop.f32.mrb[0].mxu0
      %v420 = vadd.f32 0.0, %v419
      %v421 = vpop.f32.mrb[0].mxu0
      %422 = vmatprep.mubr.bf16.mxu0 0
      %423 = vmatmul.mubr.bf16.gmra.mrb[0].mxu0 %v301
      %v424 = vpop.f32.mrb[0].mxu0
      %v425 = vadd.f32 0.0, %v424
      %v426 = vpop.f32.mrb[0].mxu0
      %v427 = vpop.f32.mrb[0].mxu0
      %v428 = vadd.f32 0.0, %v427
      %v429 = vpop.f32.mrb[0].mxu0
      %430 = vmatprep.mubr.bf16.mxu0 0
      %431 = vmatmul.mubr.bf16.gmra.mrb[0].mxu0 %v302
      %v432 = vpop.f32.mrb[0].mxu0
      %v433 = vadd.f32 0.0, %v432
      %v434 = vpop.f32.mrb[0].mxu0
      %v435 = vpop.f32.mrb[0].mxu0
      %v436 = vadd.f32 0.0, %v435
      %v437 = vpop.f32.mrb[0].mxu0
      %438 = vmatprep.mubr.bf16.mxu0 0
      %439 = vmatmul.mubr.bf16.gmra.mrb[0].mxu0 %v303
      %v440 = vpop.f32.mrb[0].mxu0
      %v441 = vadd.f32 0.0, %v440
      %v442 = vpop.f32.mrb[0].mxu0
      %v443 = vpop.f32.mrb[0].mxu0
      %v444 = vadd.f32 0.0, %v443
      %v445 = vpop.f32.mrb[0].mxu0
      %446 = vmatprep.mubr.bf16.mxu0 0
      %447 = vmatmul.mubr.bf16.gmra.mrb[0].mxu0 %v304
      %v448 = vpop.f32.mrb[0].mxu0
      %v449 = vadd.f32 0.0, %v448
      %v450 = vpop.f32.mrb[0].mxu0
      %v451 = vpop.f32.mrb[0].mxu0
      %v452 = vadd.f32 0.0, %v451
      %v453 = vpop.f32.mrb[0].mxu0
      %454 = vmatprep.mubr.bf16.mxu0 0
      %455 = vmatmul.mubr.bf16.gmra.mrb[0].mxu0 %v305
      %v456 = vpop.f32.mrb[0].mxu0
      %v457 = vadd.f32 0.0, %v456
      %v458 = vpop.f32.mrb[0].mxu0
      %v459 = vpop.f32.mrb[0].mxu0
      %v460 = vadd.f32 0.0, %v459
      %v461 = vpop.f32.mrb[0].mxu0
      %462 = vmatprep.mubr.bf16.mxu0 0
      %463 = vmatmul.mubr.bf16.gmra.mrb[0].mxu0 %v306
      %v464 = vpop.f32.mrb[0].mxu0
      %v465 = vadd.f32 0.0, %v464
      %v466 = vpop.f32.mrb[0].mxu0
      %v467 = vpop.f32.mrb[0].mxu0
      %v468 = vadd.f32 0.0, %v467
      %v469 = vpop.f32.mrb[0].mxu0
      %470 = vmatprep.mubr.bf16.mxu0 0
      %471 = vmatmul.mubr.bf16.gmra.mrb[0].mxu0 %v307
      %v472 = vpop.f32.mrb[0].mxu0
      %v473 = vadd.f32 0.0, %v472
      %v474 = vpop.f32.mrb[0].mxu0
      %v475 = vpop.f32.mrb[0].mxu0
      %v476 = vadd.f32 0.0, %v475
      %v477 = vpop.f32.mrb[0].mxu0
      %478 = vmatprep.mubr.bf16.mxu0 0
      %479 = vmatmul.mubr.bf16.gmra.mrb[0].mxu0 %v308
      %v480 = vpop.f32.mrb[0].mxu0
      %v481 = vadd.f32 0.0, %v480
      %v482 = vpop.f32.mrb[0].mxu0
      %v483 = vpop.f32.mrb[0].mxu0
      %v484 = vadd.f32 0.0, %v483
      %v485 = vpop.f32.mrb[0].mxu0
      %486 = vmatprep.mubr.bf16.mxu0 0
      %487 = vmatmul.mubr.bf16.gmra.mrb[0].mxu0 %v309
      %v488 = vpop.f32.mrb[0].mxu0
      %v489 = vadd.f32 0.0, %v488
      %v490 = vpop.f32.mrb[0].mxu0
      %v491 = vpop.f32.mrb[0].mxu0
      %v492 = vadd.f32 0.0, %v491
      %v493 = vpop.f32.mrb[0].mxu0
      %494 = vmatprep.mubr.bf16.mxu0 0
      %495 = vmatmul.mubr.bf16.gmra.mrb[0].mxu0 %v310
      %v496 = vpop.f32.mrb[0].mxu0
      %v497 = vadd.f32 0.0, %v496
      %v498 = vpop.f32.mrb[0].mxu0
      %v499 = vpop.f32.mrb[0].mxu0
      %v500 = vadd.f32 0.0, %v499
      %v501 = vpop.f32.mrb[0].mxu0
      %502 = vmatprep.mubr.bf16.mxu0 0
      %503 = vmatmul.mubr.bf16.gmra.mrb[0].mxu0 %v311
      %v504 = vpop.f32.mrb[0].mxu0
      %v505 = vadd.f32 0.0, %v504
      %v506 = vpop.f32.mrb[0].mxu0
      %v507 = vpop.f32.mrb[0].mxu0
      %v508 = vadd.f32 0.0, %v507
      %v509 = vpop.f32.mrb[0].mxu0
      %510 = vmatprep.mubr.bf16.mxu0 0
      %511 = vmatmul.mubr.bf16.gmra.mrb[0].mxu0 %v312
      %v512 = vpop.f32.mrb[0].mxu0
      %v513 = vadd.f32 0.0, %v512
      %v514 = vpop.f32.mrb[0].mxu0
      %v515 = vpop.f32.mrb[0].mxu0
      %v516 = vadd.f32 0.0, %v515
      %v517 = vpop.f32.mrb[0].mxu0
      %518 = vmatprep.mubr.bf16.mxu0 0
      %519 = vmatmul.mubr.bf16.gmra.mrb[0].mxu0 %v313
      %v520 = vpop.f32.mrb[0].mxu0
      %v521 = vadd.f32 0.0, %v520
      %v522 = vpop.f32.mrb[0].mxu0
      %v523 = vpop.f32.mrb[0].mxu0
      %v524 = vadd.f32 0.0, %v523
      %v525 = vpop.f32.mrb[0].mxu0
      %526 = vmatprep.mubr.bf16.mxu0 0
      %527 = vmatmul.mubr.bf16.gmra.mrb[0].mxu0 %v314
      %v528 = vpop.f32.mrb[0].mxu0
      %v529 = vadd.f32 0.0, %v528
      %v530 = vpop.f32.mrb[0].mxu0
      %v531 = vpop.f32.mrb[0].mxu0
      %v532 = vadd.f32 0.0, %v531
      %v533 = vpop.f32.mrb[0].mxu0
      %534 = vmatprep.mubr.bf16.mxu0 0
      %535 = vmatmul.mubr.bf16.gmra.mrb[0].mxu0 %v315
      %v536 = vpop.f32.mrb[0].mxu0
      %v537 = vadd.f32 0.0, %v536
      %v538 = vpop.f32.mrb[0].mxu0
      %v539 = vpop.f32.mrb[0].mxu0
      %v540 = vadd.f32 0.0, %v539
      %v541 = vpop.f32.mrb[0].mxu0
      %542 = vmatprep.mubr.bf16.mxu0 0
      %543 = vmatmul.mubr.bf16.gmra.mrb[0].mxu0 %v316
      %v544 = vpop.f32.mrb[0].mxu0
      %v545 = vadd.f32 0.0, %v544
      %v546 = vpop.f32.mrb[0].mxu0
      %v547 = vpop.f32.mrb[0].mxu0
      %v548 = vadd.f32 0.0, %v547
      %v549 = vpop.f32.mrb[0].mxu0
      %550 = vdwg.mxu0
      %v567 = vunpack.c.l.b16 %v248
      %v568 = vunpack.c.l.b16 %v249
      %v569 = vunpack.c.l.b16 %v250
      %v570 = vunpack.c.l.b16 %v251
      %v571 = vunpack.c.l.b16 %v252
      %v572 = vunpack.c.l.b16 %v253
      %v573 = vunpack.c.l.b16 %v254
      %v574 = vunpack.c.l.b16 %v255
      %v575 = vunpack.c.l.b16 %v256
      %v576 = vunpack.c.l.b16 %v257
      %v577 = vunpack.c.l.b16 %v258
      %v578 = vunpack.c.l.b16 %v259
      %v579 = vunpack.c.l.b16 %v260
      %v580 = vunpack.c.l.b16 %v261
      %v581 = vunpack.c.l.b16 %v262
      %v582 = vunpack.c.l.b16 %v263
      %v583 = vpack.c.b16 %v568, %v567
      %v584 = vpack.c.b16 %v570, %v569
      %v585 = vpack.c.b16 %v572, %v571
      %v586 = vpack.c.b16 %v574, %v573
      %v587 = vpack.c.b16 %v576, %v575
      %v588 = vpack.c.b16 %v578, %v577
      %v589 = vpack.c.b16 %v580, %v579
      %v590 = vpack.c.b16 %v582, %v581
      %599 = vmatprep.subr.bf16.mxu0 0
      %600 = vmatpush1.bf16.msra.mxu0 %v583
      %601 = vmatprep.subr.bf16.mxu0 0
      %602 = vmatpush1.bf16.msra.mxu0 %v584
      %603 = vmatprep.subr.bf16.mxu0 0
      %604 = vmatpush1.bf16.msra.mxu0 %v585
      %605 = vmatprep.subr.bf16.mxu0 0
      %606 = vmatpush1.bf16.msra.mxu0 %v586
      %607 = vmatprep.subr.bf16.mxu0 0
      %608 = vmatpush1.bf16.msra.mxu0 %v587
      %609 = vmatprep.subr.bf16.mxu0 0
      %610 = vmatpush1.bf16.msra.mxu0 %v588
      %611 = vmatprep.subr.bf16.mxu0 0
      %612 = vmatpush1.bf16.msra.mxu0 %v589
      %613 = vmatprep.subr.bf16.mxu0 0
      %614 = vmatpush1.bf16.msra.mxu0 %v590
      %615 = vmatprep.subr.bf16.mxu0 0
      %616 = vmatpush1.bf16.msra.mxu0 0
      %617 = vmatprep.subr.bf16.mxu0 0
      %618 = vmatpush1.bf16.msra.mxu0 0
      %619 = vmatprep.subr.bf16.mxu0 0
      %620 = vmatpush1.bf16.msra.mxu0 0
      %621 = vmatprep.subr.bf16.mxu0 0
      %622 = vmatpush1.bf16.msra.mxu0 0
      %623 = vmatprep.subr.bf16.mxu0 0
      %624 = vmatpush1.bf16.msra.mxu0 0
      %625 = vmatprep.subr.bf16.mxu0 0
      %626 = vmatpush1.bf16.msra.mxu0 0
      %627 = vmatprep.subr.bf16.mxu0 0
      %628 = vmatpush1.bf16.msra.mxu0 0
      %629 = vmatprep.subr.bf16.mxu0 0
      %630 = vmatpush1.bf16.msra.mxu0 0
      %631 = vmatprep.mubr.bf16.mxu0 0
      %632 = vmatmul.mubr.bf16.gmra.mrb[0].mxu0 %v231
      %v633 = vpop.f32.mrb[0].mxu0
      %v634 = vadd.f32 %v417, %v633
      %v635 = vpop.f32.mrb[0].mxu0
      %v636 = vpop.f32.mrb[0].mxu0
      %v637 = vadd.f32 %v420, %v636
      %v638 = vpop.f32.mrb[0].mxu0
      %639 = vmatprep.mubr.bf16.mxu0 0
      %640 = vmatmul.mubr.bf16.gmra.mrb[0].mxu0 %v232
      %v641 = vpop.f32.mrb[0].mxu0
      %v642 = vadd.f32 %v425, %v641
      %v643 = vpop.f32.mrb[0].mxu0
      %v644 = vpop.f32.mrb[0].mxu0
      %v645 = vadd.f32 %v428, %v644
      %v646 = vpop.f32.mrb[0].mxu0
      %647 = vmatprep.mubr.bf16.mxu0 0
      %648 = vmatmul.mubr.bf16.gmra.mrb[0].mxu0 %v233
      %v649 = vpop.f32.mrb[0].mxu0
      %v650 = vadd.f32 %v433, %v649
      %v651 = vpop.f32.mrb[0].mxu0
      %v652 = vpop.f32.mrb[0].mxu0
      %v653 = vadd.f32 %v436, %v652
      %v654 = vpop.f32.mrb[0].mxu0
      %655 = vmatprep.mubr.bf16.mxu0 0
      %656 = vmatmul.mubr.bf16.gmra.mrb[0].mxu0 %v234
      %v657 = vpop.f32.mrb[0].mxu0
      %v658 = vadd.f32 %v441, %v657
      %v659 = vpop.f32.mrb[0].mxu0
      %v660 = vpop.f32.mrb[0].mxu0
      %v661 = vadd.f32 %v444, %v660
      %v662 = vpop.f32.mrb[0].mxu0
      %663 = vmatprep.mubr.bf16.mxu0 0
      %664 = vmatmul.mubr.bf16.gmra.mrb[0].mxu0 %v235
      %v665 = vpop.f32.mrb[0].mxu0
      %v666 = vadd.f32 %v449, %v665
      %v667 = vpop.f32.mrb[0].mxu0
      %v668 = vpop.f32.mrb[0].mxu0
      %v669 = vadd.f32 %v452, %v668
      %v670 = vpop.f32.mrb[0].mxu0
      %671 = vmatprep.mubr.bf16.mxu0 0
      %672 = vmatmul.mubr.bf16.gmra.mrb[0].mxu0 %v236
      %v673 = vpop.f32.mrb[0].mxu0
      %v674 = vadd.f32 %v457, %v673
      %v675 = vpop.f32.mrb[0].mxu0
      %v676 = vpop.f32.mrb[0].mxu0
      %v677 = vadd.f32 %v460, %v676
      %v678 = vpop.f32.mrb[0].mxu0
      %679 = vmatprep.mubr.bf16.mxu0 0
      %680 = vmatmul.mubr.bf16.gmra.mrb[0].mxu0 %v237
      %v681 = vpop.f32.mrb[0].mxu0
      %v682 = vadd.f32 %v465, %v681
      %v683 = vpop.f32.mrb[0].mxu0
      %v684 = vpop.f32.mrb[0].mxu0
      %v685 = vadd.f32 %v468, %v684
      %v686 = vpop.f32.mrb[0].mxu0
      %687 = vmatprep.mubr.bf16.mxu0 0
      %688 = vmatmul.mubr.bf16.gmra.mrb[0].mxu0 %v238
      %v689 = vpop.f32.mrb[0].mxu0
      %v690 = vadd.f32 %v473, %v689
      %v691 = vpop.f32.mrb[0].mxu0
      %v692 = vpop.f32.mrb[0].mxu0
      %v693 = vadd.f32 %v476, %v692
      %v694 = vpop.f32.mrb[0].mxu0
      %695 = vmatprep.mubr.bf16.mxu0 0
      %696 = vmatmul.mubr.bf16.gmra.mrb[0].mxu0 %v239
      %v697 = vpop.f32.mrb[0].mxu0
      %v698 = vadd.f32 %v481, %v697
      %v699 = vpop.f32.mrb[0].mxu0
      %v700 = vpop.f32.mrb[0].mxu0
      %v701 = vadd.f32 %v484, %v700
      %v702 = vpop.f32.mrb[0].mxu0
      %703 = vmatprep.mubr.bf16.mxu0 0
      %704 = vmatmul.mubr.bf16.gmra.mrb[0].mxu0 %v240
      %v705 = vpop.f32.mrb[0].mxu0
      %v706 = vadd.f32 %v489, %v705
      %v707 = vpop.f32.mrb[0].mxu0
      %v708 = vpop.f32.mrb[0].mxu0
      %v709 = vadd.f32 %v492, %v708
      %v710 = vpop.f32.mrb[0].mxu0
      %711 = vmatprep.mubr.bf16.mxu0 0
      %712 = vmatmul.mubr.bf16.gmra.mrb[0].mxu0 %v241
      %v713 = vpop.f32.mrb[0].mxu0
      %v714 = vadd.f32 %v497, %v713
      %v715 = vpop.f32.mrb[0].mxu0
      %v716 = vpop.f32.mrb[0].mxu0
      %v717 = vadd.f32 %v500, %v716
      %v718 = vpop.f32.mrb[0].mxu0
      %719 = vmatprep.mubr.bf16.mxu0 0
      %720 = vmatmul.mubr.bf16.gmra.mrb[0].mxu0 %v242
      %v721 = vpop.f32.mrb[0].mxu0
      %v722 = vadd.f32 %v505, %v721
      %v723 = vpop.f32.mrb[0].mxu0
      %v724 = vpop.f32.mrb[0].mxu0
      %v725 = vadd.f32 %v508, %v724
      %v726 = vpop.f32.mrb[0].mxu0
      %727 = vmatprep.mubr.bf16.mxu0 0
      %728 = vmatmul.mubr.bf16.gmra.mrb[0].mxu0 %v243
      %v729 = vpop.f32.mrb[0].mxu0
      %v730 = vadd.f32 %v513, %v729
      %v731 = vpop.f32.mrb[0].mxu0
      %v732 = vpop.f32.mrb[0].mxu0
      %v733 = vadd.f32 %v516, %v732
      %v734 = vpop.f32.mrb[0].mxu0
      %735 = vmatprep.mubr.bf16.mxu0 0
      %736 = vmatmul.mubr.bf16.gmra.mrb[0].mxu0 %v244
      %v737 = vpop.f32.mrb[0].mxu0
      %v738 = vadd.f32 %v521, %v737
      %v739 = vpop.f32.mrb[0].mxu0
      %v740 = vpop.f32.mrb[0].mxu0
      %v741 = vadd.f32 %v524, %v740
      %v742 = vpop.f32.mrb[0].mxu0
      %743 = vmatprep.mubr.bf16.mxu0 0
      %744 = vmatmul.mubr.bf16.gmra.mrb[0].mxu0 %v245
      %v745 = vpop.f32.mrb[0].mxu0
      %v746 = vadd.f32 %v529, %v745
      %v747 = vpop.f32.mrb[0].mxu0
      %v748 = vpop.f32.mrb[0].mxu0
      %v749 = vadd.f32 %v532, %v748
      %v750 = vpop.f32.mrb[0].mxu0
      %751 = vmatprep.mubr.bf16.mxu0 0
      %752 = vmatmul.mubr.bf16.gmra.mrb[0].mxu0 %v246
      %v753 = vpop.f32.mrb[0].mxu0
      %v754 = vadd.f32 %v537, %v753
      %v755 = vpop.f32.mrb[0].mxu0
      %v756 = vpop.f32.mrb[0].mxu0
      %v757 = vadd.f32 %v540, %v756
      %v758 = vpop.f32.mrb[0].mxu0
      %759 = vmatprep.mubr.bf16.mxu0 0
      %760 = vmatmul.mubr.bf16.gmra.mrb[0].mxu0 %v247
      %v761 = vpop.f32.mrb[0].mxu0
      %v762 = vadd.f32 %v545, %v761
      %v763 = vpop.f32.mrb[0].mxu0
      %v764 = vpop.f32.mrb[0].mxu0
      %v765 = vadd.f32 %v548, %v764
      %v766 = vpop.f32.mrb[0].mxu0
      %767 = vdwg.mxu0
      %s768 = sadd.s32 %s195, 2
      %s769 = scalar_lea.vmem %s183, %s768
      %v770 = vld [vmem:[%s769] sm:$0xff]
      %v771 = vld [vmem:[%s769 + $0x8] sm:$0xff]
      %v772 = vld [vmem:[%s769 + $0x10] sm:$0xff]
      %v773 = vld [vmem:[%s769 + $0x18] sm:$0xff]
      %v774 = vld [vmem:[%s769 + $0x20] sm:$0xff]
      %v775 = vld [vmem:[%s769 + $0x28] sm:$0xff]
      %v776 = vld [vmem:[%s769 + $0x30] sm:$0xff]
      %v777 = vld [vmem:[%s769 + $0x38] sm:$0xff]
      %v778 = vld [vmem:[%s769 + $0x40] sm:$0xff]
      %v779 = vld [vmem:[%s769 + $0x48] sm:$0xff]
      %v780 = vld [vmem:[%s769 + $0x50] sm:$0xff]
      %v781 = vld [vmem:[%s769 + $0x58] sm:$0xff]
      %v782 = vld [vmem:[%s769 + $0x60] sm:$0xff]
      %v783 = vld [vmem:[%s769 + $0x68] sm:$0xff]
      %v784 = vld [vmem:[%s769 + $0x70] sm:$0xff]
      %v785 = vld [vmem:[%s769 + $0x78] sm:$0xff]
      %v786 = vld [vmem:[%s769 + $0x80] sm:$0xff]
      %v787 = vld [vmem:[%s769 + $0x88] sm:$0xff]
      %v788 = vld [vmem:[%s769 + $0x90] sm:$0xff]
      %v789 = vld [vmem:[%s769 + $0x98] sm:$0xff]
      %v790 = vld [vmem:[%s769 + $0xa0] sm:$0xff]
      %v791 = vld [vmem:[%s769 + $0xa8] sm:$0xff]
      %v792 = vld [vmem:[%s769 + $0xb0] sm:$0xff]
      %v793 = vld [vmem:[%s769 + $0xb8] sm:$0xff]
      %v794 = vld [vmem:[%s769 + $0xc0] sm:$0xff]
      %v795 = vld [vmem:[%s769 + $0xc8] sm:$0xff]
      %v796 = vld [vmem:[%s769 + $0xd0] sm:$0xff]
      %v797 = vld [vmem:[%s769 + $0xd8] sm:$0xff]
      %v798 = vld [vmem:[%s769 + $0xe0] sm:$0xff]
      %v799 = vld [vmem:[%s769 + $0xe8] sm:$0xff]
      %v800 = vld [vmem:[%s769 + $0xf0] sm:$0xff]
      %v801 = vld [vmem:[%s769 + $0xf8] sm:$0xff]
      %v802 = vld [vmem:[%s769 + $0x100] sm:$0xff]
      %v803 = vld [vmem:[%s769 + $0x108] sm:$0xff]
      %v804 = vpack.c.bf16 %v771, %v770
      %v805 = vpack.c.bf16 %v773, %v772
      %v806 = vpack.c.bf16 %v775, %v774
      %v807 = vpack.c.bf16 %v777, %v776
      %v808 = vpack.c.bf16 %v779, %v778
      %v809 = vpack.c.bf16 %v781, %v780
      %v810 = vpack.c.bf16 %v783, %v782
      %v811 = vpack.c.bf16 %v785, %v784
      %v812 = vpack.c.bf16 %v787, %v786
      %v813 = vpack.c.bf16 %v789, %v788
      %v814 = vpack.c.bf16 %v791, %v790
      %v815 = vpack.c.bf16 %v793, %v792
      %v816 = vpack.c.bf16 %v795, %v794
      %v817 = vpack.c.bf16 %v797, %v796
      %v818 = vpack.c.bf16 %v799, %v798
      %v819 = vpack.c.bf16 %v801, %v800
      %v820 = vpack.c.bf16 %v803, %v802
      %s821 = scalar_lea.vmem %s1, 128
      %v822 = vld [vmem:[%s821] sm:$0xf]
      %v823 = vld [vmem:[%s821 + $0x4] sm:$0xf]
      %v824 = vld [vmem:[%s821 + $0x8] sm:$0xf]
      %v825 = vld [vmem:[%s821 + $0xc] sm:$0xf]
      %v826 = vld [vmem:[%s821 + $0x10] sm:$0xf]
      %v827 = vld [vmem:[%s821 + $0x14] sm:$0xf]
      %v828 = vld [vmem:[%s821 + $0x18] sm:$0xf]
      %v829 = vld [vmem:[%s821 + $0x1c] sm:$0xf]
      %v830 = vld [vmem:[%s821 + $0x20] sm:$0xf]
      %v831 = vld [vmem:[%s821 + $0x24] sm:$0xf]
      %v832 = vld [vmem:[%s821 + $0x28] sm:$0xf]
      %v833 = vld [vmem:[%s821 + $0x2c] sm:$0xf]
      %v834 = vld [vmem:[%s821 + $0x30] sm:$0xf]
      %v835 = vld [vmem:[%s821 + $0x34] sm:$0xf]
      %v836 = vld [vmem:[%s821 + $0x38] sm:$0xf]
      %v837 = vld [vmem:[%s821 + $0x3c] sm:$0xf]
      %v854 = vunpack.c.l.b16 %v822
      %v855 = vunpack.c.l.b16 %v823
      %v856 = vunpack.c.l.b16 %v824
      %v857 = vunpack.c.l.b16 %v825
      %v858 = vunpack.c.l.b16 %v826
      %v859 = vunpack.c.l.b16 %v827
      %v860 = vunpack.c.l.b16 %v828
      %v861 = vunpack.c.l.b16 %v829
      %v862 = vunpack.c.l.b16 %v830
      %v863 = vunpack.c.l.b16 %v831
      %v864 = vunpack.c.l.b16 %v832
      %v865 = vunpack.c.l.b16 %v833
      %v866 = vunpack.c.l.b16 %v834
      %v867 = vunpack.c.l.b16 %v835
      %v868 = vunpack.c.l.b16 %v836
      %v869 = vunpack.c.l.b16 %v837
      %v870 = vpack.c.b16 %v855, %v854
      %v871 = vpack.c.b16 %v857, %v856
      %v872 = vpack.c.b16 %v859, %v858
      %v873 = vpack.c.b16 %v861, %v860
      %v874 = vpack.c.b16 %v863, %v862
      %v875 = vpack.c.b16 %v865, %v864
      %v876 = vpack.c.b16 %v867, %v866
      %v877 = vpack.c.b16 %v869, %v868
      %886 = vmatprep.subr.bf16.mxu0 0
      %887 = vmatpush1.bf16.msra.mxu0 %v870
      %888 = vmatprep.subr.bf16.mxu0 0
      %889 = vmatpush1.bf16.msra.mxu0 %v871
      %890 = vmatprep.subr.bf16.mxu0 0
      %891 = vmatpush1.bf16.msra.mxu0 %v872
      %892 = vmatprep.subr.bf16.mxu0 0
      %893 = vmatpush1.bf16.msra.mxu0 %v873
      %894 = vmatprep.subr.bf16.mxu0 0
      %895 = vmatpush1.bf16.msra.mxu0 %v874
      %896 = vmatprep.subr.bf16.mxu0 0
      %897 = vmatpush1.bf16.msra.mxu0 %v875
      %898 = vmatprep.subr.bf16.mxu0 0
      %899 = vmatpush1.bf16.msra.mxu0 %v876
      %900 = vmatprep.subr.bf16.mxu0 0
      %901 = vmatpush1.bf16.msra.mxu0 %v877
      %902 = vmatprep.subr.bf16.mxu0 0
      %903 = vmatpush1.bf16.msra.mxu0 0
      %904 = vmatprep.subr.bf16.mxu0 0
      %905 = vmatpush1.bf16.msra.mxu0 0
      %906 = vmatprep.subr.bf16.mxu0 0
      %907 = vmatpush1.bf16.msra.mxu0 0
      %908 = vmatprep.subr.bf16.mxu0 0
      %909 = vmatpush1.bf16.msra.mxu0 0
      %910 = vmatprep.subr.bf16.mxu0 0
      %911 = vmatpush1.bf16.msra.mxu0 0
      %912 = vmatprep.subr.bf16.mxu0 0
      %913 = vmatpush1.bf16.msra.mxu0 0
      %914 = vmatprep.subr.bf16.mxu0 0
      %915 = vmatpush1.bf16.msra.mxu0 0
      %916 = vmatprep.subr.bf16.mxu0 0
      %917 = vmatpush1.bf16.msra.mxu0 0
      %918 = vmatprep.mubr.bf16.mxu0 0
      %919 = vmatmul.mubr.bf16.gmra.mrb[0].mxu0 %v804
      %v920 = vpop.f32.mrb[0].mxu0
      %v921 = vadd.f32 0.0, %v920
      %v922 = vpop.f32.mrb[0].mxu0
      %v923 = vpop.f32.mrb[0].mxu0
      %v924 = vadd.f32 0.0, %v923
      %v925 = vpop.f32.mrb[0].mxu0
      %926 = vmatprep.mubr.bf16.mxu0 0
      %927 = vmatmul.mubr.bf16.gmra.mrb[0].mxu0 %v805
      %v928 = vpop.f32.mrb[0].mxu0
      %v929 = vadd.f32 0.0, %v928
      %v930 = vpop.f32.mrb[0].mxu0
      %v931 = vpop.f32.mrb[0].mxu0
      %v932 = vadd.f32 0.0, %v931
      %v933 = vpop.f32.mrb[0].mxu0
      %934 = vmatprep.mubr.bf16.mxu0 0
      %935 = vmatmul.mubr.bf16.gmra.mrb[0].mxu0 %v806
      %v936 = vpop.f32.mrb[0].mxu0
      %v937 = vadd.f32 0.0, %v936
      %v938 = vpop.f32.mrb[0].mxu0
      %v939 = vpop.f32.mrb[0].mxu0
      %v940 = vadd.f32 0.0, %v939
      %v941 = vpop.f32.mrb[0].mxu0
      %942 = vmatprep.mubr.bf16.mxu0 0
      %943 = vmatmul.mubr.bf16.gmra.mrb[0].mxu0 %v807
      %v944 = vpop.f32.mrb[0].mxu0
      %v945 = vadd.f32 0.0, %v944
      %v946 = vpop.f32.mrb[0].mxu0
      %v947 = vpop.f32.mrb[0].mxu0
      %v948 = vadd.f32 0.0, %v947
      %v949 = vpop.f32.mrb[0].mxu0
      %950 = vmatprep.mubr.bf16.mxu0 0
      %951 = vmatmul.mubr.bf16.gmra.mrb[0].mxu0 %v808
      %v952 = vpop.f32.mrb[0].mxu0
      %v953 = vadd.f32 0.0, %v952
      %v954 = vpop.f32.mrb[0].mxu0
      %v955 = vpop.f32.mrb[0].mxu0
      %v956 = vadd.f32 0.0, %v955
      %v957 = vpop.f32.mrb[0].mxu0
      %958 = vmatprep.mubr.bf16.mxu0 0
      %959 = vmatmul.mubr.bf16.gmra.mrb[0].mxu0 %v809
      %v960 = vpop.f32.mrb[0].mxu0
      %v961 = vadd.f32 0.0, %v960
      %v962 = vpop.f32.mrb[0].mxu0
      %v963 = vpop.f32.mrb[0].mxu0
      %v964 = vadd.f32 0.0, %v963
      %v965 = vpop.f32.mrb[0].mxu0
      %966 = vmatprep.mubr.bf16.mxu0 0
      %967 = vmatmul.mubr.bf16.gmra.mrb[0].mxu0 %v810
      %v968 = vpop.f32.mrb[0].mxu0
      %v969 = vadd.f32 0.0, %v968
      %v970 = vpop.f32.mrb[0].mxu0
      %v971 = vpop.f32.mrb[0].mxu0
      %v972 = vadd.f32 0.0, %v971
      %v973 = vpop.f32.mrb[0].mxu0
      %974 = vmatprep.mubr.bf16.mxu0 0
      %975 = vmatmul.mubr.bf16.gmra.mrb[0].mxu0 %v811
      %v976 = vpop.f32.mrb[0].mxu0
      %v977 = vadd.f32 0.0, %v976
      %v978 = vpop.f32.mrb[0].mxu0
      %v979 = vpop.f32.mrb[0].mxu0
      %v980 = vadd.f32 0.0, %v979
      %v981 = vpop.f32.mrb[0].mxu0
      %982 = vmatprep.mubr.bf16.mxu0 0
      %983 = vmatmul.mubr.bf16.gmra.mrb[0].mxu0 %v812
      %v984 = vpop.f32.mrb[0].mxu0
      %v985 = vadd.f32 0.0, %v984
      %v986 = vpop.f32.mrb[0].mxu0
      %v987 = vpop.f32.mrb[0].mxu0
      %v988 = vadd.f32 0.0, %v987
      %v989 = vpop.f32.mrb[0].mxu0
      %990 = vmatprep.mubr.bf16.mxu0 0
      %991 = vmatmul.mubr.bf16.gmra.mrb[0].mxu0 %v813
      %v992 = vpop.f32.mrb[0].mxu0
      %v993 = vadd.f32 0.0, %v992
      %v994 = vpop.f32.mrb[0].mxu0
      %v995 = vpop.f32.mrb[0].mxu0
      %v996 = vadd.f32 0.0, %v995
      %v997 = vpop.f32.mrb[0].mxu0
      %998 = vmatprep.mubr.bf16.mxu0 0
      %999 = vmatmul.mubr.bf16.gmra.mrb[0].mxu0 %v814
      %v1000 = vpop.f32.mrb[0].mxu0
      %v1001 = vadd.f32 0.0, %v1000
      %v1002 = vpop.f32.mrb[0].mxu0
      %v1003 = vpop.f32.mrb[0].mxu0
      %v1004 = vadd.f32 0.0, %v1003
      %v1005 = vpop.f32.mrb[0].mxu0
      %1006 = vmatprep.mubr.bf16.mxu0 0
      %1007 = vmatmul.mubr.bf16.gmra.mrb[0].mxu0 %v815
      %v1008 = vpop.f32.mrb[0].mxu0
      %v1009 = vadd.f32 0.0, %v1008
      %v1010 = vpop.f32.mrb[0].mxu0
      %v1011 = vpop.f32.mrb[0].mxu0
      %v1012 = vadd.f32 0.0, %v1011
      %v1013 = vpop.f32.mrb[0].mxu0
      %1014 = vmatprep.mubr.bf16.mxu0 0
      %1015 = vmatmul.mubr.bf16.gmra.mrb[0].mxu0 %v816
      %v1016 = vpop.f32.mrb[0].mxu0
      %v1017 = vadd.f32 0.0, %v1016
      %v1018 = vpop.f32.mrb[0].mxu0
      %v1019 = vpop.f32.mrb[0].mxu0
      %v1020 = vadd.f32 0.0, %v1019
      %v1021 = vpop.f32.mrb[0].mxu0
      %1022 = vmatprep.mubr.bf16.mxu0 0
      %1023 = vmatmul.mubr.bf16.gmra.mrb[0].mxu0 %v817
      %v1024 = vpop.f32.mrb[0].mxu0
      %v1025 = vadd.f32 0.0, %v1024
      %v1026 = vpop.f32.mrb[0].mxu0
      %v1027 = vpop.f32.mrb[0].mxu0
      %v1028 = vadd.f32 0.0, %v1027
      %v1029 = vpop.f32.mrb[0].mxu0
      %1030 = vmatprep.mubr.bf16.mxu0 0
      %1031 = vmatmul.mubr.bf16.gmra.mrb[0].mxu0 %v818
      %v1032 = vpop.f32.mrb[0].mxu0
      %v1033 = vadd.f32 0.0, %v1032
      %v1034 = vpop.f32.mrb[0].mxu0
      %v1035 = vpop.f32.mrb[0].mxu0
      %v1036 = vadd.f32 0.0, %v1035
      %v1037 = vpop.f32.mrb[0].mxu0
      %1038 = vmatprep.mubr.bf16.mxu0 0
      %1039 = vmatmul.mubr.bf16.gmra.mrb[0].mxu0 %v819
      %v1040 = vpop.f32.mrb[0].mxu0
      %v1041 = vadd.f32 0.0, %v1040
      %v1042 = vpop.f32.mrb[0].mxu0
      %v1043 = vpop.f32.mrb[0].mxu0
      %v1044 = vadd.f32 0.0, %v1043
      %v1045 = vpop.f32.mrb[0].mxu0
      %1046 = vmatprep.mubr.bf16.mxu0 0
      %1047 = vmatmul.mubr.bf16.gmra.mrb[0].mxu0 %v820
      %v1048 = vpop.f32.mrb[0].mxu0
      %v1049 = vadd.f32 0.0, %v1048
      %v1050 = vpop.f32.mrb[0].mxu0
      %v1051 = vpop.f32.mrb[0].mxu0
      %v1052 = vadd.f32 0.0, %v1051
      %v1053 = vpop.f32.mrb[0].mxu0
      %1054 = vdwg.mxu0
      %v1055 = vadd.f32 %v634, %v921
      %v1056 = vadd.f32 %v637, %v924
      %v1057 = vadd.f32 %v642, %v929
      %v1058 = vadd.f32 %v645, %v932
      %v1059 = vadd.f32 %v650, %v937
      %v1060 = vadd.f32 %v653, %v940
      %v1061 = vadd.f32 %v658, %v945
      %v1062 = vadd.f32 %v661, %v948
      %v1063 = vadd.f32 %v666, %v953
      %v1064 = vadd.f32 %v669, %v956
      %v1065 = vadd.f32 %v674, %v961
      %v1066 = vadd.f32 %v677, %v964
      %v1067 = vadd.f32 %v682, %v969
      %v1068 = vadd.f32 %v685, %v972
      %v1069 = vadd.f32 %v690, %v977
      %v1070 = vadd.f32 %v693, %v980
      %v1071 = vadd.f32 %v698, %v985
      %v1072 = vadd.f32 %v701, %v988
      %v1073 = vadd.f32 %v706, %v993
      %v1074 = vadd.f32 %v709, %v996
      %v1075 = vadd.f32 %v714, %v1001
      %v1076 = vadd.f32 %v717, %v1004
      %v1077 = vadd.f32 %v722, %v1009
      %v1078 = vadd.f32 %v725, %v1012
      %v1079 = vadd.f32 %v730, %v1017
      %v1080 = vadd.f32 %v733, %v1020
      %v1081 = vadd.f32 %v738, %v1025
      %v1082 = vadd.f32 %v741, %v1028
      %v1083 = vadd.f32 %v746, %v1033
      %v1084 = vadd.f32 %v749, %v1036
      %v1085 = vadd.f32 %v754, %v1041
      %v1086 = vadd.f32 %v757, %v1044
      %v1087 = vadd.f32 %v762, %v1049
      %v1088 = vadd.f32 %v765, %v1052
      %s1089 = sadd.s32 %s195, 34
      %s1090 = scalar_lea.vmem %s183, %s1089
      %v1091 = vld [vmem:[%s1090] sm:$0xff]
      %v1092 = vld [vmem:[%s1090 + $0x8] sm:$0xff]
      %v1093 = vld [vmem:[%s1090 + $0x10] sm:$0xff]
      %v1094 = vld [vmem:[%s1090 + $0x18] sm:$0xff]
      %v1095 = vld [vmem:[%s1090 + $0x20] sm:$0xff]
      %v1096 = vld [vmem:[%s1090 + $0x28] sm:$0xff]
      %v1097 = vld [vmem:[%s1090 + $0x30] sm:$0xff]
      %v1098 = vld [vmem:[%s1090 + $0x38] sm:$0xff]
      %v1099 = vld [vmem:[%s1090 + $0x40] sm:$0xff]
      %v1100 = vld [vmem:[%s1090 + $0x48] sm:$0xff]
      %v1101 = vld [vmem:[%s1090 + $0x50] sm:$0xff]
      %v1102 = vld [vmem:[%s1090 + $0x58] sm:$0xff]
      %v1103 = vld [vmem:[%s1090 + $0x60] sm:$0xff]
      %v1104 = vld [vmem:[%s1090 + $0x68] sm:$0xff]
      %v1105 = vld [vmem:[%s1090 + $0x70] sm:$0xff]
      %v1106 = vld [vmem:[%s1090 + $0x78] sm:$0xff]
      %v1107 = vld [vmem:[%s1090 + $0x80] sm:$0xff]
      %v1108 = vld [vmem:[%s1090 + $0x88] sm:$0xff]
      %v1109 = vld [vmem:[%s1090 + $0x90] sm:$0xff]
      %v1110 = vld [vmem:[%s1090 + $0x98] sm:$0xff]
      %v1111 = vld [vmem:[%s1090 + $0xa0] sm:$0xff]
      %v1112 = vld [vmem:[%s1090 + $0xa8] sm:$0xff]
      %v1113 = vld [vmem:[%s1090 + $0xb0] sm:$0xff]
      %v1114 = vld [vmem:[%s1090 + $0xb8] sm:$0xff]
      %v1115 = vld [vmem:[%s1090 + $0xc0] sm:$0xff]
      %v1116 = vld [vmem:[%s1090 + $0xc8] sm:$0xff]
      %v1117 = vld [vmem:[%s1090 + $0xd0] sm:$0xff]
      %v1118 = vld [vmem:[%s1090 + $0xd8] sm:$0xff]
      %v1119 = vld [vmem:[%s1090 + $0xe0] sm:$0xff]
      %v1120 = vld [vmem:[%s1090 + $0xe8] sm:$0xff]
      %v1121 = vld [vmem:[%s1090 + $0xf0] sm:$0xff]
      %v1122 = vld [vmem:[%s1090 + $0xf8] sm:$0xff]
      %v1123 = vld [vmem:[%s1090 + $0x100] sm:$0xff]
      %v1124 = vld [vmem:[%s1090 + $0x108] sm:$0xff]
      %v1125 = vpack.c.bf16 %v1092, %v1091
      %v1126 = vpack.c.bf16 %v1094, %v1093
      %v1127 = vpack.c.bf16 %v1096, %v1095
      %v1128 = vpack.c.bf16 %v1098, %v1097
      %v1129 = vpack.c.bf16 %v1100, %v1099
      %v1130 = vpack.c.bf16 %v1102, %v1101
      %v1131 = vpack.c.bf16 %v1104, %v1103
      %v1132 = vpack.c.bf16 %v1106, %v1105
      %v1133 = vpack.c.bf16 %v1108, %v1107
      %v1134 = vpack.c.bf16 %v1110, %v1109
      %v1135 = vpack.c.bf16 %v1112, %v1111
      %v1136 = vpack.c.bf16 %v1114, %v1113
      %v1137 = vpack.c.bf16 %v1116, %v1115
      %v1138 = vpack.c.bf16 %v1118, %v1117
      %v1139 = vpack.c.bf16 %v1120, %v1119
      %v1140 = vpack.c.bf16 %v1122, %v1121
      %v1141 = vpack.c.bf16 %v1124, %v1123
      %s1142 = scalar_lea.vmem %s1, 192
      %v1143 = vld [vmem:[%s1142] sm:$0xf]
      %v1144 = vld [vmem:[%s1142 + $0x4] sm:$0xf]
      %v1145 = vld [vmem:[%s1142 + $0x8] sm:$0xf]
      %v1146 = vld [vmem:[%s1142 + $0xc] sm:$0xf]
      %v1147 = vld [vmem:[%s1142 + $0x10] sm:$0xf]
      %v1148 = vld [vmem:[%s1142 + $0x14] sm:$0xf]
      %v1149 = vld [vmem:[%s1142 + $0x18] sm:$0xf]
      %v1150 = vld [vmem:[%s1142 + $0x1c] sm:$0xf]
      %v1151 = vld [vmem:[%s1142 + $0x20] sm:$0xf]
      %v1152 = vld [vmem:[%s1142 + $0x24] sm:$0xf]
      %v1153 = vld [vmem:[%s1142 + $0x28] sm:$0xf]
      %v1154 = vld [vmem:[%s1142 + $0x2c] sm:$0xf]
      %v1155 = vld [vmem:[%s1142 + $0x30] sm:$0xf]
      %v1156 = vld [vmem:[%s1142 + $0x34] sm:$0xf]
      %v1157 = vld [vmem:[%s1142 + $0x38] sm:$0xf]
      %v1158 = vld [vmem:[%s1142 + $0x3c] sm:$0xf]
      %v1175 = vunpack.c.l.b16 %v1143
      %v1176 = vunpack.c.l.b16 %v1144
      %v1177 = vunpack.c.l.b16 %v1145
      %v1178 = vunpack.c.l.b16 %v1146
      %v1179 = vunpack.c.l.b16 %v1147
      %v1180 = vunpack.c.l.b16 %v1148
      %v1181 = vunpack.c.l.b16 %v1149
      %v1182 = vunpack.c.l.b16 %v1150
      %v1183 = vunpack.c.l.b16 %v1151
      %v1184 = vunpack.c.l.b16 %v1152
      %v1185 = vunpack.c.l.b16 %v1153
      %v1186 = vunpack.c.l.b16 %v1154
      %v1187 = vunpack.c.l.b16 %v1155
      %v1188 = vunpack.c.l.b16 %v1156
      %v1189 = vunpack.c.l.b16 %v1157
      %v1190 = vunpack.c.l.b16 %v1158
      %v1191 = vpack.c.b16 %v1176, %v1175
      %v1192 = vpack.c.b16 %v1178, %v1177
      %v1193 = vpack.c.b16 %v1180, %v1179
      %v1194 = vpack.c.b16 %v1182, %v1181
      %v1195 = vpack.c.b16 %v1184, %v1183
      %v1196 = vpack.c.b16 %v1186, %v1185
      %v1197 = vpack.c.b16 %v1188, %v1187
      %v1198 = vpack.c.b16 %v1190, %v1189
      %1207 = vmatprep.subr.bf16.mxu0 0
      %1208 = vmatpush1.bf16.msra.mxu0 %v1191
      %1209 = vmatprep.subr.bf16.mxu0 0
      %1210 = vmatpush1.bf16.msra.mxu0 %v1192
      %1211 = vmatprep.subr.bf16.mxu0 0
      %1212 = vmatpush1.bf16.msra.mxu0 %v1193
      %1213 = vmatprep.subr.bf16.mxu0 0
      %1214 = vmatpush1.bf16.msra.mxu0 %v1194
      %1215 = vmatprep.subr.bf16.mxu0 0
      %1216 = vmatpush1.bf16.msra.mxu0 %v1195
      %1217 = vmatprep.subr.bf16.mxu0 0
      %1218 = vmatpush1.bf16.msra.mxu0 %v1196
      %1219 = vmatprep.subr.bf16.mxu0 0
      %1220 = vmatpush1.bf16.msra.mxu0 %v1197
      %1221 = vmatprep.subr.bf16.mxu0 0
      %1222 = vmatpush1.bf16.msra.mxu0 %v1198
      %1223 = vmatprep.subr.bf16.mxu0 0
      %1224 = vmatpush1.bf16.msra.mxu0 0
      %1225 = vmatprep.subr.bf16.mxu0 0
      %1226 = vmatpush1.bf16.msra.mxu0 0
      %1227 = vmatprep.subr.bf16.mxu0 0
      %1228 = vmatpush1.bf16.msra.mxu0 0
      %1229 = vmatprep.subr.bf16.mxu0 0
      %1230 = vmatpush1.bf16.msra.mxu0 0
      %1231 = vmatprep.subr.bf16.mxu0 0
      %1232 = vmatpush1.bf16.msra.mxu0 0
      %1233 = vmatprep.subr.bf16.mxu0 0
      %1234 = vmatpush1.bf16.msra.mxu0 0
      %1235 = vmatprep.subr.bf16.mxu0 0
      %1236 = vmatpush1.bf16.msra.mxu0 0
      %1237 = vmatprep.subr.bf16.mxu0 0
      %1238 = vmatpush1.bf16.msra.mxu0 0
      %1239 = vmatprep.mubr.bf16.mxu0 0
      %1240 = vmatmul.mubr.bf16.gmra.mrb[0].mxu0 %v1125
      %v1241 = vpop.f32.mrb[0].mxu0
      %v1242 = vadd.f32 0.0, %v1241
      %v1243 = vpop.f32.mrb[0].mxu0
      %v1244 = vpop.f32.mrb[0].mxu0
      %v1245 = vadd.f32 0.0, %v1244
      %v1246 = vpop.f32.mrb[0].mxu0
      %1247 = vmatprep.mubr.bf16.mxu0 0
      %1248 = vmatmul.mubr.bf16.gmra.mrb[0].mxu0 %v1126
      %v1249 = vpop.f32.mrb[0].mxu0
      %v1250 = vadd.f32 0.0, %v1249
      %v1251 = vpop.f32.mrb[0].mxu0
      %v1252 = vpop.f32.mrb[0].mxu0
      %v1253 = vadd.f32 0.0, %v1252
      %v1254 = vpop.f32.mrb[0].mxu0
      %1255 = vmatprep.mubr.bf16.mxu0 0
      %1256 = vmatmul.mubr.bf16.gmra.mrb[0].mxu0 %v1127
      %v1257 = vpop.f32.mrb[0].mxu0
      %v1258 = vadd.f32 0.0, %v1257
      %v1259 = vpop.f32.mrb[0].mxu0
      %v1260 = vpop.f32.mrb[0].mxu0
      %v1261 = vadd.f32 0.0, %v1260
      %v1262 = vpop.f32.mrb[0].mxu0
      %1263 = vmatprep.mubr.bf16.mxu0 0
      %1264 = vmatmul.mubr.bf16.gmra.mrb[0].mxu0 %v1128
      %v1265 = vpop.f32.mrb[0].mxu0
      %v1266 = vadd.f32 0.0, %v1265
      %v1267 = vpop.f32.mrb[0].mxu0
      %v1268 = vpop.f32.mrb[0].mxu0
      %v1269 = vadd.f32 0.0, %v1268
      %v1270 = vpop.f32.mrb[0].mxu0
      %1271 = vmatprep.mubr.bf16.mxu0 0
      %1272 = vmatmul.mubr.bf16.gmra.mrb[0].mxu0 %v1129
      %v1273 = vpop.f32.mrb[0].mxu0
      %v1274 = vadd.f32 0.0, %v1273
      %v1275 = vpop.f32.mrb[0].mxu0
      %v1276 = vpop.f32.mrb[0].mxu0
      %v1277 = vadd.f32 0.0, %v1276
      %v1278 = vpop.f32.mrb[0].mxu0
      %1279 = vmatprep.mubr.bf16.mxu0 0
      %1280 = vmatmul.mubr.bf16.gmra.mrb[0].mxu0 %v1130
      %v1281 = vpop.f32.mrb[0].mxu0
      %v1282 = vadd.f32 0.0, %v1281
      %v1283 = vpop.f32.mrb[0].mxu0
      %v1284 = vpop.f32.mrb[0].mxu0
      %v1285 = vadd.f32 0.0, %v1284
      %v1286 = vpop.f32.mrb[0].mxu0
      %1287 = vmatprep.mubr.bf16.mxu0 0
      %1288 = vmatmul.mubr.bf16.gmra.mrb[0].mxu0 %v1131
      %v1289 = vpop.f32.mrb[0].mxu0
      %v1290 = vadd.f32 0.0, %v1289
      %v1291 = vpop.f32.mrb[0].mxu0
      %v1292 = vpop.f32.mrb[0].mxu0
      %v1293 = vadd.f32 0.0, %v1292
      %v1294 = vpop.f32.mrb[0].mxu0
      %1295 = vmatprep.mubr.bf16.mxu0 0
      %1296 = vmatmul.mubr.bf16.gmra.mrb[0].mxu0 %v1132
      %v1297 = vpop.f32.mrb[0].mxu0
      %v1298 = vadd.f32 0.0, %v1297
      %v1299 = vpop.f32.mrb[0].mxu0
      %v1300 = vpop.f32.mrb[0].mxu0
      %v1301 = vadd.f32 0.0, %v1300
      %v1302 = vpop.f32.mrb[0].mxu0
      %1303 = vmatprep.mubr.bf16.mxu0 0
      %1304 = vmatmul.mubr.bf16.gmra.mrb[0].mxu0 %v1133
      %v1305 = vpop.f32.mrb[0].mxu0
      %v1306 = vadd.f32 0.0, %v1305
      %v1307 = vpop.f32.mrb[0].mxu0
      %v1308 = vpop.f32.mrb[0].mxu0
      %v1309 = vadd.f32 0.0, %v1308
      %v1310 = vpop.f32.mrb[0].mxu0
      %1311 = vmatprep.mubr.bf16.mxu0 0
      %1312 = vmatmul.mubr.bf16.gmra.mrb[0].mxu0 %v1134
      %v1313 = vpop.f32.mrb[0].mxu0
      %v1314 = vadd.f32 0.0, %v1313
      %v1315 = vpop.f32.mrb[0].mxu0
      %v1316 = vpop.f32.mrb[0].mxu0
      %v1317 = vadd.f32 0.0, %v1316
      %v1318 = vpop.f32.mrb[0].mxu0
      %1319 = vmatprep.mubr.bf16.mxu0 0
      %1320 = vmatmul.mubr.bf16.gmra.mrb[0].mxu0 %v1135
      %v1321 = vpop.f32.mrb[0].mxu0
      %v1322 = vadd.f32 0.0, %v1321
      %v1323 = vpop.f32.mrb[0].mxu0
      %v1324 = vpop.f32.mrb[0].mxu0
      %v1325 = vadd.f32 0.0, %v1324
      %v1326 = vpop.f32.mrb[0].mxu0
      %1327 = vmatprep.mubr.bf16.mxu0 0
      %1328 = vmatmul.mubr.bf16.gmra.mrb[0].mxu0 %v1136
      %v1329 = vpop.f32.mrb[0].mxu0
      %v1330 = vadd.f32 0.0, %v1329
      %v1331 = vpop.f32.mrb[0].mxu0
      %v1332 = vpop.f32.mrb[0].mxu0
      %v1333 = vadd.f32 0.0, %v1332
      %v1334 = vpop.f32.mrb[0].mxu0
      %1335 = vmatprep.mubr.bf16.mxu0 0
      %1336 = vmatmul.mubr.bf16.gmra.mrb[0].mxu0 %v1137
      %v1337 = vpop.f32.mrb[0].mxu0
      %v1338 = vadd.f32 0.0, %v1337
      %v1339 = vpop.f32.mrb[0].mxu0
      %v1340 = vpop.f32.mrb[0].mxu0
      %v1341 = vadd.f32 0.0, %v1340
      %v1342 = vpop.f32.mrb[0].mxu0
      %1343 = vmatprep.mubr.bf16.mxu0 0
      %1344 = vmatmul.mubr.bf16.gmra.mrb[0].mxu0 %v1138
      %v1345 = vpop.f32.mrb[0].mxu0
      %v1346 = vadd.f32 0.0, %v1345
      %v1347 = vpop.f32.mrb[0].mxu0
      %v1348 = vpop.f32.mrb[0].mxu0
      %v1349 = vadd.f32 0.0, %v1348
      %v1350 = vpop.f32.mrb[0].mxu0
      %1351 = vmatprep.mubr.bf16.mxu0 0
      %1352 = vmatmul.mubr.bf16.gmra.mrb[0].mxu0 %v1139
      %v1353 = vpop.f32.mrb[0].mxu0
      %v1354 = vadd.f32 0.0, %v1353
      %v1355 = vpop.f32.mrb[0].mxu0
      %v1356 = vpop.f32.mrb[0].mxu0
      %v1357 = vadd.f32 0.0, %v1356
      %v1358 = vpop.f32.mrb[0].mxu0
      %1359 = vmatprep.mubr.bf16.mxu0 0
      %1360 = vmatmul.mubr.bf16.gmra.mrb[0].mxu0 %v1140
      %v1361 = vpop.f32.mrb[0].mxu0
      %v1362 = vadd.f32 0.0, %v1361
      %v1363 = vpop.f32.mrb[0].mxu0
      %v1364 = vpop.f32.mrb[0].mxu0
      %v1365 = vadd.f32 0.0, %v1364
      %v1366 = vpop.f32.mrb[0].mxu0
      %1367 = vmatprep.mubr.bf16.mxu0 0
      %1368 = vmatmul.mubr.bf16.gmra.mrb[0].mxu0 %v1141
      %v1369 = vpop.f32.mrb[0].mxu0
      %v1370 = vadd.f32 0.0, %v1369
      %v1371 = vpop.f32.mrb[0].mxu0
      %v1372 = vpop.f32.mrb[0].mxu0
      %v1373 = vadd.f32 0.0, %v1372
      %v1374 = vpop.f32.mrb[0].mxu0
      %1375 = vdwg.mxu0
      %v1376 = vadd.f32 %v1055, %v1242
      %v1377 = vadd.f32 %v1056, %v1245
      %v1378 = vadd.f32 %v1057, %v1250
      %v1379 = vadd.f32 %v1058, %v1253
      %v1380 = vadd.f32 %v1059, %v1258
      %v1381 = vadd.f32 %v1060, %v1261
      %v1382 = vadd.f32 %v1061, %v1266
      %v1383 = vadd.f32 %v1062, %v1269
      %v1384 = vadd.f32 %v1063, %v1274
      %v1385 = vadd.f32 %v1064, %v1277
      %v1386 = vadd.f32 %v1065, %v1282
      %v1387 = vadd.f32 %v1066, %v1285
      %v1388 = vadd.f32 %v1067, %v1290
      %v1389 = vadd.f32 %v1068, %v1293
      %v1390 = vadd.f32 %v1069, %v1298
      %v1391 = vadd.f32 %v1070, %v1301
      %v1392 = vadd.f32 %v1071, %v1306
      %v1393 = vadd.f32 %v1072, %v1309
      %v1394 = vadd.f32 %v1073, %v1314
      %v1395 = vadd.f32 %v1074, %v1317
      %v1396 = vadd.f32 %v1075, %v1322
      %v1397 = vadd.f32 %v1076, %v1325
      %v1398 = vadd.f32 %v1077, %v1330
      %v1399 = vadd.f32 %v1078, %v1333
      %v1400 = vadd.f32 %v1079, %v1338
      %v1401 = vadd.f32 %v1080, %v1341
      %v1402 = vadd.f32 %v1081, %v1346
      %v1403 = vadd.f32 %v1082, %v1349
      %v1404 = vadd.f32 %v1083, %v1354
      %v1405 = vadd.f32 %v1084, %v1357
      %v1406 = vadd.f32 %v1085, %v1362
      %v1407 = vadd.f32 %v1086, %v1365
      %v1408 = vadd.f32 %v1087, %v1370
      %v1409 = vadd.f32 %v1088, %v1373
      %s1410 = sadd.s32 %s195, 35
      %s1411 = scalar_lea.vmem %s183, %s1410
      %v1412 = vld [vmem:[%s1411] sm:$0xff]
      %v1413 = vld [vmem:[%s1411 + $0x8] sm:$0xff]
      %v1414 = vld [vmem:[%s1411 + $0x10] sm:$0xff]
      %v1415 = vld [vmem:[%s1411 + $0x18] sm:$0xff]
      %v1416 = vld [vmem:[%s1411 + $0x20] sm:$0xff]
      %v1417 = vld [vmem:[%s1411 + $0x28] sm:$0xff]
      %v1418 = vld [vmem:[%s1411 + $0x30] sm:$0xff]
      %v1419 = vld [vmem:[%s1411 + $0x38] sm:$0xff]
      %v1420 = vld [vmem:[%s1411 + $0x40] sm:$0xff]
      %v1421 = vld [vmem:[%s1411 + $0x48] sm:$0xff]
      %v1422 = vld [vmem:[%s1411 + $0x50] sm:$0xff]
      %v1423 = vld [vmem:[%s1411 + $0x58] sm:$0xff]
      %v1424 = vld [vmem:[%s1411 + $0x60] sm:$0xff]
      %v1425 = vld [vmem:[%s1411 + $0x68] sm:$0xff]
      %v1426 = vld [vmem:[%s1411 + $0x70] sm:$0xff]
      %v1427 = vld [vmem:[%s1411 + $0x78] sm:$0xff]
      %v1428 = vld [vmem:[%s1411 + $0x80] sm:$0xff]
      %v1429 = vld [vmem:[%s1411 + $0x88] sm:$0xff]
      %v1430 = vld [vmem:[%s1411 + $0x90] sm:$0xff]
      %v1431 = vld [vmem:[%s1411 + $0x98] sm:$0xff]
      %v1432 = vld [vmem:[%s1411 + $0xa0] sm:$0xff]
      %v1433 = vld [vmem:[%s1411 + $0xa8] sm:$0xff]
      %v1434 = vld [vmem:[%s1411 + $0xb0] sm:$0xff]
      %v1435 = vld [vmem:[%s1411 + $0xb8] sm:$0xff]
      %v1436 = vld [vmem:[%s1411 + $0xc0] sm:$0xff]
      %v1437 = vld [vmem:[%s1411 + $0xc8] sm:$0xff]
      %v1438 = vld [vmem:[%s1411 + $0xd0] sm:$0xff]
      %v1439 = vld [vmem:[%s1411 + $0xd8] sm:$0xff]
      %v1440 = vld [vmem:[%s1411 + $0xe0] sm:$0xff]
      %v1441 = vld [vmem:[%s1411 + $0xe8] sm:$0xff]
      %v1442 = vld [vmem:[%s1411 + $0xf0] sm:$0xff]
      %v1443 = vld [vmem:[%s1411 + $0xf8] sm:$0xff]
      %v1444 = vld [vmem:[%s1411 + $0x100] sm:$0xff]
      %v1445 = vld [vmem:[%s1411 + $0x108] sm:$0xff]
      %v1446 = vpack.c.bf16 %v1413, %v1412
      %v1447 = vpack.c.bf16 %v1415, %v1414
      %v1448 = vpack.c.bf16 %v1417, %v1416
      %v1449 = vpack.c.bf16 %v1419, %v1418
      %v1450 = vpack.c.bf16 %v1421, %v1420
      %v1451 = vpack.c.bf16 %v1423, %v1422
      %v1452 = vpack.c.bf16 %v1425, %v1424
      %v1453 = vpack.c.bf16 %v1427, %v1426
      %v1454 = vpack.c.bf16 %v1429, %v1428
      %v1455 = vpack.c.bf16 %v1431, %v1430
      %v1456 = vpack.c.bf16 %v1433, %v1432
      %v1457 = vpack.c.bf16 %v1435, %v1434
      %v1458 = vpack.c.bf16 %v1437, %v1436
      %v1459 = vpack.c.bf16 %v1439, %v1438
      %v1460 = vpack.c.bf16 %v1441, %v1440
      %v1461 = vpack.c.bf16 %v1443, %v1442
      %v1462 = vpack.c.bf16 %v1445, %v1444
      %s1463 = scalar_lea.vmem %s1, 256
      %v1464 = vld [vmem:[%s1463] sm:$0xf]
      %v1465 = vld [vmem:[%s1463 + $0x4] sm:$0xf]
      %v1466 = vld [vmem:[%s1463 + $0x8] sm:$0xf]
      %v1467 = vld [vmem:[%s1463 + $0xc] sm:$0xf]
      %v1468 = vld [vmem:[%s1463 + $0x10] sm:$0xf]
      %v1469 = vld [vmem:[%s1463 + $0x14] sm:$0xf]
      %v1470 = vld [vmem:[%s1463 + $0x18] sm:$0xf]
      %v1471 = vld [vmem:[%s1463 + $0x1c] sm:$0xf]
      %v1472 = vld [vmem:[%s1463 + $0x20] sm:$0xf]
      %v1473 = vld [vmem:[%s1463 + $0x24] sm:$0xf]
      %v1474 = vld [vmem:[%s1463 + $0x28] sm:$0xf]
      %v1475 = vld [vmem:[%s1463 + $0x2c] sm:$0xf]
      %v1476 = vld [vmem:[%s1463 + $0x30] sm:$0xf]
      %v1477 = vld [vmem:[%s1463 + $0x34] sm:$0xf]
      %v1478 = vld [vmem:[%s1463 + $0x38] sm:$0xf]
      %v1479 = vld [vmem:[%s1463 + $0x3c] sm:$0xf]
      %v1496 = vunpack.c.l.b16 %v1464
      %v1497 = vunpack.c.l.b16 %v1465
      %v1498 = vunpack.c.l.b16 %v1466
      %v1499 = vunpack.c.l.b16 %v1467
      %v1500 = vunpack.c.l.b16 %v1468
      %v1501 = vunpack.c.l.b16 %v1469
      %v1502 = vunpack.c.l.b16 %v1470
      %v1503 = vunpack.c.l.b16 %v1471
      %v1504 = vunpack.c.l.b16 %v1472
      %v1505 = vunpack.c.l.b16 %v1473
      %v1506 = vunpack.c.l.b16 %v1474
      %v1507 = vunpack.c.l.b16 %v1475
      %v1508 = vunpack.c.l.b16 %v1476
      %v1509 = vunpack.c.l.b16 %v1477
      %v1510 = vunpack.c.l.b16 %v1478
      %v1511 = vunpack.c.l.b16 %v1479
      %v1512 = vpack.c.b16 %v1497, %v1496
      %v1513 = vpack.c.b16 %v1499, %v1498
      %v1514 = vpack.c.b16 %v1501, %v1500
      %v1515 = vpack.c.b16 %v1503, %v1502
      %v1516 = vpack.c.b16 %v1505, %v1504
      %v1517 = vpack.c.b16 %v1507, %v1506
      %v1518 = vpack.c.b16 %v1509, %v1508
      %v1519 = vpack.c.b16 %v1511, %v1510
      %1528 = vmatprep.subr.bf16.mxu0 0
      %1529 = vmatpush1.bf16.msra.mxu0 %v1512
      %1530 = vmatprep.subr.bf16.mxu0 0
      %1531 = vmatpush1.bf16.msra.mxu0 %v1513
      %1532 = vmatprep.subr.bf16.mxu0 0
      %1533 = vmatpush1.bf16.msra.mxu0 %v1514
      %1534 = vmatprep.subr.bf16.mxu0 0
      %1535 = vmatpush1.bf16.msra.mxu0 %v1515
      %1536 = vmatprep.subr.bf16.mxu0 0
      %1537 = vmatpush1.bf16.msra.mxu0 %v1516
      %1538 = vmatprep.subr.bf16.mxu0 0
      %1539 = vmatpush1.bf16.msra.mxu0 %v1517
      %1540 = vmatprep.subr.bf16.mxu0 0
      %1541 = vmatpush1.bf16.msra.mxu0 %v1518
      %1542 = vmatprep.subr.bf16.mxu0 0
      %1543 = vmatpush1.bf16.msra.mxu0 %v1519
      %1544 = vmatprep.subr.bf16.mxu0 0
      %1545 = vmatpush1.bf16.msra.mxu0 0
      %1546 = vmatprep.subr.bf16.mxu0 0
      %1547 = vmatpush1.bf16.msra.mxu0 0
      %1548 = vmatprep.subr.bf16.mxu0 0
      %1549 = vmatpush1.bf16.msra.mxu0 0
      %1550 = vmatprep.subr.bf16.mxu0 0
      %1551 = vmatpush1.bf16.msra.mxu0 0
      %1552 = vmatprep.subr.bf16.mxu0 0
      %1553 = vmatpush1.bf16.msra.mxu0 0
      %1554 = vmatprep.subr.bf16.mxu0 0
      %1555 = vmatpush1.bf16.msra.mxu0 0
      %1556 = vmatprep.subr.bf16.mxu0 0
      %1557 = vmatpush1.bf16.msra.mxu0 0
      %1558 = vmatprep.subr.bf16.mxu0 0
      %1559 = vmatpush1.bf16.msra.mxu0 0
      %1560 = vmatprep.mubr.bf16.mxu0 0
      %1561 = vmatmul.mubr.bf16.gmra.mrb[0].mxu0 %v1446
      %v1562 = vpop.f32.mrb[0].mxu0
      %v1563 = vadd.f32 0.0, %v1562
      %v1564 = vpop.f32.mrb[0].mxu0
      %v1565 = vpop.f32.mrb[0].mxu0
      %v1566 = vadd.f32 0.0, %v1565
      %v1567 = vpop.f32.mrb[0].mxu0
      %1568 = vmatprep.mubr.bf16.mxu0 0
      %1569 = vmatmul.mubr.bf16.gmra.mrb[0].mxu0 %v1447
      %v1570 = vpop.f32.mrb[0].mxu0
      %v1571 = vadd.f32 0.0, %v1570
      %v1572 = vpop.f32.mrb[0].mxu0
      %v1573 = vpop.f32.mrb[0].mxu0
      %v1574 = vadd.f32 0.0, %v1573
      %v1575 = vpop.f32.mrb[0].mxu0
      %1576 = vmatprep.mubr.bf16.mxu0 0
      %1577 = vmatmul.mubr.bf16.gmra.mrb[0].mxu0 %v1448
      %v1578 = vpop.f32.mrb[0].mxu0
      %v1579 = vadd.f32 0.0, %v1578
      %v1580 = vpop.f32.mrb[0].mxu0
      %v1581 = vpop.f32.mrb[0].mxu0
      %v1582 = vadd.f32 0.0, %v1581
      %v1583 = vpop.f32.mrb[0].mxu0
      %1584 = vmatprep.mubr.bf16.mxu0 0
      %1585 = vmatmul.mubr.bf16.gmra.mrb[0].mxu0 %v1449
      %v1586 = vpop.f32.mrb[0].mxu0
      %v1587 = vadd.f32 0.0, %v1586
      %v1588 = vpop.f32.mrb[0].mxu0
      %v1589 = vpop.f32.mrb[0].mxu0
      %v1590 = vadd.f32 0.0, %v1589
      %v1591 = vpop.f32.mrb[0].mxu0
      %1592 = vmatprep.mubr.bf16.mxu0 0
      %1593 = vmatmul.mubr.bf16.gmra.mrb[0].mxu0 %v1450
      %v1594 = vpop.f32.mrb[0].mxu0
      %v1595 = vadd.f32 0.0, %v1594
      %v1596 = vpop.f32.mrb[0].mxu0
      %v1597 = vpop.f32.mrb[0].mxu0
      %v1598 = vadd.f32 0.0, %v1597
      %v1599 = vpop.f32.mrb[0].mxu0
      %1600 = vmatprep.mubr.bf16.mxu0 0
      %1601 = vmatmul.mubr.bf16.gmra.mrb[0].mxu0 %v1451
      %v1602 = vpop.f32.mrb[0].mxu0
      %v1603 = vadd.f32 0.0, %v1602
      %v1604 = vpop.f32.mrb[0].mxu0
      %v1605 = vpop.f32.mrb[0].mxu0
      %v1606 = vadd.f32 0.0, %v1605
      %v1607 = vpop.f32.mrb[0].mxu0
      %1608 = vmatprep.mubr.bf16.mxu0 0
      %1609 = vmatmul.mubr.bf16.gmra.mrb[0].mxu0 %v1452
      %v1610 = vpop.f32.mrb[0].mxu0
      %v1611 = vadd.f32 0.0, %v1610
      %v1612 = vpop.f32.mrb[0].mxu0
      %v1613 = vpop.f32.mrb[0].mxu0
      %v1614 = vadd.f32 0.0, %v1613
      %v1615 = vpop.f32.mrb[0].mxu0
      %1616 = vmatprep.mubr.bf16.mxu0 0
      %1617 = vmatmul.mubr.bf16.gmra.mrb[0].mxu0 %v1453
      %v1618 = vpop.f32.mrb[0].mxu0
      %v1619 = vadd.f32 0.0, %v1618
      %v1620 = vpop.f32.mrb[0].mxu0
      %v1621 = vpop.f32.mrb[0].mxu0
      %v1622 = vadd.f32 0.0, %v1621
      %v1623 = vpop.f32.mrb[0].mxu0
      %1624 = vmatprep.mubr.bf16.mxu0 0
      %1625 = vmatmul.mubr.bf16.gmra.mrb[0].mxu0 %v1454
      %v1626 = vpop.f32.mrb[0].mxu0
      %v1627 = vadd.f32 0.0, %v1626
      %v1628 = vpop.f32.mrb[0].mxu0
      %v1629 = vpop.f32.mrb[0].mxu0
      %v1630 = vadd.f32 0.0, %v1629
      %v1631 = vpop.f32.mrb[0].mxu0
      %1632 = vmatprep.mubr.bf16.mxu0 0
      %1633 = vmatmul.mubr.bf16.gmra.mrb[0].mxu0 %v1455
      %v1634 = vpop.f32.mrb[0].mxu0
      %v1635 = vadd.f32 0.0, %v1634
      %v1636 = vpop.f32.mrb[0].mxu0
      %v1637 = vpop.f32.mrb[0].mxu0
      %v1638 = vadd.f32 0.0, %v1637
      %v1639 = vpop.f32.mrb[0].mxu0
      %1640 = vmatprep.mubr.bf16.mxu0 0
      %1641 = vmatmul.mubr.bf16.gmra.mrb[0].mxu0 %v1456
      %v1642 = vpop.f32.mrb[0].mxu0
      %v1643 = vadd.f32 0.0, %v1642
      %v1644 = vpop.f32.mrb[0].mxu0
      %v1645 = vpop.f32.mrb[0].mxu0
      %v1646 = vadd.f32 0.0, %v1645
      %v1647 = vpop.f32.mrb[0].mxu0
      %1648 = vmatprep.mubr.bf16.mxu0 0
      %1649 = vmatmul.mubr.bf16.gmra.mrb[0].mxu0 %v1457
      %v1650 = vpop.f32.mrb[0].mxu0
      %v1651 = vadd.f32 0.0, %v1650
      %v1652 = vpop.f32.mrb[0].mxu0
      %v1653 = vpop.f32.mrb[0].mxu0
      %v1654 = vadd.f32 0.0, %v1653
      %v1655 = vpop.f32.mrb[0].mxu0
      %1656 = vmatprep.mubr.bf16.mxu0 0
      %1657 = vmatmul.mubr.bf16.gmra.mrb[0].mxu0 %v1458
      %v1658 = vpop.f32.mrb[0].mxu0
      %v1659 = vadd.f32 0.0, %v1658
      %v1660 = vpop.f32.mrb[0].mxu0
      %v1661 = vpop.f32.mrb[0].mxu0
      %v1662 = vadd.f32 0.0, %v1661
      %v1663 = vpop.f32.mrb[0].mxu0
      %1664 = vmatprep.mubr.bf16.mxu0 0
      %1665 = vmatmul.mubr.bf16.gmra.mrb[0].mxu0 %v1459
      %v1666 = vpop.f32.mrb[0].mxu0
      %v1667 = vadd.f32 0.0, %v1666
      %v1668 = vpop.f32.mrb[0].mxu0
      %v1669 = vpop.f32.mrb[0].mxu0
      %v1670 = vadd.f32 0.0, %v1669
      %v1671 = vpop.f32.mrb[0].mxu0
      %1672 = vmatprep.mubr.bf16.mxu0 0
      %1673 = vmatmul.mubr.bf16.gmra.mrb[0].mxu0 %v1460
      %v1674 = vpop.f32.mrb[0].mxu0
      %v1675 = vadd.f32 0.0, %v1674
      %v1676 = vpop.f32.mrb[0].mxu0
      %v1677 = vpop.f32.mrb[0].mxu0
      %v1678 = vadd.f32 0.0, %v1677
      %v1679 = vpop.f32.mrb[0].mxu0
      %1680 = vmatprep.mubr.bf16.mxu0 0
      %1681 = vmatmul.mubr.bf16.gmra.mrb[0].mxu0 %v1461
      %v1682 = vpop.f32.mrb[0].mxu0
      %v1683 = vadd.f32 0.0, %v1682
      %v1684 = vpop.f32.mrb[0].mxu0
      %v1685 = vpop.f32.mrb[0].mxu0
      %v1686 = vadd.f32 0.0, %v1685
      %v1687 = vpop.f32.mrb[0].mxu0
      %1688 = vmatprep.mubr.bf16.mxu0 0
      %1689 = vmatmul.mubr.bf16.gmra.mrb[0].mxu0 %v1462
      %v1690 = vpop.f32.mrb[0].mxu0
      %v1691 = vadd.f32 0.0, %v1690
      %v1692 = vpop.f32.mrb[0].mxu0
      %v1693 = vpop.f32.mrb[0].mxu0
      %v1694 = vadd.f32 0.0, %v1693
      %v1695 = vpop.f32.mrb[0].mxu0
      %1696 = vdwg.mxu0
      %v1697 = vadd.f32 %v1376, %v1563
      %v1698 = vadd.f32 %v1377, %v1566
      %v1699 = vadd.f32 %v1378, %v1571
      %v1700 = vadd.f32 %v1379, %v1574
      %v1701 = vadd.f32 %v1380, %v1579
      %v1702 = vadd.f32 %v1381, %v1582
      %v1703 = vadd.f32 %v1382, %v1587
      %v1704 = vadd.f32 %v1383, %v1590
      %v1705 = vadd.f32 %v1384, %v1595
      %v1706 = vadd.f32 %v1385, %v1598
      %v1707 = vadd.f32 %v1386, %v1603
      %v1708 = vadd.f32 %v1387, %v1606
      %v1709 = vadd.f32 %v1388, %v1611
      %v1710 = vadd.f32 %v1389, %v1614
      %v1711 = vadd.f32 %v1390, %v1619
      %v1712 = vadd.f32 %v1391, %v1622
      %v1713 = vadd.f32 %v1392, %v1627
      %v1714 = vadd.f32 %v1393, %v1630
      %v1715 = vadd.f32 %v1394, %v1635
      %v1716 = vadd.f32 %v1395, %v1638
      %v1717 = vadd.f32 %v1396, %v1643
      %v1718 = vadd.f32 %v1397, %v1646
      %v1719 = vadd.f32 %v1398, %v1651
      %v1720 = vadd.f32 %v1399, %v1654
      %v1721 = vadd.f32 %v1400, %v1659
      %v1722 = vadd.f32 %v1401, %v1662
      %v1723 = vadd.f32 %v1402, %v1667
      %v1724 = vadd.f32 %v1403, %v1670
      %v1725 = vadd.f32 %v1404, %v1675
      %v1726 = vadd.f32 %v1405, %v1678
      %v1727 = vadd.f32 %v1406, %v1683
      %v1728 = vadd.f32 %v1407, %v1686
      %v1729 = vadd.f32 %v1408, %v1691
      %v1730 = vadd.f32 %v1409, %v1694
      %s1731 = sadd.s32 %s195, 36
      %s1732 = scalar_lea.vmem %s183, %s1731
      %v1733 = vld [vmem:[%s1732] sm:$0xff]
      %v1734 = vld [vmem:[%s1732 + $0x8] sm:$0xff]
      %v1735 = vld [vmem:[%s1732 + $0x10] sm:$0xff]
      %v1736 = vld [vmem:[%s1732 + $0x18] sm:$0xff]
      %v1737 = vld [vmem:[%s1732 + $0x20] sm:$0xff]
      %v1738 = vld [vmem:[%s1732 + $0x28] sm:$0xff]
      %v1739 = vld [vmem:[%s1732 + $0x30] sm:$0xff]
      %v1740 = vld [vmem:[%s1732 + $0x38] sm:$0xff]
      %v1741 = vld [vmem:[%s1732 + $0x40] sm:$0xff]
      %v1742 = vld [vmem:[%s1732 + $0x48] sm:$0xff]
      %v1743 = vld [vmem:[%s1732 + $0x50] sm:$0xff]
      %v1744 = vld [vmem:[%s1732 + $0x58] sm:$0xff]
      %v1745 = vld [vmem:[%s1732 + $0x60] sm:$0xff]
      %v1746 = vld [vmem:[%s1732 + $0x68] sm:$0xff]
      %v1747 = vld [vmem:[%s1732 + $0x70] sm:$0xff]
      %v1748 = vld [vmem:[%s1732 + $0x78] sm:$0xff]
      %v1749 = vld [vmem:[%s1732 + $0x80] sm:$0xff]
      %v1750 = vld [vmem:[%s1732 + $0x88] sm:$0xff]
      %v1751 = vld [vmem:[%s1732 + $0x90] sm:$0xff]
      %v1752 = vld [vmem:[%s1732 + $0x98] sm:$0xff]
      %v1753 = vld [vmem:[%s1732 + $0xa0] sm:$0xff]
      %v1754 = vld [vmem:[%s1732 + $0xa8] sm:$0xff]
      %v1755 = vld [vmem:[%s1732 + $0xb0] sm:$0xff]
      %v1756 = vld [vmem:[%s1732 + $0xb8] sm:$0xff]
      %v1757 = vld [vmem:[%s1732 + $0xc0] sm:$0xff]
      %v1758 = vld [vmem:[%s1732 + $0xc8] sm:$0xff]
      %v1759 = vld [vmem:[%s1732 + $0xd0] sm:$0xff]
      %v1760 = vld [vmem:[%s1732 + $0xd8] sm:$0xff]
      %v1761 = vld [vmem:[%s1732 + $0xe0] sm:$0xff]
      %v1762 = vld [vmem:[%s1732 + $0xe8] sm:$0xff]
      %v1763 = vld [vmem:[%s1732 + $0xf0] sm:$0xff]
      %v1764 = vld [vmem:[%s1732 + $0xf8] sm:$0xff]
      %v1765 = vld [vmem:[%s1732 + $0x100] sm:$0xff]
      %v1766 = vld [vmem:[%s1732 + $0x108] sm:$0xff]
      %v1767 = vpack.c.bf16 %v1734, %v1733
      %v1768 = vpack.c.bf16 %v1736, %v1735
      %v1769 = vpack.c.bf16 %v1738, %v1737
      %v1770 = vpack.c.bf16 %v1740, %v1739
      %v1771 = vpack.c.bf16 %v1742, %v1741
      %v1772 = vpack.c.bf16 %v1744, %v1743
      %v1773 = vpack.c.bf16 %v1746, %v1745
      %v1774 = vpack.c.bf16 %v1748, %v1747
      %v1775 = vpack.c.bf16 %v1750, %v1749
      %v1776 = vpack.c.bf16 %v1752, %v1751
      %v1777 = vpack.c.bf16 %v1754, %v1753
      %v1778 = vpack.c.bf16 %v1756, %v1755
      %v1779 = vpack.c.bf16 %v1758, %v1757
      %v1780 = vpack.c.bf16 %v1760, %v1759
      %v1781 = vpack.c.bf16 %v1762, %v1761
      %v1782 = vpack.c.bf16 %v1764, %v1763
      %v1783 = vpack.c.bf16 %v1766, %v1765
      %s1784 = scalar_lea.vmem %s1, 320
      %v1785 = vld [vmem:[%s1784] sm:$0xf]
      %v1786 = vld [vmem:[%s1784 + $0x4] sm:$0xf]
      %v1787 = vld [vmem:[%s1784 + $0x8] sm:$0xf]
      %v1788 = vld [vmem:[%s1784 + $0xc] sm:$0xf]
      %v1789 = vld [vmem:[%s1784 + $0x10] sm:$0xf]
      %v1790 = vld [vmem:[%s1784 + $0x14] sm:$0xf]
      %v1791 = vld [vmem:[%s1784 + $0x18] sm:$0xf]
      %v1792 = vld [vmem:[%s1784 + $0x1c] sm:$0xf]
      %v1793 = vld [vmem:[%s1784 + $0x20] sm:$0xf]
      %v1794 = vld [vmem:[%s1784 + $0x24] sm:$0xf]
      %v1795 = vld [vmem:[%s1784 + $0x28] sm:$0xf]
      %v1796 = vld [vmem:[%s1784 + $0x2c] sm:$0xf]
      %v1797 = vld [vmem:[%s1784 + $0x30] sm:$0xf]
      %v1798 = vld [vmem:[%s1784 + $0x34] sm:$0xf]
      %v1799 = vld [vmem:[%s1784 + $0x38] sm:$0xf]
      %v1800 = vld [vmem:[%s1784 + $0x3c] sm:$0xf]
      %v1817 = vunpack.c.l.b16 %v1785
      %v1818 = vunpack.c.l.b16 %v1786
      %v1819 = vunpack.c.l.b16 %v1787
      %v1820 = vunpack.c.l.b16 %v1788
      %v1821 = vunpack.c.l.b16 %v1789
      %v1822 = vunpack.c.l.b16 %v1790
      %v1823 = vunpack.c.l.b16 %v1791
      %v1824 = vunpack.c.l.b16 %v1792
      %v1825 = vunpack.c.l.b16 %v1793
      %v1826 = vunpack.c.l.b16 %v1794
      %v1827 = vunpack.c.l.b16 %v1795
      %v1828 = vunpack.c.l.b16 %v1796
      %v1829 = vunpack.c.l.b16 %v1797
      %v1830 = vunpack.c.l.b16 %v1798
      %v1831 = vunpack.c.l.b16 %v1799
      %v1832 = vunpack.c.l.b16 %v1800
      %v1833 = vpack.c.b16 %v1818, %v1817
      %v1834 = vpack.c.b16 %v1820, %v1819
      %v1835 = vpack.c.b16 %v1822, %v1821
      %v1836 = vpack.c.b16 %v1824, %v1823
      %v1837 = vpack.c.b16 %v1826, %v1825
      %v1838 = vpack.c.b16 %v1828, %v1827
      %v1839 = vpack.c.b16 %v1830, %v1829
      %v1840 = vpack.c.b16 %v1832, %v1831
      %1849 = vmatprep.subr.bf16.mxu0 0
      %1850 = vmatpush1.bf16.msra.mxu0 %v1833
      %1851 = vmatprep.subr.bf16.mxu0 0
      %1852 = vmatpush1.bf16.msra.mxu0 %v1834
      %1853 = vmatprep.subr.bf16.mxu0 0
      %1854 = vmatpush1.bf16.msra.mxu0 %v1835
      %1855 = vmatprep.subr.bf16.mxu0 0
      %1856 = vmatpush1.bf16.msra.mxu0 %v1836
      %1857 = vmatprep.subr.bf16.mxu0 0
      %1858 = vmatpush1.bf16.msra.mxu0 %v1837
      %1859 = vmatprep.subr.bf16.mxu0 0
      %1860 = vmatpush1.bf16.msra.mxu0 %v1838
      %1861 = vmatprep.subr.bf16.mxu0 0
      %1862 = vmatpush1.bf16.msra.mxu0 %v1839
      %1863 = vmatprep.subr.bf16.mxu0 0
      %1864 = vmatpush1.bf16.msra.mxu0 %v1840
      %1865 = vmatprep.subr.bf16.mxu0 0
      %1866 = vmatpush1.bf16.msra.mxu0 0
      %1867 = vmatprep.subr.bf16.mxu0 0
      %1868 = vmatpush1.bf16.msra.mxu0 0
      %1869 = vmatprep.subr.bf16.mxu0 0
      %1870 = vmatpush1.bf16.msra.mxu0 0
      %1871 = vmatprep.subr.bf16.mxu0 0
      %1872 = vmatpush1.bf16.msra.mxu0 0
      %1873 = vmatprep.subr.bf16.mxu0 0
      %1874 = vmatpush1.bf16.msra.mxu0 0
      %1875 = vmatprep.subr.bf16.mxu0 0
      %1876 = vmatpush1.bf16.msra.mxu0 0
      %1877 = vmatprep.subr.bf16.mxu0 0
      %1878 = vmatpush1.bf16.msra.mxu0 0
      %1879 = vmatprep.subr.bf16.mxu0 0
      %1880 = vmatpush1.bf16.msra.mxu0 0
      %1881 = vmatprep.mubr.bf16.mxu0 0
      %1882 = vmatmul.mubr.bf16.gmra.mrb[0].mxu0 %v1767
      %v1883 = vpop.f32.mrb[0].mxu0
      %v1884 = vadd.f32 0.0, %v1883
      %v1885 = vpop.f32.mrb[0].mxu0
      %v1886 = vpop.f32.mrb[0].mxu0
      %v1887 = vadd.f32 0.0, %v1886
      %v1888 = vpop.f32.mrb[0].mxu0
      %1889 = vmatprep.mubr.bf16.mxu0 0
      %1890 = vmatmul.mubr.bf16.gmra.mrb[0].mxu0 %v1768
      %v1891 = vpop.f32.mrb[0].mxu0
      %v1892 = vadd.f32 0.0, %v1891
      %v1893 = vpop.f32.mrb[0].mxu0
      %v1894 = vpop.f32.mrb[0].mxu0
      %v1895 = vadd.f32 0.0, %v1894
      %v1896 = vpop.f32.mrb[0].mxu0
      %1897 = vmatprep.mubr.bf16.mxu0 0
      %1898 = vmatmul.mubr.bf16.gmra.mrb[0].mxu0 %v1769
      %v1899 = vpop.f32.mrb[0].mxu0
      %v1900 = vadd.f32 0.0, %v1899
      %v1901 = vpop.f32.mrb[0].mxu0
      %v1902 = vpop.f32.mrb[0].mxu0
      %v1903 = vadd.f32 0.0, %v1902
      %v1904 = vpop.f32.mrb[0].mxu0
      %1905 = vmatprep.mubr.bf16.mxu0 0
      %1906 = vmatmul.mubr.bf16.gmra.mrb[0].mxu0 %v1770
      %v1907 = vpop.f32.mrb[0].mxu0
      %v1908 = vadd.f32 0.0, %v1907
      %v1909 = vpop.f32.mrb[0].mxu0
      %v1910 = vpop.f32.mrb[0].mxu0
      %v1911 = vadd.f32 0.0, %v1910
      %v1912 = vpop.f32.mrb[0].mxu0
      %1913 = vmatprep.mubr.bf16.mxu0 0
      %1914 = vmatmul.mubr.bf16.gmra.mrb[0].mxu0 %v1771
      %v1915 = vpop.f32.mrb[0].mxu0
      %v1916 = vadd.f32 0.0, %v1915
      %v1917 = vpop.f32.mrb[0].mxu0
      %v1918 = vpop.f32.mrb[0].mxu0
      %v1919 = vadd.f32 0.0, %v1918
      %v1920 = vpop.f32.mrb[0].mxu0
      %1921 = vmatprep.mubr.bf16.mxu0 0
      %1922 = vmatmul.mubr.bf16.gmra.mrb[0].mxu0 %v1772
      %v1923 = vpop.f32.mrb[0].mxu0
      %v1924 = vadd.f32 0.0, %v1923
      %v1925 = vpop.f32.mrb[0].mxu0
      %v1926 = vpop.f32.mrb[0].mxu0
      %v1927 = vadd.f32 0.0, %v1926
      %v1928 = vpop.f32.mrb[0].mxu0
      %1929 = vmatprep.mubr.bf16.mxu0 0
      %1930 = vmatmul.mubr.bf16.gmra.mrb[0].mxu0 %v1773
      %v1931 = vpop.f32.mrb[0].mxu0
      %v1932 = vadd.f32 0.0, %v1931
      %v1933 = vpop.f32.mrb[0].mxu0
      %v1934 = vpop.f32.mrb[0].mxu0
      %v1935 = vadd.f32 0.0, %v1934
      %v1936 = vpop.f32.mrb[0].mxu0
      %1937 = vmatprep.mubr.bf16.mxu0 0
      %1938 = vmatmul.mubr.bf16.gmra.mrb[0].mxu0 %v1774
      %v1939 = vpop.f32.mrb[0].mxu0
      %v1940 = vadd.f32 0.0, %v1939
      %v1941 = vpop.f32.mrb[0].mxu0
      %v1942 = vpop.f32.mrb[0].mxu0
      %v1943 = vadd.f32 0.0, %v1942
      %v1944 = vpop.f32.mrb[0].mxu0
      %1945 = vmatprep.mubr.bf16.mxu0 0
      %1946 = vmatmul.mubr.bf16.gmra.mrb[0].mxu0 %v1775
      %v1947 = vpop.f32.mrb[0].mxu0
      %v1948 = vadd.f32 0.0, %v1947
      %v1949 = vpop.f32.mrb[0].mxu0
      %v1950 = vpop.f32.mrb[0].mxu0
      %v1951 = vadd.f32 0.0, %v1950
      %v1952 = vpop.f32.mrb[0].mxu0
      %1953 = vmatprep.mubr.bf16.mxu0 0
      %1954 = vmatmul.mubr.bf16.gmra.mrb[0].mxu0 %v1776
      %v1955 = vpop.f32.mrb[0].mxu0
      %v1956 = vadd.f32 0.0, %v1955
      %v1957 = vpop.f32.mrb[0].mxu0
      %v1958 = vpop.f32.mrb[0].mxu0
      %v1959 = vadd.f32 0.0, %v1958
      %v1960 = vpop.f32.mrb[0].mxu0
      %1961 = vmatprep.mubr.bf16.mxu0 0
      %1962 = vmatmul.mubr.bf16.gmra.mrb[0].mxu0 %v1777
      %v1963 = vpop.f32.mrb[0].mxu0
      %v1964 = vadd.f32 0.0, %v1963
      %v1965 = vpop.f32.mrb[0].mxu0
      %v1966 = vpop.f32.mrb[0].mxu0
      %v1967 = vadd.f32 0.0, %v1966
      %v1968 = vpop.f32.mrb[0].mxu0
      %1969 = vmatprep.mubr.bf16.mxu0 0
      %1970 = vmatmul.mubr.bf16.gmra.mrb[0].mxu0 %v1778
      %v1971 = vpop.f32.mrb[0].mxu0
      %v1972 = vadd.f32 0.0, %v1971
      %v1973 = vpop.f32.mrb[0].mxu0
      %v1974 = vpop.f32.mrb[0].mxu0
      %v1975 = vadd.f32 0.0, %v1974
      %v1976 = vpop.f32.mrb[0].mxu0
      %1977 = vmatprep.mubr.bf16.mxu0 0
      %1978 = vmatmul.mubr.bf16.gmra.mrb[0].mxu0 %v1779
      %v1979 = vpop.f32.mrb[0].mxu0
      %v1980 = vadd.f32 0.0, %v1979
      %v1981 = vpop.f32.mrb[0].mxu0
      %v1982 = vpop.f32.mrb[0].mxu0
      %v1983 = vadd.f32 0.0, %v1982
      %v1984 = vpop.f32.mrb[0].mxu0
      %1985 = vmatprep.mubr.bf16.mxu0 0
      %1986 = vmatmul.mubr.bf16.gmra.mrb[0].mxu0 %v1780
      %v1987 = vpop.f32.mrb[0].mxu0
      %v1988 = vadd.f32 0.0, %v1987
      %v1989 = vpop.f32.mrb[0].mxu0
      %v1990 = vpop.f32.mrb[0].mxu0
      %v1991 = vadd.f32 0.0, %v1990
      %v1992 = vpop.f32.mrb[0].mxu0
      %1993 = vmatprep.mubr.bf16.mxu0 0
      %1994 = vmatmul.mubr.bf16.gmra.mrb[0].mxu0 %v1781
      %v1995 = vpop.f32.mrb[0].mxu0
      %v1996 = vadd.f32 0.0, %v1995
      %v1997 = vpop.f32.mrb[0].mxu0
      %v1998 = vpop.f32.mrb[0].mxu0
      %v1999 = vadd.f32 0.0, %v1998
      %v2000 = vpop.f32.mrb[0].mxu0
      %2001 = vmatprep.mubr.bf16.mxu0 0
      %2002 = vmatmul.mubr.bf16.gmra.mrb[0].mxu0 %v1782
      %v2003 = vpop.f32.mrb[0].mxu0
      %v2004 = vadd.f32 0.0, %v2003
      %v2005 = vpop.f32.mrb[0].mxu0
      %v2006 = vpop.f32.mrb[0].mxu0
      %v2007 = vadd.f32 0.0, %v2006
      %v2008 = vpop.f32.mrb[0].mxu0
      %2009 = vmatprep.mubr.bf16.mxu0 0
      %2010 = vmatmul.mubr.bf16.gmra.mrb[0].mxu0 %v1783
      %v2011 = vpop.f32.mrb[0].mxu0
      %v2012 = vadd.f32 0.0, %v2011
      %v2013 = vpop.f32.mrb[0].mxu0
      %v2014 = vpop.f32.mrb[0].mxu0
      %v2015 = vadd.f32 0.0, %v2014
      %v2016 = vpop.f32.mrb[0].mxu0
      %2017 = vdwg.mxu0
      %v2018 = vadd.f32 %v1697, %v1884
      %v2019 = vadd.f32 %v1698, %v1887
      %v2020 = vadd.f32 %v1699, %v1892
      %v2021 = vadd.f32 %v1700, %v1895
      %v2022 = vadd.f32 %v1701, %v1900
      %v2023 = vadd.f32 %v1702, %v1903
      %v2024 = vadd.f32 %v1703, %v1908
      %v2025 = vadd.f32 %v1704, %v1911
      %v2026 = vadd.f32 %v1705, %v1916
      %v2027 = vadd.f32 %v1706, %v1919
      %v2028 = vadd.f32 %v1707, %v1924
      %v2029 = vadd.f32 %v1708, %v1927
      %v2030 = vadd.f32 %v1709, %v1932
      %v2031 = vadd.f32 %v1710, %v1935
      %v2032 = vadd.f32 %v1711, %v1940
      %v2033 = vadd.f32 %v1712, %v1943
      %v2034 = vadd.f32 %v1713, %v1948
      %v2035 = vadd.f32 %v1714, %v1951
      %v2036 = vadd.f32 %v1715, %v1956
      %v2037 = vadd.f32 %v1716, %v1959
      %v2038 = vadd.f32 %v1717, %v1964
      %v2039 = vadd.f32 %v1718, %v1967
      %v2040 = vadd.f32 %v1719, %v1972
      %v2041 = vadd.f32 %v1720, %v1975
      %v2042 = vadd.f32 %v1721, %v1980
      %v2043 = vadd.f32 %v1722, %v1983
      %v2044 = vadd.f32 %v1723, %v1988
      %v2045 = vadd.f32 %v1724, %v1991
      %v2046 = vadd.f32 %v1725, %v1996
      %v2047 = vadd.f32 %v1726, %v1999
      %v2048 = vadd.f32 %v1727, %v2004
      %v2049 = vadd.f32 %v1728, %v2007
      %v2050 = vadd.f32 %v1729, %v2012
      %v2051 = vadd.f32 %v1730, %v2015
      %s2052 = sadd.s32 %s195, 68
      %s2053 = scalar_lea.vmem %s183, %s2052
      %v2054 = vld [vmem:[%s2053] sm:$0xff]
      %v2055 = vld [vmem:[%s2053 + $0x8] sm:$0xff]
      %v2056 = vld [vmem:[%s2053 + $0x10] sm:$0xff]
      %v2057 = vld [vmem:[%s2053 + $0x18] sm:$0xff]
      %v2058 = vld [vmem:[%s2053 + $0x20] sm:$0xff]
      %v2059 = vld [vmem:[%s2053 + $0x28] sm:$0xff]
      %v2060 = vld [vmem:[%s2053 + $0x30] sm:$0xff]
      %v2061 = vld [vmem:[%s2053 + $0x38] sm:$0xff]
      %v2062 = vld [vmem:[%s2053 + $0x40] sm:$0xff]
      %v2063 = vld [vmem:[%s2053 + $0x48] sm:$0xff]
      %v2064 = vld [vmem:[%s2053 + $0x50] sm:$0xff]
      %v2065 = vld [vmem:[%s2053 + $0x58] sm:$0xff]
      %v2066 = vld [vmem:[%s2053 + $0x60] sm:$0xff]
      %v2067 = vld [vmem:[%s2053 + $0x68] sm:$0xff]
      %v2068 = vld [vmem:[%s2053 + $0x70] sm:$0xff]
      %v2069 = vld [vmem:[%s2053 + $0x78] sm:$0xff]
      %v2070 = vld [vmem:[%s2053 + $0x80] sm:$0xff]
      %v2071 = vld [vmem:[%s2053 + $0x88] sm:$0xff]
      %v2072 = vld [vmem:[%s2053 + $0x90] sm:$0xff]
      %v2073 = vld [vmem:[%s2053 + $0x98] sm:$0xff]
      %v2074 = vld [vmem:[%s2053 + $0xa0] sm:$0xff]
      %v2075 = vld [vmem:[%s2053 + $0xa8] sm:$0xff]
      %v2076 = vld [vmem:[%s2053 + $0xb0] sm:$0xff]
      %v2077 = vld [vmem:[%s2053 + $0xb8] sm:$0xff]
      %v2078 = vld [vmem:[%s2053 + $0xc0] sm:$0xff]
      %v2079 = vld [vmem:[%s2053 + $0xc8] sm:$0xff]
      %v2080 = vld [vmem:[%s2053 + $0xd0] sm:$0xff]
      %v2081 = vld [vmem:[%s2053 + $0xd8] sm:$0xff]
      %v2082 = vld [vmem:[%s2053 + $0xe0] sm:$0xff]
      %v2083 = vld [vmem:[%s2053 + $0xe8] sm:$0xff]
      %v2084 = vld [vmem:[%s2053 + $0xf0] sm:$0xff]
      %v2085 = vld [vmem:[%s2053 + $0xf8] sm:$0xff]
      %v2086 = vld [vmem:[%s2053 + $0x100] sm:$0xff]
      %v2087 = vld [vmem:[%s2053 + $0x108] sm:$0xff]
      %v2088 = vpack.c.bf16 %v2055, %v2054
      %v2089 = vpack.c.bf16 %v2057, %v2056
      %v2090 = vpack.c.bf16 %v2059, %v2058
      %v2091 = vpack.c.bf16 %v2061, %v2060
      %v2092 = vpack.c.bf16 %v2063, %v2062
      %v2093 = vpack.c.bf16 %v2065, %v2064
      %v2094 = vpack.c.bf16 %v2067, %v2066
      %v2095 = vpack.c.bf16 %v2069, %v2068
      %v2096 = vpack.c.bf16 %v2071, %v2070
      %v2097 = vpack.c.bf16 %v2073, %v2072
      %v2098 = vpack.c.bf16 %v2075, %v2074
      %v2099 = vpack.c.bf16 %v2077, %v2076
      %v2100 = vpack.c.bf16 %v2079, %v2078
      %v2101 = vpack.c.bf16 %v2081, %v2080
      %v2102 = vpack.c.bf16 %v2083, %v2082
      %v2103 = vpack.c.bf16 %v2085, %v2084
      %v2104 = vpack.c.bf16 %v2087, %v2086
      %s2105 = scalar_lea.vmem %s1, 384
      %v2106 = vld [vmem:[%s2105] sm:$0xf]
      %v2107 = vld [vmem:[%s2105 + $0x4] sm:$0xf]
      %v2108 = vld [vmem:[%s2105 + $0x8] sm:$0xf]
      %v2109 = vld [vmem:[%s2105 + $0xc] sm:$0xf]
      %v2110 = vld [vmem:[%s2105 + $0x10] sm:$0xf]
      %v2111 = vld [vmem:[%s2105 + $0x14] sm:$0xf]
      %v2112 = vld [vmem:[%s2105 + $0x18] sm:$0xf]
      %v2113 = vld [vmem:[%s2105 + $0x1c] sm:$0xf]
      %v2114 = vld [vmem:[%s2105 + $0x20] sm:$0xf]
      %v2115 = vld [vmem:[%s2105 + $0x24] sm:$0xf]
      %v2116 = vld [vmem:[%s2105 + $0x28] sm:$0xf]
      %v2117 = vld [vmem:[%s2105 + $0x2c] sm:$0xf]
      %v2118 = vld [vmem:[%s2105 + $0x30] sm:$0xf]
      %v2119 = vld [vmem:[%s2105 + $0x34] sm:$0xf]
      %v2120 = vld [vmem:[%s2105 + $0x38] sm:$0xf]
      %v2121 = vld [vmem:[%s2105 + $0x3c] sm:$0xf]
      %v2138 = vunpack.c.l.b16 %v2106
      %v2139 = vunpack.c.l.b16 %v2107
      %v2140 = vunpack.c.l.b16 %v2108
      %v2141 = vunpack.c.l.b16 %v2109
      %v2142 = vunpack.c.l.b16 %v2110
      %v2143 = vunpack.c.l.b16 %v2111
      %v2144 = vunpack.c.l.b16 %v2112
      %v2145 = vunpack.c.l.b16 %v2113
      %v2146 = vunpack.c.l.b16 %v2114
      %v2147 = vunpack.c.l.b16 %v2115
      %v2148 = vunpack.c.l.b16 %v2116
      %v2149 = vunpack.c.l.b16 %v2117
      %v2150 = vunpack.c.l.b16 %v2118
      %v2151 = vunpack.c.l.b16 %v2119
      %v2152 = vunpack.c.l.b16 %v2120
      %v2153 = vunpack.c.l.b16 %v2121
      %v2154 = vpack.c.b16 %v2139, %v2138
      %v2155 = vpack.c.b16 %v2141, %v2140
      %v2156 = vpack.c.b16 %v2143, %v2142
      %v2157 = vpack.c.b16 %v2145, %v2144
      %v2158 = vpack.c.b16 %v2147, %v2146
      %v2159 = vpack.c.b16 %v2149, %v2148
      %v2160 = vpack.c.b16 %v2151, %v2150
      %v2161 = vpack.c.b16 %v2153, %v2152
      %2170 = vmatprep.subr.bf16.mxu0 0
      %2171 = vmatpush1.bf16.msra.mxu0 %v2154
      %2172 = vmatprep.subr.bf16.mxu0 0
      %2173 = vmatpush1.bf16.msra.mxu0 %v2155
      %2174 = vmatprep.subr.bf16.mxu0 0
      %2175 = vmatpush1.bf16.msra.mxu0 %v2156
      %2176 = vmatprep.subr.bf16.mxu0 0
      %2177 = vmatpush1.bf16.msra.mxu0 %v2157
      %2178 = vmatprep.subr.bf16.mxu0 0
      %2179 = vmatpush1.bf16.msra.mxu0 %v2158
      %2180 = vmatprep.subr.bf16.mxu0 0
      %2181 = vmatpush1.bf16.msra.mxu0 %v2159
      %2182 = vmatprep.subr.bf16.mxu0 0
      %2183 = vmatpush1.bf16.msra.mxu0 %v2160
      %2184 = vmatprep.subr.bf16.mxu0 0
      %2185 = vmatpush1.bf16.msra.mxu0 %v2161
      %2186 = vmatprep.subr.bf16.mxu0 0
      %2187 = vmatpush1.bf16.msra.mxu0 0
      %2188 = vmatprep.subr.bf16.mxu0 0
      %2189 = vmatpush1.bf16.msra.mxu0 0
      %2190 = vmatprep.subr.bf16.mxu0 0
      %2191 = vmatpush1.bf16.msra.mxu0 0
      %2192 = vmatprep.subr.bf16.mxu0 0
      %2193 = vmatpush1.bf16.msra.mxu0 0
      %2194 = vmatprep.subr.bf16.mxu0 0
      %2195 = vmatpush1.bf16.msra.mxu0 0
      %2196 = vmatprep.subr.bf16.mxu0 0
      %2197 = vmatpush1.bf16.msra.mxu0 0
      %2198 = vmatprep.subr.bf16.mxu0 0
      %2199 = vmatpush1.bf16.msra.mxu0 0
      %2200 = vmatprep.subr.bf16.mxu0 0
      %2201 = vmatpush1.bf16.msra.mxu0 0
      %2202 = vmatprep.mubr.bf16.mxu0 0
      %2203 = vmatmul.mubr.bf16.gmra.mrb[0].mxu0 %v2088
      %v2204 = vpop.f32.mrb[0].mxu0
      %v2205 = vadd.f32 0.0, %v2204
      %v2206 = vpop.f32.mrb[0].mxu0
      %v2207 = vpop.f32.mrb[0].mxu0
      %v2208 = vadd.f32 0.0, %v2207
      %v2209 = vpop.f32.mrb[0].mxu0
      %2210 = vmatprep.mubr.bf16.mxu0 0
      %2211 = vmatmul.mubr.bf16.gmra.mrb[0].mxu0 %v2089
      %v2212 = vpop.f32.mrb[0].mxu0
      %v2213 = vadd.f32 0.0, %v2212
      %v2214 = vpop.f32.mrb[0].mxu0
      %v2215 = vpop.f32.mrb[0].mxu0
      %v2216 = vadd.f32 0.0, %v2215
      %v2217 = vpop.f32.mrb[0].mxu0
      %2218 = vmatprep.mubr.bf16.mxu0 0
      %2219 = vmatmul.mubr.bf16.gmra.mrb[0].mxu0 %v2090
      %v2220 = vpop.f32.mrb[0].mxu0
      %v2221 = vadd.f32 0.0, %v2220
      %v2222 = vpop.f32.mrb[0].mxu0
      %v2223 = vpop.f32.mrb[0].mxu0
      %v2224 = vadd.f32 0.0, %v2223
      %v2225 = vpop.f32.mrb[0].mxu0
      %2226 = vmatprep.mubr.bf16.mxu0 0
      %2227 = vmatmul.mubr.bf16.gmra.mrb[0].mxu0 %v2091
      %v2228 = vpop.f32.mrb[0].mxu0
      %v2229 = vadd.f32 0.0, %v2228
      %v2230 = vpop.f32.mrb[0].mxu0
      %v2231 = vpop.f32.mrb[0].mxu0
      %v2232 = vadd.f32 0.0, %v2231
      %v2233 = vpop.f32.mrb[0].mxu0
      %2234 = vmatprep.mubr.bf16.mxu0 0
      %2235 = vmatmul.mubr.bf16.gmra.mrb[0].mxu0 %v2092
      %v2236 = vpop.f32.mrb[0].mxu0
      %v2237 = vadd.f32 0.0, %v2236
      %v2238 = vpop.f32.mrb[0].mxu0
      %v2239 = vpop.f32.mrb[0].mxu0
      %v2240 = vadd.f32 0.0, %v2239
      %v2241 = vpop.f32.mrb[0].mxu0
      %2242 = vmatprep.mubr.bf16.mxu0 0
      %2243 = vmatmul.mubr.bf16.gmra.mrb[0].mxu0 %v2093
      %v2244 = vpop.f32.mrb[0].mxu0
      %v2245 = vadd.f32 0.0, %v2244
      %v2246 = vpop.f32.mrb[0].mxu0
      %v2247 = vpop.f32.mrb[0].mxu0
      %v2248 = vadd.f32 0.0, %v2247
      %v2249 = vpop.f32.mrb[0].mxu0
      %2250 = vmatprep.mubr.bf16.mxu0 0
      %2251 = vmatmul.mubr.bf16.gmra.mrb[0].mxu0 %v2094
      %v2252 = vpop.f32.mrb[0].mxu0
      %v2253 = vadd.f32 0.0, %v2252
      %v2254 = vpop.f32.mrb[0].mxu0
      %v2255 = vpop.f32.mrb[0].mxu0
      %v2256 = vadd.f32 0.0, %v2255
      %v2257 = vpop.f32.mrb[0].mxu0
      %2258 = vmatprep.mubr.bf16.mxu0 0
      %2259 = vmatmul.mubr.bf16.gmra.mrb[0].mxu0 %v2095
      %v2260 = vpop.f32.mrb[0].mxu0
      %v2261 = vadd.f32 0.0, %v2260
      %v2262 = vpop.f32.mrb[0].mxu0
      %v2263 = vpop.f32.mrb[0].mxu0
      %v2264 = vadd.f32 0.0, %v2263
      %v2265 = vpop.f32.mrb[0].mxu0
      %2266 = vmatprep.mubr.bf16.mxu0 0
      %2267 = vmatmul.mubr.bf16.gmra.mrb[0].mxu0 %v2096
      %v2268 = vpop.f32.mrb[0].mxu0
      %v2269 = vadd.f32 0.0, %v2268
      %v2270 = vpop.f32.mrb[0].mxu0
      %v2271 = vpop.f32.mrb[0].mxu0
      %v2272 = vadd.f32 0.0, %v2271
      %v2273 = vpop.f32.mrb[0].mxu0
      %2274 = vmatprep.mubr.bf16.mxu0 0
      %2275 = vmatmul.mubr.bf16.gmra.mrb[0].mxu0 %v2097
      %v2276 = vpop.f32.mrb[0].mxu0
      %v2277 = vadd.f32 0.0, %v2276
      %v2278 = vpop.f32.mrb[0].mxu0
      %v2279 = vpop.f32.mrb[0].mxu0
      %v2280 = vadd.f32 0.0, %v2279
      %v2281 = vpop.f32.mrb[0].mxu0
      %2282 = vmatprep.mubr.bf16.mxu0 0
      %2283 = vmatmul.mubr.bf16.gmra.mrb[0].mxu0 %v2098
      %v2284 = vpop.f32.mrb[0].mxu0
      %v2285 = vadd.f32 0.0, %v2284
      %v2286 = vpop.f32.mrb[0].mxu0
      %v2287 = vpop.f32.mrb[0].mxu0
      %v2288 = vadd.f32 0.0, %v2287
      %v2289 = vpop.f32.mrb[0].mxu0
      %2290 = vmatprep.mubr.bf16.mxu0 0
      %2291 = vmatmul.mubr.bf16.gmra.mrb[0].mxu0 %v2099
      %v2292 = vpop.f32.mrb[0].mxu0
      %v2293 = vadd.f32 0.0, %v2292
      %v2294 = vpop.f32.mrb[0].mxu0
      %v2295 = vpop.f32.mrb[0].mxu0
      %v2296 = vadd.f32 0.0, %v2295
      %v2297 = vpop.f32.mrb[0].mxu0
      %2298 = vmatprep.mubr.bf16.mxu0 0
      %2299 = vmatmul.mubr.bf16.gmra.mrb[0].mxu0 %v2100
      %v2300 = vpop.f32.mrb[0].mxu0
      %v2301 = vadd.f32 0.0, %v2300
      %v2302 = vpop.f32.mrb[0].mxu0
      %v2303 = vpop.f32.mrb[0].mxu0
      %v2304 = vadd.f32 0.0, %v2303
      %v2305 = vpop.f32.mrb[0].mxu0
      %2306 = vmatprep.mubr.bf16.mxu0 0
      %2307 = vmatmul.mubr.bf16.gmra.mrb[0].mxu0 %v2101
      %v2308 = vpop.f32.mrb[0].mxu0
      %v2309 = vadd.f32 0.0, %v2308
      %v2310 = vpop.f32.mrb[0].mxu0
      %v2311 = vpop.f32.mrb[0].mxu0
      %v2312 = vadd.f32 0.0, %v2311
      %v2313 = vpop.f32.mrb[0].mxu0
      %2314 = vmatprep.mubr.bf16.mxu0 0
      %2315 = vmatmul.mubr.bf16.gmra.mrb[0].mxu0 %v2102
      %v2316 = vpop.f32.mrb[0].mxu0
      %v2317 = vadd.f32 0.0, %v2316
      %v2318 = vpop.f32.mrb[0].mxu0
      %v2319 = vpop.f32.mrb[0].mxu0
      %v2320 = vadd.f32 0.0, %v2319
      %v2321 = vpop.f32.mrb[0].mxu0
      %2322 = vmatprep.mubr.bf16.mxu0 0
      %2323 = vmatmul.mubr.bf16.gmra.mrb[0].mxu0 %v2103
      %v2324 = vpop.f32.mrb[0].mxu0
      %v2325 = vadd.f32 0.0, %v2324
      %v2326 = vpop.f32.mrb[0].mxu0
      %v2327 = vpop.f32.mrb[0].mxu0
      %v2328 = vadd.f32 0.0, %v2327
      %v2329 = vpop.f32.mrb[0].mxu0
      %2330 = vmatprep.mubr.bf16.mxu0 0
      %2331 = vmatmul.mubr.bf16.gmra.mrb[0].mxu0 %v2104
      %v2332 = vpop.f32.mrb[0].mxu0
      %v2333 = vadd.f32 0.0, %v2332
      %v2334 = vpop.f32.mrb[0].mxu0
      %v2335 = vpop.f32.mrb[0].mxu0
      %v2336 = vadd.f32 0.0, %v2335
      %v2337 = vpop.f32.mrb[0].mxu0
      %2338 = vdwg.mxu0
      %v2339 = vadd.f32 %v2018, %v2205
      %v2340 = vadd.f32 %v2019, %v2208
      %v2341 = vadd.f32 %v2020, %v2213
      %v2342 = vadd.f32 %v2021, %v2216
      %v2343 = vadd.f32 %v2022, %v2221
      %v2344 = vadd.f32 %v2023, %v2224
      %v2345 = vadd.f32 %v2024, %v2229
      %v2346 = vadd.f32 %v2025, %v2232
      %v2347 = vadd.f32 %v2026, %v2237
      %v2348 = vadd.f32 %v2027, %v2240
      %v2349 = vadd.f32 %v2028, %v2245
      %v2350 = vadd.f32 %v2029, %v2248
      %v2351 = vadd.f32 %v2030, %v2253
      %v2352 = vadd.f32 %v2031, %v2256
      %v2353 = vadd.f32 %v2032, %v2261
      %v2354 = vadd.f32 %v2033, %v2264
      %v2355 = vadd.f32 %v2034, %v2269
      %v2356 = vadd.f32 %v2035, %v2272
      %v2357 = vadd.f32 %v2036, %v2277
      %v2358 = vadd.f32 %v2037, %v2280
      %v2359 = vadd.f32 %v2038, %v2285
      %v2360 = vadd.f32 %v2039, %v2288
      %v2361 = vadd.f32 %v2040, %v2293
      %v2362 = vadd.f32 %v2041, %v2296
      %v2363 = vadd.f32 %v2042, %v2301
      %v2364 = vadd.f32 %v2043, %v2304
      %v2365 = vadd.f32 %v2044, %v2309
      %v2366 = vadd.f32 %v2045, %v2312
      %v2367 = vadd.f32 %v2046, %v2317
      %v2368 = vadd.f32 %v2047, %v2320
      %v2369 = vadd.f32 %v2048, %v2325
      %v2370 = vadd.f32 %v2049, %v2328
      %v2371 = vadd.f32 %v2050, %v2333
      %v2372 = vadd.f32 %v2051, %v2336
      %s2373 = sadd.s32 %s195, 69
      %s2374 = scalar_lea.vmem %s183, %s2373
      %v2375 = vld [vmem:[%s2374] sm:$0xff]
      %v2376 = vld [vmem:[%s2374 + $0x8] sm:$0xff]
      %v2377 = vld [vmem:[%s2374 + $0x10] sm:$0xff]
      %v2378 = vld [vmem:[%s2374 + $0x18] sm:$0xff]
      %v2379 = vld [vmem:[%s2374 + $0x20] sm:$0xff]
      %v2380 = vld [vmem:[%s2374 + $0x28] sm:$0xff]
      %v2381 = vld [vmem:[%s2374 + $0x30] sm:$0xff]
      %v2382 = vld [vmem:[%s2374 + $0x38] sm:$0xff]
      %v2383 = vld [vmem:[%s2374 + $0x40] sm:$0xff]
      %v2384 = vld [vmem:[%s2374 + $0x48] sm:$0xff]
      %v2385 = vld [vmem:[%s2374 + $0x50] sm:$0xff]
      %v2386 = vld [vmem:[%s2374 + $0x58] sm:$0xff]
      %v2387 = vld [vmem:[%s2374 + $0x60] sm:$0xff]
      %v2388 = vld [vmem:[%s2374 + $0x68] sm:$0xff]
      %v2389 = vld [vmem:[%s2374 + $0x70] sm:$0xff]
      %v2390 = vld [vmem:[%s2374 + $0x78] sm:$0xff]
      %v2391 = vld [vmem:[%s2374 + $0x80] sm:$0xff]
      %v2392 = vld [vmem:[%s2374 + $0x88] sm:$0xff]
      %v2393 = vld [vmem:[%s2374 + $0x90] sm:$0xff]
      %v2394 = vld [vmem:[%s2374 + $0x98] sm:$0xff]
      %v2395 = vld [vmem:[%s2374 + $0xa0] sm:$0xff]
      %v2396 = vld [vmem:[%s2374 + $0xa8] sm:$0xff]
      %v2397 = vld [vmem:[%s2374 + $0xb0] sm:$0xff]
      %v2398 = vld [vmem:[%s2374 + $0xb8] sm:$0xff]
      %v2399 = vld [vmem:[%s2374 + $0xc0] sm:$0xff]
      %v2400 = vld [vmem:[%s2374 + $0xc8] sm:$0xff]
      %v2401 = vld [vmem:[%s2374 + $0xd0] sm:$0xff]
      %v2402 = vld [vmem:[%s2374 + $0xd8] sm:$0xff]
      %v2403 = vld [vmem:[%s2374 + $0xe0] sm:$0xff]
      %v2404 = vld [vmem:[%s2374 + $0xe8] sm:$0xff]
      %v2405 = vld [vmem:[%s2374 + $0xf0] sm:$0xff]
      %v2406 = vld [vmem:[%s2374 + $0xf8] sm:$0xff]
      %v2407 = vld [vmem:[%s2374 + $0x100] sm:$0xff]
      %v2408 = vld [vmem:[%s2374 + $0x108] sm:$0xff]
      %v2409 = vpack.c.bf16 %v2376, %v2375
      %v2410 = vpack.c.bf16 %v2378, %v2377
      %v2411 = vpack.c.bf16 %v2380, %v2379
      %v2412 = vpack.c.bf16 %v2382, %v2381
      %v2413 = vpack.c.bf16 %v2384, %v2383
      %v2414 = vpack.c.bf16 %v2386, %v2385
      %v2415 = vpack.c.bf16 %v2388, %v2387
      %v2416 = vpack.c.bf16 %v2390, %v2389
      %v2417 = vpack.c.bf16 %v2392, %v2391
      %v2418 = vpack.c.bf16 %v2394, %v2393
      %v2419 = vpack.c.bf16 %v2396, %v2395
      %v2420 = vpack.c.bf16 %v2398, %v2397
      %v2421 = vpack.c.bf16 %v2400, %v2399
      %v2422 = vpack.c.bf16 %v2402, %v2401
      %v2423 = vpack.c.bf16 %v2404, %v2403
      %v2424 = vpack.c.bf16 %v2406, %v2405
      %v2425 = vpack.c.bf16 %v2408, %v2407
      %s2426 = scalar_lea.vmem %s1, 448
      %v2427 = vld [vmem:[%s2426] sm:$0xf]
      %v2428 = vld [vmem:[%s2426 + $0x4] sm:$0xf]
      %v2429 = vld [vmem:[%s2426 + $0x8] sm:$0xf]
      %v2430 = vld [vmem:[%s2426 + $0xc] sm:$0xf]
      %v2431 = vld [vmem:[%s2426 + $0x10] sm:$0xf]
      %v2432 = vld [vmem:[%s2426 + $0x14] sm:$0xf]
      %v2433 = vld [vmem:[%s2426 + $0x18] sm:$0xf]
      %v2434 = vld [vmem:[%s2426 + $0x1c] sm:$0xf]
      %v2435 = vld [vmem:[%s2426 + $0x20] sm:$0xf]
      %v2436 = vld [vmem:[%s2426 + $0x24] sm:$0xf]
      %v2437 = vld [vmem:[%s2426 + $0x28] sm:$0xf]
      %v2438 = vld [vmem:[%s2426 + $0x2c] sm:$0xf]
      %v2439 = vld [vmem:[%s2426 + $0x30] sm:$0xf]
      %v2440 = vld [vmem:[%s2426 + $0x34] sm:$0xf]
      %v2441 = vld [vmem:[%s2426 + $0x38] sm:$0xf]
      %v2442 = vld [vmem:[%s2426 + $0x3c] sm:$0xf]
      %v2459 = vunpack.c.l.b16 %v2427
      %v2460 = vunpack.c.l.b16 %v2428
      %v2461 = vunpack.c.l.b16 %v2429
      %v2462 = vunpack.c.l.b16 %v2430
      %v2463 = vunpack.c.l.b16 %v2431
      %v2464 = vunpack.c.l.b16 %v2432
      %v2465 = vunpack.c.l.b16 %v2433
      %v2466 = vunpack.c.l.b16 %v2434
      %v2467 = vunpack.c.l.b16 %v2435
      %v2468 = vunpack.c.l.b16 %v2436
      %v2469 = vunpack.c.l.b16 %v2437
      %v2470 = vunpack.c.l.b16 %v2438
      %v2471 = vunpack.c.l.b16 %v2439
      %v2472 = vunpack.c.l.b16 %v2440
      %v2473 = vunpack.c.l.b16 %v2441
      %v2474 = vunpack.c.l.b16 %v2442
      %v2475 = vpack.c.b16 %v2460, %v2459
      %v2476 = vpack.c.b16 %v2462, %v2461
      %v2477 = vpack.c.b16 %v2464, %v2463
      %v2478 = vpack.c.b16 %v2466, %v2465
      %v2479 = vpack.c.b16 %v2468, %v2467
      %v2480 = vpack.c.b16 %v2470, %v2469
      %v2481 = vpack.c.b16 %v2472, %v2471
      %v2482 = vpack.c.b16 %v2474, %v2473
      %2491 = vmatprep.subr.bf16.mxu0 0
      %2492 = vmatpush1.bf16.msra.mxu0 %v2475
      %2493 = vmatprep.subr.bf16.mxu0 0
      %2494 = vmatpush1.bf16.msra.mxu0 %v2476
      %2495 = vmatprep.subr.bf16.mxu0 0
      %2496 = vmatpush1.bf16.msra.mxu0 %v2477
      %2497 = vmatprep.subr.bf16.mxu0 0
      %2498 = vmatpush1.bf16.msra.mxu0 %v2478
      %2499 = vmatprep.subr.bf16.mxu0 0
      %2500 = vmatpush1.bf16.msra.mxu0 %v2479
      %2501 = vmatprep.subr.bf16.mxu0 0
      %2502 = vmatpush1.bf16.msra.mxu0 %v2480
      %2503 = vmatprep.subr.bf16.mxu0 0
      %2504 = vmatpush1.bf16.msra.mxu0 %v2481
      %2505 = vmatprep.subr.bf16.mxu0 0
      %2506 = vmatpush1.bf16.msra.mxu0 %v2482
      %2507 = vmatprep.subr.bf16.mxu0 0
      %2508 = vmatpush1.bf16.msra.mxu0 0
      %2509 = vmatprep.subr.bf16.mxu0 0
      %2510 = vmatpush1.bf16.msra.mxu0 0
      %2511 = vmatprep.subr.bf16.mxu0 0
      %2512 = vmatpush1.bf16.msra.mxu0 0
      %2513 = vmatprep.subr.bf16.mxu0 0
      %2514 = vmatpush1.bf16.msra.mxu0 0
      %2515 = vmatprep.subr.bf16.mxu0 0
      %2516 = vmatpush1.bf16.msra.mxu0 0
      %2517 = vmatprep.subr.bf16.mxu0 0
      %2518 = vmatpush1.bf16.msra.mxu0 0
      %2519 = vmatprep.subr.bf16.mxu0 0
      %2520 = vmatpush1.bf16.msra.mxu0 0
      %2521 = vmatprep.subr.bf16.mxu0 0
      %2522 = vmatpush1.bf16.msra.mxu0 0
      %2523 = vmatprep.mubr.bf16.mxu0 0
      %2524 = vmatmul.mubr.bf16.gmra.mrb[0].mxu0 %v2409
      %v2525 = vpop.f32.mrb[0].mxu0
      %v2526 = vadd.f32 0.0, %v2525
      %v2527 = vpop.f32.mrb[0].mxu0
      %v2528 = vpop.f32.mrb[0].mxu0
      %v2529 = vadd.f32 0.0, %v2528
      %v2530 = vpop.f32.mrb[0].mxu0
      %2531 = vmatprep.mubr.bf16.mxu0 0
      %2532 = vmatmul.mubr.bf16.gmra.mrb[0].mxu0 %v2410
      %v2533 = vpop.f32.mrb[0].mxu0
      %v2534 = vadd.f32 0.0, %v2533
      %v2535 = vpop.f32.mrb[0].mxu0
      %v2536 = vpop.f32.mrb[0].mxu0
      %v2537 = vadd.f32 0.0, %v2536
      %v2538 = vpop.f32.mrb[0].mxu0
      %2539 = vmatprep.mubr.bf16.mxu0 0
      %2540 = vmatmul.mubr.bf16.gmra.mrb[0].mxu0 %v2411
      %v2541 = vpop.f32.mrb[0].mxu0
      %v2542 = vadd.f32 0.0, %v2541
      %v2543 = vpop.f32.mrb[0].mxu0
      %v2544 = vpop.f32.mrb[0].mxu0
      %v2545 = vadd.f32 0.0, %v2544
      %v2546 = vpop.f32.mrb[0].mxu0
      %2547 = vmatprep.mubr.bf16.mxu0 0
      %2548 = vmatmul.mubr.bf16.gmra.mrb[0].mxu0 %v2412
      %v2549 = vpop.f32.mrb[0].mxu0
      %v2550 = vadd.f32 0.0, %v2549
      %v2551 = vpop.f32.mrb[0].mxu0
      %v2552 = vpop.f32.mrb[0].mxu0
      %v2553 = vadd.f32 0.0, %v2552
      %v2554 = vpop.f32.mrb[0].mxu0
      %2555 = vmatprep.mubr.bf16.mxu0 0
      %2556 = vmatmul.mubr.bf16.gmra.mrb[0].mxu0 %v2413
      %v2557 = vpop.f32.mrb[0].mxu0
      %v2558 = vadd.f32 0.0, %v2557
      %v2559 = vpop.f32.mrb[0].mxu0
      %v2560 = vpop.f32.mrb[0].mxu0
      %v2561 = vadd.f32 0.0, %v2560
      %v2562 = vpop.f32.mrb[0].mxu0
      %2563 = vmatprep.mubr.bf16.mxu0 0
      %2564 = vmatmul.mubr.bf16.gmra.mrb[0].mxu0 %v2414
      %v2565 = vpop.f32.mrb[0].mxu0
      %v2566 = vadd.f32 0.0, %v2565
      %v2567 = vpop.f32.mrb[0].mxu0
      %v2568 = vpop.f32.mrb[0].mxu0
      %v2569 = vadd.f32 0.0, %v2568
      %v2570 = vpop.f32.mrb[0].mxu0
      %2571 = vmatprep.mubr.bf16.mxu0 0
      %2572 = vmatmul.mubr.bf16.gmra.mrb[0].mxu0 %v2415
      %v2573 = vpop.f32.mrb[0].mxu0
      %v2574 = vadd.f32 0.0, %v2573
      %v2575 = vpop.f32.mrb[0].mxu0
      %v2576 = vpop.f32.mrb[0].mxu0
      %v2577 = vadd.f32 0.0, %v2576
      %v2578 = vpop.f32.mrb[0].mxu0
      %2579 = vmatprep.mubr.bf16.mxu0 0
      %2580 = vmatmul.mubr.bf16.gmra.mrb[0].mxu0 %v2416
      %v2581 = vpop.f32.mrb[0].mxu0
      %v2582 = vadd.f32 0.0, %v2581
      %v2583 = vpop.f32.mrb[0].mxu0
      %v2584 = vpop.f32.mrb[0].mxu0
      %v2585 = vadd.f32 0.0, %v2584
      %v2586 = vpop.f32.mrb[0].mxu0
      %2587 = vmatprep.mubr.bf16.mxu0 0
      %2588 = vmatmul.mubr.bf16.gmra.mrb[0].mxu0 %v2417
      %v2589 = vpop.f32.mrb[0].mxu0
      %v2590 = vadd.f32 0.0, %v2589
      %v2591 = vpop.f32.mrb[0].mxu0
      %v2592 = vpop.f32.mrb[0].mxu0
      %v2593 = vadd.f32 0.0, %v2592
      %v2594 = vpop.f32.mrb[0].mxu0
      %2595 = vmatprep.mubr.bf16.mxu0 0
      %2596 = vmatmul.mubr.bf16.gmra.mrb[0].mxu0 %v2418
      %v2597 = vpop.f32.mrb[0].mxu0
      %v2598 = vadd.f32 0.0, %v2597
      %v2599 = vpop.f32.mrb[0].mxu0
      %v2600 = vpop.f32.mrb[0].mxu0
      %v2601 = vadd.f32 0.0, %v2600
      %v2602 = vpop.f32.mrb[0].mxu0
      %2603 = vmatprep.mubr.bf16.mxu0 0
      %2604 = vmatmul.mubr.bf16.gmra.mrb[0].mxu0 %v2419
      %v2605 = vpop.f32.mrb[0].mxu0
      %v2606 = vadd.f32 0.0, %v2605
      %v2607 = vpop.f32.mrb[0].mxu0
      %v2608 = vpop.f32.mrb[0].mxu0
      %v2609 = vadd.f32 0.0, %v2608
      %v2610 = vpop.f32.mrb[0].mxu0
      %2611 = vmatprep.mubr.bf16.mxu0 0
      %2612 = vmatmul.mubr.bf16.gmra.mrb[0].mxu0 %v2420
      %v2613 = vpop.f32.mrb[0].mxu0
      %v2614 = vadd.f32 0.0, %v2613
      %v2615 = vpop.f32.mrb[0].mxu0
      %v2616 = vpop.f32.mrb[0].mxu0
      %v2617 = vadd.f32 0.0, %v2616
      %v2618 = vpop.f32.mrb[0].mxu0
      %2619 = vmatprep.mubr.bf16.mxu0 0
      %2620 = vmatmul.mubr.bf16.gmra.mrb[0].mxu0 %v2421
      %v2621 = vpop.f32.mrb[0].mxu0
      %v2622 = vadd.f32 0.0, %v2621
      %v2623 = vpop.f32.mrb[0].mxu0
      %v2624 = vpop.f32.mrb[0].mxu0
      %v2625 = vadd.f32 0.0, %v2624
      %v2626 = vpop.f32.mrb[0].mxu0
      %2627 = vmatprep.mubr.bf16.mxu0 0
      %2628 = vmatmul.mubr.bf16.gmra.mrb[0].mxu0 %v2422
      %v2629 = vpop.f32.mrb[0].mxu0
      %v2630 = vadd.f32 0.0, %v2629
      %v2631 = vpop.f32.mrb[0].mxu0
      %v2632 = vpop.f32.mrb[0].mxu0
      %v2633 = vadd.f32 0.0, %v2632
      %v2634 = vpop.f32.mrb[0].mxu0
      %2635 = vmatprep.mubr.bf16.mxu0 0
      %2636 = vmatmul.mubr.bf16.gmra.mrb[0].mxu0 %v2423
      %v2637 = vpop.f32.mrb[0].mxu0
      %v2638 = vadd.f32 0.0, %v2637
      %v2639 = vpop.f32.mrb[0].mxu0
      %v2640 = vpop.f32.mrb[0].mxu0
      %v2641 = vadd.f32 0.0, %v2640
      %v2642 = vpop.f32.mrb[0].mxu0
      %2643 = vmatprep.mubr.bf16.mxu0 0
      %2644 = vmatmul.mubr.bf16.gmra.mrb[0].mxu0 %v2424
      %v2645 = vpop.f32.mrb[0].mxu0
      %v2646 = vadd.f32 0.0, %v2645
      %v2647 = vpop.f32.mrb[0].mxu0
      %v2648 = vpop.f32.mrb[0].mxu0
      %v2649 = vadd.f32 0.0, %v2648
      %v2650 = vpop.f32.mrb[0].mxu0
      %2651 = vmatprep.mubr.bf16.mxu0 0
      %2652 = vmatmul.mubr.bf16.gmra.mrb[0].mxu0 %v2425
      %v2653 = vpop.f32.mrb[0].mxu0
      %v2654 = vadd.f32 0.0, %v2653
      %v2655 = vpop.f32.mrb[0].mxu0
      %v2656 = vpop.f32.mrb[0].mxu0
      %v2657 = vadd.f32 0.0, %v2656
      %v2658 = vpop.f32.mrb[0].mxu0
      %2659 = vdwg.mxu0
      %v2660 = vadd.f32 %v2339, %v2526
      %v2661 = vadd.f32 %v2340, %v2529
      %v2662 = vadd.f32 %v2341, %v2534
      %v2663 = vadd.f32 %v2342, %v2537
      %v2664 = vadd.f32 %v2343, %v2542
      %v2665 = vadd.f32 %v2344, %v2545
      %v2666 = vadd.f32 %v2345, %v2550
      %v2667 = vadd.f32 %v2346, %v2553
      %v2668 = vadd.f32 %v2347, %v2558
      %v2669 = vadd.f32 %v2348, %v2561
      %v2670 = vadd.f32 %v2349, %v2566
      %v2671 = vadd.f32 %v2350, %v2569
      %v2672 = vadd.f32 %v2351, %v2574
      %v2673 = vadd.f32 %v2352, %v2577
      %v2674 = vadd.f32 %v2353, %v2582
      %v2675 = vadd.f32 %v2354, %v2585
      %v2676 = vadd.f32 %v2355, %v2590
      %v2677 = vadd.f32 %v2356, %v2593
      %v2678 = vadd.f32 %v2357, %v2598
      %v2679 = vadd.f32 %v2358, %v2601
      %v2680 = vadd.f32 %v2359, %v2606
      %v2681 = vadd.f32 %v2360, %v2609
      %v2682 = vadd.f32 %v2361, %v2614
      %v2683 = vadd.f32 %v2362, %v2617
      %v2684 = vadd.f32 %v2363, %v2622
      %v2685 = vadd.f32 %v2364, %v2625
      %v2686 = vadd.f32 %v2365, %v2630
      %v2687 = vadd.f32 %v2366, %v2633
      %v2688 = vadd.f32 %v2367, %v2638
      %v2689 = vadd.f32 %v2368, %v2641
      %v2690 = vadd.f32 %v2369, %v2646
      %v2691 = vadd.f32 %v2370, %v2649
      %v2692 = vadd.f32 %v2371, %v2654
      %v2693 = vadd.f32 %v2372, %v2657
      %s2694 = sadd.s32 %s195, 70
      %s2695 = scalar_lea.vmem %s183, %s2694
      %v2696 = vld [vmem:[%s2695] sm:$0xff]
      %v2697 = vld [vmem:[%s2695 + $0x8] sm:$0xff]
      %v2698 = vld [vmem:[%s2695 + $0x10] sm:$0xff]
      %v2699 = vld [vmem:[%s2695 + $0x18] sm:$0xff]
      %v2700 = vld [vmem:[%s2695 + $0x20] sm:$0xff]
      %v2701 = vld [vmem:[%s2695 + $0x28] sm:$0xff]
      %v2702 = vld [vmem:[%s2695 + $0x30] sm:$0xff]
      %v2703 = vld [vmem:[%s2695 + $0x38] sm:$0xff]
      %v2704 = vld [vmem:[%s2695 + $0x40] sm:$0xff]
      %v2705 = vld [vmem:[%s2695 + $0x48] sm:$0xff]
      %v2706 = vld [vmem:[%s2695 + $0x50] sm:$0xff]
      %v2707 = vld [vmem:[%s2695 + $0x58] sm:$0xff]
      %v2708 = vld [vmem:[%s2695 + $0x60] sm:$0xff]
      %v2709 = vld [vmem:[%s2695 + $0x68] sm:$0xff]
      %v2710 = vld [vmem:[%s2695 + $0x70] sm:$0xff]
      %v2711 = vld [vmem:[%s2695 + $0x78] sm:$0xff]
      %v2712 = vld [vmem:[%s2695 + $0x80] sm:$0xff]
      %v2713 = vld [vmem:[%s2695 + $0x88] sm:$0xff]
      %v2714 = vld [vmem:[%s2695 + $0x90] sm:$0xff]
      %v2715 = vld [vmem:[%s2695 + $0x98] sm:$0xff]
      %v2716 = vld [vmem:[%s2695 + $0xa0] sm:$0xff]
      %v2717 = vld [vmem:[%s2695 + $0xa8] sm:$0xff]
      %v2718 = vld [vmem:[%s2695 + $0xb0] sm:$0xff]
      %v2719 = vld [vmem:[%s2695 + $0xb8] sm:$0xff]
      %v2720 = vld [vmem:[%s2695 + $0xc0] sm:$0xff]
      %v2721 = vld [vmem:[%s2695 + $0xc8] sm:$0xff]
      %v2722 = vld [vmem:[%s2695 + $0xd0] sm:$0xff]
      %v2723 = vld [vmem:[%s2695 + $0xd8] sm:$0xff]
      %v2724 = vld [vmem:[%s2695 + $0xe0] sm:$0xff]
      %v2725 = vld [vmem:[%s2695 + $0xe8] sm:$0xff]
      %v2726 = vld [vmem:[%s2695 + $0xf0] sm:$0xff]
      %v2727 = vld [vmem:[%s2695 + $0xf8] sm:$0xff]
      %v2728 = vld [vmem:[%s2695 + $0x100] sm:$0xff]
      %v2729 = vld [vmem:[%s2695 + $0x108] sm:$0xff]
      %v2730 = vpack.c.bf16 %v2697, %v2696
      %v2731 = vpack.c.bf16 %v2699, %v2698
      %v2732 = vpack.c.bf16 %v2701, %v2700
      %v2733 = vpack.c.bf16 %v2703, %v2702
      %v2734 = vpack.c.bf16 %v2705, %v2704
      %v2735 = vpack.c.bf16 %v2707, %v2706
      %v2736 = vpack.c.bf16 %v2709, %v2708
      %v2737 = vpack.c.bf16 %v2711, %v2710
      %v2738 = vpack.c.bf16 %v2713, %v2712
      %v2739 = vpack.c.bf16 %v2715, %v2714
      %v2740 = vpack.c.bf16 %v2717, %v2716
      %v2741 = vpack.c.bf16 %v2719, %v2718
      %v2742 = vpack.c.bf16 %v2721, %v2720
      %v2743 = vpack.c.bf16 %v2723, %v2722
      %v2744 = vpack.c.bf16 %v2725, %v2724
      %v2745 = vpack.c.bf16 %v2727, %v2726
      %v2746 = vpack.c.bf16 %v2729, %v2728
      %s2747 = scalar_lea.vmem %s1, 512
      %v2748 = vld [vmem:[%s2747] sm:$0xf]
      %v2749 = vld [vmem:[%s2747 + $0x4] sm:$0xf]
      %v2750 = vld [vmem:[%s2747 + $0x8] sm:$0xf]
      %v2751 = vld [vmem:[%s2747 + $0xc] sm:$0xf]
      %v2752 = vld [vmem:[%s2747 + $0x10] sm:$0xf]
      %v2753 = vld [vmem:[%s2747 + $0x14] sm:$0xf]
      %v2754 = vld [vmem:[%s2747 + $0x18] sm:$0xf]
      %v2755 = vld [vmem:[%s2747 + $0x1c] sm:$0xf]
      %v2756 = vld [vmem:[%s2747 + $0x20] sm:$0xf]
      %v2757 = vld [vmem:[%s2747 + $0x24] sm:$0xf]
      %v2758 = vld [vmem:[%s2747 + $0x28] sm:$0xf]
      %v2759 = vld [vmem:[%s2747 + $0x2c] sm:$0xf]
      %v2760 = vld [vmem:[%s2747 + $0x30] sm:$0xf]
      %v2761 = vld [vmem:[%s2747 + $0x34] sm:$0xf]
      %v2762 = vld [vmem:[%s2747 + $0x38] sm:$0xf]
      %v2763 = vld [vmem:[%s2747 + $0x3c] sm:$0xf]
      %v2780 = vunpack.c.l.b16 %v2748
      %v2781 = vunpack.c.l.b16 %v2749
      %v2782 = vunpack.c.l.b16 %v2750
      %v2783 = vunpack.c.l.b16 %v2751
      %v2784 = vunpack.c.l.b16 %v2752
      %v2785 = vunpack.c.l.b16 %v2753
      %v2786 = vunpack.c.l.b16 %v2754
      %v2787 = vunpack.c.l.b16 %v2755
      %v2788 = vunpack.c.l.b16 %v2756
      %v2789 = vunpack.c.l.b16 %v2757
      %v2790 = vunpack.c.l.b16 %v2758
      %v2791 = vunpack.c.l.b16 %v2759
      %v2792 = vunpack.c.l.b16 %v2760
      %v2793 = vunpack.c.l.b16 %v2761
      %v2794 = vunpack.c.l.b16 %v2762
      %v2795 = vunpack.c.l.b16 %v2763
      %v2796 = vpack.c.b16 %v2781, %v2780
      %v2797 = vpack.c.b16 %v2783, %v2782
      %v2798 = vpack.c.b16 %v2785, %v2784
      %v2799 = vpack.c.b16 %v2787, %v2786
      %v2800 = vpack.c.b16 %v2789, %v2788
      %v2801 = vpack.c.b16 %v2791, %v2790
      %v2802 = vpack.c.b16 %v2793, %v2792
      %v2803 = vpack.c.b16 %v2795, %v2794
      %2812 = vmatprep.subr.bf16.mxu0 0
      %2813 = vmatpush1.bf16.msra.mxu0 %v2796
      %2814 = vmatprep.subr.bf16.mxu0 0
      %2815 = vmatpush1.bf16.msra.mxu0 %v2797
      %2816 = vmatprep.subr.bf16.mxu0 0
      %2817 = vmatpush1.bf16.msra.mxu0 %v2798
      %2818 = vmatprep.subr.bf16.mxu0 0
      %2819 = vmatpush1.bf16.msra.mxu0 %v2799
      %2820 = vmatprep.subr.bf16.mxu0 0
      %2821 = vmatpush1.bf16.msra.mxu0 %v2800
      %2822 = vmatprep.subr.bf16.mxu0 0
      %2823 = vmatpush1.bf16.msra.mxu0 %v2801
      %2824 = vmatprep.subr.bf16.mxu0 0
      %2825 = vmatpush1.bf16.msra.mxu0 %v2802
      %2826 = vmatprep.subr.bf16.mxu0 0
      %2827 = vmatpush1.bf16.msra.mxu0 %v2803
      %2828 = vmatprep.subr.bf16.mxu0 0
      %2829 = vmatpush1.bf16.msra.mxu0 0
      %2830 = vmatprep.subr.bf16.mxu0 0
      %2831 = vmatpush1.bf16.msra.mxu0 0
      %2832 = vmatprep.subr.bf16.mxu0 0
      %2833 = vmatpush1.bf16.msra.mxu0 0
      %2834 = vmatprep.subr.bf16.mxu0 0
      %2835 = vmatpush1.bf16.msra.mxu0 0
      %2836 = vmatprep.subr.bf16.mxu0 0
      %2837 = vmatpush1.bf16.msra.mxu0 0
      %2838 = vmatprep.subr.bf16.mxu0 0
      %2839 = vmatpush1.bf16.msra.mxu0 0
      %2840 = vmatprep.subr.bf16.mxu0 0
      %2841 = vmatpush1.bf16.msra.mxu0 0
      %2842 = vmatprep.subr.bf16.mxu0 0
      %2843 = vmatpush1.bf16.msra.mxu0 0
      %2844 = vmatprep.mubr.bf16.mxu0 0
      %2845 = vmatmul.mubr.bf16.gmra.mrb[0].mxu0 %v2730
      %v2846 = vpop.f32.mrb[0].mxu0
      %v2847 = vadd.f32 0.0, %v2846
      %v2848 = vpop.f32.mrb[0].mxu0
      %v2849 = vpop.f32.mrb[0].mxu0
      %v2850 = vadd.f32 0.0, %v2849
      %v2851 = vpop.f32.mrb[0].mxu0
      %2852 = vmatprep.mubr.bf16.mxu0 0
      %2853 = vmatmul.mubr.bf16.gmra.mrb[0].mxu0 %v2731
      %v2854 = vpop.f32.mrb[0].mxu0
      %v2855 = vadd.f32 0.0, %v2854
      %v2856 = vpop.f32.mrb[0].mxu0
      %v2857 = vpop.f32.mrb[0].mxu0
      %v2858 = vadd.f32 0.0, %v2857
      %v2859 = vpop.f32.mrb[0].mxu0
      %2860 = vmatprep.mubr.bf16.mxu0 0
      %2861 = vmatmul.mubr.bf16.gmra.mrb[0].mxu0 %v2732
      %v2862 = vpop.f32.mrb[0].mxu0
      %v2863 = vadd.f32 0.0, %v2862
      %v2864 = vpop.f32.mrb[0].mxu0
      %v2865 = vpop.f32.mrb[0].mxu0
      %v2866 = vadd.f32 0.0, %v2865
      %v2867 = vpop.f32.mrb[0].mxu0
      %2868 = vmatprep.mubr.bf16.mxu0 0
      %2869 = vmatmul.mubr.bf16.gmra.mrb[0].mxu0 %v2733
      %v2870 = vpop.f32.mrb[0].mxu0
      %v2871 = vadd.f32 0.0, %v2870
      %v2872 = vpop.f32.mrb[0].mxu0
      %v2873 = vpop.f32.mrb[0].mxu0
      %v2874 = vadd.f32 0.0, %v2873
      %v2875 = vpop.f32.mrb[0].mxu0
      %2876 = vmatprep.mubr.bf16.mxu0 0
      %2877 = vmatmul.mubr.bf16.gmra.mrb[0].mxu0 %v2734
      %v2878 = vpop.f32.mrb[0].mxu0
      %v2879 = vadd.f32 0.0, %v2878
      %v2880 = vpop.f32.mrb[0].mxu0
      %v2881 = vpop.f32.mrb[0].mxu0
      %v2882 = vadd.f32 0.0, %v2881
      %v2883 = vpop.f32.mrb[0].mxu0
      %2884 = vmatprep.mubr.bf16.mxu0 0
      %2885 = vmatmul.mubr.bf16.gmra.mrb[0].mxu0 %v2735
      %v2886 = vpop.f32.mrb[0].mxu0
      %v2887 = vadd.f32 0.0, %v2886
      %v2888 = vpop.f32.mrb[0].mxu0
      %v2889 = vpop.f32.mrb[0].mxu0
      %v2890 = vadd.f32 0.0, %v2889
      %v2891 = vpop.f32.mrb[0].mxu0
      %2892 = vmatprep.mubr.bf16.mxu0 0
      %2893 = vmatmul.mubr.bf16.gmra.mrb[0].mxu0 %v2736
      %v2894 = vpop.f32.mrb[0].mxu0
      %v2895 = vadd.f32 0.0, %v2894
      %v2896 = vpop.f32.mrb[0].mxu0
      %v2897 = vpop.f32.mrb[0].mxu0
      %v2898 = vadd.f32 0.0, %v2897
      %v2899 = vpop.f32.mrb[0].mxu0
      %2900 = vmatprep.mubr.bf16.mxu0 0
      %2901 = vmatmul.mubr.bf16.gmra.mrb[0].mxu0 %v2737
      %v2902 = vpop.f32.mrb[0].mxu0
      %v2903 = vadd.f32 0.0, %v2902
      %v2904 = vpop.f32.mrb[0].mxu0
      %v2905 = vpop.f32.mrb[0].mxu0
      %v2906 = vadd.f32 0.0, %v2905
      %v2907 = vpop.f32.mrb[0].mxu0
      %2908 = vmatprep.mubr.bf16.mxu0 0
      %2909 = vmatmul.mubr.bf16.gmra.mrb[0].mxu0 %v2738
      %v2910 = vpop.f32.mrb[0].mxu0
      %v2911 = vadd.f32 0.0, %v2910
      %v2912 = vpop.f32.mrb[0].mxu0
      %v2913 = vpop.f32.mrb[0].mxu0
      %v2914 = vadd.f32 0.0, %v2913
      %v2915 = vpop.f32.mrb[0].mxu0
      %2916 = vmatprep.mubr.bf16.mxu0 0
      %2917 = vmatmul.mubr.bf16.gmra.mrb[0].mxu0 %v2739
      %v2918 = vpop.f32.mrb[0].mxu0
      %v2919 = vadd.f32 0.0, %v2918
      %v2920 = vpop.f32.mrb[0].mxu0
      %v2921 = vpop.f32.mrb[0].mxu0
      %v2922 = vadd.f32 0.0, %v2921
      %v2923 = vpop.f32.mrb[0].mxu0
      %2924 = vmatprep.mubr.bf16.mxu0 0
      %2925 = vmatmul.mubr.bf16.gmra.mrb[0].mxu0 %v2740
      %v2926 = vpop.f32.mrb[0].mxu0
      %v2927 = vadd.f32 0.0, %v2926
      %v2928 = vpop.f32.mrb[0].mxu0
      %v2929 = vpop.f32.mrb[0].mxu0
      %v2930 = vadd.f32 0.0, %v2929
      %v2931 = vpop.f32.mrb[0].mxu0
      %2932 = vmatprep.mubr.bf16.mxu0 0
      %2933 = vmatmul.mubr.bf16.gmra.mrb[0].mxu0 %v2741
      %v2934 = vpop.f32.mrb[0].mxu0
      %v2935 = vadd.f32 0.0, %v2934
      %v2936 = vpop.f32.mrb[0].mxu0
      %v2937 = vpop.f32.mrb[0].mxu0
      %v2938 = vadd.f32 0.0, %v2937
      %v2939 = vpop.f32.mrb[0].mxu0
      %2940 = vmatprep.mubr.bf16.mxu0 0
      %2941 = vmatmul.mubr.bf16.gmra.mrb[0].mxu0 %v2742
      %v2942 = vpop.f32.mrb[0].mxu0
      %v2943 = vadd.f32 0.0, %v2942
      %v2944 = vpop.f32.mrb[0].mxu0
      %v2945 = vpop.f32.mrb[0].mxu0
      %v2946 = vadd.f32 0.0, %v2945
      %v2947 = vpop.f32.mrb[0].mxu0
      %2948 = vmatprep.mubr.bf16.mxu0 0
      %2949 = vmatmul.mubr.bf16.gmra.mrb[0].mxu0 %v2743
      %v2950 = vpop.f32.mrb[0].mxu0
      %v2951 = vadd.f32 0.0, %v2950
      %v2952 = vpop.f32.mrb[0].mxu0
      %v2953 = vpop.f32.mrb[0].mxu0
      %v2954 = vadd.f32 0.0, %v2953
      %v2955 = vpop.f32.mrb[0].mxu0
      %2956 = vmatprep.mubr.bf16.mxu0 0
      %2957 = vmatmul.mubr.bf16.gmra.mrb[0].mxu0 %v2744
      %v2958 = vpop.f32.mrb[0].mxu0
      %v2959 = vadd.f32 0.0, %v2958
      %v2960 = vpop.f32.mrb[0].mxu0
      %v2961 = vpop.f32.mrb[0].mxu0
      %v2962 = vadd.f32 0.0, %v2961
      %v2963 = vpop.f32.mrb[0].mxu0
      %2964 = vmatprep.mubr.bf16.mxu0 0
      %2965 = vmatmul.mubr.bf16.gmra.mrb[0].mxu0 %v2745
      %v2966 = vpop.f32.mrb[0].mxu0
      %v2967 = vadd.f32 0.0, %v2966
      %v2968 = vpop.f32.mrb[0].mxu0
      %v2969 = vpop.f32.mrb[0].mxu0
      %v2970 = vadd.f32 0.0, %v2969
      %v2971 = vpop.f32.mrb[0].mxu0
      %2972 = vmatprep.mubr.bf16.mxu0 0
      %2973 = vmatmul.mubr.bf16.gmra.mrb[0].mxu0 %v2746
      %v2974 = vpop.f32.mrb[0].mxu0
      %v2975 = vadd.f32 0.0, %v2974
      %v2976 = vpop.f32.mrb[0].mxu0
      %v2977 = vpop.f32.mrb[0].mxu0
      %v2978 = vadd.f32 0.0, %v2977
      %v2979 = vpop.f32.mrb[0].mxu0
      %2980 = vdwg.mxu0
      %v2981 = vadd.f32 %v2660, %v2847
      %v2982 = vadd.f32 %v2661, %v2850
      %v2983 = vadd.f32 %v2662, %v2855
      %v2984 = vadd.f32 %v2663, %v2858
      %v2985 = vadd.f32 %v2664, %v2863
      %v2986 = vadd.f32 %v2665, %v2866
      %v2987 = vadd.f32 %v2666, %v2871
      %v2988 = vadd.f32 %v2667, %v2874
      %v2989 = vadd.f32 %v2668, %v2879
      %v2990 = vadd.f32 %v2669, %v2882
      %v2991 = vadd.f32 %v2670, %v2887
      %v2992 = vadd.f32 %v2671, %v2890
      %v2993 = vadd.f32 %v2672, %v2895
      %v2994 = vadd.f32 %v2673, %v2898
      %v2995 = vadd.f32 %v2674, %v2903
      %v2996 = vadd.f32 %v2675, %v2906
      %v2997 = vadd.f32 %v2676, %v2911
      %v2998 = vadd.f32 %v2677, %v2914
      %v2999 = vadd.f32 %v2678, %v2919
      %v3000 = vadd.f32 %v2679, %v2922
      %v3001 = vadd.f32 %v2680, %v2927
      %v3002 = vadd.f32 %v2681, %v2930
      %v3003 = vadd.f32 %v2682, %v2935
      %v3004 = vadd.f32 %v2683, %v2938
      %v3005 = vadd.f32 %v2684, %v2943
      %v3006 = vadd.f32 %v2685, %v2946
      %v3007 = vadd.f32 %v2686, %v2951
      %v3008 = vadd.f32 %v2687, %v2954
      %v3009 = vadd.f32 %v2688, %v2959
      %v3010 = vadd.f32 %v2689, %v2962
      %v3011 = vadd.f32 %v2690, %v2967
      %v3012 = vadd.f32 %v2691, %v2970
      %v3013 = vadd.f32 %v2692, %v2975
      %v3014 = vadd.f32 %v2693, %v2978
      %v3015 = vld [vmem:[%s2] sm:$0x1]
      %v3017 = vlaneseq
      %v3018 = vshrl.u32 %v3017, 7
      %v3019 = vsub.s32 0, %v3018
      %v3020 = vrot.slane %v3015, %v3019
      %v3022 = vadd.f32 %v2981, %v3020
      %v3023 = vadd.f32 %v2982, %v3020
      %v3024 = vadd.f32 %v2983, %v3020
      %v3025 = vadd.f32 %v2984, %v3020
      %v3026 = vadd.f32 %v2985, %v3020
      %v3027 = vadd.f32 %v2986, %v3020
      %v3028 = vadd.f32 %v2987, %v3020
      %v3029 = vadd.f32 %v2988, %v3020
      %v3030 = vadd.f32 %v2989, %v3020
      %v3031 = vadd.f32 %v2990, %v3020
      %v3032 = vadd.f32 %v2991, %v3020
      %v3033 = vadd.f32 %v2992, %v3020
      %v3034 = vadd.f32 %v2993, %v3020
      %v3035 = vadd.f32 %v2994, %v3020
      %v3036 = vadd.f32 %v2995, %v3020
      %v3037 = vadd.f32 %v2996, %v3020
      %v3038 = vadd.f32 %v2997, %v3020
      %v3039 = vadd.f32 %v2998, %v3020
      %v3040 = vadd.f32 %v2999, %v3020
      %v3041 = vadd.f32 %v3000, %v3020
      %v3042 = vadd.f32 %v3001, %v3020
      %v3043 = vadd.f32 %v3002, %v3020
      %v3044 = vadd.f32 %v3003, %v3020
      %v3045 = vadd.f32 %v3004, %v3020
      %v3046 = vadd.f32 %v3005, %v3020
      %v3047 = vadd.f32 %v3006, %v3020
      %v3048 = vadd.f32 %v3007, %v3020
      %v3049 = vadd.f32 %v3008, %v3020
      %v3050 = vadd.f32 %v3009, %v3020
      %v3051 = vadd.f32 %v3010, %v3020
      %v3052 = vadd.f32 %v3011, %v3020
      %v3053 = vadd.f32 %v3012, %v3020
      %v3054 = vadd.f32 %v3013, %v3020
      %v3055 = vadd.f32 %v3014, %v3020
      %v3056 = vmax.f32 %v3022, 0.0
      %v3057 = vmax.f32 %v3023, 0.0
      %v3058 = vmax.f32 %v3024, 0.0
      %v3059 = vmax.f32 %v3025, 0.0
      %v3060 = vmax.f32 %v3026, 0.0
      %v3061 = vmax.f32 %v3027, 0.0
      %v3062 = vmax.f32 %v3028, 0.0
      %v3063 = vmax.f32 %v3029, 0.0
      %v3064 = vmax.f32 %v3030, 0.0
      %v3065 = vmax.f32 %v3031, 0.0
      %v3066 = vmax.f32 %v3032, 0.0
      %v3067 = vmax.f32 %v3033, 0.0
      %v3068 = vmax.f32 %v3034, 0.0
      %v3069 = vmax.f32 %v3035, 0.0
      %v3070 = vmax.f32 %v3036, 0.0
      %v3071 = vmax.f32 %v3037, 0.0
      %v3072 = vmax.f32 %v3038, 0.0
      %v3073 = vmax.f32 %v3039, 0.0
      %v3074 = vmax.f32 %v3040, 0.0
      %v3075 = vmax.f32 %v3041, 0.0
      %v3076 = vmax.f32 %v3042, 0.0
      %v3077 = vmax.f32 %v3043, 0.0
      %v3078 = vmax.f32 %v3044, 0.0
      %v3079 = vmax.f32 %v3045, 0.0
      %v3080 = vmax.f32 %v3046, 0.0
      %v3081 = vmax.f32 %v3047, 0.0
      %v3082 = vmax.f32 %v3048, 0.0
      %v3083 = vmax.f32 %v3049, 0.0
      %v3084 = vmax.f32 %v3050, 0.0
      %v3085 = vmax.f32 %v3051, 0.0
      %v3086 = vmax.f32 %v3052, 0.0
      %v3087 = vmax.f32 %v3053, 0.0
      %v3088 = vmax.f32 %v3054, 0.0
      %v3089 = vmax.f32 %v3055, 0.0
      %3090 = vst [vmem:[%s192] sm:$0xff] %v3056
      %3091 = vst [vmem:[%s192 + $0x8] sm:$0xff] %v3057
      %3092 = vst [vmem:[%s192 + $0x10] sm:$0xff] %v3058
      %3093 = vst [vmem:[%s192 + $0x18] sm:$0xff] %v3059
      %3094 = vst [vmem:[%s192 + $0x20] sm:$0xff] %v3060
      %3095 = vst [vmem:[%s192 + $0x28] sm:$0xff] %v3061
      %3096 = vst [vmem:[%s192 + $0x30] sm:$0xff] %v3062
      %3097 = vst [vmem:[%s192 + $0x38] sm:$0xff] %v3063
      %3098 = vst [vmem:[%s192 + $0x40] sm:$0xff] %v3064
      %3099 = vst [vmem:[%s192 + $0x48] sm:$0xff] %v3065
      %3100 = vst [vmem:[%s192 + $0x50] sm:$0xff] %v3066
      %3101 = vst [vmem:[%s192 + $0x58] sm:$0xff] %v3067
      %3102 = vst [vmem:[%s192 + $0x60] sm:$0xff] %v3068
      %3103 = vst [vmem:[%s192 + $0x68] sm:$0xff] %v3069
      %3104 = vst [vmem:[%s192 + $0x70] sm:$0xff] %v3070
      %3105 = vst [vmem:[%s192 + $0x78] sm:$0xff] %v3071
      %3106 = vst [vmem:[%s192 + $0x80] sm:$0xff] %v3072
      %3107 = vst [vmem:[%s192 + $0x88] sm:$0xff] %v3073
      %3108 = vst [vmem:[%s192 + $0x90] sm:$0xff] %v3074
      %3109 = vst [vmem:[%s192 + $0x98] sm:$0xff] %v3075
      %3110 = vst [vmem:[%s192 + $0xa0] sm:$0xff] %v3076
      %3111 = vst [vmem:[%s192 + $0xa8] sm:$0xff] %v3077
      %3112 = vst [vmem:[%s192 + $0xb0] sm:$0xff] %v3078
      %3113 = vst [vmem:[%s192 + $0xb8] sm:$0xff] %v3079
      %3114 = vst [vmem:[%s192 + $0xc0] sm:$0xff] %v3080
      %3115 = vst [vmem:[%s192 + $0xc8] sm:$0xff] %v3081
      %3116 = vst [vmem:[%s192 + $0xd0] sm:$0xff] %v3082
      %3117 = vst [vmem:[%s192 + $0xd8] sm:$0xff] %v3083
      %3118 = vst [vmem:[%s192 + $0xe0] sm:$0xff] %v3084
      %3119 = vst [vmem:[%s192 + $0xe8] sm:$0xff] %v3085
      %3120 = vst [vmem:[%s192 + $0xf0] sm:$0xff] %v3086
      %3121 = vst [vmem:[%s192 + $0xf8] sm:$0xff] %v3087
      %3122 = vst [vmem:[%s192 + $0x100] sm:$0xff] %v3088
      %3123 = vst [vmem:[%s192 + $0x108] sm:$0xff] %v3089
      %s3124 = smul.u32 34, %s19
      %p3125 = scmp.lt.s32.totalorder %s18, 1
      %s3126 = scalar_select %p3125, %s18, 1
      %p3127 = scmp.lt.s32.totalorder %s3124, 135
      %s3128 = scalar_select %p3127, %s3124, 135
      %s3129 = smul.addr %s3126, 136
      %s3130 = sadd.s32 %s3128, %s3129
      %s3131 = smul.addr %s3130, 8
      %s3132 = scalar_lea.vmem %s3, %s3131
      // Predicated region
      $region33: #{student_forward.5} parent=31 // pred_check
        %p3133 = pneg %p114
      $region34: #{student_forward.5} parent=31 // pred_check_branch
        %3135 = sbr.rel (%p3133) target = $region36
      $region35: #{student_forward.5} parent=31 // pred_region
        %s3136 = smul.u32 34, %s19
      $region36: #{student_forward.5} parent=31 // pred_fallthru
        _
    $region32: #{student_forward.5} parent=5 // pred_fallthru
      _
    %p3137 = scmp.le.s32.totalorder 2, %s9
    // Predicated region
    $region37: #{student_forward.5} parent=5 // pred_check
      %p3138 = pneg %p3137
    $region38: #{student_forward.5} parent=5 // pred_check_branch
      %3140 = sbr.rel (%p3138) target = $region40
    $region39: #{student_forward.5} parent=5 // pred_region
      %s3141 = ssub.s32 %s9, 2
      // Predicated region
      $region41: #{student_forward.5} parent=39 // pred_check
        %p3142 = pneg %p120
      $region42: #{student_forward.5} parent=39 // pred_check_branch
        %3144 = sbr.rel (%p3142) target = $region44
      $region43: #{student_forward.5} parent=39 // pred_region
        %s3145 = smul.u32 34, %s21
        %p3146 = scmp.lt.s32.totalorder %s20, 1
        %s3147 = scalar_select %p3146, %s20, 1
        %p3148 = scmp.lt.s32.totalorder %s3145, 135
        %s3149 = scalar_select %p3148, %s3145, 135
        %s3150 = smul.addr %s3147, 136
        %s3151 = sadd.s32 %s3149, %s3150
        %s3152 = smul.addr %s3151, 8
        %s3153 = scalar_lea.vmem %s3, %s3152
      $region44: #{student_forward.5} parent=39 // pred_fallthru
        _
    $region40: #{student_forward.5} parent=5 // pred_fallthru
      _
  $region6: #{student_forward.5} parent=0 // loop_footer
    %s13 = sadd.s32 1, %s9
  $region7: #{student_forward.5} parent=0 // loop_footer_branch
    %8 = sbr.rel target = $region3
  $region8: #{student_forward.5} parent=0 // loop_exit
    _

// kernel: student_forward.8
$region0: #{student_forward.8}
  #allocation0 [shape = 'u32[]', space=smem, size = 0x4, offset = 0x4, fixed_abs, tag = 'smem constant byte address 0x4 - core index']
  #allocation1 [shape = 'u32[144,128]{1,0:T(1,128)}', space=vmem, size = 0x12000, scoped, tag = 'internal scratch']
  %s0 = inlined_call_operand.vmem [shape: f32[2,328,128], index: 0, kind: input, shape index: {}]
  %s1 = inlined_call_operand.vmem [shape: bf16[9,128,128], index: 1, kind: input, shape index: {}]
  %s2 = inlined_call_operand.vmem [shape: f32[1,128], index: 2, kind: input, shape index: {}]
  %s3 = inlined_call_operand.vmem [shape: f32[2,288,128], index: 3, kind: output, shape index: {}]
  %s4 = sld [smem:[#allocation0]]
  $region45: #{student_forward.8} parent=0
    _
  %s6 = ssub.s32 1, %s4
  %s7 = scalar_select 0, %s6, %s4
  loop: start=0, step=1, limit=6
  $region2: #{student_forward.8} parent=0 // loop_pre_header
    _
  $region3: #{student_forward.8} parent=0 // loop_header
    %s9 = sphi 0, %s13
    %p10 = scmp.ge.s32.totalorder %s9, 6
    %s16 = sphi 0, %s28
    %s17 = sphi 0, %s24
    %s18 = sphi 0, %s16
    %s19 = sphi 0, %s17
    %s20 = sphi 0, %s18
    %s21 = sphi 0, %s19
    %s31 = sphi 0, %s33
    %s34 = sphi 0, %s31
    %s35 = sphi 0, %s34
    %s51 = sphi 0, %s35
    %s55 = sphi 0, %s55
    %s57 = sphi 0, %s55
    %s58 = sphi 0, %s57
    %s72 = sphi 0, %s58
    %s76 = sphi 0, %s76
    %s78 = sphi 0, %s76
    %s79 = sphi 0, %s78
    %s93 = sphi 0, %s79
    %s101 = sphi 0, %s103
    %s104 = sphi 0, %s101
    %s105 = sphi 0, %s104
    %s121 = sphi 0, %s105
  $region4: #{student_forward.8} parent=0 // loop_header_branch
    %12 = sbr.rel (%p10) target = $region8
  $region5: #{student_forward.8} parent=0 // loop_body
    %s14 = ssub.s32 %s9, 1
    %s15 = ssub.s32 %s9, 2
    %s22 = sadd.s32 1, %s17
    %p23 = scmp.ge.s32.totalorder %s22, 2
    %s24 = scalar_select %p23, 0, %s22
    %s25 = sadd.s32 1, %s16
    %s26 = scalar_select %p23, %s25, %s16
    %p27 = scmp.ge.s32.totalorder %s26, 2
    %s28 = scalar_select %p27, 0, %s26
    %s29 = ssub.s32 %s16, %s28
    %p30 = scmp.eq.s32.totalorder %s29, 0
    %s32 = sadd.s32 %s31, 1
    %s33 = scalar_select %p30, %s31, %s32
    %p36 = pneg %p30
    %p37 = scmp.eq.s32.totalorder %s9, 3
    %p38 = por %p36, %p37
    %p39 = scmp.ne.s32.totalorder %s31, %s34
    %p40 = scmp.eq.s32.totalorder %s9, 0
    %p41 = por %p39, %p40
    %p42 = scmp.ne.s32.totalorder %s31, %s34
    %p43 = scmp.eq.s32.totalorder %s14, 3
    %p44 = por %p42, %p43
    %p45 = scmp.ne.s32.totalorder %s34, %s35
    %p46 = scmp.eq.s32.totalorder %s14, 0
    %p47 = por %p45, %p46
    %p48 = scmp.ne.s32.totalorder %s34, %s35
    %p49 = scmp.eq.s32.totalorder %s15, 3
    %p50 = por %p48, %p49
    %p52 = scmp.ne.s32.totalorder %s35, %s51
    %p53 = scmp.eq.s32.totalorder %s15, 0
    %p54 = por %p52, %p53
    %s56 = sadd.s32 %s55, 1
    %p59 = scmp.eq.s32.totalorder %s9, 3
    %p60 = scmp.ne.s32.totalorder %s55, %s57
    %p61 = scmp.eq.s32.totalorder %s9, 0
    %p62 = por %p60, %p61
    %p63 = scmp.ne.s32.totalorder %s55, %s57
    %p64 = scmp.eq.s32.totalorder %s14, 3
    %p65 = por %p63, %p64
    %p66 = scmp.ne.s32.totalorder %s57, %s58
    %p67 = scmp.eq.s32.totalorder %s14, 0
    %p68 = por %p66, %p67
    %p69 = scmp.ne.s32.totalorder %s57, %s58
    %p70 = scmp.eq.s32.totalorder %s15, 3
    %p71 = por %p69, %p70
    %p73 = scmp.ne.s32.totalorder %s58, %s72
    %p74 = scmp.eq.s32.totalorder %s15, 0
    %p75 = por %p73, %p74
    %s77 = sadd.s32 %s76, 1
    %p80 = scmp.eq.s32.totalorder %s9, 3
    %p81 = scmp.ne.s32.totalorder %s76, %s78
    %p82 = scmp.eq.s32.totalorder %s9, 0
    %p83 = por %p81, %p82
    %p84 = scmp.ne.s32.totalorder %s76, %s78
    %p85 = scmp.eq.s32.totalorder %s14, 3
    %p86 = por %p84, %p85
    %p87 = scmp.ne.s32.totalorder %s78, %s79
    %p88 = scmp.eq.s32.totalorder %s14, 0
    %p89 = por %p87, %p88
    %p90 = scmp.ne.s32.totalorder %s78, %s79
    %p91 = scmp.eq.s32.totalorder %s15, 3
    %p92 = por %p90, %p91
    %p94 = scmp.ne.s32.totalorder %s79, %s93
    %p95 = scmp.eq.s32.totalorder %s15, 0
    %p96 = por %p94, %p95
    %s97 = ssub.s32 %s16, %s28
    %s98 = ssub.s32 %s17, %s24
    %s99 = sor.u32 %s97, %s98
    %p100 = scmp.eq.s32.totalorder %s99, 0
    %s102 = sadd.s32 %s101, 1
    %s103 = scalar_select %p100, %s101, %s102
    %p106 = pneg %p100
    %p107 = scmp.eq.s32.totalorder %s9, 3
    %p108 = por %p106, %p107
    %p109 = scmp.ne.s32.totalorder %s101, %s104
    %p110 = scmp.eq.s32.totalorder %s9, 0
    %p111 = por %p109, %p110
    %p112 = scmp.ne.s32.totalorder %s101, %s104
    %p113 = scmp.eq.s32.totalorder %s14, 3
    %p114 = por %p112, %p113
    %p115 = scmp.ne.s32.totalorder %s104, %s105
    %p116 = scmp.eq.s32.totalorder %s14, 0
    %p117 = por %p115, %p116
    %p118 = scmp.ne.s32.totalorder %s104, %s105
    %p119 = scmp.eq.s32.totalorder %s15, 3
    %p120 = por %p118, %p119
    %p122 = scmp.ne.s32.totalorder %s105, %s121
    %p123 = scmp.eq.s32.totalorder %s15, 0
    %p124 = por %p122, %p123
    %p125 = scmp.le.s32.totalorder 1, %s9
    %p126 = scmp.lt.s32.totalorder %s9, 5
    %p127 = pnand %p125, %p126
    %p128 = pneg %p127
    // Predicated region
    $region9: #{student_forward.8} parent=5 // pred_check
      _
    $region10: #{student_forward.8} parent=5 // pred_check_branch
      %130 = sbr.rel (%p127) target = $region12
    $region11: #{student_forward.8} parent=5 // pred_region
      %s131 = ssub.s32 %s9, 1
      // Predicated region
      $region13: #{student_forward.8} parent=11 // pred_check
        %p132 = pneg %p68
      $region14: #{student_forward.8} parent=11 // pred_check_branch
        %134 = sbr.rel (%p132) target = $region16
      $region15: #{student_forward.8} parent=11 // pred_region
        _
      $region16: #{student_forward.8} parent=11 // pred_fallthru
        _
      // Predicated region
      $region17: #{student_forward.8} parent=11 // pred_check
        %p135 = pneg %p89
      $region18: #{student_forward.8} parent=11 // pred_check_branch
        %137 = sbr.rel (%p135) target = $region20
      $region19: #{student_forward.8} parent=11 // pred_region
        _
      $region20: #{student_forward.8} parent=11 // pred_fallthru
        _
    $region12: #{student_forward.8} parent=5 // pred_fallthru
      _
    %p138 = scmp.lt.s32.totalorder %s9, 4
    // Predicated region
    $region21: #{student_forward.8} parent=5 // pred_check
      %p139 = pneg %p138
    $region22: #{student_forward.8} parent=5 // pred_check_branch
      %141 = sbr.rel (%p139) target = $region24
    $region23: #{student_forward.8} parent=5 // pred_region
      // Predicated region
      $region25: #{student_forward.8} parent=23 // pred_check
        %p142 = pneg %p41
      $region26: #{student_forward.8} parent=23 // pred_check_branch
        %144 = sbr.rel (%p142) target = $region28
      $region27: #{student_forward.8} parent=23 // pred_region
        %p145 = scmp.lt.s32.totalorder %s16, 1
        %s146 = scalar_select %p145, %s16, 1
        %s147 = smul.addr %s146, 41
        %s148 = smul.addr %s147, 8
        %s149 = scalar_lea.vmem %s0, %s148
      $region28: #{student_forward.8} parent=23 // pred_fallthru
        _
    $region24: #{student_forward.8} parent=5 // pred_fallthru
      _
    %p150 = scmp.le.s32.totalorder 1, %s9
    %p151 = scmp.lt.s32.totalorder %s9, 5
    %p152 = pnand %p150, %p151
    %p153 = pneg %p152
    // Predicated region
    $region29: #{student_forward.8} parent=5 // pred_check
      _
    $region30: #{student_forward.8} parent=5 // pred_check_branch
      %155 = sbr.rel (%p152) target = $region32
    $region31: #{student_forward.8} parent=5 // pred_region
      %s156 = ssub.s32 %s9, 1
      %p157 = scmp.lt.s32.totalorder %s18, 1
      %s158 = scalar_select %p157, %s18, 1
      %s159 = smul.addr %s158, 41
      %s160 = smul.addr %s159, 8
      %s161 = scalar_lea.vmem %s0, %s160
      %p162 = pneg %p47
      %p163 = pneg %p44
      %p164 = pneg %p68
      %p165 = pneg %p65
      %p166 = pneg %p89
      %p167 = pneg %p86
      %p168 = pneg %p117
      %p169 = pneg %p114
      %s170 = smul.u32 18, %s19
      %p171 = scmp.lt.s32.totalorder %s18, 1
      %s172 = scalar_select %p171, %s18, 1
      %p173 = scmp.lt.s32.totalorder %s170, 35
      %s174 = scalar_select %p173, %s170, 35
      %s175 = smul.addr %s172, 36
      %s176 = sadd.s32 %s174, %s175
      %s177 = smul.addr %s176, 8
      %s178 = scalar_lea.vmem %s3, %s177
      %p179 = scmp.lt.s32.totalorder %s18, 1
      %s180 = scalar_select %p179, %s18, 1
      %s181 = smul.addr %s180, 41
      %s182 = smul.addr %s181, 8
      %s183 = scalar_lea.vmem %s0, %s182
      %s184 = smul.u32 18, %s19
      %p185 = scmp.lt.s32.totalorder %s18, 1
      %s186 = scalar_select %p185, %s18, 1
      %p187 = scmp.lt.s32.totalorder %s184, 35
      %s188 = scalar_select %p187, %s184, 35
      %s189 = smul.addr %s186, 36
      %s190 = sadd.s32 %s188, %s189
      %s191 = smul.addr %s190, 8
      %s192 = scalar_lea.vmem %s3, %s191
      %s193 = smul.u32 18, %s19
      %s195 = smul.u32 %s19, 144
      %s196 = scalar_lea.vmem %s183, %s195
      %v197 = vld [vmem:[%s196] sm:$0xff]
      %v198 = vld [vmem:[%s196 + $0x8] sm:$0xff]
      %v199 = vld [vmem:[%s196 + $0x10] sm:$0xff]
      %v200 = vld [vmem:[%s196 + $0x18] sm:$0xff]
      %v201 = vld [vmem:[%s196 + $0x20] sm:$0xff]
      %v202 = vld [vmem:[%s196 + $0x28] sm:$0xff]
      %v203 = vld [vmem:[%s196 + $0x30] sm:$0xff]
      %v204 = vld [vmem:[%s196 + $0x38] sm:$0xff]
      %v205 = vld [vmem:[%s196 + $0x40] sm:$0xff]
      %v206 = vld [vmem:[%s196 + $0x48] sm:$0xff]
      %v207 = vld [vmem:[%s196 + $0x50] sm:$0xff]
      %v208 = vld [vmem:[%s196 + $0x58] sm:$0xff]
      %v209 = vld [vmem:[%s196 + $0x60] sm:$0xff]
      %v210 = vld [vmem:[%s196 + $0x68] sm:$0xff]
      %v211 = vld [vmem:[%s196 + $0x70] sm:$0xff]
      %v212 = vld [vmem:[%s196 + $0x78] sm:$0xff]
      %v213 = vld [vmem:[%s196 + $0x80] sm:$0xff]
      %v214 = vld [vmem:[%s196 + $0x88] sm:$0xff]
      %v215 = vpack.c.bf16 %v198, %v197
      %v216 = vpack.c.bf16 %v200, %v199
      %v217 = vpack.c.bf16 %v202, %v201
      %v218 = vpack.c.bf16 %v204, %v203
      %v219 = vpack.c.bf16 %v206, %v205
      %v220 = vpack.c.bf16 %v208, %v207
      %v221 = vpack.c.bf16 %v210, %v209
      %v222 = vpack.c.bf16 %v212, %v211
      %v223 = vpack.c.bf16 %v214, %v213
      %v224 = vld [vmem:[%s1] sm:$0xf]
      %v225 = vld [vmem:[%s1 + $0x4] sm:$0xf]
      %v226 = vld [vmem:[%s1 + $0x8] sm:$0xf]
      %v227 = vld [vmem:[%s1 + $0xc] sm:$0xf]
      %v228 = vld [vmem:[%s1 + $0x10] sm:$0xf]
      %v229 = vld [vmem:[%s1 + $0x14] sm:$0xf]
      %v230 = vld [vmem:[%s1 + $0x18] sm:$0xf]
      %v231 = vld [vmem:[%s1 + $0x1c] sm:$0xf]
      %v232 = vld [vmem:[%s1 + $0x20] sm:$0xf]
      %v233 = vld [vmem:[%s1 + $0x24] sm:$0xf]
      %v234 = vld [vmem:[%s1 + $0x28] sm:$0xf]
      %v235 = vld [vmem:[%s1 + $0x2c] sm:$0xf]
      %v236 = vld [vmem:[%s1 + $0x30] sm:$0xf]
      %v237 = vld [vmem:[%s1 + $0x34] sm:$0xf]
      %v238 = vld [vmem:[%s1 + $0x38] sm:$0xf]
      %v239 = vld [vmem:[%s1 + $0x3c] sm:$0xf]
      %s240 = sadd.s32 %s195, 1
      %s241 = scalar_lea.vmem %s183, %s240
      %v242 = vld [vmem:[%s241] sm:$0xff]
      %v243 = vld [vmem:[%s241 + $0x8] sm:$0xff]
      %v244 = vld [vmem:[%s241 + $0x10] sm:$0xff]
      %v245 = vld [vmem:[%s241 + $0x18] sm:$0xff]
      %v246 = vld [vmem:[%s241 + $0x20] sm:$0xff]
      %v247 = vld [vmem:[%s241 + $0x28] sm:$0xff]
      %v248 = vld [vmem:[%s241 + $0x30] sm:$0xff]
      %v249 = vld [vmem:[%s241 + $0x38] sm:$0xff]
      %v250 = vld [vmem:[%s241 + $0x40] sm:$0xff]
      %v251 = vld [vmem:[%s241 + $0x48] sm:$0xff]
      %v252 = vld [vmem:[%s241 + $0x50] sm:$0xff]
      %v253 = vld [vmem:[%s241 + $0x58] sm:$0xff]
      %v254 = vld [vmem:[%s241 + $0x60] sm:$0xff]
      %v255 = vld [vmem:[%s241 + $0x68] sm:$0xff]
      %v256 = vld [vmem:[%s241 + $0x70] sm:$0xff]
      %v257 = vld [vmem:[%s241 + $0x78] sm:$0xff]
      %v258 = vld [vmem:[%s241 + $0x80] sm:$0xff]
      %v259 = vld [vmem:[%s241 + $0x88] sm:$0xff]
      %v260 = vpack.c.bf16 %v243, %v242
      %v261 = vpack.c.bf16 %v245, %v244
      %v262 = vpack.c.bf16 %v247, %v246
      %v263 = vpack.c.bf16 %v249, %v248
      %v264 = vpack.c.bf16 %v251, %v250
      %v265 = vpack.c.bf16 %v253, %v252
      %v266 = vpack.c.bf16 %v255, %v254
      %v267 = vpack.c.bf16 %v257, %v256
      %v268 = vpack.c.bf16 %v259, %v258
      %s269 = scalar_lea.vmem %s1, 64
      %v270 = vld [vmem:[%s269] sm:$0xf]
      %v271 = vld [vmem:[%s269 + $0x4] sm:$0xf]
      %v272 = vld [vmem:[%s269 + $0x8] sm:$0xf]
      %v273 = vld [vmem:[%s269 + $0xc] sm:$0xf]
      %v274 = vld [vmem:[%s269 + $0x10] sm:$0xf]
      %v275 = vld [vmem:[%s269 + $0x14] sm:$0xf]
      %v276 = vld [vmem:[%s269 + $0x18] sm:$0xf]
      %v277 = vld [vmem:[%s269 + $0x1c] sm:$0xf]
      %v278 = vld [vmem:[%s269 + $0x20] sm:$0xf]
      %v279 = vld [vmem:[%s269 + $0x24] sm:$0xf]
      %v280 = vld [vmem:[%s269 + $0x28] sm:$0xf]
      %v281 = vld [vmem:[%s269 + $0x2c] sm:$0xf]
      %v282 = vld [vmem:[%s269 + $0x30] sm:$0xf]
      %v283 = vld [vmem:[%s269 + $0x34] sm:$0xf]
      %v284 = vld [vmem:[%s269 + $0x38] sm:$0xf]
      %v285 = vld [vmem:[%s269 + $0x3c] sm:$0xf]
      %v302 = vunpack.c.l.b16 %v270
      %v303 = vunpack.c.l.b16 %v271
      %v304 = vunpack.c.l.b16 %v272
      %v305 = vunpack.c.l.b16 %v273
      %v306 = vunpack.c.l.b16 %v274
      %v307 = vunpack.c.l.b16 %v275
      %v308 = vunpack.c.l.b16 %v276
      %v309 = vunpack.c.l.b16 %v277
      %v310 = vunpack.c.l.b16 %v278
      %v311 = vunpack.c.l.b16 %v279
      %v312 = vunpack.c.l.b16 %v280
      %v313 = vunpack.c.l.b16 %v281
      %v314 = vunpack.c.l.b16 %v282
      %v315 = vunpack.c.l.b16 %v283
      %v316 = vunpack.c.l.b16 %v284
      %v317 = vunpack.c.l.b16 %v285
      %v318 = vpack.c.b16 %v303, %v302
      %v319 = vpack.c.b16 %v305, %v304
      %v320 = vpack.c.b16 %v307, %v306
      %v321 = vpack.c.b16 %v309, %v308
      %v322 = vpack.c.b16 %v311, %v310
      %v323 = vpack.c.b16 %v313, %v312
      %v324 = vpack.c.b16 %v315, %v314
      %v325 = vpack.c.b16 %v317, %v316
      %334 = vmatprep.subr.bf16.mxu0 0
      %335 = vmatpush1.bf16.msra.mxu0 %v318
      %336 = vmatprep.subr.bf16.mxu0 0
      %337 = vmatpush1.bf16.msra.mxu0 %v319
      %338 = vmatprep.subr.bf16.mxu0 0
      %339 = vmatpush1.bf16.msra.mxu0 %v320
      %340 = vmatprep.subr.bf16.mxu0 0
      %341 = vmatpush1.bf16.msra.mxu0 %v321
      %342 = vmatprep.subr.bf16.mxu0 0
      %343 = vmatpush1.bf16.msra.mxu0 %v322
      %344 = vmatprep.subr.bf16.mxu0 0
      %345 = vmatpush1.bf16.msra.mxu0 %v323
      %346 = vmatprep.subr.bf16.mxu0 0
      %347 = vmatpush1.bf16.msra.mxu0 %v324
      %348 = vmatprep.subr.bf16.mxu0 0
      %349 = vmatpush1.bf16.msra.mxu0 %v325
      %350 = vmatprep.subr.bf16.mxu0 0
      %351 = vmatpush1.bf16.msra.mxu0 0
      %352 = vmatprep.subr.bf16.mxu0 0
      %353 = vmatpush1.bf16.msra.mxu0 0
      %354 = vmatprep.subr.bf16.mxu0 0
      %355 = vmatpush1.bf16.msra.mxu0 0
      %356 = vmatprep.subr.bf16.mxu0 0
      %357 = vmatpush1.bf16.msra.mxu0 0
      %358 = vmatprep.subr.bf16.mxu0 0
      %359 = vmatpush1.bf16.msra.mxu0 0
      %360 = vmatprep.subr.bf16.mxu0 0
      %361 = vmatpush1.bf16.msra.mxu0 0
      %362 = vmatprep.subr.bf16.mxu0 0
      %363 = vmatpush1.bf16.msra.mxu0 0
      %364 = vmatprep.subr.bf16.mxu0 0
      %365 = vmatpush1.bf16.msra.mxu0 0
      %366 = vmatprep.mubr.bf16.mxu0 0
      %367 = vmatmul.mubr.bf16.gmra.mrb[0].mxu0 %v260
      %v368 = vpop.f32.mrb[0].mxu0
      %v369 = vadd.f32 0.0, %v368
      %v370 = vpop.f32.mrb[0].mxu0
      %v371 = vpop.f32.mrb[0].mxu0
      %v372 = vadd.f32 0.0, %v371
      %v373 = vpop.f32.mrb[0].mxu0
      %374 = vmatprep.mubr.bf16.mxu0 0
      %375 = vmatmul.mubr.bf16.gmra.mrb[0].mxu0 %v261
      %v376 = vpop.f32.mrb[0].mxu0
      %v377 = vadd.f32 0.0, %v376
      %v378 = vpop.f32.mrb[0].mxu0
      %v379 = vpop.f32.mrb[0].mxu0
      %v380 = vadd.f32 0.0, %v379
      %v381 = vpop.f32.mrb[0].mxu0
      %382 = vmatprep.mubr.bf16.mxu0 0
      %383 = vmatmul.mubr.bf16.gmra.mrb[0].mxu0 %v262
      %v384 = vpop.f32.mrb[0].mxu0
      %v385 = vadd.f32 0.0, %v384
      %v386 = vpop.f32.mrb[0].mxu0
      %v387 = vpop.f32.mrb[0].mxu0
      %v388 = vadd.f32 0.0, %v387
      %v389 = vpop.f32.mrb[0].mxu0
      %390 = vmatprep.mubr.bf16.mxu0 0
      %391 = vmatmul.mubr.bf16.gmra.mrb[0].mxu0 %v263
      %v392 = vpop.f32.mrb[0].mxu0
      %v393 = vadd.f32 0.0, %v392
      %v394 = vpop.f32.mrb[0].mxu0
      %v395 = vpop.f32.mrb[0].mxu0
      %v396 = vadd.f32 0.0, %v395
      %v397 = vpop.f32.mrb[0].mxu0
      %398 = vmatprep.mubr.bf16.mxu0 0
      %399 = vmatmul.mubr.bf16.gmra.mrb[0].mxu0 %v264
      %v400 = vpop.f32.mrb[0].mxu0
      %v401 = vadd.f32 0.0, %v400
      %v402 = vpop.f32.mrb[0].mxu0
      %v403 = vpop.f32.mrb[0].mxu0
      %v404 = vadd.f32 0.0, %v403
      %v405 = vpop.f32.mrb[0].mxu0
      %406 = vmatprep.mubr.bf16.mxu0 0
      %407 = vmatmul.mubr.bf16.gmra.mrb[0].mxu0 %v265
      %v408 = vpop.f32.mrb[0].mxu0
      %v409 = vadd.f32 0.0, %v408
      %v410 = vpop.f32.mrb[0].mxu0
      %v411 = vpop.f32.mrb[0].mxu0
      %v412 = vadd.f32 0.0, %v411
      %v413 = vpop.f32.mrb[0].mxu0
      %414 = vmatprep.mubr.bf16.mxu0 0
      %415 = vmatmul.mubr.bf16.gmra.mrb[0].mxu0 %v266
      %v416 = vpop.f32.mrb[0].mxu0
      %v417 = vadd.f32 0.0, %v416
      %v418 = vpop.f32.mrb[0].mxu0
      %v419 = vpop.f32.mrb[0].mxu0
      %v420 = vadd.f32 0.0, %v419
      %v421 = vpop.f32.mrb[0].mxu0
      %422 = vmatprep.mubr.bf16.mxu0 0
      %423 = vmatmul.mubr.bf16.gmra.mrb[0].mxu0 %v267
      %v424 = vpop.f32.mrb[0].mxu0
      %v425 = vadd.f32 0.0, %v424
      %v426 = vpop.f32.mrb[0].mxu0
      %v427 = vpop.f32.mrb[0].mxu0
      %v428 = vadd.f32 0.0, %v427
      %v429 = vpop.f32.mrb[0].mxu0
      %430 = vmatprep.mubr.bf16.mxu0 0
      %431 = vmatmul.mubr.bf16.gmra.mrb[0].mxu0 %v268
      %v432 = vpop.f32.mrb[0].mxu0
      %v433 = vadd.f32 0.0, %v432
      %v434 = vpop.f32.mrb[0].mxu0
      %v435 = vpop.f32.mrb[0].mxu0
      %v436 = vadd.f32 0.0, %v435
      %v437 = vpop.f32.mrb[0].mxu0
      %438 = vdwg.mxu0
      %v455 = vunpack.c.l.b16 %v224
      %v456 = vunpack.c.l.b16 %v225
      %v457 = vunpack.c.l.b16 %v226
      %v458 = vunpack.c.l.b16 %v227
      %v459 = vunpack.c.l.b16 %v228
      %v460 = vunpack.c.l.b16 %v229
      %v461 = vunpack.c.l.b16 %v230
      %v462 = vunpack.c.l.b16 %v231
      %v463 = vunpack.c.l.b16 %v232
      %v464 = vunpack.c.l.b16 %v233
      %v465 = vunpack.c.l.b16 %v234
      %v466 = vunpack.c.l.b16 %v235
      %v467 = vunpack.c.l.b16 %v236
      %v468 = vunpack.c.l.b16 %v237
      %v469 = vunpack.c.l.b16 %v238
      %v470 = vunpack.c.l.b16 %v239
      %v471 = vpack.c.b16 %v456, %v455
      %v472 = vpack.c.b16 %v458, %v457
      %v473 = vpack.c.b16 %v460, %v459
      %v474 = vpack.c.b16 %v462, %v461
      %v475 = vpack.c.b16 %v464, %v463
      %v476 = vpack.c.b16 %v466, %v465
      %v477 = vpack.c.b16 %v468, %v467
      %v478 = vpack.c.b16 %v470, %v469
      %487 = vmatprep.subr.bf16.mxu0 0
      %488 = vmatpush1.bf16.msra.mxu0 %v471
      %489 = vmatprep.subr.bf16.mxu0 0
      %490 = vmatpush1.bf16.msra.mxu0 %v472
      %491 = vmatprep.subr.bf16.mxu0 0
      %492 = vmatpush1.bf16.msra.mxu0 %v473
      %493 = vmatprep.subr.bf16.mxu0 0
      %494 = vmatpush1.bf16.msra.mxu0 %v474
      %495 = vmatprep.subr.bf16.mxu0 0
      %496 = vmatpush1.bf16.msra.mxu0 %v475
      %497 = vmatprep.subr.bf16.mxu0 0
      %498 = vmatpush1.bf16.msra.mxu0 %v476
      %499 = vmatprep.subr.bf16.mxu0 0
      %500 = vmatpush1.bf16.msra.mxu0 %v477
      %501 = vmatprep.subr.bf16.mxu0 0
      %502 = vmatpush1.bf16.msra.mxu0 %v478
      %503 = vmatprep.subr.bf16.mxu0 0
      %504 = vmatpush1.bf16.msra.mxu0 0
      %505 = vmatprep.subr.bf16.mxu0 0
      %506 = vmatpush1.bf16.msra.mxu0 0
      %507 = vmatprep.subr.bf16.mxu0 0
      %508 = vmatpush1.bf16.msra.mxu0 0
      %509 = vmatprep.subr.bf16.mxu0 0
      %510 = vmatpush1.bf16.msra.mxu0 0
      %511 = vmatprep.subr.bf16.mxu0 0
      %512 = vmatpush1.bf16.msra.mxu0 0
      %513 = vmatprep.subr.bf16.mxu0 0
      %514 = vmatpush1.bf16.msra.mxu0 0
      %515 = vmatprep.subr.bf16.mxu0 0
      %516 = vmatpush1.bf16.msra.mxu0 0
      %517 = vmatprep.subr.bf16.mxu0 0
      %518 = vmatpush1.bf16.msra.mxu0 0
      %519 = vmatprep.mubr.bf16.mxu0 0
      %520 = vmatmul.mubr.bf16.gmra.mrb[0].mxu0 %v215
      %v521 = vpop.f32.mrb[0].mxu0
      %v522 = vadd.f32 %v369, %v521
      %v523 = vpop.f32.mrb[0].mxu0
      %v524 = vpop.f32.mrb[0].mxu0
      %v525 = vadd.f32 %v372, %v524
      %v526 = vpop.f32.mrb[0].mxu0
      %527 = vmatprep.mubr.bf16.mxu0 0
      %528 = vmatmul.mubr.bf16.gmra.mrb[0].mxu0 %v216
      %v529 = vpop.f32.mrb[0].mxu0
      %v530 = vadd.f32 %v377, %v529
      %v531 = vpop.f32.mrb[0].mxu0
      %v532 = vpop.f32.mrb[0].mxu0
      %v533 = vadd.f32 %v380, %v532
      %v534 = vpop.f32.mrb[0].mxu0
      %535 = vmatprep.mubr.bf16.mxu0 0
      %536 = vmatmul.mubr.bf16.gmra.mrb[0].mxu0 %v217
      %v537 = vpop.f32.mrb[0].mxu0
      %v538 = vadd.f32 %v385, %v537
      %v539 = vpop.f32.mrb[0].mxu0
      %v540 = vpop.f32.mrb[0].mxu0
      %v541 = vadd.f32 %v388, %v540
      %v542 = vpop.f32.mrb[0].mxu0
      %543 = vmatprep.mubr.bf16.mxu0 0
      %544 = vmatmul.mubr.bf16.gmra.mrb[0].mxu0 %v218
      %v545 = vpop.f32.mrb[0].mxu0
      %v546 = vadd.f32 %v393, %v545
      %v547 = vpop.f32.mrb[0].mxu0
      %v548 = vpop.f32.mrb[0].mxu0
      %v549 = vadd.f32 %v396, %v548
      %v550 = vpop.f32.mrb[0].mxu0
      %551 = vmatprep.mubr.bf16.mxu0 0
      %552 = vmatmul.mubr.bf16.gmra.mrb[0].mxu0 %v219
      %v553 = vpop.f32.mrb[0].mxu0
      %v554 = vadd.f32 %v401, %v553
      %v555 = vpop.f32.mrb[0].mxu0
      %v556 = vpop.f32.mrb[0].mxu0
      %v557 = vadd.f32 %v404, %v556
      %v558 = vpop.f32.mrb[0].mxu0
      %559 = vmatprep.mubr.bf16.mxu0 0
      %560 = vmatmul.mubr.bf16.gmra.mrb[0].mxu0 %v220
      %v561 = vpop.f32.mrb[0].mxu0
      %v562 = vadd.f32 %v409, %v561
      %v563 = vpop.f32.mrb[0].mxu0
      %v564 = vpop.f32.mrb[0].mxu0
      %v565 = vadd.f32 %v412, %v564
      %v566 = vpop.f32.mrb[0].mxu0
      %567 = vmatprep.mubr.bf16.mxu0 0
      %568 = vmatmul.mubr.bf16.gmra.mrb[0].mxu0 %v221
      %v569 = vpop.f32.mrb[0].mxu0
      %v570 = vadd.f32 %v417, %v569
      %v571 = vpop.f32.mrb[0].mxu0
      %v572 = vpop.f32.mrb[0].mxu0
      %v573 = vadd.f32 %v420, %v572
      %v574 = vpop.f32.mrb[0].mxu0
      %575 = vmatprep.mubr.bf16.mxu0 0
      %576 = vmatmul.mubr.bf16.gmra.mrb[0].mxu0 %v222
      %v577 = vpop.f32.mrb[0].mxu0
      %v578 = vadd.f32 %v425, %v577
      %v579 = vpop.f32.mrb[0].mxu0
      %v580 = vpop.f32.mrb[0].mxu0
      %v581 = vadd.f32 %v428, %v580
      %v582 = vpop.f32.mrb[0].mxu0
      %583 = vmatprep.mubr.bf16.mxu0 0
      %584 = vmatmul.mubr.bf16.gmra.mrb[0].mxu0 %v223
      %v585 = vpop.f32.mrb[0].mxu0
      %v586 = vadd.f32 %v433, %v585
      %v587 = vpop.f32.mrb[0].mxu0
      %v588 = vpop.f32.mrb[0].mxu0
      %v589 = vadd.f32 %v436, %v588
      %v590 = vpop.f32.mrb[0].mxu0
      %591 = vdwg.mxu0
      %s592 = sadd.s32 %s195, 2
      %s593 = scalar_lea.vmem %s183, %s592
      %v594 = vld [vmem:[%s593] sm:$0xff]
      %v595 = vld [vmem:[%s593 + $0x8] sm:$0xff]
      %v596 = vld [vmem:[%s593 + $0x10] sm:$0xff]
      %v597 = vld [vmem:[%s593 + $0x18] sm:$0xff]
      %v598 = vld [vmem:[%s593 + $0x20] sm:$0xff]
      %v599 = vld [vmem:[%s593 + $0x28] sm:$0xff]
      %v600 = vld [vmem:[%s593 + $0x30] sm:$0xff]
      %v601 = vld [vmem:[%s593 + $0x38] sm:$0xff]
      %v602 = vld [vmem:[%s593 + $0x40] sm:$0xff]
      %v603 = vld [vmem:[%s593 + $0x48] sm:$0xff]
      %v604 = vld [vmem:[%s593 + $0x50] sm:$0xff]
      %v605 = vld [vmem:[%s593 + $0x58] sm:$0xff]
      %v606 = vld [vmem:[%s593 + $0x60] sm:$0xff]
      %v607 = vld [vmem:[%s593 + $0x68] sm:$0xff]
      %v608 = vld [vmem:[%s593 + $0x70] sm:$0xff]
      %v609 = vld [vmem:[%s593 + $0x78] sm:$0xff]
      %v610 = vld [vmem:[%s593 + $0x80] sm:$0xff]
      %v611 = vld [vmem:[%s593 + $0x88] sm:$0xff]
      %v612 = vpack.c.bf16 %v595, %v594
      %v613 = vpack.c.bf16 %v597, %v596
      %v614 = vpack.c.bf16 %v599, %v598
      %v615 = vpack.c.bf16 %v601, %v600
      %v616 = vpack.c.bf16 %v603, %v602
      %v617 = vpack.c.bf16 %v605, %v604
      %v618 = vpack.c.bf16 %v607, %v606
      %v619 = vpack.c.bf16 %v609, %v608
      %v620 = vpack.c.bf16 %v611, %v610
      %s621 = scalar_lea.vmem %s1, 128
      %v622 = vld [vmem:[%s621] sm:$0xf]
      %v623 = vld [vmem:[%s621 + $0x4] sm:$0xf]
      %v624 = vld [vmem:[%s621 + $0x8] sm:$0xf]
      %v625 = vld [vmem:[%s621 + $0xc] sm:$0xf]
      %v626 = vld [vmem:[%s621 + $0x10] sm:$0xf]
      %v627 = vld [vmem:[%s621 + $0x14] sm:$0xf]
      %v628 = vld [vmem:[%s621 + $0x18] sm:$0xf]
      %v629 = vld [vmem:[%s621 + $0x1c] sm:$0xf]
      %v630 = vld [vmem:[%s621 + $0x20] sm:$0xf]
      %v631 = vld [vmem:[%s621 + $0x24] sm:$0xf]
      %v632 = vld [vmem:[%s621 + $0x28] sm:$0xf]
      %v633 = vld [vmem:[%s621 + $0x2c] sm:$0xf]
      %v634 = vld [vmem:[%s621 + $0x30] sm:$0xf]
      %v635 = vld [vmem:[%s621 + $0x34] sm:$0xf]
      %v636 = vld [vmem:[%s621 + $0x38] sm:$0xf]
      %v637 = vld [vmem:[%s621 + $0x3c] sm:$0xf]
      %v654 = vunpack.c.l.b16 %v622
      %v655 = vunpack.c.l.b16 %v623
      %v656 = vunpack.c.l.b16 %v624
      %v657 = vunpack.c.l.b16 %v625
      %v658 = vunpack.c.l.b16 %v626
      %v659 = vunpack.c.l.b16 %v627
      %v660 = vunpack.c.l.b16 %v628
      %v661 = vunpack.c.l.b16 %v629
      %v662 = vunpack.c.l.b16 %v630
      %v663 = vunpack.c.l.b16 %v631
      %v664 = vunpack.c.l.b16 %v632
      %v665 = vunpack.c.l.b16 %v633
      %v666 = vunpack.c.l.b16 %v634
      %v667 = vunpack.c.l.b16 %v635
      %v668 = vunpack.c.l.b16 %v636
      %v669 = vunpack.c.l.b16 %v637
      %v670 = vpack.c.b16 %v655, %v654
      %v671 = vpack.c.b16 %v657, %v656
      %v672 = vpack.c.b16 %v659, %v658
      %v673 = vpack.c.b16 %v661, %v660
      %v674 = vpack.c.b16 %v663, %v662
      %v675 = vpack.c.b16 %v665, %v664
      %v676 = vpack.c.b16 %v667, %v666
      %v677 = vpack.c.b16 %v669, %v668
      %686 = vmatprep.subr.bf16.mxu0 0
      %687 = vmatpush1.bf16.msra.mxu0 %v670
      %688 = vmatprep.subr.bf16.mxu0 0
      %689 = vmatpush1.bf16.msra.mxu0 %v671
      %690 = vmatprep.subr.bf16.mxu0 0
      %691 = vmatpush1.bf16.msra.mxu0 %v672
      %692 = vmatprep.subr.bf16.mxu0 0
      %693 = vmatpush1.bf16.msra.mxu0 %v673
      %694 = vmatprep.subr.bf16.mxu0 0
      %695 = vmatpush1.bf16.msra.mxu0 %v674
      %696 = vmatprep.subr.bf16.mxu0 0
      %697 = vmatpush1.bf16.msra.mxu0 %v675
      %698 = vmatprep.subr.bf16.mxu0 0
      %699 = vmatpush1.bf16.msra.mxu0 %v676
      %700 = vmatprep.subr.bf16.mxu0 0
      %701 = vmatpush1.bf16.msra.mxu0 %v677
      %702 = vmatprep.subr.bf16.mxu0 0
      %703 = vmatpush1.bf16.msra.mxu0 0
      %704 = vmatprep.subr.bf16.mxu0 0
      %705 = vmatpush1.bf16.msra.mxu0 0
      %706 = vmatprep.subr.bf16.mxu0 0
      %707 = vmatpush1.bf16.msra.mxu0 0
      %708 = vmatprep.subr.bf16.mxu0 0
      %709 = vmatpush1.bf16.msra.mxu0 0
      %710 = vmatprep.subr.bf16.mxu0 0
      %711 = vmatpush1.bf16.msra.mxu0 0
      %712 = vmatprep.subr.bf16.mxu0 0
      %713 = vmatpush1.bf16.msra.mxu0 0
      %714 = vmatprep.subr.bf16.mxu0 0
      %715 = vmatpush1.bf16.msra.mxu0 0
      %716 = vmatprep.subr.bf16.mxu0 0
      %717 = vmatpush1.bf16.msra.mxu0 0
      %718 = vmatprep.mubr.bf16.mxu0 0
      %719 = vmatmul.mubr.bf16.gmra.mrb[0].mxu0 %v612
      %v720 = vpop.f32.mrb[0].mxu0
      %v721 = vadd.f32 0.0, %v720
      %v722 = vpop.f32.mrb[0].mxu0
      %v723 = vpop.f32.mrb[0].mxu0
      %v724 = vadd.f32 0.0, %v723
      %v725 = vpop.f32.mrb[0].mxu0
      %726 = vmatprep.mubr.bf16.mxu0 0
      %727 = vmatmul.mubr.bf16.gmra.mrb[0].mxu0 %v613
      %v728 = vpop.f32.mrb[0].mxu0
      %v729 = vadd.f32 0.0, %v728
      %v730 = vpop.f32.mrb[0].mxu0
      %v731 = vpop.f32.mrb[0].mxu0
      %v732 = vadd.f32 0.0, %v731
      %v733 = vpop.f32.mrb[0].mxu0
      %734 = vmatprep.mubr.bf16.mxu0 0
      %735 = vmatmul.mubr.bf16.gmra.mrb[0].mxu0 %v614
      %v736 = vpop.f32.mrb[0].mxu0
      %v737 = vadd.f32 0.0, %v736
      %v738 = vpop.f32.mrb[0].mxu0
      %v739 = vpop.f32.mrb[0].mxu0
      %v740 = vadd.f32 0.0, %v739
      %v741 = vpop.f32.mrb[0].mxu0
      %742 = vmatprep.mubr.bf16.mxu0 0
      %743 = vmatmul.mubr.bf16.gmra.mrb[0].mxu0 %v615
      %v744 = vpop.f32.mrb[0].mxu0
      %v745 = vadd.f32 0.0, %v744
      %v746 = vpop.f32.mrb[0].mxu0
      %v747 = vpop.f32.mrb[0].mxu0
      %v748 = vadd.f32 0.0, %v747
      %v749 = vpop.f32.mrb[0].mxu0
      %750 = vmatprep.mubr.bf16.mxu0 0
      %751 = vmatmul.mubr.bf16.gmra.mrb[0].mxu0 %v616
      %v752 = vpop.f32.mrb[0].mxu0
      %v753 = vadd.f32 0.0, %v752
      %v754 = vpop.f32.mrb[0].mxu0
      %v755 = vpop.f32.mrb[0].mxu0
      %v756 = vadd.f32 0.0, %v755
      %v757 = vpop.f32.mrb[0].mxu0
      %758 = vmatprep.mubr.bf16.mxu0 0
      %759 = vmatmul.mubr.bf16.gmra.mrb[0].mxu0 %v617
      %v760 = vpop.f32.mrb[0].mxu0
      %v761 = vadd.f32 0.0, %v760
      %v762 = vpop.f32.mrb[0].mxu0
      %v763 = vpop.f32.mrb[0].mxu0
      %v764 = vadd.f32 0.0, %v763
      %v765 = vpop.f32.mrb[0].mxu0
      %766 = vmatprep.mubr.bf16.mxu0 0
      %767 = vmatmul.mubr.bf16.gmra.mrb[0].mxu0 %v618
      %v768 = vpop.f32.mrb[0].mxu0
      %v769 = vadd.f32 0.0, %v768
      %v770 = vpop.f32.mrb[0].mxu0
      %v771 = vpop.f32.mrb[0].mxu0
      %v772 = vadd.f32 0.0, %v771
      %v773 = vpop.f32.mrb[0].mxu0
      %774 = vmatprep.mubr.bf16.mxu0 0
      %775 = vmatmul.mubr.bf16.gmra.mrb[0].mxu0 %v619
      %v776 = vpop.f32.mrb[0].mxu0
      %v777 = vadd.f32 0.0, %v776
      %v778 = vpop.f32.mrb[0].mxu0
      %v779 = vpop.f32.mrb[0].mxu0
      %v780 = vadd.f32 0.0, %v779
      %v781 = vpop.f32.mrb[0].mxu0
      %782 = vmatprep.mubr.bf16.mxu0 0
      %783 = vmatmul.mubr.bf16.gmra.mrb[0].mxu0 %v620
      %v784 = vpop.f32.mrb[0].mxu0
      %v785 = vadd.f32 0.0, %v784
      %v786 = vpop.f32.mrb[0].mxu0
      %v787 = vpop.f32.mrb[0].mxu0
      %v788 = vadd.f32 0.0, %v787
      %v789 = vpop.f32.mrb[0].mxu0
      %790 = vdwg.mxu0
      %v791 = vadd.f32 %v522, %v721
      %v792 = vadd.f32 %v525, %v724
      %v793 = vadd.f32 %v530, %v729
      %v794 = vadd.f32 %v533, %v732
      %v795 = vadd.f32 %v538, %v737
      %v796 = vadd.f32 %v541, %v740
      %v797 = vadd.f32 %v546, %v745
      %v798 = vadd.f32 %v549, %v748
      %v799 = vadd.f32 %v554, %v753
      %v800 = vadd.f32 %v557, %v756
      %v801 = vadd.f32 %v562, %v761
      %v802 = vadd.f32 %v565, %v764
      %v803 = vadd.f32 %v570, %v769
      %v804 = vadd.f32 %v573, %v772
      %v805 = vadd.f32 %v578, %v777
      %v806 = vadd.f32 %v581, %v780
      %v807 = vadd.f32 %v586, %v785
      %v808 = vadd.f32 %v589, %v788
      %s809 = sadd.s32 %s195, 18
      %s810 = scalar_lea.vmem %s183, %s809
      %v811 = vld [vmem:[%s810] sm:$0xff]
      %v812 = vld [vmem:[%s810 + $0x8] sm:$0xff]
      %v813 = vld [vmem:[%s810 + $0x10] sm:$0xff]
      %v814 = vld [vmem:[%s810 + $0x18] sm:$0xff]
      %v815 = vld [vmem:[%s810 + $0x20] sm:$0xff]
      %v816 = vld [vmem:[%s810 + $0x28] sm:$0xff]
      %v817 = vld [vmem:[%s810 + $0x30] sm:$0xff]
      %v818 = vld [vmem:[%s810 + $0x38] sm:$0xff]
      %v819 = vld [vmem:[%s810 + $0x40] sm:$0xff]
      %v820 = vld [vmem:[%s810 + $0x48] sm:$0xff]
      %v821 = vld [vmem:[%s810 + $0x50] sm:$0xff]
      %v822 = vld [vmem:[%s810 + $0x58] sm:$0xff]
      %v823 = vld [vmem:[%s810 + $0x60] sm:$0xff]
      %v824 = vld [vmem:[%s810 + $0x68] sm:$0xff]
      %v825 = vld [vmem:[%s810 + $0x70] sm:$0xff]
      %v826 = vld [vmem:[%s810 + $0x78] sm:$0xff]
      %v827 = vld [vmem:[%s810 + $0x80] sm:$0xff]
      %v828 = vld [vmem:[%s810 + $0x88] sm:$0xff]
      %v829 = vpack.c.bf16 %v812, %v811
      %v830 = vpack.c.bf16 %v814, %v813
      %v831 = vpack.c.bf16 %v816, %v815
      %v832 = vpack.c.bf16 %v818, %v817
      %v833 = vpack.c.bf16 %v820, %v819
      %v834 = vpack.c.bf16 %v822, %v821
      %v835 = vpack.c.bf16 %v824, %v823
      %v836 = vpack.c.bf16 %v826, %v825
      %v837 = vpack.c.bf16 %v828, %v827
      %s838 = scalar_lea.vmem %s1, 192
      %v839 = vld [vmem:[%s838] sm:$0xf]
      %v840 = vld [vmem:[%s838 + $0x4] sm:$0xf]
      %v841 = vld [vmem:[%s838 + $0x8] sm:$0xf]
      %v842 = vld [vmem:[%s838 + $0xc] sm:$0xf]
      %v843 = vld [vmem:[%s838 + $0x10] sm:$0xf]
      %v844 = vld [vmem:[%s838 + $0x14] sm:$0xf]
      %v845 = vld [vmem:[%s838 + $0x18] sm:$0xf]
      %v846 = vld [vmem:[%s838 + $0x1c] sm:$0xf]
      %v847 = vld [vmem:[%s838 + $0x20] sm:$0xf]
      %v848 = vld [vmem:[%s838 + $0x24] sm:$0xf]
      %v849 = vld [vmem:[%s838 + $0x28] sm:$0xf]
      %v850 = vld [vmem:[%s838 + $0x2c] sm:$0xf]
      %v851 = vld [vmem:[%s838 + $0x30] sm:$0xf]
      %v852 = vld [vmem:[%s838 + $0x34] sm:$0xf]
      %v853 = vld [vmem:[%s838 + $0x38] sm:$0xf]
      %v854 = vld [vmem:[%s838 + $0x3c] sm:$0xf]
      %v871 = vunpack.c.l.b16 %v839
      %v872 = vunpack.c.l.b16 %v840
      %v873 = vunpack.c.l.b16 %v841
      %v874 = vunpack.c.l.b16 %v842
      %v875 = vunpack.c.l.b16 %v843
      %v876 = vunpack.c.l.b16 %v844
      %v877 = vunpack.c.l.b16 %v845
      %v878 = vunpack.c.l.b16 %v846
      %v879 = vunpack.c.l.b16 %v847
      %v880 = vunpack.c.l.b16 %v848
      %v881 = vunpack.c.l.b16 %v849
      %v882 = vunpack.c.l.b16 %v850
      %v883 = vunpack.c.l.b16 %v851
      %v884 = vunpack.c.l.b16 %v852
      %v885 = vunpack.c.l.b16 %v853
      %v886 = vunpack.c.l.b16 %v854
      %v887 = vpack.c.b16 %v872, %v871
      %v888 = vpack.c.b16 %v874, %v873
      %v889 = vpack.c.b16 %v876, %v875
      %v890 = vpack.c.b16 %v878, %v877
      %v891 = vpack.c.b16 %v880, %v879
      %v892 = vpack.c.b16 %v882, %v881
      %v893 = vpack.c.b16 %v884, %v883
      %v894 = vpack.c.b16 %v886, %v885
      %903 = vmatprep.subr.bf16.mxu0 0
      %904 = vmatpush1.bf16.msra.mxu0 %v887
      %905 = vmatprep.subr.bf16.mxu0 0
      %906 = vmatpush1.bf16.msra.mxu0 %v888
      %907 = vmatprep.subr.bf16.mxu0 0
      %908 = vmatpush1.bf16.msra.mxu0 %v889
      %909 = vmatprep.subr.bf16.mxu0 0
      %910 = vmatpush1.bf16.msra.mxu0 %v890
      %911 = vmatprep.subr.bf16.mxu0 0
      %912 = vmatpush1.bf16.msra.mxu0 %v891
      %913 = vmatprep.subr.bf16.mxu0 0
      %914 = vmatpush1.bf16.msra.mxu0 %v892
      %915 = vmatprep.subr.bf16.mxu0 0
      %916 = vmatpush1.bf16.msra.mxu0 %v893
      %917 = vmatprep.subr.bf16.mxu0 0
      %918 = vmatpush1.bf16.msra.mxu0 %v894
      %919 = vmatprep.subr.bf16.mxu0 0
      %920 = vmatpush1.bf16.msra.mxu0 0
      %921 = vmatprep.subr.bf16.mxu0 0
      %922 = vmatpush1.bf16.msra.mxu0 0
      %923 = vmatprep.subr.bf16.mxu0 0
      %924 = vmatpush1.bf16.msra.mxu0 0
      %925 = vmatprep.subr.bf16.mxu0 0
      %926 = vmatpush1.bf16.msra.mxu0 0
      %927 = vmatprep.subr.bf16.mxu0 0
      %928 = vmatpush1.bf16.msra.mxu0 0
      %929 = vmatprep.subr.bf16.mxu0 0
      %930 = vmatpush1.bf16.msra.mxu0 0
      %931 = vmatprep.subr.bf16.mxu0 0
      %932 = vmatpush1.bf16.msra.mxu0 0
      %933 = vmatprep.subr.bf16.mxu0 0
      %934 = vmatpush1.bf16.msra.mxu0 0
      %935 = vmatprep.mubr.bf16.mxu0 0
      %936 = vmatmul.mubr.bf16.gmra.mrb[0].mxu0 %v829
      %v937 = vpop.f32.mrb[0].mxu0
      %v938 = vadd.f32 0.0, %v937
      %v939 = vpop.f32.mrb[0].mxu0
      %v940 = vpop.f32.mrb[0].mxu0
      %v941 = vadd.f32 0.0, %v940
      %v942 = vpop.f32.mrb[0].mxu0
      %943 = vmatprep.mubr.bf16.mxu0 0
      %944 = vmatmul.mubr.bf16.gmra.mrb[0].mxu0 %v830
      %v945 = vpop.f32.mrb[0].mxu0
      %v946 = vadd.f32 0.0, %v945
      %v947 = vpop.f32.mrb[0].mxu0
      %v948 = vpop.f32.mrb[0].mxu0
      %v949 = vadd.f32 0.0, %v948
      %v950 = vpop.f32.mrb[0].mxu0
      %951 = vmatprep.mubr.bf16.mxu0 0
      %952 = vmatmul.mubr.bf16.gmra.mrb[0].mxu0 %v831
      %v953 = vpop.f32.mrb[0].mxu0
      %v954 = vadd.f32 0.0, %v953
      %v955 = vpop.f32.mrb[0].mxu0
      %v956 = vpop.f32.mrb[0].mxu0
      %v957 = vadd.f32 0.0, %v956
      %v958 = vpop.f32.mrb[0].mxu0
      %959 = vmatprep.mubr.bf16.mxu0 0
      %960 = vmatmul.mubr.bf16.gmra.mrb[0].mxu0 %v832
      %v961 = vpop.f32.mrb[0].mxu0
      %v962 = vadd.f32 0.0, %v961
      %v963 = vpop.f32.mrb[0].mxu0
      %v964 = vpop.f32.mrb[0].mxu0
      %v965 = vadd.f32 0.0, %v964
      %v966 = vpop.f32.mrb[0].mxu0
      %967 = vmatprep.mubr.bf16.mxu0 0
      %968 = vmatmul.mubr.bf16.gmra.mrb[0].mxu0 %v833
      %v969 = vpop.f32.mrb[0].mxu0
      %v970 = vadd.f32 0.0, %v969
      %v971 = vpop.f32.mrb[0].mxu0
      %v972 = vpop.f32.mrb[0].mxu0
      %v973 = vadd.f32 0.0, %v972
      %v974 = vpop.f32.mrb[0].mxu0
      %975 = vmatprep.mubr.bf16.mxu0 0
      %976 = vmatmul.mubr.bf16.gmra.mrb[0].mxu0 %v834
      %v977 = vpop.f32.mrb[0].mxu0
      %v978 = vadd.f32 0.0, %v977
      %v979 = vpop.f32.mrb[0].mxu0
      %v980 = vpop.f32.mrb[0].mxu0
      %v981 = vadd.f32 0.0, %v980
      %v982 = vpop.f32.mrb[0].mxu0
      %983 = vmatprep.mubr.bf16.mxu0 0
      %984 = vmatmul.mubr.bf16.gmra.mrb[0].mxu0 %v835
      %v985 = vpop.f32.mrb[0].mxu0
      %v986 = vadd.f32 0.0, %v985
      %v987 = vpop.f32.mrb[0].mxu0
      %v988 = vpop.f32.mrb[0].mxu0
      %v989 = vadd.f32 0.0, %v988
      %v990 = vpop.f32.mrb[0].mxu0
      %991 = vmatprep.mubr.bf16.mxu0 0
      %992 = vmatmul.mubr.bf16.gmra.mrb[0].mxu0 %v836
      %v993 = vpop.f32.mrb[0].mxu0
      %v994 = vadd.f32 0.0, %v993
      %v995 = vpop.f32.mrb[0].mxu0
      %v996 = vpop.f32.mrb[0].mxu0
      %v997 = vadd.f32 0.0, %v996
      %v998 = vpop.f32.mrb[0].mxu0
      %999 = vmatprep.mubr.bf16.mxu0 0
      %1000 = vmatmul.mubr.bf16.gmra.mrb[0].mxu0 %v837
      %v1001 = vpop.f32.mrb[0].mxu0
      %v1002 = vadd.f32 0.0, %v1001
      %v1003 = vpop.f32.mrb[0].mxu0
      %v1004 = vpop.f32.mrb[0].mxu0
      %v1005 = vadd.f32 0.0, %v1004
      %v1006 = vpop.f32.mrb[0].mxu0
      %1007 = vdwg.mxu0
      %v1008 = vadd.f32 %v791, %v938
      %v1009 = vadd.f32 %v792, %v941
      %v1010 = vadd.f32 %v793, %v946
      %v1011 = vadd.f32 %v794, %v949
      %v1012 = vadd.f32 %v795, %v954
      %v1013 = vadd.f32 %v796, %v957
      %v1014 = vadd.f32 %v797, %v962
      %v1015 = vadd.f32 %v798, %v965
      %v1016 = vadd.f32 %v799, %v970
      %v1017 = vadd.f32 %v800, %v973
      %v1018 = vadd.f32 %v801, %v978
      %v1019 = vadd.f32 %v802, %v981
      %v1020 = vadd.f32 %v803, %v986
      %v1021 = vadd.f32 %v804, %v989
      %v1022 = vadd.f32 %v805, %v994
      %v1023 = vadd.f32 %v806, %v997
      %v1024 = vadd.f32 %v807, %v1002
      %v1025 = vadd.f32 %v808, %v1005
      %s1026 = sadd.s32 %s195, 19
      %s1027 = scalar_lea.vmem %s183, %s1026
      %v1028 = vld [vmem:[%s1027] sm:$0xff]
      %v1029 = vld [vmem:[%s1027 + $0x8] sm:$0xff]
      %v1030 = vld [vmem:[%s1027 + $0x10] sm:$0xff]
      %v1031 = vld [vmem:[%s1027 + $0x18] sm:$0xff]
      %v1032 = vld [vmem:[%s1027 + $0x20] sm:$0xff]
      %v1033 = vld [vmem:[%s1027 + $0x28] sm:$0xff]
      %v1034 = vld [vmem:[%s1027 + $0x30] sm:$0xff]
      %v1035 = vld [vmem:[%s1027 + $0x38] sm:$0xff]
      %v1036 = vld [vmem:[%s1027 + $0x40] sm:$0xff]
      %v1037 = vld [vmem:[%s1027 + $0x48] sm:$0xff]
      %v1038 = vld [vmem:[%s1027 + $0x50] sm:$0xff]
      %v1039 = vld [vmem:[%s1027 + $0x58] sm:$0xff]
      %v1040 = vld [vmem:[%s1027 + $0x60] sm:$0xff]
      %v1041 = vld [vmem:[%s1027 + $0x68] sm:$0xff]
      %v1042 = vld [vmem:[%s1027 + $0x70] sm:$0xff]
      %v1043 = vld [vmem:[%s1027 + $0x78] sm:$0xff]
      %v1044 = vld [vmem:[%s1027 + $0x80] sm:$0xff]
      %v1045 = vld [vmem:[%s1027 + $0x88] sm:$0xff]
      %v1046 = vpack.c.bf16 %v1029, %v1028
      %v1047 = vpack.c.bf16 %v1031, %v1030
      %v1048 = vpack.c.bf16 %v1033, %v1032
      %v1049 = vpack.c.bf16 %v1035, %v1034
      %v1050 = vpack.c.bf16 %v1037, %v1036
      %v1051 = vpack.c.bf16 %v1039, %v1038
      %v1052 = vpack.c.bf16 %v1041, %v1040
      %v1053 = vpack.c.bf16 %v1043, %v1042
      %v1054 = vpack.c.bf16 %v1045, %v1044
      %s1055 = scalar_lea.vmem %s1, 256
      %v1056 = vld [vmem:[%s1055] sm:$0xf]
      %v1057 = vld [vmem:[%s1055 + $0x4] sm:$0xf]
      %v1058 = vld [vmem:[%s1055 + $0x8] sm:$0xf]
      %v1059 = vld [vmem:[%s1055 + $0xc] sm:$0xf]
      %v1060 = vld [vmem:[%s1055 + $0x10] sm:$0xf]
      %v1061 = vld [vmem:[%s1055 + $0x14] sm:$0xf]
      %v1062 = vld [vmem:[%s1055 + $0x18] sm:$0xf]
      %v1063 = vld [vmem:[%s1055 + $0x1c] sm:$0xf]
      %v1064 = vld [vmem:[%s1055 + $0x20] sm:$0xf]
      %v1065 = vld [vmem:[%s1055 + $0x24] sm:$0xf]
      %v1066 = vld [vmem:[%s1055 + $0x28] sm:$0xf]
      %v1067 = vld [vmem:[%s1055 + $0x2c] sm:$0xf]
      %v1068 = vld [vmem:[%s1055 + $0x30] sm:$0xf]
      %v1069 = vld [vmem:[%s1055 + $0x34] sm:$0xf]
      %v1070 = vld [vmem:[%s1055 + $0x38] sm:$0xf]
      %v1071 = vld [vmem:[%s1055 + $0x3c] sm:$0xf]
      %v1088 = vunpack.c.l.b16 %v1056
      %v1089 = vunpack.c.l.b16 %v1057
      %v1090 = vunpack.c.l.b16 %v1058
      %v1091 = vunpack.c.l.b16 %v1059
      %v1092 = vunpack.c.l.b16 %v1060
      %v1093 = vunpack.c.l.b16 %v1061
      %v1094 = vunpack.c.l.b16 %v1062
      %v1095 = vunpack.c.l.b16 %v1063
      %v1096 = vunpack.c.l.b16 %v1064
      %v1097 = vunpack.c.l.b16 %v1065
      %v1098 = vunpack.c.l.b16 %v1066
      %v1099 = vunpack.c.l.b16 %v1067
      %v1100 = vunpack.c.l.b16 %v1068
      %v1101 = vunpack.c.l.b16 %v1069
      %v1102 = vunpack.c.l.b16 %v1070
      %v1103 = vunpack.c.l.b16 %v1071
      %v1104 = vpack.c.b16 %v1089, %v1088
      %v1105 = vpack.c.b16 %v1091, %v1090
      %v1106 = vpack.c.b16 %v1093, %v1092
      %v1107 = vpack.c.b16 %v1095, %v1094
      %v1108 = vpack.c.b16 %v1097, %v1096
      %v1109 = vpack.c.b16 %v1099, %v1098
      %v1110 = vpack.c.b16 %v1101, %v1100
      %v1111 = vpack.c.b16 %v1103, %v1102
      %1120 = vmatprep.subr.bf16.mxu0 0
      %1121 = vmatpush1.bf16.msra.mxu0 %v1104
      %1122 = vmatprep.subr.bf16.mxu0 0
      %1123 = vmatpush1.bf16.msra.mxu0 %v1105
      %1124 = vmatprep.subr.bf16.mxu0 0
      %1125 = vmatpush1.bf16.msra.mxu0 %v1106
      %1126 = vmatprep.subr.bf16.mxu0 0
      %1127 = vmatpush1.bf16.msra.mxu0 %v1107
      %1128 = vmatprep.subr.bf16.mxu0 0
      %1129 = vmatpush1.bf16.msra.mxu0 %v1108
      %1130 = vmatprep.subr.bf16.mxu0 0
      %1131 = vmatpush1.bf16.msra.mxu0 %v1109
      %1132 = vmatprep.subr.bf16.mxu0 0
      %1133 = vmatpush1.bf16.msra.mxu0 %v1110
      %1134 = vmatprep.subr.bf16.mxu0 0
      %1135 = vmatpush1.bf16.msra.mxu0 %v1111
      %1136 = vmatprep.subr.bf16.mxu0 0
      %1137 = vmatpush1.bf16.msra.mxu0 0
      %1138 = vmatprep.subr.bf16.mxu0 0
      %1139 = vmatpush1.bf16.msra.mxu0 0
      %1140 = vmatprep.subr.bf16.mxu0 0
      %1141 = vmatpush1.bf16.msra.mxu0 0
      %1142 = vmatprep.subr.bf16.mxu0 0
      %1143 = vmatpush1.bf16.msra.mxu0 0
      %1144 = vmatprep.subr.bf16.mxu0 0
      %1145 = vmatpush1.bf16.msra.mxu0 0
      %1146 = vmatprep.subr.bf16.mxu0 0
      %1147 = vmatpush1.bf16.msra.mxu0 0
      %1148 = vmatprep.subr.bf16.mxu0 0
      %1149 = vmatpush1.bf16.msra.mxu0 0
      %1150 = vmatprep.subr.bf16.mxu0 0
      %1151 = vmatpush1.bf16.msra.mxu0 0
      %1152 = vmatprep.mubr.bf16.mxu0 0
      %1153 = vmatmul.mubr.bf16.gmra.mrb[0].mxu0 %v1046
      %v1154 = vpop.f32.mrb[0].mxu0
      %v1155 = vadd.f32 0.0, %v1154
      %v1156 = vpop.f32.mrb[0].mxu0
      %v1157 = vpop.f32.mrb[0].mxu0
      %v1158 = vadd.f32 0.0, %v1157
      %v1159 = vpop.f32.mrb[0].mxu0
      %1160 = vmatprep.mubr.bf16.mxu0 0
      %1161 = vmatmul.mubr.bf16.gmra.mrb[0].mxu0 %v1047
      %v1162 = vpop.f32.mrb[0].mxu0
      %v1163 = vadd.f32 0.0, %v1162
      %v1164 = vpop.f32.mrb[0].mxu0
      %v1165 = vpop.f32.mrb[0].mxu0
      %v1166 = vadd.f32 0.0, %v1165
      %v1167 = vpop.f32.mrb[0].mxu0
      %1168 = vmatprep.mubr.bf16.mxu0 0
      %1169 = vmatmul.mubr.bf16.gmra.mrb[0].mxu0 %v1048
      %v1170 = vpop.f32.mrb[0].mxu0
      %v1171 = vadd.f32 0.0, %v1170
      %v1172 = vpop.f32.mrb[0].mxu0
      %v1173 = vpop.f32.mrb[0].mxu0
      %v1174 = vadd.f32 0.0, %v1173
      %v1175 = vpop.f32.mrb[0].mxu0
      %1176 = vmatprep.mubr.bf16.mxu0 0
      %1177 = vmatmul.mubr.bf16.gmra.mrb[0].mxu0 %v1049
      %v1178 = vpop.f32.mrb[0].mxu0
      %v1179 = vadd.f32 0.0, %v1178
      %v1180 = vpop.f32.mrb[0].mxu0
      %v1181 = vpop.f32.mrb[0].mxu0
      %v1182 = vadd.f32 0.0, %v1181
      %v1183 = vpop.f32.mrb[0].mxu0
      %1184 = vmatprep.mubr.bf16.mxu0 0
      %1185 = vmatmul.mubr.bf16.gmra.mrb[0].mxu0 %v1050
      %v1186 = vpop.f32.mrb[0].mxu0
      %v1187 = vadd.f32 0.0, %v1186
      %v1188 = vpop.f32.mrb[0].mxu0
      %v1189 = vpop.f32.mrb[0].mxu0
      %v1190 = vadd.f32 0.0, %v1189
      %v1191 = vpop.f32.mrb[0].mxu0
      %1192 = vmatprep.mubr.bf16.mxu0 0
      %1193 = vmatmul.mubr.bf16.gmra.mrb[0].mxu0 %v1051
      %v1194 = vpop.f32.mrb[0].mxu0
      %v1195 = vadd.f32 0.0, %v1194
      %v1196 = vpop.f32.mrb[0].mxu0
      %v1197 = vpop.f32.mrb[0].mxu0
      %v1198 = vadd.f32 0.0, %v1197
      %v1199 = vpop.f32.mrb[0].mxu0
      %1200 = vmatprep.mubr.bf16.mxu0 0
      %1201 = vmatmul.mubr.bf16.gmra.mrb[0].mxu0 %v1052
      %v1202 = vpop.f32.mrb[0].mxu0
      %v1203 = vadd.f32 0.0, %v1202
      %v1204 = vpop.f32.mrb[0].mxu0
      %v1205 = vpop.f32.mrb[0].mxu0
      %v1206 = vadd.f32 0.0, %v1205
      %v1207 = vpop.f32.mrb[0].mxu0
      %1208 = vmatprep.mubr.bf16.mxu0 0
      %1209 = vmatmul.mubr.bf16.gmra.mrb[0].mxu0 %v1053
      %v1210 = vpop.f32.mrb[0].mxu0
      %v1211 = vadd.f32 0.0, %v1210
      %v1212 = vpop.f32.mrb[0].mxu0
      %v1213 = vpop.f32.mrb[0].mxu0
      %v1214 = vadd.f32 0.0, %v1213
      %v1215 = vpop.f32.mrb[0].mxu0
      %1216 = vmatprep.mubr.bf16.mxu0 0
      %1217 = vmatmul.mubr.bf16.gmra.mrb[0].mxu0 %v1054
      %v1218 = vpop.f32.mrb[0].mxu0
      %v1219 = vadd.f32 0.0, %v1218
      %v1220 = vpop.f32.mrb[0].mxu0
      %v1221 = vpop.f32.mrb[0].mxu0
      %v1222 = vadd.f32 0.0, %v1221
      %v1223 = vpop.f32.mrb[0].mxu0
      %1224 = vdwg.mxu0
      %v1225 = vadd.f32 %v1008, %v1155
      %v1226 = vadd.f32 %v1009, %v1158
      %v1227 = vadd.f32 %v1010, %v1163
      %v1228 = vadd.f32 %v1011, %v1166
      %v1229 = vadd.f32 %v1012, %v1171
      %v1230 = vadd.f32 %v1013, %v1174
      %v1231 = vadd.f32 %v1014, %v1179
      %v1232 = vadd.f32 %v1015, %v1182
      %v1233 = vadd.f32 %v1016, %v1187
      %v1234 = vadd.f32 %v1017, %v1190
      %v1235 = vadd.f32 %v1018, %v1195
      %v1236 = vadd.f32 %v1019, %v1198
      %v1237 = vadd.f32 %v1020, %v1203
      %v1238 = vadd.f32 %v1021, %v1206
      %v1239 = vadd.f32 %v1022, %v1211
      %v1240 = vadd.f32 %v1023, %v1214
      %v1241 = vadd.f32 %v1024, %v1219
      %v1242 = vadd.f32 %v1025, %v1222
      %s1243 = sadd.s32 %s195, 20
      %s1244 = scalar_lea.vmem %s183, %s1243
      %v1245 = vld [vmem:[%s1244] sm:$0xff]
      %v1246 = vld [vmem:[%s1244 + $0x8] sm:$0xff]
      %v1247 = vld [vmem:[%s1244 + $0x10] sm:$0xff]
      %v1248 = vld [vmem:[%s1244 + $0x18] sm:$0xff]
      %v1249 = vld [vmem:[%s1244 + $0x20] sm:$0xff]
      %v1250 = vld [vmem:[%s1244 + $0x28] sm:$0xff]
      %v1251 = vld [vmem:[%s1244 + $0x30] sm:$0xff]
      %v1252 = vld [vmem:[%s1244 + $0x38] sm:$0xff]
      %v1253 = vld [vmem:[%s1244 + $0x40] sm:$0xff]
      %v1254 = vld [vmem:[%s1244 + $0x48] sm:$0xff]
      %v1255 = vld [vmem:[%s1244 + $0x50] sm:$0xff]
      %v1256 = vld [vmem:[%s1244 + $0x58] sm:$0xff]
      %v1257 = vld [vmem:[%s1244 + $0x60] sm:$0xff]
      %v1258 = vld [vmem:[%s1244 + $0x68] sm:$0xff]
      %v1259 = vld [vmem:[%s1244 + $0x70] sm:$0xff]
      %v1260 = vld [vmem:[%s1244 + $0x78] sm:$0xff]
      %v1261 = vld [vmem:[%s1244 + $0x80] sm:$0xff]
      %v1262 = vld [vmem:[%s1244 + $0x88] sm:$0xff]
      %v1263 = vpack.c.bf16 %v1246, %v1245
      %v1264 = vpack.c.bf16 %v1248, %v1247
      %v1265 = vpack.c.bf16 %v1250, %v1249
      %v1266 = vpack.c.bf16 %v1252, %v1251
      %v1267 = vpack.c.bf16 %v1254, %v1253
      %v1268 = vpack.c.bf16 %v1256, %v1255
      %v1269 = vpack.c.bf16 %v1258, %v1257
      %v1270 = vpack.c.bf16 %v1260, %v1259
      %v1271 = vpack.c.bf16 %v1262, %v1261
      %s1272 = scalar_lea.vmem %s1, 320
      %v1273 = vld [vmem:[%s1272] sm:$0xf]
      %v1274 = vld [vmem:[%s1272 + $0x4] sm:$0xf]
      %v1275 = vld [vmem:[%s1272 + $0x8] sm:$0xf]
      %v1276 = vld [vmem:[%s1272 + $0xc] sm:$0xf]
      %v1277 = vld [vmem:[%s1272 + $0x10] sm:$0xf]
      %v1278 = vld [vmem:[%s1272 + $0x14] sm:$0xf]
      %v1279 = vld [vmem:[%s1272 + $0x18] sm:$0xf]
      %v1280 = vld [vmem:[%s1272 + $0x1c] sm:$0xf]
      %v1281 = vld [vmem:[%s1272 + $0x20] sm:$0xf]
      %v1282 = vld [vmem:[%s1272 + $0x24] sm:$0xf]
      %v1283 = vld [vmem:[%s1272 + $0x28] sm:$0xf]
      %v1284 = vld [vmem:[%s1272 + $0x2c] sm:$0xf]
      %v1285 = vld [vmem:[%s1272 + $0x30] sm:$0xf]
      %v1286 = vld [vmem:[%s1272 + $0x34] sm:$0xf]
      %v1287 = vld [vmem:[%s1272 + $0x38] sm:$0xf]
      %v1288 = vld [vmem:[%s1272 + $0x3c] sm:$0xf]
      %v1305 = vunpack.c.l.b16 %v1273
      %v1306 = vunpack.c.l.b16 %v1274
      %v1307 = vunpack.c.l.b16 %v1275
      %v1308 = vunpack.c.l.b16 %v1276
      %v1309 = vunpack.c.l.b16 %v1277
      %v1310 = vunpack.c.l.b16 %v1278
      %v1311 = vunpack.c.l.b16 %v1279
      %v1312 = vunpack.c.l.b16 %v1280
      %v1313 = vunpack.c.l.b16 %v1281
      %v1314 = vunpack.c.l.b16 %v1282
      %v1315 = vunpack.c.l.b16 %v1283
      %v1316 = vunpack.c.l.b16 %v1284
      %v1317 = vunpack.c.l.b16 %v1285
      %v1318 = vunpack.c.l.b16 %v1286
      %v1319 = vunpack.c.l.b16 %v1287
      %v1320 = vunpack.c.l.b16 %v1288
      %v1321 = vpack.c.b16 %v1306, %v1305
      %v1322 = vpack.c.b16 %v1308, %v1307
      %v1323 = vpack.c.b16 %v1310, %v1309
      %v1324 = vpack.c.b16 %v1312, %v1311
      %v1325 = vpack.c.b16 %v1314, %v1313
      %v1326 = vpack.c.b16 %v1316, %v1315
      %v1327 = vpack.c.b16 %v1318, %v1317
      %v1328 = vpack.c.b16 %v1320, %v1319
      %1337 = vmatprep.subr.bf16.mxu0 0
      %1338 = vmatpush1.bf16.msra.mxu0 %v1321
      %1339 = vmatprep.subr.bf16.mxu0 0
      %1340 = vmatpush1.bf16.msra.mxu0 %v1322
      %1341 = vmatprep.subr.bf16.mxu0 0
      %1342 = vmatpush1.bf16.msra.mxu0 %v1323
      %1343 = vmatprep.subr.bf16.mxu0 0
      %1344 = vmatpush1.bf16.msra.mxu0 %v1324
      %1345 = vmatprep.subr.bf16.mxu0 0
      %1346 = vmatpush1.bf16.msra.mxu0 %v1325
      %1347 = vmatprep.subr.bf16.mxu0 0
      %1348 = vmatpush1.bf16.msra.mxu0 %v1326
      %1349 = vmatprep.subr.bf16.mxu0 0
      %1350 = vmatpush1.bf16.msra.mxu0 %v1327
      %1351 = vmatprep.subr.bf16.mxu0 0
      %1352 = vmatpush1.bf16.msra.mxu0 %v1328
      %1353 = vmatprep.subr.bf16.mxu0 0
      %1354 = vmatpush1.bf16.msra.mxu0 0
      %1355 = vmatprep.subr.bf16.mxu0 0
      %1356 = vmatpush1.bf16.msra.mxu0 0
      %1357 = vmatprep.subr.bf16.mxu0 0
      %1358 = vmatpush1.bf16.msra.mxu0 0
      %1359 = vmatprep.subr.bf16.mxu0 0
      %1360 = vmatpush1.bf16.msra.mxu0 0
      %1361 = vmatprep.subr.bf16.mxu0 0
      %1362 = vmatpush1.bf16.msra.mxu0 0
      %1363 = vmatprep.subr.bf16.mxu0 0
      %1364 = vmatpush1.bf16.msra.mxu0 0
      %1365 = vmatprep.subr.bf16.mxu0 0
      %1366 = vmatpush1.bf16.msra.mxu0 0
      %1367 = vmatprep.subr.bf16.mxu0 0
      %1368 = vmatpush1.bf16.msra.mxu0 0
      %1369 = vmatprep.mubr.bf16.mxu0 0
      %1370 = vmatmul.mubr.bf16.gmra.mrb[0].mxu0 %v1263
      %v1371 = vpop.f32.mrb[0].mxu0
      %v1372 = vadd.f32 0.0, %v1371
      %v1373 = vpop.f32.mrb[0].mxu0
      %v1374 = vpop.f32.mrb[0].mxu0
      %v1375 = vadd.f32 0.0, %v1374
      %v1376 = vpop.f32.mrb[0].mxu0
      %1377 = vmatprep.mubr.bf16.mxu0 0
      %1378 = vmatmul.mubr.bf16.gmra.mrb[0].mxu0 %v1264
      %v1379 = vpop.f32.mrb[0].mxu0
      %v1380 = vadd.f32 0.0, %v1379
      %v1381 = vpop.f32.mrb[0].mxu0
      %v1382 = vpop.f32.mrb[0].mxu0
      %v1383 = vadd.f32 0.0, %v1382
      %v1384 = vpop.f32.mrb[0].mxu0
      %1385 = vmatprep.mubr.bf16.mxu0 0
      %1386 = vmatmul.mubr.bf16.gmra.mrb[0].mxu0 %v1265
      %v1387 = vpop.f32.mrb[0].mxu0
      %v1388 = vadd.f32 0.0, %v1387
      %v1389 = vpop.f32.mrb[0].mxu0
      %v1390 = vpop.f32.mrb[0].mxu0
      %v1391 = vadd.f32 0.0, %v1390
      %v1392 = vpop.f32.mrb[0].mxu0
      %1393 = vmatprep.mubr.bf16.mxu0 0
      %1394 = vmatmul.mubr.bf16.gmra.mrb[0].mxu0 %v1266
      %v1395 = vpop.f32.mrb[0].mxu0
      %v1396 = vadd.f32 0.0, %v1395
      %v1397 = vpop.f32.mrb[0].mxu0
      %v1398 = vpop.f32.mrb[0].mxu0
      %v1399 = vadd.f32 0.0, %v1398
      %v1400 = vpop.f32.mrb[0].mxu0
      %1401 = vmatprep.mubr.bf16.mxu0 0
      %1402 = vmatmul.mubr.bf16.gmra.mrb[0].mxu0 %v1267
      %v1403 = vpop.f32.mrb[0].mxu0
      %v1404 = vadd.f32 0.0, %v1403
      %v1405 = vpop.f32.mrb[0].mxu0
      %v1406 = vpop.f32.mrb[0].mxu0
      %v1407 = vadd.f32 0.0, %v1406
      %v1408 = vpop.f32.mrb[0].mxu0
      %1409 = vmatprep.mubr.bf16.mxu0 0
      %1410 = vmatmul.mubr.bf16.gmra.mrb[0].mxu0 %v1268
      %v1411 = vpop.f32.mrb[0].mxu0
      %v1412 = vadd.f32 0.0, %v1411
      %v1413 = vpop.f32.mrb[0].mxu0
      %v1414 = vpop.f32.mrb[0].mxu0
      %v1415 = vadd.f32 0.0, %v1414
      %v1416 = vpop.f32.mrb[0].mxu0
      %1417 = vmatprep.mubr.bf16.mxu0 0
      %1418 = vmatmul.mubr.bf16.gmra.mrb[0].mxu0 %v1269
      %v1419 = vpop.f32.mrb[0].mxu0
      %v1420 = vadd.f32 0.0, %v1419
      %v1421 = vpop.f32.mrb[0].mxu0
      %v1422 = vpop.f32.mrb[0].mxu0
      %v1423 = vadd.f32 0.0, %v1422
      %v1424 = vpop.f32.mrb[0].mxu0
      %1425 = vmatprep.mubr.bf16.mxu0 0
      %1426 = vmatmul.mubr.bf16.gmra.mrb[0].mxu0 %v1270
      %v1427 = vpop.f32.mrb[0].mxu0
      %v1428 = vadd.f32 0.0, %v1427
      %v1429 = vpop.f32.mrb[0].mxu0
      %v1430 = vpop.f32.mrb[0].mxu0
      %v1431 = vadd.f32 0.0, %v1430
      %v1432 = vpop.f32.mrb[0].mxu0
      %1433 = vmatprep.mubr.bf16.mxu0 0
      %1434 = vmatmul.mubr.bf16.gmra.mrb[0].mxu0 %v1271
      %v1435 = vpop.f32.mrb[0].mxu0
      %v1436 = vadd.f32 0.0, %v1435
      %v1437 = vpop.f32.mrb[0].mxu0
      %v1438 = vpop.f32.mrb[0].mxu0
      %v1439 = vadd.f32 0.0, %v1438
      %v1440 = vpop.f32.mrb[0].mxu0
      %1441 = vdwg.mxu0
      %v1442 = vadd.f32 %v1225, %v1372
      %v1443 = vadd.f32 %v1226, %v1375
      %v1444 = vadd.f32 %v1227, %v1380
      %v1445 = vadd.f32 %v1228, %v1383
      %v1446 = vadd.f32 %v1229, %v1388
      %v1447 = vadd.f32 %v1230, %v1391
      %v1448 = vadd.f32 %v1231, %v1396
      %v1449 = vadd.f32 %v1232, %v1399
      %v1450 = vadd.f32 %v1233, %v1404
      %v1451 = vadd.f32 %v1234, %v1407
      %v1452 = vadd.f32 %v1235, %v1412
      %v1453 = vadd.f32 %v1236, %v1415
      %v1454 = vadd.f32 %v1237, %v1420
      %v1455 = vadd.f32 %v1238, %v1423
      %v1456 = vadd.f32 %v1239, %v1428
      %v1457 = vadd.f32 %v1240, %v1431
      %v1458 = vadd.f32 %v1241, %v1436
      %v1459 = vadd.f32 %v1242, %v1439
      %s1460 = sadd.s32 %s195, 36
      %s1461 = scalar_lea.vmem %s183, %s1460
      %v1462 = vld [vmem:[%s1461] sm:$0xff]
      %v1463 = vld [vmem:[%s1461 + $0x8] sm:$0xff]
      %v1464 = vld [vmem:[%s1461 + $0x10] sm:$0xff]
      %v1465 = vld [vmem:[%s1461 + $0x18] sm:$0xff]
      %v1466 = vld [vmem:[%s1461 + $0x20] sm:$0xff]
      %v1467 = vld [vmem:[%s1461 + $0x28] sm:$0xff]
      %v1468 = vld [vmem:[%s1461 + $0x30] sm:$0xff]
      %v1469 = vld [vmem:[%s1461 + $0x38] sm:$0xff]
      %v1470 = vld [vmem:[%s1461 + $0x40] sm:$0xff]
      %v1471 = vld [vmem:[%s1461 + $0x48] sm:$0xff]
      %v1472 = vld [vmem:[%s1461 + $0x50] sm:$0xff]
      %v1473 = vld [vmem:[%s1461 + $0x58] sm:$0xff]
      %v1474 = vld [vmem:[%s1461 + $0x60] sm:$0xff]
      %v1475 = vld [vmem:[%s1461 + $0x68] sm:$0xff]
      %v1476 = vld [vmem:[%s1461 + $0x70] sm:$0xff]
      %v1477 = vld [vmem:[%s1461 + $0x78] sm:$0xff]
      %v1478 = vld [vmem:[%s1461 + $0x80] sm:$0xff]
      %v1479 = vld [vmem:[%s1461 + $0x88] sm:$0xff]
      %v1480 = vpack.c.bf16 %v1463, %v1462
      %v1481 = vpack.c.bf16 %v1465, %v1464
      %v1482 = vpack.c.bf16 %v1467, %v1466
      %v1483 = vpack.c.bf16 %v1469, %v1468
      %v1484 = vpack.c.bf16 %v1471, %v1470
      %v1485 = vpack.c.bf16 %v1473, %v1472
      %v1486 = vpack.c.bf16 %v1475, %v1474
      %v1487 = vpack.c.bf16 %v1477, %v1476
      %v1488 = vpack.c.bf16 %v1479, %v1478
      %s1489 = scalar_lea.vmem %s1, 384
      %v1490 = vld [vmem:[%s1489] sm:$0xf]
      %v1491 = vld [vmem:[%s1489 + $0x4] sm:$0xf]
      %v1492 = vld [vmem:[%s1489 + $0x8] sm:$0xf]
      %v1493 = vld [vmem:[%s1489 + $0xc] sm:$0xf]
      %v1494 = vld [vmem:[%s1489 + $0x10] sm:$0xf]
      %v1495 = vld [vmem:[%s1489 + $0x14] sm:$0xf]
      %v1496 = vld [vmem:[%s1489 + $0x18] sm:$0xf]
      %v1497 = vld [vmem:[%s1489 + $0x1c] sm:$0xf]
      %v1498 = vld [vmem:[%s1489 + $0x20] sm:$0xf]
      %v1499 = vld [vmem:[%s1489 + $0x24] sm:$0xf]
      %v1500 = vld [vmem:[%s1489 + $0x28] sm:$0xf]
      %v1501 = vld [vmem:[%s1489 + $0x2c] sm:$0xf]
      %v1502 = vld [vmem:[%s1489 + $0x30] sm:$0xf]
      %v1503 = vld [vmem:[%s1489 + $0x34] sm:$0xf]
      %v1504 = vld [vmem:[%s1489 + $0x38] sm:$0xf]
      %v1505 = vld [vmem:[%s1489 + $0x3c] sm:$0xf]
      %v1522 = vunpack.c.l.b16 %v1490
      %v1523 = vunpack.c.l.b16 %v1491
      %v1524 = vunpack.c.l.b16 %v1492
      %v1525 = vunpack.c.l.b16 %v1493
      %v1526 = vunpack.c.l.b16 %v1494
      %v1527 = vunpack.c.l.b16 %v1495
      %v1528 = vunpack.c.l.b16 %v1496
      %v1529 = vunpack.c.l.b16 %v1497
      %v1530 = vunpack.c.l.b16 %v1498
      %v1531 = vunpack.c.l.b16 %v1499
      %v1532 = vunpack.c.l.b16 %v1500
      %v1533 = vunpack.c.l.b16 %v1501
      %v1534 = vunpack.c.l.b16 %v1502
      %v1535 = vunpack.c.l.b16 %v1503
      %v1536 = vunpack.c.l.b16 %v1504
      %v1537 = vunpack.c.l.b16 %v1505
      %v1538 = vpack.c.b16 %v1523, %v1522
      %v1539 = vpack.c.b16 %v1525, %v1524
      %v1540 = vpack.c.b16 %v1527, %v1526
      %v1541 = vpack.c.b16 %v1529, %v1528
      %v1542 = vpack.c.b16 %v1531, %v1530
      %v1543 = vpack.c.b16 %v1533, %v1532
      %v1544 = vpack.c.b16 %v1535, %v1534
      %v1545 = vpack.c.b16 %v1537, %v1536
      %1554 = vmatprep.subr.bf16.mxu0 0
      %1555 = vmatpush1.bf16.msra.mxu0 %v1538
      %1556 = vmatprep.subr.bf16.mxu0 0
      %1557 = vmatpush1.bf16.msra.mxu0 %v1539
      %1558 = vmatprep.subr.bf16.mxu0 0
      %1559 = vmatpush1.bf16.msra.mxu0 %v1540
      %1560 = vmatprep.subr.bf16.mxu0 0
      %1561 = vmatpush1.bf16.msra.mxu0 %v1541
      %1562 = vmatprep.subr.bf16.mxu0 0
      %1563 = vmatpush1.bf16.msra.mxu0 %v1542
      %1564 = vmatprep.subr.bf16.mxu0 0
      %1565 = vmatpush1.bf16.msra.mxu0 %v1543
      %1566 = vmatprep.subr.bf16.mxu0 0
      %1567 = vmatpush1.bf16.msra.mxu0 %v1544
      %1568 = vmatprep.subr.bf16.mxu0 0
      %1569 = vmatpush1.bf16.msra.mxu0 %v1545
      %1570 = vmatprep.subr.bf16.mxu0 0
      %1571 = vmatpush1.bf16.msra.mxu0 0
      %1572 = vmatprep.subr.bf16.mxu0 0
      %1573 = vmatpush1.bf16.msra.mxu0 0
      %1574 = vmatprep.subr.bf16.mxu0 0
      %1575 = vmatpush1.bf16.msra.mxu0 0
      %1576 = vmatprep.subr.bf16.mxu0 0
      %1577 = vmatpush1.bf16.msra.mxu0 0
      %1578 = vmatprep.subr.bf16.mxu0 0
      %1579 = vmatpush1.bf16.msra.mxu0 0
      %1580 = vmatprep.subr.bf16.mxu0 0
      %1581 = vmatpush1.bf16.msra.mxu0 0
      %1582 = vmatprep.subr.bf16.mxu0 0
      %1583 = vmatpush1.bf16.msra.mxu0 0
      %1584 = vmatprep.subr.bf16.mxu0 0
      %1585 = vmatpush1.bf16.msra.mxu0 0
      %1586 = vmatprep.mubr.bf16.mxu0 0
      %1587 = vmatmul.mubr.bf16.gmra.mrb[0].mxu0 %v1480
      %v1588 = vpop.f32.mrb[0].mxu0
      %v1589 = vadd.f32 0.0, %v1588
      %v1590 = vpop.f32.mrb[0].mxu0
      %v1591 = vpop.f32.mrb[0].mxu0
      %v1592 = vadd.f32 0.0, %v1591
      %v1593 = vpop.f32.mrb[0].mxu0
      %1594 = vmatprep.mubr.bf16.mxu0 0
      %1595 = vmatmul.mubr.bf16.gmra.mrb[0].mxu0 %v1481
      %v1596 = vpop.f32.mrb[0].mxu0
      %v1597 = vadd.f32 0.0, %v1596
      %v1598 = vpop.f32.mrb[0].mxu0
      %v1599 = vpop.f32.mrb[0].mxu0
      %v1600 = vadd.f32 0.0, %v1599
      %v1601 = vpop.f32.mrb[0].mxu0
      %1602 = vmatprep.mubr.bf16.mxu0 0
      %1603 = vmatmul.mubr.bf16.gmra.mrb[0].mxu0 %v1482
      %v1604 = vpop.f32.mrb[0].mxu0
      %v1605 = vadd.f32 0.0, %v1604
      %v1606 = vpop.f32.mrb[0].mxu0
      %v1607 = vpop.f32.mrb[0].mxu0
      %v1608 = vadd.f32 0.0, %v1607
      %v1609 = vpop.f32.mrb[0].mxu0
      %1610 = vmatprep.mubr.bf16.mxu0 0
      %1611 = vmatmul.mubr.bf16.gmra.mrb[0].mxu0 %v1483
      %v1612 = vpop.f32.mrb[0].mxu0
      %v1613 = vadd.f32 0.0, %v1612
      %v1614 = vpop.f32.mrb[0].mxu0
      %v1615 = vpop.f32.mrb[0].mxu0
      %v1616 = vadd.f32 0.0, %v1615
      %v1617 = vpop.f32.mrb[0].mxu0
      %1618 = vmatprep.mubr.bf16.mxu0 0
      %1619 = vmatmul.mubr.bf16.gmra.mrb[0].mxu0 %v1484
      %v1620 = vpop.f32.mrb[0].mxu0
      %v1621 = vadd.f32 0.0, %v1620
      %v1622 = vpop.f32.mrb[0].mxu0
      %v1623 = vpop.f32.mrb[0].mxu0
      %v1624 = vadd.f32 0.0, %v1623
      %v1625 = vpop.f32.mrb[0].mxu0
      %1626 = vmatprep.mubr.bf16.mxu0 0
      %1627 = vmatmul.mubr.bf16.gmra.mrb[0].mxu0 %v1485
      %v1628 = vpop.f32.mrb[0].mxu0
      %v1629 = vadd.f32 0.0, %v1628
      %v1630 = vpop.f32.mrb[0].mxu0
      %v1631 = vpop.f32.mrb[0].mxu0
      %v1632 = vadd.f32 0.0, %v1631
      %v1633 = vpop.f32.mrb[0].mxu0
      %1634 = vmatprep.mubr.bf16.mxu0 0
      %1635 = vmatmul.mubr.bf16.gmra.mrb[0].mxu0 %v1486
      %v1636 = vpop.f32.mrb[0].mxu0
      %v1637 = vadd.f32 0.0, %v1636
      %v1638 = vpop.f32.mrb[0].mxu0
      %v1639 = vpop.f32.mrb[0].mxu0
      %v1640 = vadd.f32 0.0, %v1639
      %v1641 = vpop.f32.mrb[0].mxu0
      %1642 = vmatprep.mubr.bf16.mxu0 0
      %1643 = vmatmul.mubr.bf16.gmra.mrb[0].mxu0 %v1487
      %v1644 = vpop.f32.mrb[0].mxu0
      %v1645 = vadd.f32 0.0, %v1644
      %v1646 = vpop.f32.mrb[0].mxu0
      %v1647 = vpop.f32.mrb[0].mxu0
      %v1648 = vadd.f32 0.0, %v1647
      %v1649 = vpop.f32.mrb[0].mxu0
      %1650 = vmatprep.mubr.bf16.mxu0 0
      %1651 = vmatmul.mubr.bf16.gmra.mrb[0].mxu0 %v1488
      %v1652 = vpop.f32.mrb[0].mxu0
      %v1653 = vadd.f32 0.0, %v1652
      %v1654 = vpop.f32.mrb[0].mxu0
      %v1655 = vpop.f32.mrb[0].mxu0
      %v1656 = vadd.f32 0.0, %v1655
      %v1657 = vpop.f32.mrb[0].mxu0
      %1658 = vdwg.mxu0
      %v1659 = vadd.f32 %v1442, %v1589
      %v1660 = vadd.f32 %v1443, %v1592
      %v1661 = vadd.f32 %v1444, %v1597
      %v1662 = vadd.f32 %v1445, %v1600
      %v1663 = vadd.f32 %v1446, %v1605
      %v1664 = vadd.f32 %v1447, %v1608
      %v1665 = vadd.f32 %v1448, %v1613
      %v1666 = vadd.f32 %v1449, %v1616
      %v1667 = vadd.f32 %v1450, %v1621
      %v1668 = vadd.f32 %v1451, %v1624
      %v1669 = vadd.f32 %v1452, %v1629
      %v1670 = vadd.f32 %v1453, %v1632
      %v1671 = vadd.f32 %v1454, %v1637
      %v1672 = vadd.f32 %v1455, %v1640
      %v1673 = vadd.f32 %v1456, %v1645
      %v1674 = vadd.f32 %v1457, %v1648
      %v1675 = vadd.f32 %v1458, %v1653
      %v1676 = vadd.f32 %v1459, %v1656
      %s1677 = sadd.s32 %s195, 37
      %s1678 = scalar_lea.vmem %s183, %s1677
      %v1679 = vld [vmem:[%s1678] sm:$0xff]
      %v1680 = vld [vmem:[%s1678 + $0x8] sm:$0xff]
      %v1681 = vld [vmem:[%s1678 + $0x10] sm:$0xff]
      %v1682 = vld [vmem:[%s1678 + $0x18] sm:$0xff]
      %v1683 = vld [vmem:[%s1678 + $0x20] sm:$0xff]
      %v1684 = vld [vmem:[%s1678 + $0x28] sm:$0xff]
      %v1685 = vld [vmem:[%s1678 + $0x30] sm:$0xff]
      %v1686 = vld [vmem:[%s1678 + $0x38] sm:$0xff]
      %v1687 = vld [vmem:[%s1678 + $0x40] sm:$0xff]
      %v1688 = vld [vmem:[%s1678 + $0x48] sm:$0xff]
      %v1689 = vld [vmem:[%s1678 + $0x50] sm:$0xff]
      %v1690 = vld [vmem:[%s1678 + $0x58] sm:$0xff]
      %v1691 = vld [vmem:[%s1678 + $0x60] sm:$0xff]
      %v1692 = vld [vmem:[%s1678 + $0x68] sm:$0xff]
      %v1693 = vld [vmem:[%s1678 + $0x70] sm:$0xff]
      %v1694 = vld [vmem:[%s1678 + $0x78] sm:$0xff]
      %v1695 = vld [vmem:[%s1678 + $0x80] sm:$0xff]
      %v1696 = vld [vmem:[%s1678 + $0x88] sm:$0xff]
      %v1697 = vpack.c.bf16 %v1680, %v1679
      %v1698 = vpack.c.bf16 %v1682, %v1681
      %v1699 = vpack.c.bf16 %v1684, %v1683
      %v1700 = vpack.c.bf16 %v1686, %v1685
      %v1701 = vpack.c.bf16 %v1688, %v1687
      %v1702 = vpack.c.bf16 %v1690, %v1689
      %v1703 = vpack.c.bf16 %v1692, %v1691
      %v1704 = vpack.c.bf16 %v1694, %v1693
      %v1705 = vpack.c.bf16 %v1696, %v1695
      %s1706 = scalar_lea.vmem %s1, 448
      %v1707 = vld [vmem:[%s1706] sm:$0xf]
      %v1708 = vld [vmem:[%s1706 + $0x4] sm:$0xf]
      %v1709 = vld [vmem:[%s1706 + $0x8] sm:$0xf]
      %v1710 = vld [vmem:[%s1706 + $0xc] sm:$0xf]
      %v1711 = vld [vmem:[%s1706 + $0x10] sm:$0xf]
      %v1712 = vld [vmem:[%s1706 + $0x14] sm:$0xf]
      %v1713 = vld [vmem:[%s1706 + $0x18] sm:$0xf]
      %v1714 = vld [vmem:[%s1706 + $0x1c] sm:$0xf]
      %v1715 = vld [vmem:[%s1706 + $0x20] sm:$0xf]
      %v1716 = vld [vmem:[%s1706 + $0x24] sm:$0xf]
      %v1717 = vld [vmem:[%s1706 + $0x28] sm:$0xf]
      %v1718 = vld [vmem:[%s1706 + $0x2c] sm:$0xf]
      %v1719 = vld [vmem:[%s1706 + $0x30] sm:$0xf]
      %v1720 = vld [vmem:[%s1706 + $0x34] sm:$0xf]
      %v1721 = vld [vmem:[%s1706 + $0x38] sm:$0xf]
      %v1722 = vld [vmem:[%s1706 + $0x3c] sm:$0xf]
      %v1739 = vunpack.c.l.b16 %v1707
      %v1740 = vunpack.c.l.b16 %v1708
      %v1741 = vunpack.c.l.b16 %v1709
      %v1742 = vunpack.c.l.b16 %v1710
      %v1743 = vunpack.c.l.b16 %v1711
      %v1744 = vunpack.c.l.b16 %v1712
      %v1745 = vunpack.c.l.b16 %v1713
      %v1746 = vunpack.c.l.b16 %v1714
      %v1747 = vunpack.c.l.b16 %v1715
      %v1748 = vunpack.c.l.b16 %v1716
      %v1749 = vunpack.c.l.b16 %v1717
      %v1750 = vunpack.c.l.b16 %v1718
      %v1751 = vunpack.c.l.b16 %v1719
      %v1752 = vunpack.c.l.b16 %v1720
      %v1753 = vunpack.c.l.b16 %v1721
      %v1754 = vunpack.c.l.b16 %v1722
      %v1755 = vpack.c.b16 %v1740, %v1739
      %v1756 = vpack.c.b16 %v1742, %v1741
      %v1757 = vpack.c.b16 %v1744, %v1743
      %v1758 = vpack.c.b16 %v1746, %v1745
      %v1759 = vpack.c.b16 %v1748, %v1747
      %v1760 = vpack.c.b16 %v1750, %v1749
      %v1761 = vpack.c.b16 %v1752, %v1751
      %v1762 = vpack.c.b16 %v1754, %v1753
      %1771 = vmatprep.subr.bf16.mxu0 0
      %1772 = vmatpush1.bf16.msra.mxu0 %v1755
      %1773 = vmatprep.subr.bf16.mxu0 0
      %1774 = vmatpush1.bf16.msra.mxu0 %v1756
      %1775 = vmatprep.subr.bf16.mxu0 0
      %1776 = vmatpush1.bf16.msra.mxu0 %v1757
      %1777 = vmatprep.subr.bf16.mxu0 0
      %1778 = vmatpush1.bf16.msra.mxu0 %v1758
      %1779 = vmatprep.subr.bf16.mxu0 0
      %1780 = vmatpush1.bf16.msra.mxu0 %v1759
      %1781 = vmatprep.subr.bf16.mxu0 0
      %1782 = vmatpush1.bf16.msra.mxu0 %v1760
      %1783 = vmatprep.subr.bf16.mxu0 0
      %1784 = vmatpush1.bf16.msra.mxu0 %v1761
      %1785 = vmatprep.subr.bf16.mxu0 0
      %1786 = vmatpush1.bf16.msra.mxu0 %v1762
      %1787 = vmatprep.subr.bf16.mxu0 0
      %1788 = vmatpush1.bf16.msra.mxu0 0
      %1789 = vmatprep.subr.bf16.mxu0 0
      %1790 = vmatpush1.bf16.msra.mxu0 0
      %1791 = vmatprep.subr.bf16.mxu0 0
      %1792 = vmatpush1.bf16.msra.mxu0 0
      %1793 = vmatprep.subr.bf16.mxu0 0
      %1794 = vmatpush1.bf16.msra.mxu0 0
      %1795 = vmatprep.subr.bf16.mxu0 0
      %1796 = vmatpush1.bf16.msra.mxu0 0
      %1797 = vmatprep.subr.bf16.mxu0 0
      %1798 = vmatpush1.bf16.msra.mxu0 0
      %1799 = vmatprep.subr.bf16.mxu0 0
      %1800 = vmatpush1.bf16.msra.mxu0 0
      %1801 = vmatprep.subr.bf16.mxu0 0
      %1802 = vmatpush1.bf16.msra.mxu0 0
      %1803 = vmatprep.mubr.bf16.mxu0 0
      %1804 = vmatmul.mubr.bf16.gmra.mrb[0].mxu0 %v1697
      %v1805 = vpop.f32.mrb[0].mxu0
      %v1806 = vadd.f32 0.0, %v1805
      %v1807 = vpop.f32.mrb[0].mxu0
      %v1808 = vpop.f32.mrb[0].mxu0
      %v1809 = vadd.f32 0.0, %v1808
      %v1810 = vpop.f32.mrb[0].mxu0
      %1811 = vmatprep.mubr.bf16.mxu0 0
      %1812 = vmatmul.mubr.bf16.gmra.mrb[0].mxu0 %v1698
      %v1813 = vpop.f32.mrb[0].mxu0
      %v1814 = vadd.f32 0.0, %v1813
      %v1815 = vpop.f32.mrb[0].mxu0
      %v1816 = vpop.f32.mrb[0].mxu0
      %v1817 = vadd.f32 0.0, %v1816
      %v1818 = vpop.f32.mrb[0].mxu0
      %1819 = vmatprep.mubr.bf16.mxu0 0
      %1820 = vmatmul.mubr.bf16.gmra.mrb[0].mxu0 %v1699
      %v1821 = vpop.f32.mrb[0].mxu0
      %v1822 = vadd.f32 0.0, %v1821
      %v1823 = vpop.f32.mrb[0].mxu0
      %v1824 = vpop.f32.mrb[0].mxu0
      %v1825 = vadd.f32 0.0, %v1824
      %v1826 = vpop.f32.mrb[0].mxu0
      %1827 = vmatprep.mubr.bf16.mxu0 0
      %1828 = vmatmul.mubr.bf16.gmra.mrb[0].mxu0 %v1700
      %v1829 = vpop.f32.mrb[0].mxu0
      %v1830 = vadd.f32 0.0, %v1829
      %v1831 = vpop.f32.mrb[0].mxu0
      %v1832 = vpop.f32.mrb[0].mxu0
      %v1833 = vadd.f32 0.0, %v1832
      %v1834 = vpop.f32.mrb[0].mxu0
      %1835 = vmatprep.mubr.bf16.mxu0 0
      %1836 = vmatmul.mubr.bf16.gmra.mrb[0].mxu0 %v1701
      %v1837 = vpop.f32.mrb[0].mxu0
      %v1838 = vadd.f32 0.0, %v1837
      %v1839 = vpop.f32.mrb[0].mxu0
      %v1840 = vpop.f32.mrb[0].mxu0
      %v1841 = vadd.f32 0.0, %v1840
      %v1842 = vpop.f32.mrb[0].mxu0
      %1843 = vmatprep.mubr.bf16.mxu0 0
      %1844 = vmatmul.mubr.bf16.gmra.mrb[0].mxu0 %v1702
      %v1845 = vpop.f32.mrb[0].mxu0
      %v1846 = vadd.f32 0.0, %v1845
      %v1847 = vpop.f32.mrb[0].mxu0
      %v1848 = vpop.f32.mrb[0].mxu0
      %v1849 = vadd.f32 0.0, %v1848
      %v1850 = vpop.f32.mrb[0].mxu0
      %1851 = vmatprep.mubr.bf16.mxu0 0
      %1852 = vmatmul.mubr.bf16.gmra.mrb[0].mxu0 %v1703
      %v1853 = vpop.f32.mrb[0].mxu0
      %v1854 = vadd.f32 0.0, %v1853
      %v1855 = vpop.f32.mrb[0].mxu0
      %v1856 = vpop.f32.mrb[0].mxu0
      %v1857 = vadd.f32 0.0, %v1856
      %v1858 = vpop.f32.mrb[0].mxu0
      %1859 = vmatprep.mubr.bf16.mxu0 0
      %1860 = vmatmul.mubr.bf16.gmra.mrb[0].mxu0 %v1704
      %v1861 = vpop.f32.mrb[0].mxu0
      %v1862 = vadd.f32 0.0, %v1861
      %v1863 = vpop.f32.mrb[0].mxu0
      %v1864 = vpop.f32.mrb[0].mxu0
      %v1865 = vadd.f32 0.0, %v1864
      %v1866 = vpop.f32.mrb[0].mxu0
      %1867 = vmatprep.mubr.bf16.mxu0 0
      %1868 = vmatmul.mubr.bf16.gmra.mrb[0].mxu0 %v1705
      %v1869 = vpop.f32.mrb[0].mxu0
      %v1870 = vadd.f32 0.0, %v1869
      %v1871 = vpop.f32.mrb[0].mxu0
      %v1872 = vpop.f32.mrb[0].mxu0
      %v1873 = vadd.f32 0.0, %v1872
      %v1874 = vpop.f32.mrb[0].mxu0
      %1875 = vdwg.mxu0
      %v1876 = vadd.f32 %v1659, %v1806
      %v1877 = vadd.f32 %v1660, %v1809
      %v1878 = vadd.f32 %v1661, %v1814
      %v1879 = vadd.f32 %v1662, %v1817
      %v1880 = vadd.f32 %v1663, %v1822
      %v1881 = vadd.f32 %v1664, %v1825
      %v1882 = vadd.f32 %v1665, %v1830
      %v1883 = vadd.f32 %v1666, %v1833
      %v1884 = vadd.f32 %v1667, %v1838
      %v1885 = vadd.f32 %v1668, %v1841
      %v1886 = vadd.f32 %v1669, %v1846
      %v1887 = vadd.f32 %v1670, %v1849
      %v1888 = vadd.f32 %v1671, %v1854
      %v1889 = vadd.f32 %v1672, %v1857
      %v1890 = vadd.f32 %v1673, %v1862
      %v1891 = vadd.f32 %v1674, %v1865
      %v1892 = vadd.f32 %v1675, %v1870
      %v1893 = vadd.f32 %v1676, %v1873
      %s1894 = sadd.s32 %s195, 38
      %s1895 = scalar_lea.vmem %s183, %s1894
      %v1896 = vld [vmem:[%s1895] sm:$0xff]
      %v1897 = vld [vmem:[%s1895 + $0x8] sm:$0xff]
      %v1898 = vld [vmem:[%s1895 + $0x10] sm:$0xff]
      %v1899 = vld [vmem:[%s1895 + $0x18] sm:$0xff]
      %v1900 = vld [vmem:[%s1895 + $0x20] sm:$0xff]
      %v1901 = vld [vmem:[%s1895 + $0x28] sm:$0xff]
      %v1902 = vld [vmem:[%s1895 + $0x30] sm:$0xff]
      %v1903 = vld [vmem:[%s1895 + $0x38] sm:$0xff]
      %v1904 = vld [vmem:[%s1895 + $0x40] sm:$0xff]
      %v1905 = vld [vmem:[%s1895 + $0x48] sm:$0xff]
      %v1906 = vld [vmem:[%s1895 + $0x50] sm:$0xff]
      %v1907 = vld [vmem:[%s1895 + $0x58] sm:$0xff]
      %v1908 = vld [vmem:[%s1895 + $0x60] sm:$0xff]
      %v1909 = vld [vmem:[%s1895 + $0x68] sm:$0xff]
      %v1910 = vld [vmem:[%s1895 + $0x70] sm:$0xff]
      %v1911 = vld [vmem:[%s1895 + $0x78] sm:$0xff]
      %v1912 = vld [vmem:[%s1895 + $0x80] sm:$0xff]
      %v1913 = vld [vmem:[%s1895 + $0x88] sm:$0xff]
      %v1914 = vpack.c.bf16 %v1897, %v1896
      %v1915 = vpack.c.bf16 %v1899, %v1898
      %v1916 = vpack.c.bf16 %v1901, %v1900
      %v1917 = vpack.c.bf16 %v1903, %v1902
      %v1918 = vpack.c.bf16 %v1905, %v1904
      %v1919 = vpack.c.bf16 %v1907, %v1906
      %v1920 = vpack.c.bf16 %v1909, %v1908
      %v1921 = vpack.c.bf16 %v1911, %v1910
      %v1922 = vpack.c.bf16 %v1913, %v1912
      %s1923 = scalar_lea.vmem %s1, 512
      %v1924 = vld [vmem:[%s1923] sm:$0xf]
      %v1925 = vld [vmem:[%s1923 + $0x4] sm:$0xf]
      %v1926 = vld [vmem:[%s1923 + $0x8] sm:$0xf]
      %v1927 = vld [vmem:[%s1923 + $0xc] sm:$0xf]
      %v1928 = vld [vmem:[%s1923 + $0x10] sm:$0xf]
      %v1929 = vld [vmem:[%s1923 + $0x14] sm:$0xf]
      %v1930 = vld [vmem:[%s1923 + $0x18] sm:$0xf]
      %v1931 = vld [vmem:[%s1923 + $0x1c] sm:$0xf]
      %v1932 = vld [vmem:[%s1923 + $0x20] sm:$0xf]
      %v1933 = vld [vmem:[%s1923 + $0x24] sm:$0xf]
      %v1934 = vld [vmem:[%s1923 + $0x28] sm:$0xf]
      %v1935 = vld [vmem:[%s1923 + $0x2c] sm:$0xf]
      %v1936 = vld [vmem:[%s1923 + $0x30] sm:$0xf]
      %v1937 = vld [vmem:[%s1923 + $0x34] sm:$0xf]
      %v1938 = vld [vmem:[%s1923 + $0x38] sm:$0xf]
      %v1939 = vld [vmem:[%s1923 + $0x3c] sm:$0xf]
      %v1956 = vunpack.c.l.b16 %v1924
      %v1957 = vunpack.c.l.b16 %v1925
      %v1958 = vunpack.c.l.b16 %v1926
      %v1959 = vunpack.c.l.b16 %v1927
      %v1960 = vunpack.c.l.b16 %v1928
      %v1961 = vunpack.c.l.b16 %v1929
      %v1962 = vunpack.c.l.b16 %v1930
      %v1963 = vunpack.c.l.b16 %v1931
      %v1964 = vunpack.c.l.b16 %v1932
      %v1965 = vunpack.c.l.b16 %v1933
      %v1966 = vunpack.c.l.b16 %v1934
      %v1967 = vunpack.c.l.b16 %v1935
      %v1968 = vunpack.c.l.b16 %v1936
      %v1969 = vunpack.c.l.b16 %v1937
      %v1970 = vunpack.c.l.b16 %v1938
      %v1971 = vunpack.c.l.b16 %v1939
      %v1972 = vpack.c.b16 %v1957, %v1956
      %v1973 = vpack.c.b16 %v1959, %v1958
      %v1974 = vpack.c.b16 %v1961, %v1960
      %v1975 = vpack.c.b16 %v1963, %v1962
      %v1976 = vpack.c.b16 %v1965, %v1964
      %v1977 = vpack.c.b16 %v1967, %v1966
      %v1978 = vpack.c.b16 %v1969, %v1968
      %v1979 = vpack.c.b16 %v1971, %v1970
      %1988 = vmatprep.subr.bf16.mxu0 0
      %1989 = vmatpush1.bf16.msra.mxu0 %v1972
      %1990 = vmatprep.subr.bf16.mxu0 0
      %1991 = vmatpush1.bf16.msra.mxu0 %v1973
      %1992 = vmatprep.subr.bf16.mxu0 0
      %1993 = vmatpush1.bf16.msra.mxu0 %v1974
      %1994 = vmatprep.subr.bf16.mxu0 0
      %1995 = vmatpush1.bf16.msra.mxu0 %v1975
      %1996 = vmatprep.subr.bf16.mxu0 0
      %1997 = vmatpush1.bf16.msra.mxu0 %v1976
      %1998 = vmatprep.subr.bf16.mxu0 0
      %1999 = vmatpush1.bf16.msra.mxu0 %v1977
      %2000 = vmatprep.subr.bf16.mxu0 0
      %2001 = vmatpush1.bf16.msra.mxu0 %v1978
      %2002 = vmatprep.subr.bf16.mxu0 0
      %2003 = vmatpush1.bf16.msra.mxu0 %v1979
      %2004 = vmatprep.subr.bf16.mxu0 0
      %2005 = vmatpush1.bf16.msra.mxu0 0
      %2006 = vmatprep.subr.bf16.mxu0 0
      %2007 = vmatpush1.bf16.msra.mxu0 0
      %2008 = vmatprep.subr.bf16.mxu0 0
      %2009 = vmatpush1.bf16.msra.mxu0 0
      %2010 = vmatprep.subr.bf16.mxu0 0
      %2011 = vmatpush1.bf16.msra.mxu0 0
      %2012 = vmatprep.subr.bf16.mxu0 0
      %2013 = vmatpush1.bf16.msra.mxu0 0
      %2014 = vmatprep.subr.bf16.mxu0 0
      %2015 = vmatpush1.bf16.msra.mxu0 0
      %2016 = vmatprep.subr.bf16.mxu0 0
      %2017 = vmatpush1.bf16.msra.mxu0 0
      %2018 = vmatprep.subr.bf16.mxu0 0
      %2019 = vmatpush1.bf16.msra.mxu0 0
      %2020 = vmatprep.mubr.bf16.mxu0 0
      %2021 = vmatmul.mubr.bf16.gmra.mrb[0].mxu0 %v1914
      %v2022 = vpop.f32.mrb[0].mxu0
      %v2023 = vadd.f32 0.0, %v2022
      %v2024 = vpop.f32.mrb[0].mxu0
      %v2025 = vpop.f32.mrb[0].mxu0
      %v2026 = vadd.f32 0.0, %v2025
      %v2027 = vpop.f32.mrb[0].mxu0
      %2028 = vmatprep.mubr.bf16.mxu0 0
      %2029 = vmatmul.mubr.bf16.gmra.mrb[0].mxu0 %v1915
      %v2030 = vpop.f32.mrb[0].mxu0
      %v2031 = vadd.f32 0.0, %v2030
      %v2032 = vpop.f32.mrb[0].mxu0
      %v2033 = vpop.f32.mrb[0].mxu0
      %v2034 = vadd.f32 0.0, %v2033
      %v2035 = vpop.f32.mrb[0].mxu0
      %2036 = vmatprep.mubr.bf16.mxu0 0
      %2037 = vmatmul.mubr.bf16.gmra.mrb[0].mxu0 %v1916
      %v2038 = vpop.f32.mrb[0].mxu0
      %v2039 = vadd.f32 0.0, %v2038
      %v2040 = vpop.f32.mrb[0].mxu0
      %v2041 = vpop.f32.mrb[0].mxu0
      %v2042 = vadd.f32 0.0, %v2041
      %v2043 = vpop.f32.mrb[0].mxu0
      %2044 = vmatprep.mubr.bf16.mxu0 0
      %2045 = vmatmul.mubr.bf16.gmra.mrb[0].mxu0 %v1917
      %v2046 = vpop.f32.mrb[0].mxu0
      %v2047 = vadd.f32 0.0, %v2046
      %v2048 = vpop.f32.mrb[0].mxu0
      %v2049 = vpop.f32.mrb[0].mxu0
      %v2050 = vadd.f32 0.0, %v2049
      %v2051 = vpop.f32.mrb[0].mxu0
      %2052 = vmatprep.mubr.bf16.mxu0 0
      %2053 = vmatmul.mubr.bf16.gmra.mrb[0].mxu0 %v1918
      %v2054 = vpop.f32.mrb[0].mxu0
      %v2055 = vadd.f32 0.0, %v2054
      %v2056 = vpop.f32.mrb[0].mxu0
      %v2057 = vpop.f32.mrb[0].mxu0
      %v2058 = vadd.f32 0.0, %v2057
      %v2059 = vpop.f32.mrb[0].mxu0
      %2060 = vmatprep.mubr.bf16.mxu0 0
      %2061 = vmatmul.mubr.bf16.gmra.mrb[0].mxu0 %v1919
      %v2062 = vpop.f32.mrb[0].mxu0
      %v2063 = vadd.f32 0.0, %v2062
      %v2064 = vpop.f32.mrb[0].mxu0
      %v2065 = vpop.f32.mrb[0].mxu0
      %v2066 = vadd.f32 0.0, %v2065
      %v2067 = vpop.f32.mrb[0].mxu0
      %2068 = vmatprep.mubr.bf16.mxu0 0
      %2069 = vmatmul.mubr.bf16.gmra.mrb[0].mxu0 %v1920
      %v2070 = vpop.f32.mrb[0].mxu0
      %v2071 = vadd.f32 0.0, %v2070
      %v2072 = vpop.f32.mrb[0].mxu0
      %v2073 = vpop.f32.mrb[0].mxu0
      %v2074 = vadd.f32 0.0, %v2073
      %v2075 = vpop.f32.mrb[0].mxu0
      %2076 = vmatprep.mubr.bf16.mxu0 0
      %2077 = vmatmul.mubr.bf16.gmra.mrb[0].mxu0 %v1921
      %v2078 = vpop.f32.mrb[0].mxu0
      %v2079 = vadd.f32 0.0, %v2078
      %v2080 = vpop.f32.mrb[0].mxu0
      %v2081 = vpop.f32.mrb[0].mxu0
      %v2082 = vadd.f32 0.0, %v2081
      %v2083 = vpop.f32.mrb[0].mxu0
      %2084 = vmatprep.mubr.bf16.mxu0 0
      %2085 = vmatmul.mubr.bf16.gmra.mrb[0].mxu0 %v1922
      %v2086 = vpop.f32.mrb[0].mxu0
      %v2087 = vadd.f32 0.0, %v2086
      %v2088 = vpop.f32.mrb[0].mxu0
      %v2089 = vpop.f32.mrb[0].mxu0
      %v2090 = vadd.f32 0.0, %v2089
      %v2091 = vpop.f32.mrb[0].mxu0
      %2092 = vdwg.mxu0
      %v2093 = vadd.f32 %v1876, %v2023
      %v2094 = vadd.f32 %v1877, %v2026
      %v2095 = vadd.f32 %v1878, %v2031
      %v2096 = vadd.f32 %v1879, %v2034
      %v2097 = vadd.f32 %v1880, %v2039
      %v2098 = vadd.f32 %v1881, %v2042
      %v2099 = vadd.f32 %v1882, %v2047
      %v2100 = vadd.f32 %v1883, %v2050
      %v2101 = vadd.f32 %v1884, %v2055
      %v2102 = vadd.f32 %v1885, %v2058
      %v2103 = vadd.f32 %v1886, %v2063
      %v2104 = vadd.f32 %v1887, %v2066
      %v2105 = vadd.f32 %v1888, %v2071
      %v2106 = vadd.f32 %v1889, %v2074
      %v2107 = vadd.f32 %v1890, %v2079
      %v2108 = vadd.f32 %v1891, %v2082
      %v2109 = vadd.f32 %v1892, %v2087
      %v2110 = vadd.f32 %v1893, %v2090
      %v2111 = vld [vmem:[%s2] sm:$0x1]
      %v2113 = vlaneseq
      %v2114 = vshrl.u32 %v2113, 7
      %v2115 = vsub.s32 0, %v2114
      %v2116 = vrot.slane %v2111, %v2115
      %v2118 = vadd.f32 %v2093, %v2116
      %v2119 = vadd.f32 %v2094, %v2116
      %v2120 = vadd.f32 %v2095, %v2116
      %v2121 = vadd.f32 %v2096, %v2116
      %v2122 = vadd.f32 %v2097, %v2116
      %v2123 = vadd.f32 %v2098, %v2116
      %v2124 = vadd.f32 %v2099, %v2116
      %v2125 = vadd.f32 %v2100, %v2116
      %v2126 = vadd.f32 %v2101, %v2116
      %v2127 = vadd.f32 %v2102, %v2116
      %v2128 = vadd.f32 %v2103, %v2116
      %v2129 = vadd.f32 %v2104, %v2116
      %v2130 = vadd.f32 %v2105, %v2116
      %v2131 = vadd.f32 %v2106, %v2116
      %v2132 = vadd.f32 %v2107, %v2116
      %v2133 = vadd.f32 %v2108, %v2116
      %v2134 = vadd.f32 %v2109, %v2116
      %v2135 = vadd.f32 %v2110, %v2116
      %v2136 = vmax.f32 %v2118, 0.0
      %v2137 = vmax.f32 %v2119, 0.0
      %v2138 = vmax.f32 %v2120, 0.0
      %v2139 = vmax.f32 %v2121, 0.0
      %v2140 = vmax.f32 %v2122, 0.0
      %v2141 = vmax.f32 %v2123, 0.0
      %v2142 = vmax.f32 %v2124, 0.0
      %v2143 = vmax.f32 %v2125, 0.0
      %v2144 = vmax.f32 %v2126, 0.0
      %v2145 = vmax.f32 %v2127, 0.0
      %v2146 = vmax.f32 %v2128, 0.0
      %v2147 = vmax.f32 %v2129, 0.0
      %v2148 = vmax.f32 %v2130, 0.0
      %v2149 = vmax.f32 %v2131, 0.0
      %v2150 = vmax.f32 %v2132, 0.0
      %v2151 = vmax.f32 %v2133, 0.0
      %v2152 = vmax.f32 %v2134, 0.0
      %v2153 = vmax.f32 %v2135, 0.0
      %2154 = vst [vmem:[%s192] sm:$0xff] %v2136
      %2155 = vst [vmem:[%s192 + $0x8] sm:$0xff] %v2137
      %2156 = vst [vmem:[%s192 + $0x10] sm:$0xff] %v2138
      %2157 = vst [vmem:[%s192 + $0x18] sm:$0xff] %v2139
      %2158 = vst [vmem:[%s192 + $0x20] sm:$0xff] %v2140
      %2159 = vst [vmem:[%s192 + $0x28] sm:$0xff] %v2141
      %2160 = vst [vmem:[%s192 + $0x30] sm:$0xff] %v2142
      %2161 = vst [vmem:[%s192 + $0x38] sm:$0xff] %v2143
      %2162 = vst [vmem:[%s192 + $0x40] sm:$0xff] %v2144
      %2163 = vst [vmem:[%s192 + $0x48] sm:$0xff] %v2145
      %2164 = vst [vmem:[%s192 + $0x50] sm:$0xff] %v2146
      %2165 = vst [vmem:[%s192 + $0x58] sm:$0xff] %v2147
      %2166 = vst [vmem:[%s192 + $0x60] sm:$0xff] %v2148
      %2167 = vst [vmem:[%s192 + $0x68] sm:$0xff] %v2149
      %2168 = vst [vmem:[%s192 + $0x70] sm:$0xff] %v2150
      %2169 = vst [vmem:[%s192 + $0x78] sm:$0xff] %v2151
      %2170 = vst [vmem:[%s192 + $0x80] sm:$0xff] %v2152
      %2171 = vst [vmem:[%s192 + $0x88] sm:$0xff] %v2153
      %s2172 = smul.u32 18, %s19
      %p2173 = scmp.lt.s32.totalorder %s18, 1
      %s2174 = scalar_select %p2173, %s18, 1
      %p2175 = scmp.lt.s32.totalorder %s2172, 35
      %s2176 = scalar_select %p2175, %s2172, 35
      %s2177 = smul.addr %s2174, 36
      %s2178 = sadd.s32 %s2176, %s2177
      %s2179 = smul.addr %s2178, 8
      %s2180 = scalar_lea.vmem %s3, %s2179
      // Predicated region
      $region33: #{student_forward.8} parent=31 // pred_check
        %p2181 = pneg %p114
      $region34: #{student_forward.8} parent=31 // pred_check_branch
        %2183 = sbr.rel (%p2181) target = $region36
      $region35: #{student_forward.8} parent=31 // pred_region
        %s2184 = smul.u32 18, %s19
      $region36: #{student_forward.8} parent=31 // pred_fallthru
        _
    $region32: #{student_forward.8} parent=5 // pred_fallthru
      _
    %p2185 = scmp.le.s32.totalorder 2, %s9
    // Predicated region
    $region37: #{student_forward.8} parent=5 // pred_check
      %p2186 = pneg %p2185
    $region38: #{student_forward.8} parent=5 // pred_check_branch
      %2188 = sbr.rel (%p2186) target = $region40
    $region39: #{student_forward.8} parent=5 // pred_region
      %s2189 = ssub.s32 %s9, 2
      // Predicated region
      $region41: #{student_forward.8} parent=39 // pred_check
        %p2190 = pneg %p120
      $region42: #{student_forward.8} parent=39 // pred_check_branch
        %2192 = sbr.rel (%p2190) target = $region44
      $region43: #{student_forward.8} parent=39 // pred_region
        %s2193 = smul.u32 18, %s21
        %p2194 = scmp.lt.s32.totalorder %s20, 1
        %s2195 = scalar_select %p2194, %s20, 1
        %p2196 = scmp.lt.s32.totalorder %s2193, 35
        %s2197 = scalar_select %p2196, %s2193, 35
        %s2198 = smul.addr %s2195, 36
        %s2199 = sadd.s32 %s2197, %s2198
        %s2200 = smul.addr %s2199, 8
        %s2201 = scalar_lea.vmem %s3, %s2200
      $region44: #{student_forward.8} parent=39 // pred_fallthru
        _
    $region40: #{student_forward.8} parent=5 // pred_fallthru
      _
  $region6: #{student_forward.8} parent=0 // loop_footer
    %s13 = sadd.s32 1, %s9
  $region7: #{student_forward.8} parent=0 // loop_footer_branch
    %8 = sbr.rel target = $region3
  $region8: #{student_forward.8} parent=0 // loop_exit
    _

// kernel: student_forward.7
$region0: #{student_forward.7}
  #allocation0 [shape = 'u32[]', space=smem, size = 0x4, offset = 0x4, fixed_abs, tag = 'smem constant byte address 0x4 - core index']
  #allocation1 [shape = 'u32[144,128]{1,0:T(1,128)}', space=vmem, size = 0x12000, scoped, tag = 'internal scratch']
  %s0 = inlined_call_operand.vmem [shape: f32[2,1024,128], index: 0, kind: input, shape index: {}]
  %s1 = inlined_call_operand.vmem [shape: f32[4,256,1024], index: 1, kind: input, shape index: {}]
  %s2 = inlined_call_operand.vmem [shape: f32[2,256,128], index: 2, kind: output, shape index: {}]
  %s3 = sld [smem:[#allocation0]]
  $region41: #{student_forward.7} parent=0
    _
  %s5 = ssub.s32 1, %s3
  %s6 = scalar_select 0, %s5, %s3
  loop: start=0, step=1, limit=4
  $region2: #{student_forward.7} parent=0 // loop_pre_header
    _
  $region3: #{student_forward.7} parent=0 // loop_header
    %s8 = sphi 0, %s12
    %p9 = scmp.ge.s32.totalorder %s8, 4
    %s18 = sphi 0, %s20
    %s21 = sphi 0, %s18
    %s22 = sphi 0, %s21
    %s38 = sphi 0, %s22
    %s42 = sphi 0, %s42
    %s44 = sphi 0, %s42
    %s45 = sphi 0, %s44
    %s59 = sphi 0, %s45
    %s65 = sphi 0, %s67
    %s68 = sphi 0, %s65
    %s69 = sphi 0, %s68
    %s85 = sphi 0, %s69
  $region4: #{student_forward.7} parent=0 // loop_header_branch
    %11 = sbr.rel (%p9) target = $region8
  $region5: #{student_forward.7} parent=0 // loop_body
    %s13 = ssub.s32 %s8, 1
    %s14 = ssub.s32 %s8, 2
    %s15 = sadd.s32 %s8, 1
    %s16 = ssub.s32 %s8, %s15
    %p17 = scmp.eq.s32.totalorder %s16, 0
    %s19 = sadd.s32 %s18, 1
    %s20 = scalar_select %p17, %s18, %s19
    %p23 = pneg %p17
    %p24 = scmp.eq.s32.totalorder %s8, 1
    %p25 = por %p23, %p24
    %p26 = scmp.ne.s32.totalorder %s18, %s21
    %p27 = scmp.eq.s32.totalorder %s8, 0
    %p28 = por %p26, %p27
    %p29 = scmp.ne.s32.totalorder %s18, %s21
    %p30 = scmp.eq.s32.totalorder %s13, 1
    %p31 = por %p29, %p30
    %p32 = scmp.ne.s32.totalorder %s21, %s22
    %p33 = scmp.eq.s32.totalorder %s13, 0
    %p34 = por %p32, %p33
    %p35 = scmp.ne.s32.totalorder %s21, %s22
    %p36 = scmp.eq.s32.totalorder %s14, 1
    %p37 = por %p35, %p36
    %p39 = scmp.ne.s32.totalorder %s22, %s38
    %p40 = scmp.eq.s32.totalorder %s14, 0
    %p41 = por %p39, %p40
    %s43 = sadd.s32 %s42, 1
    %p46 = scmp.eq.s32.totalorder %s8, 1
    %p47 = scmp.ne.s32.totalorder %s42, %s44
    %p48 = scmp.eq.s32.totalorder %s8, 0
    %p49 = por %p47, %p48
    %p50 = scmp.ne.s32.totalorder %s42, %s44
    %p51 = scmp.eq.s32.totalorder %s13, 1
    %p52 = por %p50, %p51
    %p53 = scmp.ne.s32.totalorder %s44, %s45
    %p54 = scmp.eq.s32.totalorder %s13, 0
    %p55 = por %p53, %p54
    %p56 = scmp.ne.s32.totalorder %s44, %s45
    %p57 = scmp.eq.s32.totalorder %s14, 1
    %p58 = por %p56, %p57
    %p60 = scmp.ne.s32.totalorder %s45, %s59
    %p61 = scmp.eq.s32.totalorder %s14, 0
    %p62 = por %p60, %p61
    %s63 = ssub.s32 %s8, %s15
    %p64 = scmp.eq.s32.totalorder %s63, 0
    %s66 = sadd.s32 %s65, 1
    %s67 = scalar_select %p64, %s65, %s66
    %p70 = pneg %p64
    %p71 = scmp.eq.s32.totalorder %s8, 1
    %p72 = por %p70, %p71
    %p73 = scmp.ne.s32.totalorder %s65, %s68
    %p74 = scmp.eq.s32.totalorder %s8, 0
    %p75 = por %p73, %p74
    %p76 = scmp.ne.s32.totalorder %s65, %s68
    %p77 = scmp.eq.s32.totalorder %s13, 1
    %p78 = por %p76, %p77
    %p79 = scmp.ne.s32.totalorder %s68, %s69
    %p80 = scmp.eq.s32.totalorder %s13, 0
    %p81 = por %p79, %p80
    %p82 = scmp.ne.s32.totalorder %s68, %s69
    %p83 = scmp.eq.s32.totalorder %s14, 1
    %p84 = por %p82, %p83
    %p86 = scmp.ne.s32.totalorder %s69, %s85
    %p87 = scmp.eq.s32.totalorder %s14, 0
    %p88 = por %p86, %p87
    %p89 = scmp.le.s32.totalorder 1, %s8
    %p90 = scmp.lt.s32.totalorder %s8, 3
    %p91 = pnand %p89, %p90
    %p92 = pneg %p91
    // Predicated region
    $region9: #{student_forward.7} parent=5 // pred_check
      _
    $region10: #{student_forward.7} parent=5 // pred_check_branch
      %94 = sbr.rel (%p91) target = $region12
    $region11: #{student_forward.7} parent=5 // pred_region
      %s95 = ssub.s32 %s8, 1
      // Predicated region
      $region13: #{student_forward.7} parent=11 // pred_check
        %p96 = pneg %p55
      $region14: #{student_forward.7} parent=11 // pred_check_branch
        %98 = sbr.rel (%p96) target = $region16
      $region15: #{student_forward.7} parent=11 // pred_region
        _
      $region16: #{student_forward.7} parent=11 // pred_fallthru
        _
    $region12: #{student_forward.7} parent=5 // pred_fallthru
      _
    %p99 = scmp.lt.s32.totalorder %s8, 2
    // Predicated region
    $region17: #{student_forward.7} parent=5 // pred_check
      %p100 = pneg %p99
    $region18: #{student_forward.7} parent=5 // pred_check_branch
      %102 = sbr.rel (%p100) target = $region20
    $region19: #{student_forward.7} parent=5 // pred_region
      // Predicated region
      $region21: #{student_forward.7} parent=19 // pred_check
        %p103 = pneg %p28
      $region22: #{student_forward.7} parent=19 // pred_check_branch
        %105 = sbr.rel (%p103) target = $region24
      $region23: #{student_forward.7} parent=19 // pred_region
        %p106 = scmp.lt.s32.totalorder %s8, 1
        %s107 = scalar_select %p106, %s8, 1
        %s108 = smul.addr %s107, 128
        %s109 = smul.addr %s108, 8
        %s110 = scalar_lea.vmem %s0, %s109
      $region24: #{student_forward.7} parent=19 // pred_fallthru
        _
    $region20: #{student_forward.7} parent=5 // pred_fallthru
      _
    %p111 = scmp.le.s32.totalorder 1, %s8
    %p112 = scmp.lt.s32.totalorder %s8, 3
    %p113 = pnand %p111, %p112
    %p114 = pneg %p113
    // Predicated region
    $region25: #{student_forward.7} parent=5 // pred_check
      _
    $region26: #{student_forward.7} parent=5 // pred_check_branch
      %116 = sbr.rel (%p113) target = $region28
    $region27: #{student_forward.7} parent=5 // pred_region
      %s117 = ssub.s32 %s8, 1
      %p118 = scmp.lt.s32.totalorder %s13, 1
      %s119 = scalar_select %p118, %s13, 1
      %s120 = smul.addr %s119, 128
      %s121 = smul.addr %s120, 8
      %s122 = scalar_lea.vmem %s0, %s121
      %p123 = pneg %p34
      %p124 = pneg %p31
      %p125 = pneg %p55
      %p126 = pneg %p52
      %p127 = pneg %p81
      %p128 = pneg %p78
      %p129 = scmp.lt.s32.totalorder %s13, 1
      %s130 = scalar_select %p129, %s13, 1
      %s131 = smul.addr %s130, 32
      %s132 = smul.addr %s131, 8
      %s133 = scalar_lea.vmem %s2, %s132
      %p134 = scmp.lt.s32.totalorder %s13, 1
      %s135 = scalar_select %p134, %s13, 1
      %s136 = smul.addr %s135, 128
      %s137 = smul.addr %s136, 8
      %s138 = scalar_lea.vmem %s0, %s137
      %p139 = scmp.lt.s32.totalorder %s13, 1
      %s140 = scalar_select %p139, %s13, 1
      %s141 = smul.addr %s140, 32
      %s142 = smul.addr %s141, 8
      %s143 = scalar_lea.vmem %s2, %s142
      %v144 = vld [vmem:[%s138] sm:$0xff]
      %v145 = vld [vmem:[%s138 + $0x8] sm:$0xff]
      %v146 = vld [vmem:[%s138 + $0x10] sm:$0xff]
      %v147 = vld [vmem:[%s138 + $0x18] sm:$0xff]
      %v148 = vld [vmem:[%s138 + $0x20] sm:$0xff]
      %v149 = vld [vmem:[%s138 + $0x28] sm:$0xff]
      %v150 = vld [vmem:[%s138 + $0x30] sm:$0xff]
      %v151 = vld [vmem:[%s138 + $0x38] sm:$0xff]
      %v152 = vld [vmem:[%s138 + $0x40] sm:$0xff]
      %v153 = vld [vmem:[%s138 + $0x48] sm:$0xff]
      %v154 = vld [vmem:[%s138 + $0x50] sm:$0xff]
      %v155 = vld [vmem:[%s138 + $0x58] sm:$0xff]
      %v156 = vld [vmem:[%s138 + $0x60] sm:$0xff]
      %v157 = vld [vmem:[%s138 + $0x68] sm:$0xff]
      %v158 = vld [vmem:[%s138 + $0x70] sm:$0xff]
      %v159 = vld [vmem:[%s138 + $0x78] sm:$0xff]
      %v160 = vld [vmem:[%s138 + $0x80] sm:$0xff]
      %v161 = vld [vmem:[%s138 + $0x88] sm:$0xff]
      %v162 = vld [vmem:[%s138 + $0x90] sm:$0xff]
      %v163 = vld [vmem:[%s138 + $0x98] sm:$0xff]
      %v164 = vld [vmem:[%s138 + $0xa0] sm:$0xff]
      %v165 = vld [vmem:[%s138 + $0xa8] sm:$0xff]
      %v166 = vld [vmem:[%s138 + $0xb0] sm:$0xff]
      %v167 = vld [vmem:[%s138 + $0xb8] sm:$0xff]
      %v168 = vld [vmem:[%s138 + $0xc0] sm:$0xff]
      %v169 = vld [vmem:[%s138 + $0xc8] sm:$0xff]
      %v170 = vld [vmem:[%s138 + $0xd0] sm:$0xff]
      %v171 = vld [vmem:[%s138 + $0xd8] sm:$0xff]
      %v172 = vld [vmem:[%s138 + $0xe0] sm:$0xff]
      %v173 = vld [vmem:[%s138 + $0xe8] sm:$0xff]
      %v174 = vld [vmem:[%s138 + $0xf0] sm:$0xff]
      %v175 = vld [vmem:[%s138 + $0xf8] sm:$0xff]
      %v176 = vld [vmem:[%s138 + $0x100] sm:$0xff]
      %v177 = vld [vmem:[%s138 + $0x108] sm:$0xff]
      %v178 = vld [vmem:[%s138 + $0x110] sm:$0xff]
      %v179 = vld [vmem:[%s138 + $0x118] sm:$0xff]
      %v180 = vld [vmem:[%s138 + $0x120] sm:$0xff]
      %v181 = vld [vmem:[%s138 + $0x128] sm:$0xff]
      %v182 = vld [vmem:[%s138 + $0x130] sm:$0xff]
      %v183 = vld [vmem:[%s138 + $0x138] sm:$0xff]
      %v184 = vld [vmem:[%s138 + $0x140] sm:$0xff]
      %v185 = vld [vmem:[%s138 + $0x148] sm:$0xff]
      %v186 = vld [vmem:[%s138 + $0x150] sm:$0xff]
      %v187 = vld [vmem:[%s138 + $0x158] sm:$0xff]
      %v188 = vld [vmem:[%s138 + $0x160] sm:$0xff]
      %v189 = vld [vmem:[%s138 + $0x168] sm:$0xff]
      %v190 = vld [vmem:[%s138 + $0x170] sm:$0xff]
      %v191 = vld [vmem:[%s138 + $0x178] sm:$0xff]
      %v192 = vld [vmem:[%s138 + $0x180] sm:$0xff]
      %v193 = vld [vmem:[%s138 + $0x188] sm:$0xff]
      %v194 = vld [vmem:[%s138 + $0x190] sm:$0xff]
      %v195 = vld [vmem:[%s138 + $0x198] sm:$0xff]
      %v196 = vld [vmem:[%s138 + $0x1a0] sm:$0xff]
      %v197 = vld [vmem:[%s138 + $0x1a8] sm:$0xff]
      %v198 = vld [vmem:[%s138 + $0x1b0] sm:$0xff]
      %v199 = vld [vmem:[%s138 + $0x1b8] sm:$0xff]
      %v200 = vld [vmem:[%s138 + $0x1c0] sm:$0xff]
      %v201 = vld [vmem:[%s138 + $0x1c8] sm:$0xff]
      %v202 = vld [vmem:[%s138 + $0x1d0] sm:$0xff]
      %v203 = vld [vmem:[%s138 + $0x1d8] sm:$0xff]
      %v204 = vld [vmem:[%s138 + $0x1e0] sm:$0xff]
      %v205 = vld [vmem:[%s138 + $0x1e8] sm:$0xff]
      %v206 = vld [vmem:[%s138 + $0x1f0] sm:$0xff]
      %v207 = vld [vmem:[%s138 + $0x1f8] sm:$0xff]
      %v208 = vld [vmem:[%s138 + $0x200] sm:$0xff]
      %v209 = vld [vmem:[%s138 + $0x208] sm:$0xff]
      %v210 = vld [vmem:[%s138 + $0x210] sm:$0xff]
      %v211 = vld [vmem:[%s138 + $0x218] sm:$0xff]
      %v212 = vld [vmem:[%s138 + $0x220] sm:$0xff]
      %v213 = vld [vmem:[%s138 + $0x228] sm:$0xff]
      %v214 = vld [vmem:[%s138 + $0x230] sm:$0xff]
      %v215 = vld [vmem:[%s138 + $0x238] sm:$0xff]
      %v216 = vld [vmem:[%s138 + $0x240] sm:$0xff]
      %v217 = vld [vmem:[%s138 + $0x248] sm:$0xff]
      %v218 = vld [vmem:[%s138 + $0x250] sm:$0xff]
      %v219 = vld [vmem:[%s138 + $0x258] sm:$0xff]
      %v220 = vld [vmem:[%s138 + $0x260] sm:$0xff]
      %v221 = vld [vmem:[%s138 + $0x268] sm:$0xff]
      %v222 = vld [vmem:[%s138 + $0x270] sm:$0xff]
      %v223 = vld [vmem:[%s138 + $0x278] sm:$0xff]
      %v224 = vld [vmem:[%s138 + $0x280] sm:$0xff]
      %v225 = vld [vmem:[%s138 + $0x288] sm:$0xff]
      %v226 = vld [vmem:[%s138 + $0x290] sm:$0xff]
      %v227 = vld [vmem:[%s138 + $0x298] sm:$0xff]
      %v228 = vld [vmem:[%s138 + $0x2a0] sm:$0xff]
      %v229 = vld [vmem:[%s138 + $0x2a8] sm:$0xff]
      %v230 = vld [vmem:[%s138 + $0x2b0] sm:$0xff]
      %v231 = vld [vmem:[%s138 + $0x2b8] sm:$0xff]
      %v232 = vld [vmem:[%s138 + $0x2c0] sm:$0xff]
      %v233 = vld [vmem:[%s138 + $0x2c8] sm:$0xff]
      %v234 = vld [vmem:[%s138 + $0x2d0] sm:$0xff]
      %v235 = vld [vmem:[%s138 + $0x2d8] sm:$0xff]
      %v236 = vld [vmem:[%s138 + $0x2e0] sm:$0xff]
      %v237 = vld [vmem:[%s138 + $0x2e8] sm:$0xff]
      %v238 = vld [vmem:[%s138 + $0x2f0] sm:$0xff]
      %v239 = vld [vmem:[%s138 + $0x2f8] sm:$0xff]
      %v240 = vld [vmem:[%s138 + $0x300] sm:$0xff]
      %v241 = vld [vmem:[%s138 + $0x308] sm:$0xff]
      %v242 = vld [vmem:[%s138 + $0x310] sm:$0xff]
      %v243 = vld [vmem:[%s138 + $0x318] sm:$0xff]
      %v244 = vld [vmem:[%s138 + $0x320] sm:$0xff]
      %v245 = vld [vmem:[%s138 + $0x328] sm:$0xff]
      %v246 = vld [vmem:[%s138 + $0x330] sm:$0xff]
      %v247 = vld [vmem:[%s138 + $0x338] sm:$0xff]
      %v248 = vld [vmem:[%s138 + $0x340] sm:$0xff]
      %v249 = vld [vmem:[%s138 + $0x348] sm:$0xff]
      %v250 = vld [vmem:[%s138 + $0x350] sm:$0xff]
      %v251 = vld [vmem:[%s138 + $0x358] sm:$0xff]
      %v252 = vld [vmem:[%s138 + $0x360] sm:$0xff]
      %v253 = vld [vmem:[%s138 + $0x368] sm:$0xff]
      %v254 = vld [vmem:[%s138 + $0x370] sm:$0xff]
      %v255 = vld [vmem:[%s138 + $0x378] sm:$0xff]
      %v256 = vld [vmem:[%s138 + $0x380] sm:$0xff]
      %v257 = vld [vmem:[%s138 + $0x388] sm:$0xff]
      %v258 = vld [vmem:[%s138 + $0x390] sm:$0xff]
      %v259 = vld [vmem:[%s138 + $0x398] sm:$0xff]
      %v260 = vld [vmem:[%s138 + $0x3a0] sm:$0xff]
      %v261 = vld [vmem:[%s138 + $0x3a8] sm:$0xff]
      %v262 = vld [vmem:[%s138 + $0x3b0] sm:$0xff]
      %v263 = vld [vmem:[%s138 + $0x3b8] sm:$0xff]
      %v264 = vld [vmem:[%s138 + $0x3c0] sm:$0xff]
      %v265 = vld [vmem:[%s138 + $0x3c8] sm:$0xff]
      %v266 = vld [vmem:[%s138 + $0x3d0] sm:$0xff]
      %v267 = vld [vmem:[%s138 + $0x3d8] sm:$0xff]
      %v268 = vld [vmem:[%s138 + $0x3e0] sm:$0xff]
      %v269 = vld [vmem:[%s138 + $0x3e8] sm:$0xff]
      %v270 = vld [vmem:[%s138 + $0x3f0] sm:$0xff]
      %v271 = vld [vmem:[%s138 + $0x3f8] sm:$0xff]
      %v272 = vld [vmem:[%s1] sm:$0xff]
      %v273 = vld [vmem:[%s1 + $0x8] sm:$0xff]
      %v274 = vld [vmem:[%s1 + $0x10] sm:$0xff]
      %v275 = vld [vmem:[%s1 + $0x18] sm:$0xff]
      %v276 = vld [vmem:[%s1 + $0x20] sm:$0xff]
      %v277 = vld [vmem:[%s1 + $0x28] sm:$0xff]
      %v278 = vld [vmem:[%s1 + $0x30] sm:$0xff]
      %v279 = vld [vmem:[%s1 + $0x38] sm:$0xff]
      %v280 = vld [vmem:[%s1 + $0x40] sm:$0xff]
      %v281 = vld [vmem:[%s1 + $0x48] sm:$0xff]
      %v282 = vld [vmem:[%s1 + $0x50] sm:$0xff]
      %v283 = vld [vmem:[%s1 + $0x58] sm:$0xff]
      %v284 = vld [vmem:[%s1 + $0x60] sm:$0xff]
      %v285 = vld [vmem:[%s1 + $0x68] sm:$0xff]
      %v286 = vld [vmem:[%s1 + $0x70] sm:$0xff]
      %v287 = vld [vmem:[%s1 + $0x78] sm:$0xff]
      %v288 = vld [vmem:[%s1 + $0x80] sm:$0xff]
      %v289 = vld [vmem:[%s1 + $0x88] sm:$0xff]
      %v290 = vld [vmem:[%s1 + $0x90] sm:$0xff]
      %v291 = vld [vmem:[%s1 + $0x98] sm:$0xff]
      %v292 = vld [vmem:[%s1 + $0xa0] sm:$0xff]
      %v293 = vld [vmem:[%s1 + $0xa8] sm:$0xff]
      %v294 = vld [vmem:[%s1 + $0xb0] sm:$0xff]
      %v295 = vld [vmem:[%s1 + $0xb8] sm:$0xff]
      %v296 = vld [vmem:[%s1 + $0xc0] sm:$0xff]
      %v297 = vld [vmem:[%s1 + $0xc8] sm:$0xff]
      %v298 = vld [vmem:[%s1 + $0xd0] sm:$0xff]
      %v299 = vld [vmem:[%s1 + $0xd8] sm:$0xff]
      %v300 = vld [vmem:[%s1 + $0xe0] sm:$0xff]
      %v301 = vld [vmem:[%s1 + $0xe8] sm:$0xff]
      %v302 = vld [vmem:[%s1 + $0xf0] sm:$0xff]
      %v303 = vld [vmem:[%s1 + $0xf8] sm:$0xff]
      %v304 = vld [vmem:[%s1 + $0x100] sm:$0xff]
      %v305 = vld [vmem:[%s1 + $0x108] sm:$0xff]
      %v306 = vld [vmem:[%s1 + $0x110] sm:$0xff]
      %v307 = vld [vmem:[%s1 + $0x118] sm:$0xff]
      %v308 = vld [vmem:[%s1 + $0x120] sm:$0xff]
      %v309 = vld [vmem:[%s1 + $0x128] sm:$0xff]
      %v310 = vld [vmem:[%s1 + $0x130] sm:$0xff]
      %v311 = vld [vmem:[%s1 + $0x138] sm:$0xff]
      %v312 = vld [vmem:[%s1 + $0x140] sm:$0xff]
      %v313 = vld [vmem:[%s1 + $0x148] sm:$0xff]
      %v314 = vld [vmem:[%s1 + $0x150] sm:$0xff]
      %v315 = vld [vmem:[%s1 + $0x158] sm:$0xff]
      %v316 = vld [vmem:[%s1 + $0x160] sm:$0xff]
      %v317 = vld [vmem:[%s1 + $0x168] sm:$0xff]
      %v318 = vld [vmem:[%s1 + $0x170] sm:$0xff]
      %v319 = vld [vmem:[%s1 + $0x178] sm:$0xff]
      %v320 = vld [vmem:[%s1 + $0x180] sm:$0xff]
      %v321 = vld [vmem:[%s1 + $0x188] sm:$0xff]
      %v322 = vld [vmem:[%s1 + $0x190] sm:$0xff]
      %v323 = vld [vmem:[%s1 + $0x198] sm:$0xff]
      %v324 = vld [vmem:[%s1 + $0x1a0] sm:$0xff]
      %v325 = vld [vmem:[%s1 + $0x1a8] sm:$0xff]
      %v326 = vld [vmem:[%s1 + $0x1b0] sm:$0xff]
      %v327 = vld [vmem:[%s1 + $0x1b8] sm:$0xff]
      %v328 = vld [vmem:[%s1 + $0x1c0] sm:$0xff]
      %v329 = vld [vmem:[%s1 + $0x1c8] sm:$0xff]
      %v330 = vld [vmem:[%s1 + $0x1d0] sm:$0xff]
      %v331 = vld [vmem:[%s1 + $0x1d8] sm:$0xff]
      %v332 = vld [vmem:[%s1 + $0x1e0] sm:$0xff]
      %v333 = vld [vmem:[%s1 + $0x1e8] sm:$0xff]
      %v334 = vld [vmem:[%s1 + $0x1f0] sm:$0xff]
      %v335 = vld [vmem:[%s1 + $0x1f8] sm:$0xff]
      %v336 = vld [vmem:[%s1 + $0x200] sm:$0xff]
      %v337 = vld [vmem:[%s1 + $0x208] sm:$0xff]
      %v338 = vld [vmem:[%s1 + $0x210] sm:$0xff]
      %v339 = vld [vmem:[%s1 + $0x218] sm:$0xff]
      %v340 = vld [vmem:[%s1 + $0x220] sm:$0xff]
      %v341 = vld [vmem:[%s1 + $0x228] sm:$0xff]
      %v342 = vld [vmem:[%s1 + $0x230] sm:$0xff]
      %v343 = vld [vmem:[%s1 + $0x238] sm:$0xff]
      %v344 = vld [vmem:[%s1 + $0x240] sm:$0xff]
      %v345 = vld [vmem:[%s1 + $0x248] sm:$0xff]
      %v346 = vld [vmem:[%s1 + $0x250] sm:$0xff]
      %v347 = vld [vmem:[%s1 + $0x258] sm:$0xff]
      %v348 = vld [vmem:[%s1 + $0x260] sm:$0xff]
      %v349 = vld [vmem:[%s1 + $0x268] sm:$0xff]
      %v350 = vld [vmem:[%s1 + $0x270] sm:$0xff]
      %v351 = vld [vmem:[%s1 + $0x278] sm:$0xff]
      %v352 = vld [vmem:[%s1 + $0x280] sm:$0xff]
      %v353 = vld [vmem:[%s1 + $0x288] sm:$0xff]
      %v354 = vld [vmem:[%s1 + $0x290] sm:$0xff]
      %v355 = vld [vmem:[%s1 + $0x298] sm:$0xff]
      %v356 = vld [vmem:[%s1 + $0x2a0] sm:$0xff]
      %v357 = vld [vmem:[%s1 + $0x2a8] sm:$0xff]
      %v358 = vld [vmem:[%s1 + $0x2b0] sm:$0xff]
      %v359 = vld [vmem:[%s1 + $0x2b8] sm:$0xff]
      %v360 = vld [vmem:[%s1 + $0x2c0] sm:$0xff]
      %v361 = vld [vmem:[%s1 + $0x2c8] sm:$0xff]
      %v362 = vld [vmem:[%s1 + $0x2d0] sm:$0xff]
      %v363 = vld [vmem:[%s1 + $0x2d8] sm:$0xff]
      %v364 = vld [vmem:[%s1 + $0x2e0] sm:$0xff]
      %v365 = vld [vmem:[%s1 + $0x2e8] sm:$0xff]
      %v366 = vld [vmem:[%s1 + $0x2f0] sm:$0xff]
      %v367 = vld [vmem:[%s1 + $0x2f8] sm:$0xff]
      %v368 = vld [vmem:[%s1 + $0x300] sm:$0xff]
      %v369 = vld [vmem:[%s1 + $0x308] sm:$0xff]
      %v370 = vld [vmem:[%s1 + $0x310] sm:$0xff]
      %v371 = vld [vmem:[%s1 + $0x318] sm:$0xff]
      %v372 = vld [vmem:[%s1 + $0x320] sm:$0xff]
      %v373 = vld [vmem:[%s1 + $0x328] sm:$0xff]
      %v374 = vld [vmem:[%s1 + $0x330] sm:$0xff]
      %v375 = vld [vmem:[%s1 + $0x338] sm:$0xff]
      %v376 = vld [vmem:[%s1 + $0x340] sm:$0xff]
      %v377 = vld [vmem:[%s1 + $0x348] sm:$0xff]
      %v378 = vld [vmem:[%s1 + $0x350] sm:$0xff]
      %v379 = vld [vmem:[%s1 + $0x358] sm:$0xff]
      %v380 = vld [vmem:[%s1 + $0x360] sm:$0xff]
      %v381 = vld [vmem:[%s1 + $0x368] sm:$0xff]
      %v382 = vld [vmem:[%s1 + $0x370] sm:$0xff]
      %v383 = vld [vmem:[%s1 + $0x378] sm:$0xff]
      %v384 = vld [vmem:[%s1 + $0x380] sm:$0xff]
      %v385 = vld [vmem:[%s1 + $0x388] sm:$0xff]
      %v386 = vld [vmem:[%s1 + $0x390] sm:$0xff]
      %v387 = vld [vmem:[%s1 + $0x398] sm:$0xff]
      %v388 = vld [vmem:[%s1 + $0x3a0] sm:$0xff]
      %v389 = vld [vmem:[%s1 + $0x3a8] sm:$0xff]
      %v390 = vld [vmem:[%s1 + $0x3b0] sm:$0xff]
      %v391 = vld [vmem:[%s1 + $0x3b8] sm:$0xff]
      %v392 = vld [vmem:[%s1 + $0x3c0] sm:$0xff]
      %v393 = vld [vmem:[%s1 + $0x3c8] sm:$0xff]
      %v394 = vld [vmem:[%s1 + $0x3d0] sm:$0xff]
      %v395 = vld [vmem:[%s1 + $0x3d8] sm:$0xff]
      %v396 = vld [vmem:[%s1 + $0x3e0] sm:$0xff]
      %v397 = vld [vmem:[%s1 + $0x3e8] sm:$0xff]
      %v398 = vld [vmem:[%s1 + $0x3f0] sm:$0xff]
      %v399 = vld [vmem:[%s1 + $0x3f8] sm:$0xff]
      %v400 = vld [vmem:[%s1 + $0x400] sm:$0xff]
      %v401 = vld [vmem:[%s1 + $0x408] sm:$0xff]
      %v402 = vld [vmem:[%s1 + $0x410] sm:$0xff]
      %v403 = vld [vmem:[%s1 + $0x418] sm:$0xff]
      %v404 = vld [vmem:[%s1 + $0x420] sm:$0xff]
      %v405 = vld [vmem:[%s1 + $0x428] sm:$0xff]
      %v406 = vld [vmem:[%s1 + $0x430] sm:$0xff]
      %v407 = vld [vmem:[%s1 + $0x438] sm:$0xff]
      %v408 = vld [vmem:[%s1 + $0x440] sm:$0xff]
      %v409 = vld [vmem:[%s1 + $0x448] sm:$0xff]
      %v410 = vld [vmem:[%s1 + $0x450] sm:$0xff]
      %v411 = vld [vmem:[%s1 + $0x458] sm:$0xff]
      %v412 = vld [vmem:[%s1 + $0x460] sm:$0xff]
      %v413 = vld [vmem:[%s1 + $0x468] sm:$0xff]
      %v414 = vld [vmem:[%s1 + $0x470] sm:$0xff]
      %v415 = vld [vmem:[%s1 + $0x478] sm:$0xff]
      %v416 = vld [vmem:[%s1 + $0x480] sm:$0xff]
      %v417 = vld [vmem:[%s1 + $0x488] sm:$0xff]
      %v418 = vld [vmem:[%s1 + $0x490] sm:$0xff]
      %v419 = vld [vmem:[%s1 + $0x498] sm:$0xff]
      %v420 = vld [vmem:[%s1 + $0x4a0] sm:$0xff]
      %v421 = vld [vmem:[%s1 + $0x4a8] sm:$0xff]
      %v422 = vld [vmem:[%s1 + $0x4b0] sm:$0xff]
      %v423 = vld [vmem:[%s1 + $0x4b8] sm:$0xff]
      %v424 = vld [vmem:[%s1 + $0x4c0] sm:$0xff]
      %v425 = vld [vmem:[%s1 + $0x4c8] sm:$0xff]
      %v426 = vld [vmem:[%s1 + $0x4d0] sm:$0xff]
      %v427 = vld [vmem:[%s1 + $0x4d8] sm:$0xff]
      %v428 = vld [vmem:[%s1 + $0x4e0] sm:$0xff]
      %v429 = vld [vmem:[%s1 + $0x4e8] sm:$0xff]
      %v430 = vld [vmem:[%s1 + $0x4f0] sm:$0xff]
      %v431 = vld [vmem:[%s1 + $0x4f8] sm:$0xff]
      %v432 = vld [vmem:[%s1 + $0x500] sm:$0xff]
      %v433 = vld [vmem:[%s1 + $0x508] sm:$0xff]
      %v434 = vld [vmem:[%s1 + $0x510] sm:$0xff]
      %v435 = vld [vmem:[%s1 + $0x518] sm:$0xff]
      %v436 = vld [vmem:[%s1 + $0x520] sm:$0xff]
      %v437 = vld [vmem:[%s1 + $0x528] sm:$0xff]
      %v438 = vld [vmem:[%s1 + $0x530] sm:$0xff]
      %v439 = vld [vmem:[%s1 + $0x538] sm:$0xff]
      %v440 = vld [vmem:[%s1 + $0x540] sm:$0xff]
      %v441 = vld [vmem:[%s1 + $0x548] sm:$0xff]
      %v442 = vld [vmem:[%s1 + $0x550] sm:$0xff]
      %v443 = vld [vmem:[%s1 + $0x558] sm:$0xff]
      %v444 = vld [vmem:[%s1 + $0x560] sm:$0xff]
      %v445 = vld [vmem:[%s1 + $0x568] sm:$0xff]
      %v446 = vld [vmem:[%s1 + $0x570] sm:$0xff]
      %v447 = vld [vmem:[%s1 + $0x578] sm:$0xff]
      %v448 = vld [vmem:[%s1 + $0x580] sm:$0xff]
      %v449 = vld [vmem:[%s1 + $0x588] sm:$0xff]
      %v450 = vld [vmem:[%s1 + $0x590] sm:$0xff]
      %v451 = vld [vmem:[%s1 + $0x598] sm:$0xff]
      %v452 = vld [vmem:[%s1 + $0x5a0] sm:$0xff]
      %v453 = vld [vmem:[%s1 + $0x5a8] sm:$0xff]
      %v454 = vld [vmem:[%s1 + $0x5b0] sm:$0xff]
      %v455 = vld [vmem:[%s1 + $0x5b8] sm:$0xff]
      %v456 = vld [vmem:[%s1 + $0x5c0] sm:$0xff]
      %v457 = vld [vmem:[%s1 + $0x5c8] sm:$0xff]
      %v458 = vld [vmem:[%s1 + $0x5d0] sm:$0xff]
      %v459 = vld [vmem:[%s1 + $0x5d8] sm:$0xff]
      %v460 = vld [vmem:[%s1 + $0x5e0] sm:$0xff]
      %v461 = vld [vmem:[%s1 + $0x5e8] sm:$0xff]
      %v462 = vld [vmem:[%s1 + $0x5f0] sm:$0xff]
      %v463 = vld [vmem:[%s1 + $0x5f8] sm:$0xff]
      %v464 = vld [vmem:[%s1 + $0x600] sm:$0xff]
      %v465 = vld [vmem:[%s1 + $0x608] sm:$0xff]
      %v466 = vld [vmem:[%s1 + $0x610] sm:$0xff]
      %v467 = vld [vmem:[%s1 + $0x618] sm:$0xff]
      %v468 = vld [vmem:[%s1 + $0x620] sm:$0xff]
      %v469 = vld [vmem:[%s1 + $0x628] sm:$0xff]
      %v470 = vld [vmem:[%s1 + $0x630] sm:$0xff]
      %v471 = vld [vmem:[%s1 + $0x638] sm:$0xff]
      %v472 = vld [vmem:[%s1 + $0x640] sm:$0xff]
      %v473 = vld [vmem:[%s1 + $0x648] sm:$0xff]
      %v474 = vld [vmem:[%s1 + $0x650] sm:$0xff]
      %v475 = vld [vmem:[%s1 + $0x658] sm:$0xff]
      %v476 = vld [vmem:[%s1 + $0x660] sm:$0xff]
      %v477 = vld [vmem:[%s1 + $0x668] sm:$0xff]
      %v478 = vld [vmem:[%s1 + $0x670] sm:$0xff]
      %v479 = vld [vmem:[%s1 + $0x678] sm:$0xff]
      %v480 = vld [vmem:[%s1 + $0x680] sm:$0xff]
      %v481 = vld [vmem:[%s1 + $0x688] sm:$0xff]
      %v482 = vld [vmem:[%s1 + $0x690] sm:$0xff]
      %v483 = vld [vmem:[%s1 + $0x698] sm:$0xff]
      %v484 = vld [vmem:[%s1 + $0x6a0] sm:$0xff]
      %v485 = vld [vmem:[%s1 + $0x6a8] sm:$0xff]
      %v486 = vld [vmem:[%s1 + $0x6b0] sm:$0xff]
      %v487 = vld [vmem:[%s1 + $0x6b8] sm:$0xff]
      %v488 = vld [vmem:[%s1 + $0x6c0] sm:$0xff]
      %v489 = vld [vmem:[%s1 + $0x6c8] sm:$0xff]
      %v490 = vld [vmem:[%s1 + $0x6d0] sm:$0xff]
      %v491 = vld [vmem:[%s1 + $0x6d8] sm:$0xff]
      %v492 = vld [vmem:[%s1 + $0x6e0] sm:$0xff]
      %v493 = vld [vmem:[%s1 + $0x6e8] sm:$0xff]
      %v494 = vld [vmem:[%s1 + $0x6f0] sm:$0xff]
      %v495 = vld [vmem:[%s1 + $0x6f8] sm:$0xff]
      %v496 = vld [vmem:[%s1 + $0x700] sm:$0xff]
      %v497 = vld [vmem:[%s1 + $0x708] sm:$0xff]
      %v498 = vld [vmem:[%s1 + $0x710] sm:$0xff]
      %v499 = vld [vmem:[%s1 + $0x718] sm:$0xff]
      %v500 = vld [vmem:[%s1 + $0x720] sm:$0xff]
      %v501 = vld [vmem:[%s1 + $0x728] sm:$0xff]
      %v502 = vld [vmem:[%s1 + $0x730] sm:$0xff]
      %v503 = vld [vmem:[%s1 + $0x738] sm:$0xff]
      %v504 = vld [vmem:[%s1 + $0x740] sm:$0xff]
      %v505 = vld [vmem:[%s1 + $0x748] sm:$0xff]
      %v506 = vld [vmem:[%s1 + $0x750] sm:$0xff]
      %v507 = vld [vmem:[%s1 + $0x758] sm:$0xff]
      %v508 = vld [vmem:[%s1 + $0x760] sm:$0xff]
      %v509 = vld [vmem:[%s1 + $0x768] sm:$0xff]
      %v510 = vld [vmem:[%s1 + $0x770] sm:$0xff]
      %v511 = vld [vmem:[%s1 + $0x778] sm:$0xff]
      %v512 = vld [vmem:[%s1 + $0x780] sm:$0xff]
      %v513 = vld [vmem:[%s1 + $0x788] sm:$0xff]
      %v514 = vld [vmem:[%s1 + $0x790] sm:$0xff]
      %v515 = vld [vmem:[%s1 + $0x798] sm:$0xff]
      %v516 = vld [vmem:[%s1 + $0x7a0] sm:$0xff]
      %v517 = vld [vmem:[%s1 + $0x7a8] sm:$0xff]
      %v518 = vld [vmem:[%s1 + $0x7b0] sm:$0xff]
      %v519 = vld [vmem:[%s1 + $0x7b8] sm:$0xff]
      %v520 = vld [vmem:[%s1 + $0x7c0] sm:$0xff]
      %v521 = vld [vmem:[%s1 + $0x7c8] sm:$0xff]
      %v522 = vld [vmem:[%s1 + $0x7d0] sm:$0xff]
      %v523 = vld [vmem:[%s1 + $0x7d8] sm:$0xff]
      %v524 = vld [vmem:[%s1 + $0x7e0] sm:$0xff]
      %v525 = vld [vmem:[%s1 + $0x7e8] sm:$0xff]
      %v526 = vld [vmem:[%s1 + $0x7f0] sm:$0xff]
      %v527 = vld [vmem:[%s1 + $0x7f8] sm:$0xff]
      %528 = vmatprep.subr.mxu0 0.0
      %529 = vmatpush1.msra.mxu0 %v144
      %530 = vmatprep.subr.mxu0 0.0
      %531 = vmatpush1.msra.mxu0 %v145
      %532 = vmatprep.subr.mxu0 0.0
      %533 = vmatpush1.msra.mxu0 %v146
      %534 = vmatprep.subr.mxu0 0.0
      %535 = vmatpush1.msra.mxu0 %v147
      %536 = vmatprep.subr.mxu0 0.0
      %537 = vmatpush1.msra.mxu0 %v148
      %538 = vmatprep.subr.mxu0 0.0
      %539 = vmatpush1.msra.mxu0 %v149
      %540 = vmatprep.subr.mxu0 0.0
      %541 = vmatpush1.msra.mxu0 %v150
      %542 = vmatprep.subr.mxu0 0.0
      %543 = vmatpush1.msra.mxu0 %v151
      %544 = vmatprep.subr.mxu0 0.0
      %545 = vmatpush1.msra.mxu0 %v152
      %546 = vmatprep.subr.mxu0 0.0
      %547 = vmatpush1.msra.mxu0 %v153
      %548 = vmatprep.subr.mxu0 0.0
      %549 = vmatpush1.msra.mxu0 %v154
      %550 = vmatprep.subr.mxu0 0.0
      %551 = vmatpush1.msra.mxu0 %v155
      %552 = vmatprep.subr.mxu0 0.0
      %553 = vmatpush1.msra.mxu0 %v156
      %554 = vmatprep.subr.mxu0 0.0
      %555 = vmatpush1.msra.mxu0 %v157
      %556 = vmatprep.subr.mxu0 0.0
      %557 = vmatpush1.msra.mxu0 %v158
      %558 = vmatprep.subr.mxu0 0.0
      %559 = vmatpush1.msra.mxu0 %v159
      %560 = vmatprep.subr.mxu0 0.0
      %561 = vmatpush1.msra.mxu0 %v160
      %562 = vmatprep.subr.mxu0 0.0
      %563 = vmatpush1.msra.mxu0 %v161
      %564 = vmatprep.subr.mxu0 0.0
      %565 = vmatpush1.msra.mxu0 %v162
      %566 = vmatprep.subr.mxu0 0.0
      %567 = vmatpush1.msra.mxu0 %v163
      %568 = vmatprep.subr.mxu0 0.0
      %569 = vmatpush1.msra.mxu0 %v164
      %570 = vmatprep.subr.mxu0 0.0
      %571 = vmatpush1.msra.mxu0 %v165
      %572 = vmatprep.subr.mxu0 0.0
      %573 = vmatpush1.msra.mxu0 %v166
      %574 = vmatprep.subr.mxu0 0.0
      %575 = vmatpush1.msra.mxu0 %v167
      %576 = vmatprep.subr.mxu0 0.0
      %577 = vmatpush1.msra.mxu0 %v168
      %578 = vmatprep.subr.mxu0 0.0
      %579 = vmatpush1.msra.mxu0 %v169
      %580 = vmatprep.subr.mxu0 0.0
      %581 = vmatpush1.msra.mxu0 %v170
      %582 = vmatprep.subr.mxu0 0.0
      %583 = vmatpush1.msra.mxu0 %v171
      %584 = vmatprep.subr.mxu0 0.0
      %585 = vmatpush1.msra.mxu0 %v172
      %586 = vmatprep.subr.mxu0 0.0
      %587 = vmatpush1.msra.mxu0 %v173
      %588 = vmatprep.subr.mxu0 0.0
      %589 = vmatpush1.msra.mxu0 %v174
      %590 = vmatprep.subr.mxu0 0.0
      %591 = vmatpush1.msra.mxu0 %v175
      %592 = vmatprep.mubr.f32.mxu0 %v273
      %593 = vmatmul.mubr.f32.gmra.mrb[0].mxu0 %v272
      %v594 = vpop.f32.mrb[0].mxu0
      %v595 = vadd.f32 0.0, %v594
      %v596 = vpop.f32.mrb[0].mxu0
      %597 = vmatprep.mubr.f32.mxu0 %v281
      %598 = vmatmul.mubr.f32.gmra.mrb[0].mxu0 %v280
      %v599 = vpop.f32.mrb[0].mxu0
      %v600 = vadd.f32 0.0, %v599
      %v601 = vpop.f32.mrb[0].mxu0
      %602 = vmatprep.mubr.f32.mxu0 %v289
      %603 = vmatmul.mubr.f32.gmra.mrb[0].mxu0 %v288
      %v604 = vpop.f32.mrb[0].mxu0
      %v605 = vadd.f32 0.0, %v604
      %v606 = vpop.f32.mrb[0].mxu0
      %607 = vmatprep.mubr.f32.mxu0 %v297
      %608 = vmatmul.mubr.f32.gmra.mrb[0].mxu0 %v296
      %v609 = vpop.f32.mrb[0].mxu0
      %v610 = vadd.f32 0.0, %v609
      %v611 = vpop.f32.mrb[0].mxu0
      %612 = vmatprep.mubr.f32.mxu0 %v305
      %613 = vmatmul.mubr.f32.gmra.mrb[0].mxu0 %v304
      %v614 = vpop.f32.mrb[0].mxu0
      %v615 = vadd.f32 0.0, %v614
      %v616 = vpop.f32.mrb[0].mxu0
      %617 = vmatprep.mubr.f32.mxu0 %v313
      %618 = vmatmul.mubr.f32.gmra.mrb[0].mxu0 %v312
      %v619 = vpop.f32.mrb[0].mxu0
      %v620 = vadd.f32 0.0, %v619
      %v621 = vpop.f32.mrb[0].mxu0
      %622 = vmatprep.mubr.f32.mxu0 %v321
      %623 = vmatmul.mubr.f32.gmra.mrb[0].mxu0 %v320
      %v624 = vpop.f32.mrb[0].mxu0
      %v625 = vadd.f32 0.0, %v624
      %v626 = vpop.f32.mrb[0].mxu0
      %627 = vmatprep.mubr.f32.mxu0 %v329
      %628 = vmatmul.mubr.f32.gmra.mrb[0].mxu0 %v328
      %v629 = vpop.f32.mrb[0].mxu0
      %v630 = vadd.f32 0.0, %v629
      %v631 = vpop.f32.mrb[0].mxu0
      %632 = vmatprep.mubr.f32.mxu0 %v337
      %633 = vmatmul.mubr.f32.gmra.mrb[0].mxu0 %v336
      %v634 = vpop.f32.mrb[0].mxu0
      %v635 = vadd.f32 0.0, %v634
      %v636 = vpop.f32.mrb[0].mxu0
      %637 = vmatprep.mubr.f32.mxu0 %v345
      %638 = vmatmul.mubr.f32.gmra.mrb[0].mxu0 %v344
      %v639 = vpop.f32.mrb[0].mxu0
      %v640 = vadd.f32 0.0, %v639
      %v641 = vpop.f32.mrb[0].mxu0
      %642 = vmatprep.mubr.f32.mxu0 %v353
      %643 = vmatmul.mubr.f32.gmra.mrb[0].mxu0 %v352
      %v644 = vpop.f32.mrb[0].mxu0
      %v645 = vadd.f32 0.0, %v644
      %v646 = vpop.f32.mrb[0].mxu0
      %647 = vmatprep.mubr.f32.mxu0 %v361
      %648 = vmatmul.mubr.f32.gmra.mrb[0].mxu0 %v360
      %v649 = vpop.f32.mrb[0].mxu0
      %v650 = vadd.f32 0.0, %v649
      %v651 = vpop.f32.mrb[0].mxu0
      %652 = vmatprep.mubr.f32.mxu0 %v369
      %653 = vmatmul.mubr.f32.gmra.mrb[0].mxu0 %v368
      %v654 = vpop.f32.mrb[0].mxu0
      %v655 = vadd.f32 0.0, %v654
      %v656 = vpop.f32.mrb[0].mxu0
      %657 = vmatprep.mubr.f32.mxu0 %v377
      %658 = vmatmul.mubr.f32.gmra.mrb[0].mxu0 %v376
      %v659 = vpop.f32.mrb[0].mxu0
      %v660 = vadd.f32 0.0, %v659
      %v661 = vpop.f32.mrb[0].mxu0
      %662 = vmatprep.mubr.f32.mxu0 %v385
      %663 = vmatmul.mubr.f32.gmra.mrb[0].mxu0 %v384
      %v664 = vpop.f32.mrb[0].mxu0
      %v665 = vadd.f32 0.0, %v664
      %v666 = vpop.f32.mrb[0].mxu0
      %667 = vmatprep.mubr.f32.mxu0 %v393
      %668 = vmatmul.mubr.f32.gmra.mrb[0].mxu0 %v392
      %v669 = vpop.f32.mrb[0].mxu0
      %v670 = vadd.f32 0.0, %v669
      %v671 = vpop.f32.mrb[0].mxu0
      %672 = vmatprep.mubr.f32.mxu0 %v401
      %673 = vmatmul.mubr.f32.gmra.mrb[0].mxu0 %v400
      %v674 = vpop.f32.mrb[0].mxu0
      %v675 = vadd.f32 0.0, %v674
      %v676 = vpop.f32.mrb[0].mxu0
      %677 = vmatprep.mubr.f32.mxu0 %v409
      %678 = vmatmul.mubr.f32.gmra.mrb[0].mxu0 %v408
      %v679 = vpop.f32.mrb[0].mxu0
      %v680 = vadd.f32 0.0, %v679
      %v681 = vpop.f32.mrb[0].mxu0
      %682 = vmatprep.mubr.f32.mxu0 %v417
      %683 = vmatmul.mubr.f32.gmra.mrb[0].mxu0 %v416
      %v684 = vpop.f32.mrb[0].mxu0
      %v685 = vadd.f32 0.0, %v684
      %v686 = vpop.f32.mrb[0].mxu0
      %687 = vmatprep.mubr.f32.mxu0 %v425
      %688 = vmatmul.mubr.f32.gmra.mrb[0].mxu0 %v424
      %v689 = vpop.f32.mrb[0].mxu0
      %v690 = vadd.f32 0.0, %v689
      %v691 = vpop.f32.mrb[0].mxu0
      %692 = vmatprep.mubr.f32.mxu0 %v433
      %693 = vmatmul.mubr.f32.gmra.mrb[0].mxu0 %v432
      %v694 = vpop.f32.mrb[0].mxu0
      %v695 = vadd.f32 0.0, %v694
      %v696 = vpop.f32.mrb[0].mxu0
      %697 = vmatprep.mubr.f32.mxu0 %v441
      %698 = vmatmul.mubr.f32.gmra.mrb[0].mxu0 %v440
      %v699 = vpop.f32.mrb[0].mxu0
      %v700 = vadd.f32 0.0, %v699
      %v701 = vpop.f32.mrb[0].mxu0
      %702 = vmatprep.mubr.f32.mxu0 %v449
      %703 = vmatmul.mubr.f32.gmra.mrb[0].mxu0 %v448
      %v704 = vpop.f32.mrb[0].mxu0
      %v705 = vadd.f32 0.0, %v704
      %v706 = vpop.f32.mrb[0].mxu0
      %707 = vmatprep.mubr.f32.mxu0 %v457
      %708 = vmatmul.mubr.f32.gmra.mrb[0].mxu0 %v456
      %v709 = vpop.f32.mrb[0].mxu0
      %v710 = vadd.f32 0.0, %v709
      %v711 = vpop.f32.mrb[0].mxu0
      %712 = vmatprep.mubr.f32.mxu0 %v465
      %713 = vmatmul.mubr.f32.gmra.mrb[0].mxu0 %v464
      %v714 = vpop.f32.mrb[0].mxu0
      %v715 = vadd.f32 0.0, %v714
      %v716 = vpop.f32.mrb[0].mxu0
      %717 = vmatprep.mubr.f32.mxu0 %v473
      %718 = vmatmul.mubr.f32.gmra.mrb[0].mxu0 %v472
      %v719 = vpop.f32.mrb[0].mxu0
      %v720 = vadd.f32 0.0, %v719
      %v721 = vpop.f32.mrb[0].mxu0
      %722 = vmatprep.mubr.f32.mxu0 %v481
      %723 = vmatmul.mubr.f32.gmra.mrb[0].mxu0 %v480
      %v724 = vpop.f32.mrb[0].mxu0
      %v725 = vadd.f32 0.0, %v724
      %v726 = vpop.f32.mrb[0].mxu0
      %727 = vmatprep.mubr.f32.mxu0 %v489
      %728 = vmatmul.mubr.f32.gmra.mrb[0].mxu0 %v488
      %v729 = vpop.f32.mrb[0].mxu0
      %v730 = vadd.f32 0.0, %v729
      %v731 = vpop.f32.mrb[0].mxu0
      %732 = vmatprep.mubr.f32.mxu0 %v497
      %733 = vmatmul.mubr.f32.gmra.mrb[0].mxu0 %v496
      %v734 = vpop.f32.mrb[0].mxu0
      %v735 = vadd.f32 0.0, %v734
      %v736 = vpop.f32.mrb[0].mxu0
      %737 = vmatprep.mubr.f32.mxu0 %v505
      %738 = vmatmul.mubr.f32.gmra.mrb[0].mxu0 %v504
      %v739 = vpop.f32.mrb[0].mxu0
      %v740 = vadd.f32 0.0, %v739
      %v741 = vpop.f32.mrb[0].mxu0
      %742 = vmatprep.mubr.f32.mxu0 %v513
      %743 = vmatmul.mubr.f32.gmra.mrb[0].mxu0 %v512
      %v744 = vpop.f32.mrb[0].mxu0
      %v745 = vadd.f32 0.0, %v744
      %v746 = vpop.f32.mrb[0].mxu0
      %747 = vmatprep.mubr.f32.mxu0 %v521
      %748 = vmatmul.mubr.f32.gmra.mrb[0].mxu0 %v520
      %v749 = vpop.f32.mrb[0].mxu0
      %v750 = vadd.f32 0.0, %v749
      %v751 = vpop.f32.mrb[0].mxu0
      %752 = vdwg.mxu0
      %753 = vmatprep.subr.mxu0 0.0
      %754 = vmatpush1.msra.mxu0 %v176
      %755 = vmatprep.subr.mxu0 0.0
      %756 = vmatpush1.msra.mxu0 %v177
      %757 = vmatprep.subr.mxu0 0.0
      %758 = vmatpush1.msra.mxu0 %v178
      %759 = vmatprep.subr.mxu0 0.0
      %760 = vmatpush1.msra.mxu0 %v179
      %761 = vmatprep.subr.mxu0 0.0
      %762 = vmatpush1.msra.mxu0 %v180
      %763 = vmatprep.subr.mxu0 0.0
      %764 = vmatpush1.msra.mxu0 %v181
      %765 = vmatprep.subr.mxu0 0.0
      %766 = vmatpush1.msra.mxu0 %v182
      %767 = vmatprep.subr.mxu0 0.0
      %768 = vmatpush1.msra.mxu0 %v183
      %769 = vmatprep.subr.mxu0 0.0
      %770 = vmatpush1.msra.mxu0 %v184
      %771 = vmatprep.subr.mxu0 0.0
      %772 = vmatpush1.msra.mxu0 %v185
      %773 = vmatprep.subr.mxu0 0.0
      %774 = vmatpush1.msra.mxu0 %v186
      %775 = vmatprep.subr.mxu0 0.0
      %776 = vmatpush1.msra.mxu0 %v187
      %777 = vmatprep.subr.mxu0 0.0
      %778 = vmatpush1.msra.mxu0 %v188
      %779 = vmatprep.subr.mxu0 0.0
      %780 = vmatpush1.msra.mxu0 %v189
      %781 = vmatprep.subr.mxu0 0.0
      %782 = vmatpush1.msra.mxu0 %v190
      %783 = vmatprep.subr.mxu0 0.0
      %784 = vmatpush1.msra.mxu0 %v191
      %785 = vmatprep.subr.mxu0 0.0
      %786 = vmatpush1.msra.mxu0 %v192
      %787 = vmatprep.subr.mxu0 0.0
      %788 = vmatpush1.msra.mxu0 %v193
      %789 = vmatprep.subr.mxu0 0.0
      %790 = vmatpush1.msra.mxu0 %v194
      %791 = vmatprep.subr.mxu0 0.0
      %792 = vmatpush1.msra.mxu0 %v195
      %793 = vmatprep.subr.mxu0 0.0
      %794 = vmatpush1.msra.mxu0 %v196
      %795 = vmatprep.subr.mxu0 0.0
      %796 = vmatpush1.msra.mxu0 %v197
      %797 = vmatprep.subr.mxu0 0.0
      %798 = vmatpush1.msra.mxu0 %v198
      %799 = vmatprep.subr.mxu0 0.0
      %800 = vmatpush1.msra.mxu0 %v199
      %801 = vmatprep.subr.mxu0 0.0
      %802 = vmatpush1.msra.mxu0 %v200
      %803 = vmatprep.subr.mxu0 0.0
      %804 = vmatpush1.msra.mxu0 %v201
      %805 = vmatprep.subr.mxu0 0.0
      %806 = vmatpush1.msra.mxu0 %v202
      %807 = vmatprep.subr.mxu0 0.0
      %808 = vmatpush1.msra.mxu0 %v203
      %809 = vmatprep.subr.mxu0 0.0
      %810 = vmatpush1.msra.mxu0 %v204
      %811 = vmatprep.subr.mxu0 0.0
      %812 = vmatpush1.msra.mxu0 %v205
      %813 = vmatprep.subr.mxu0 0.0
      %814 = vmatpush1.msra.mxu0 %v206
      %815 = vmatprep.subr.mxu0 0.0
      %816 = vmatpush1.msra.mxu0 %v207
      %817 = vmatprep.mubr.f32.mxu0 %v275
      %818 = vmatmul.mubr.f32.gmra.mrb[0].mxu0 %v274
      %v819 = vpop.f32.mrb[0].mxu0
      %v820 = vadd.f32 %v595, %v819
      %v821 = vpop.f32.mrb[0].mxu0
      %822 = vmatprep.mubr.f32.mxu0 %v283
      %823 = vmatmul.mubr.f32.gmra.mrb[0].mxu0 %v282
      %v824 = vpop.f32.mrb[0].mxu0
      %v825 = vadd.f32 %v600, %v824
      %v826 = vpop.f32.mrb[0].mxu0
      %827 = vmatprep.mubr.f32.mxu0 %v291
      %828 = vmatmul.mubr.f32.gmra.mrb[0].mxu0 %v290
      %v829 = vpop.f32.mrb[0].mxu0
      %v830 = vadd.f32 %v605, %v829
      %v831 = vpop.f32.mrb[0].mxu0
      %832 = vmatprep.mubr.f32.mxu0 %v299
      %833 = vmatmul.mubr.f32.gmra.mrb[0].mxu0 %v298
      %v834 = vpop.f32.mrb[0].mxu0
      %v835 = vadd.f32 %v610, %v834
      %v836 = vpop.f32.mrb[0].mxu0
      %837 = vmatprep.mubr.f32.mxu0 %v307
      %838 = vmatmul.mubr.f32.gmra.mrb[0].mxu0 %v306
      %v839 = vpop.f32.mrb[0].mxu0
      %v840 = vadd.f32 %v615, %v839
      %v841 = vpop.f32.mrb[0].mxu0
      %842 = vmatprep.mubr.f32.mxu0 %v315
      %843 = vmatmul.mubr.f32.gmra.mrb[0].mxu0 %v314
      %v844 = vpop.f32.mrb[0].mxu0
      %v845 = vadd.f32 %v620, %v844
      %v846 = vpop.f32.mrb[0].mxu0
      %847 = vmatprep.mubr.f32.mxu0 %v323
      %848 = vmatmul.mubr.f32.gmra.mrb[0].mxu0 %v322
      %v849 = vpop.f32.mrb[0].mxu0
      %v850 = vadd.f32 %v625, %v849
      %v851 = vpop.f32.mrb[0].mxu0
      %852 = vmatprep.mubr.f32.mxu0 %v331
      %853 = vmatmul.mubr.f32.gmra.mrb[0].mxu0 %v330
      %v854 = vpop.f32.mrb[0].mxu0
      %v855 = vadd.f32 %v630, %v854
      %v856 = vpop.f32.mrb[0].mxu0
      %857 = vmatprep.mubr.f32.mxu0 %v339
      %858 = vmatmul.mubr.f32.gmra.mrb[0].mxu0 %v338
      %v859 = vpop.f32.mrb[0].mxu0
      %v860 = vadd.f32 %v635, %v859
      %v861 = vpop.f32.mrb[0].mxu0
      %862 = vmatprep.mubr.f32.mxu0 %v347
      %863 = vmatmul.mubr.f32.gmra.mrb[0].mxu0 %v346
      %v864 = vpop.f32.mrb[0].mxu0
      %v865 = vadd.f32 %v640, %v864
      %v866 = vpop.f32.mrb[0].mxu0
      %867 = vmatprep.mubr.f32.mxu0 %v355
      %868 = vmatmul.mubr.f32.gmra.mrb[0].mxu0 %v354
      %v869 = vpop.f32.mrb[0].mxu0
      %v870 = vadd.f32 %v645, %v869
      %v871 = vpop.f32.mrb[0].mxu0
      %872 = vmatprep.mubr.f32.mxu0 %v363
      %873 = vmatmul.mubr.f32.gmra.mrb[0].mxu0 %v362
      %v874 = vpop.f32.mrb[0].mxu0
      %v875 = vadd.f32 %v650, %v874
      %v876 = vpop.f32.mrb[0].mxu0
      %877 = vmatprep.mubr.f32.mxu0 %v371
      %878 = vmatmul.mubr.f32.gmra.mrb[0].mxu0 %v370
      %v879 = vpop.f32.mrb[0].mxu0
      %v880 = vadd.f32 %v655, %v879
      %v881 = vpop.f32.mrb[0].mxu0
      %882 = vmatprep.mubr.f32.mxu0 %v379
      %883 = vmatmul.mubr.f32.gmra.mrb[0].mxu0 %v378
      %v884 = vpop.f32.mrb[0].mxu0
      %v885 = vadd.f32 %v660, %v884
      %v886 = vpop.f32.mrb[0].mxu0
      %887 = vmatprep.mubr.f32.mxu0 %v387
      %888 = vmatmul.mubr.f32.gmra.mrb[0].mxu0 %v386
      %v889 = vpop.f32.mrb[0].mxu0
      %v890 = vadd.f32 %v665, %v889
      %v891 = vpop.f32.mrb[0].mxu0
      %892 = vmatprep.mubr.f32.mxu0 %v395
      %893 = vmatmul.mubr.f32.gmra.mrb[0].mxu0 %v394
      %v894 = vpop.f32.mrb[0].mxu0
      %v895 = vadd.f32 %v670, %v894
      %v896 = vpop.f32.mrb[0].mxu0
      %897 = vmatprep.mubr.f32.mxu0 %v403
      %898 = vmatmul.mubr.f32.gmra.mrb[0].mxu0 %v402
      %v899 = vpop.f32.mrb[0].mxu0
      %v900 = vadd.f32 %v675, %v899
      %v901 = vpop.f32.mrb[0].mxu0
      %902 = vmatprep.mubr.f32.mxu0 %v411
      %903 = vmatmul.mubr.f32.gmra.mrb[0].mxu0 %v410
      %v904 = vpop.f32.mrb[0].mxu0
      %v905 = vadd.f32 %v680, %v904
      %v906 = vpop.f32.mrb[0].mxu0
      %907 = vmatprep.mubr.f32.mxu0 %v419
      %908 = vmatmul.mubr.f32.gmra.mrb[0].mxu0 %v418
      %v909 = vpop.f32.mrb[0].mxu0
      %v910 = vadd.f32 %v685, %v909
      %v911 = vpop.f32.mrb[0].mxu0
      %912 = vmatprep.mubr.f32.mxu0 %v427
      %913 = vmatmul.mubr.f32.gmra.mrb[0].mxu0 %v426
      %v914 = vpop.f32.mrb[0].mxu0
      %v915 = vadd.f32 %v690, %v914
      %v916 = vpop.f32.mrb[0].mxu0
      %917 = vmatprep.mubr.f32.mxu0 %v435
      %918 = vmatmul.mubr.f32.gmra.mrb[0].mxu0 %v434
      %v919 = vpop.f32.mrb[0].mxu0
      %v920 = vadd.f32 %v695, %v919
      %v921 = vpop.f32.mrb[0].mxu0
      %922 = vmatprep.mubr.f32.mxu0 %v443
      %923 = vmatmul.mubr.f32.gmra.mrb[0].mxu0 %v442
      %v924 = vpop.f32.mrb[0].mxu0
      %v925 = vadd.f32 %v700, %v924
      %v926 = vpop.f32.mrb[0].mxu0
      %927 = vmatprep.mubr.f32.mxu0 %v451
      %928 = vmatmul.mubr.f32.gmra.mrb[0].mxu0 %v450
      %v929 = vpop.f32.mrb[0].mxu0
      %v930 = vadd.f32 %v705, %v929
      %v931 = vpop.f32.mrb[0].mxu0
      %932 = vmatprep.mubr.f32.mxu0 %v459
      %933 = vmatmul.mubr.f32.gmra.mrb[0].mxu0 %v458
      %v934 = vpop.f32.mrb[0].mxu0
      %v935 = vadd.f32 %v710, %v934
      %v936 = vpop.f32.mrb[0].mxu0
      %937 = vmatprep.mubr.f32.mxu0 %v467
      %938 = vmatmul.mubr.f32.gmra.mrb[0].mxu0 %v466
      %v939 = vpop.f32.mrb[0].mxu0
      %v940 = vadd.f32 %v715, %v939
      %v941 = vpop.f32.mrb[0].mxu0
      %942 = vmatprep.mubr.f32.mxu0 %v475
      %943 = vmatmul.mubr.f32.gmra.mrb[0].mxu0 %v474
      %v944 = vpop.f32.mrb[0].mxu0
      %v945 = vadd.f32 %v720, %v944
      %v946 = vpop.f32.mrb[0].mxu0
      %947 = vmatprep.mubr.f32.mxu0 %v483
      %948 = vmatmul.mubr.f32.gmra.mrb[0].mxu0 %v482
      %v949 = vpop.f32.mrb[0].mxu0
      %v950 = vadd.f32 %v725, %v949
      %v951 = vpop.f32.mrb[0].mxu0
      %952 = vmatprep.mubr.f32.mxu0 %v491
      %953 = vmatmul.mubr.f32.gmra.mrb[0].mxu0 %v490
      %v954 = vpop.f32.mrb[0].mxu0
      %v955 = vadd.f32 %v730, %v954
      %v956 = vpop.f32.mrb[0].mxu0
      %957 = vmatprep.mubr.f32.mxu0 %v499
      %958 = vmatmul.mubr.f32.gmra.mrb[0].mxu0 %v498
      %v959 = vpop.f32.mrb[0].mxu0
      %v960 = vadd.f32 %v735, %v959
      %v961 = vpop.f32.mrb[0].mxu0
      %962 = vmatprep.mubr.f32.mxu0 %v507
      %963 = vmatmul.mubr.f32.gmra.mrb[0].mxu0 %v506
      %v964 = vpop.f32.mrb[0].mxu0
      %v965 = vadd.f32 %v740, %v964
      %v966 = vpop.f32.mrb[0].mxu0
      %967 = vmatprep.mubr.f32.mxu0 %v515
      %968 = vmatmul.mubr.f32.gmra.mrb[0].mxu0 %v514
      %v969 = vpop.f32.mrb[0].mxu0
      %v970 = vadd.f32 %v745, %v969
      %v971 = vpop.f32.mrb[0].mxu0
      %972 = vmatprep.mubr.f32.mxu0 %v523
      %973 = vmatmul.mubr.f32.gmra.mrb[0].mxu0 %v522
      %v974 = vpop.f32.mrb[0].mxu0
      %v975 = vadd.f32 %v750, %v974
      %v976 = vpop.f32.mrb[0].mxu0
      %977 = vdwg.mxu0
      %978 = vmatprep.subr.mxu0 0.0
      %979 = vmatpush1.msra.mxu0 %v208
      %980 = vmatprep.subr.mxu0 0.0
      %981 = vmatpush1.msra.mxu0 %v209
      %982 = vmatprep.subr.mxu0 0.0
      %983 = vmatpush1.msra.mxu0 %v210
      %984 = vmatprep.subr.mxu0 0.0
      %985 = vmatpush1.msra.mxu0 %v211
      %986 = vmatprep.subr.mxu0 0.0
      %987 = vmatpush1.msra.mxu0 %v212
      %988 = vmatprep.subr.mxu0 0.0
      %989 = vmatpush1.msra.mxu0 %v213
      %990 = vmatprep.subr.mxu0 0.0
      %991 = vmatpush1.msra.mxu0 %v214
      %992 = vmatprep.subr.mxu0 0.0
      %993 = vmatpush1.msra.mxu0 %v215
      %994 = vmatprep.subr.mxu0 0.0
      %995 = vmatpush1.msra.mxu0 %v216
      %996 = vmatprep.subr.mxu0 0.0
      %997 = vmatpush1.msra.mxu0 %v217
      %998 = vmatprep.subr.mxu0 0.0
      %999 = vmatpush1.msra.mxu0 %v218
      %1000 = vmatprep.subr.mxu0 0.0
      %1001 = vmatpush1.msra.mxu0 %v219
      %1002 = vmatprep.subr.mxu0 0.0
      %1003 = vmatpush1.msra.mxu0 %v220
      %1004 = vmatprep.subr.mxu0 0.0
      %1005 = vmatpush1.msra.mxu0 %v221
      %1006 = vmatprep.subr.mxu0 0.0
      %1007 = vmatpush1.msra.mxu0 %v222
      %1008 = vmatprep.subr.mxu0 0.0
      %1009 = vmatpush1.msra.mxu0 %v223
      %1010 = vmatprep.subr.mxu0 0.0
      %1011 = vmatpush1.msra.mxu0 %v224
      %1012 = vmatprep.subr.mxu0 0.0
      %1013 = vmatpush1.msra.mxu0 %v225
      %1014 = vmatprep.subr.mxu0 0.0
      %1015 = vmatpush1.msra.mxu0 %v226
      %1016 = vmatprep.subr.mxu0 0.0
      %1017 = vmatpush1.msra.mxu0 %v227
      %1018 = vmatprep.subr.mxu0 0.0
      %1019 = vmatpush1.msra.mxu0 %v228
      %1020 = vmatprep.subr.mxu0 0.0
      %1021 = vmatpush1.msra.mxu0 %v229
      %1022 = vmatprep.subr.mxu0 0.0
      %1023 = vmatpush1.msra.mxu0 %v230
      %1024 = vmatprep.subr.mxu0 0.0
      %1025 = vmatpush1.msra.mxu0 %v231
      %1026 = vmatprep.subr.mxu0 0.0
      %1027 = vmatpush1.msra.mxu0 %v232
      %1028 = vmatprep.subr.mxu0 0.0
      %1029 = vmatpush1.msra.mxu0 %v233
      %1030 = vmatprep.subr.mxu0 0.0
      %1031 = vmatpush1.msra.mxu0 %v234
      %1032 = vmatprep.subr.mxu0 0.0
      %1033 = vmatpush1.msra.mxu0 %v235
      %1034 = vmatprep.subr.mxu0 0.0
      %1035 = vmatpush1.msra.mxu0 %v236
      %1036 = vmatprep.subr.mxu0 0.0
      %1037 = vmatpush1.msra.mxu0 %v237
      %1038 = vmatprep.subr.mxu0 0.0
      %1039 = vmatpush1.msra.mxu0 %v238
      %1040 = vmatprep.subr.mxu0 0.0
      %1041 = vmatpush1.msra.mxu0 %v239
      %1042 = vmatprep.mubr.f32.mxu0 %v277
      %1043 = vmatmul.mubr.f32.gmra.mrb[0].mxu0 %v276
      %v1044 = vpop.f32.mrb[0].mxu0
      %v1045 = vadd.f32 %v820, %v1044
      %v1046 = vpop.f32.mrb[0].mxu0
      %1047 = vmatprep.mubr.f32.mxu0 %v285
      %1048 = vmatmul.mubr.f32.gmra.mrb[0].mxu0 %v284
      %v1049 = vpop.f32.mrb[0].mxu0
      %v1050 = vadd.f32 %v825, %v1049
      %v1051 = vpop.f32.mrb[0].mxu0
      %1052 = vmatprep.mubr.f32.mxu0 %v293
      %1053 = vmatmul.mubr.f32.gmra.mrb[0].mxu0 %v292
      %v1054 = vpop.f32.mrb[0].mxu0
      %v1055 = vadd.f32 %v830, %v1054
      %v1056 = vpop.f32.mrb[0].mxu0
      %1057 = vmatprep.mubr.f32.mxu0 %v301
      %1058 = vmatmul.mubr.f32.gmra.mrb[0].mxu0 %v300
      %v1059 = vpop.f32.mrb[0].mxu0
      %v1060 = vadd.f32 %v835, %v1059
      %v1061 = vpop.f32.mrb[0].mxu0
      %1062 = vmatprep.mubr.f32.mxu0 %v309
      %1063 = vmatmul.mubr.f32.gmra.mrb[0].mxu0 %v308
      %v1064 = vpop.f32.mrb[0].mxu0
      %v1065 = vadd.f32 %v840, %v1064
      %v1066 = vpop.f32.mrb[0].mxu0
      %1067 = vmatprep.mubr.f32.mxu0 %v317
      %1068 = vmatmul.mubr.f32.gmra.mrb[0].mxu0 %v316
      %v1069 = vpop.f32.mrb[0].mxu0
      %v1070 = vadd.f32 %v845, %v1069
      %v1071 = vpop.f32.mrb[0].mxu0
      %1072 = vmatprep.mubr.f32.mxu0 %v325
      %1073 = vmatmul.mubr.f32.gmra.mrb[0].mxu0 %v324
      %v1074 = vpop.f32.mrb[0].mxu0
      %v1075 = vadd.f32 %v850, %v1074
      %v1076 = vpop.f32.mrb[0].mxu0
      %1077 = vmatprep.mubr.f32.mxu0 %v333
      %1078 = vmatmul.mubr.f32.gmra.mrb[0].mxu0 %v332
      %v1079 = vpop.f32.mrb[0].mxu0
      %v1080 = vadd.f32 %v855, %v1079
      %v1081 = vpop.f32.mrb[0].mxu0
      %1082 = vmatprep.mubr.f32.mxu0 %v341
      %1083 = vmatmul.mubr.f32.gmra.mrb[0].mxu0 %v340
      %v1084 = vpop.f32.mrb[0].mxu0
      %v1085 = vadd.f32 %v860, %v1084
      %v1086 = vpop.f32.mrb[0].mxu0
      %1087 = vmatprep.mubr.f32.mxu0 %v349
      %1088 = vmatmul.mubr.f32.gmra.mrb[0].mxu0 %v348
      %v1089 = vpop.f32.mrb[0].mxu0
      %v1090 = vadd.f32 %v865, %v1089
      %v1091 = vpop.f32.mrb[0].mxu0
      %1092 = vmatprep.mubr.f32.mxu0 %v357
      %1093 = vmatmul.mubr.f32.gmra.mrb[0].mxu0 %v356
      %v1094 = vpop.f32.mrb[0].mxu0
      %v1095 = vadd.f32 %v870, %v1094
      %v1096 = vpop.f32.mrb[0].mxu0
      %1097 = vmatprep.mubr.f32.mxu0 %v365
      %1098 = vmatmul.mubr.f32.gmra.mrb[0].mxu0 %v364
      %v1099 = vpop.f32.mrb[0].mxu0
      %v1100 = vadd.f32 %v875, %v1099
      %v1101 = vpop.f32.mrb[0].mxu0
      %1102 = vmatprep.mubr.f32.mxu0 %v373
      %1103 = vmatmul.mubr.f32.gmra.mrb[0].mxu0 %v372
      %v1104 = vpop.f32.mrb[0].mxu0
      %v1105 = vadd.f32 %v880, %v1104
      %v1106 = vpop.f32.mrb[0].mxu0
      %1107 = vmatprep.mubr.f32.mxu0 %v381
      %1108 = vmatmul.mubr.f32.gmra.mrb[0].mxu0 %v380
      %v1109 = vpop.f32.mrb[0].mxu0
      %v1110 = vadd.f32 %v885, %v1109
      %v1111 = vpop.f32.mrb[0].mxu0
      %1112 = vmatprep.mubr.f32.mxu0 %v389
      %1113 = vmatmul.mubr.f32.gmra.mrb[0].mxu0 %v388
      %v1114 = vpop.f32.mrb[0].mxu0
      %v1115 = vadd.f32 %v890, %v1114
      %v1116 = vpop.f32.mrb[0].mxu0
      %1117 = vmatprep.mubr.f32.mxu0 %v397
      %1118 = vmatmul.mubr.f32.gmra.mrb[0].mxu0 %v396
      %v1119 = vpop.f32.mrb[0].mxu0
      %v1120 = vadd.f32 %v895, %v1119
      %v1121 = vpop.f32.mrb[0].mxu0
      %1122 = vmatprep.mubr.f32.mxu0 %v405
      %1123 = vmatmul.mubr.f32.gmra.mrb[0].mxu0 %v404
      %v1124 = vpop.f32.mrb[0].mxu0
      %v1125 = vadd.f32 %v900, %v1124
      %v1126 = vpop.f32.mrb[0].mxu0
      %1127 = vmatprep.mubr.f32.mxu0 %v413
      %1128 = vmatmul.mubr.f32.gmra.mrb[0].mxu0 %v412
      %v1129 = vpop.f32.mrb[0].mxu0
      %v1130 = vadd.f32 %v905, %v1129
      %v1131 = vpop.f32.mrb[0].mxu0
      %1132 = vmatprep.mubr.f32.mxu0 %v421
      %1133 = vmatmul.mubr.f32.gmra.mrb[0].mxu0 %v420
      %v1134 = vpop.f32.mrb[0].mxu0
      %v1135 = vadd.f32 %v910, %v1134
      %v1136 = vpop.f32.mrb[0].mxu0
      %1137 = vmatprep.mubr.f32.mxu0 %v429
      %1138 = vmatmul.mubr.f32.gmra.mrb[0].mxu0 %v428
      %v1139 = vpop.f32.mrb[0].mxu0
      %v1140 = vadd.f32 %v915, %v1139
      %v1141 = vpop.f32.mrb[0].mxu0
      %1142 = vmatprep.mubr.f32.mxu0 %v437
      %1143 = vmatmul.mubr.f32.gmra.mrb[0].mxu0 %v436
      %v1144 = vpop.f32.mrb[0].mxu0
      %v1145 = vadd.f32 %v920, %v1144
      %v1146 = vpop.f32.mrb[0].mxu0
      %1147 = vmatprep.mubr.f32.mxu0 %v445
      %1148 = vmatmul.mubr.f32.gmra.mrb[0].mxu0 %v444
      %v1149 = vpop.f32.mrb[0].mxu0
      %v1150 = vadd.f32 %v925, %v1149
      %v1151 = vpop.f32.mrb[0].mxu0
      %1152 = vmatprep.mubr.f32.mxu0 %v453
      %1153 = vmatmul.mubr.f32.gmra.mrb[0].mxu0 %v452
      %v1154 = vpop.f32.mrb[0].mxu0
      %v1155 = vadd.f32 %v930, %v1154
      %v1156 = vpop.f32.mrb[0].mxu0
      %1157 = vmatprep.mubr.f32.mxu0 %v461
      %1158 = vmatmul.mubr.f32.gmra.mrb[0].mxu0 %v460
      %v1159 = vpop.f32.mrb[0].mxu0
      %v1160 = vadd.f32 %v935, %v1159
      %v1161 = vpop.f32.mrb[0].mxu0
      %1162 = vmatprep.mubr.f32.mxu0 %v469
      %1163 = vmatmul.mubr.f32.gmra.mrb[0].mxu0 %v468
      %v1164 = vpop.f32.mrb[0].mxu0
      %v1165 = vadd.f32 %v940, %v1164
      %v1166 = vpop.f32.mrb[0].mxu0
      %1167 = vmatprep.mubr.f32.mxu0 %v477
      %1168 = vmatmul.mubr.f32.gmra.mrb[0].mxu0 %v476
      %v1169 = vpop.f32.mrb[0].mxu0
      %v1170 = vadd.f32 %v945, %v1169
      %v1171 = vpop.f32.mrb[0].mxu0
      %1172 = vmatprep.mubr.f32.mxu0 %v485
      %1173 = vmatmul.mubr.f32.gmra.mrb[0].mxu0 %v484
      %v1174 = vpop.f32.mrb[0].mxu0
      %v1175 = vadd.f32 %v950, %v1174
      %v1176 = vpop.f32.mrb[0].mxu0
      %1177 = vmatprep.mubr.f32.mxu0 %v493
      %1178 = vmatmul.mubr.f32.gmra.mrb[0].mxu0 %v492
      %v1179 = vpop.f32.mrb[0].mxu0
      %v1180 = vadd.f32 %v955, %v1179
      %v1181 = vpop.f32.mrb[0].mxu0
      %1182 = vmatprep.mubr.f32.mxu0 %v501
      %1183 = vmatmul.mubr.f32.gmra.mrb[0].mxu0 %v500
      %v1184 = vpop.f32.mrb[0].mxu0
      %v1185 = vadd.f32 %v960, %v1184
      %v1186 = vpop.f32.mrb[0].mxu0
      %1187 = vmatprep.mubr.f32.mxu0 %v509
      %1188 = vmatmul.mubr.f32.gmra.mrb[0].mxu0 %v508
      %v1189 = vpop.f32.mrb[0].mxu0
      %v1190 = vadd.f32 %v965, %v1189
      %v1191 = vpop.f32.mrb[0].mxu0
      %1192 = vmatprep.mubr.f32.mxu0 %v517
      %1193 = vmatmul.mubr.f32.gmra.mrb[0].mxu0 %v516
      %v1194 = vpop.f32.mrb[0].mxu0
      %v1195 = vadd.f32 %v970, %v1194
      %v1196 = vpop.f32.mrb[0].mxu0
      %1197 = vmatprep.mubr.f32.mxu0 %v525
      %1198 = vmatmul.mubr.f32.gmra.mrb[0].mxu0 %v524
      %v1199 = vpop.f32.mrb[0].mxu0
      %v1200 = vadd.f32 %v975, %v1199
      %v1201 = vpop.f32.mrb[0].mxu0
      %1202 = vdwg.mxu0
      %1203 = vmatprep.subr.mxu0 0.0
      %1204 = vmatpush1.msra.mxu0 %v240
      %1205 = vmatprep.subr.mxu0 0.0
      %1206 = vmatpush1.msra.mxu0 %v241
      %1207 = vmatprep.subr.mxu0 0.0
      %1208 = vmatpush1.msra.mxu0 %v242
      %1209 = vmatprep.subr.mxu0 0.0
      %1210 = vmatpush1.msra.mxu0 %v243
      %1211 = vmatprep.subr.mxu0 0.0
      %1212 = vmatpush1.msra.mxu0 %v244
      %1213 = vmatprep.subr.mxu0 0.0
      %1214 = vmatpush1.msra.mxu0 %v245
      %1215 = vmatprep.subr.mxu0 0.0
      %1216 = vmatpush1.msra.mxu0 %v246
      %1217 = vmatprep.subr.mxu0 0.0
      %1218 = vmatpush1.msra.mxu0 %v247
      %1219 = vmatprep.subr.mxu0 0.0
      %1220 = vmatpush1.msra.mxu0 %v248
      %1221 = vmatprep.subr.mxu0 0.0
      %1222 = vmatpush1.msra.mxu0 %v249
      %1223 = vmatprep.subr.mxu0 0.0
      %1224 = vmatpush1.msra.mxu0 %v250
      %1225 = vmatprep.subr.mxu0 0.0
      %1226 = vmatpush1.msra.mxu0 %v251
      %1227 = vmatprep.subr.mxu0 0.0
      %1228 = vmatpush1.msra.mxu0 %v252
      %1229 = vmatprep.subr.mxu0 0.0
      %1230 = vmatpush1.msra.mxu0 %v253
      %1231 = vmatprep.subr.mxu0 0.0
      %1232 = vmatpush1.msra.mxu0 %v254
      %1233 = vmatprep.subr.mxu0 0.0
      %1234 = vmatpush1.msra.mxu0 %v255
      %1235 = vmatprep.subr.mxu0 0.0
      %1236 = vmatpush1.msra.mxu0 %v256
      %1237 = vmatprep.subr.mxu0 0.0
      %1238 = vmatpush1.msra.mxu0 %v257
      %1239 = vmatprep.subr.mxu0 0.0
      %1240 = vmatpush1.msra.mxu0 %v258
      %1241 = vmatprep.subr.mxu0 0.0
      %1242 = vmatpush1.msra.mxu0 %v259
      %1243 = vmatprep.subr.mxu0 0.0
      %1244 = vmatpush1.msra.mxu0 %v260
      %1245 = vmatprep.subr.mxu0 0.0
      %1246 = vmatpush1.msra.mxu0 %v261
      %1247 = vmatprep.subr.mxu0 0.0
      %1248 = vmatpush1.msra.mxu0 %v262
      %1249 = vmatprep.subr.mxu0 0.0
      %1250 = vmatpush1.msra.mxu0 %v263
      %1251 = vmatprep.subr.mxu0 0.0
      %1252 = vmatpush1.msra.mxu0 %v264
      %1253 = vmatprep.subr.mxu0 0.0
      %1254 = vmatpush1.msra.mxu0 %v265
      %1255 = vmatprep.subr.mxu0 0.0
      %1256 = vmatpush1.msra.mxu0 %v266
      %1257 = vmatprep.subr.mxu0 0.0
      %1258 = vmatpush1.msra.mxu0 %v267
      %1259 = vmatprep.subr.mxu0 0.0
      %1260 = vmatpush1.msra.mxu0 %v268
      %1261 = vmatprep.subr.mxu0 0.0
      %1262 = vmatpush1.msra.mxu0 %v269
      %1263 = vmatprep.subr.mxu0 0.0
      %1264 = vmatpush1.msra.mxu0 %v270
      %1265 = vmatprep.subr.mxu0 0.0
      %1266 = vmatpush1.msra.mxu0 %v271
      %1267 = vmatprep.mubr.f32.mxu0 %v279
      %1268 = vmatmul.mubr.f32.gmra.mrb[0].mxu0 %v278
      %v1269 = vpop.f32.mrb[0].mxu0
      %v1270 = vadd.f32 %v1045, %v1269
      %v1271 = vpop.f32.mrb[0].mxu0
      %1272 = vmatprep.mubr.f32.mxu0 %v287
      %1273 = vmatmul.mubr.f32.gmra.mrb[0].mxu0 %v286
      %v1274 = vpop.f32.mrb[0].mxu0
      %v1275 = vadd.f32 %v1050, %v1274
      %v1276 = vpop.f32.mrb[0].mxu0
      %1277 = vmatprep.mubr.f32.mxu0 %v295
      %1278 = vmatmul.mubr.f32.gmra.mrb[0].mxu0 %v294
      %v1279 = vpop.f32.mrb[0].mxu0
      %v1280 = vadd.f32 %v1055, %v1279
      %v1281 = vpop.f32.mrb[0].mxu0
      %1282 = vmatprep.mubr.f32.mxu0 %v303
      %1283 = vmatmul.mubr.f32.gmra.mrb[0].mxu0 %v302
      %v1284 = vpop.f32.mrb[0].mxu0
      %v1285 = vadd.f32 %v1060, %v1284
      %v1286 = vpop.f32.mrb[0].mxu0
      %1287 = vmatprep.mubr.f32.mxu0 %v311
      %1288 = vmatmul.mubr.f32.gmra.mrb[0].mxu0 %v310
      %v1289 = vpop.f32.mrb[0].mxu0
      %v1290 = vadd.f32 %v1065, %v1289
      %v1291 = vpop.f32.mrb[0].mxu0
      %1292 = vmatprep.mubr.f32.mxu0 %v319
      %1293 = vmatmul.mubr.f32.gmra.mrb[0].mxu0 %v318
      %v1294 = vpop.f32.mrb[0].mxu0
      %v1295 = vadd.f32 %v1070, %v1294
      %v1296 = vpop.f32.mrb[0].mxu0
      %1297 = vmatprep.mubr.f32.mxu0 %v327
      %1298 = vmatmul.mubr.f32.gmra.mrb[0].mxu0 %v326
      %v1299 = vpop.f32.mrb[0].mxu0
      %v1300 = vadd.f32 %v1075, %v1299
      %v1301 = vpop.f32.mrb[0].mxu0
      %1302 = vmatprep.mubr.f32.mxu0 %v335
      %1303 = vmatmul.mubr.f32.gmra.mrb[0].mxu0 %v334
      %v1304 = vpop.f32.mrb[0].mxu0
      %v1305 = vadd.f32 %v1080, %v1304
      %v1306 = vpop.f32.mrb[0].mxu0
      %1307 = vmatprep.mubr.f32.mxu0 %v343
      %1308 = vmatmul.mubr.f32.gmra.mrb[0].mxu0 %v342
      %v1309 = vpop.f32.mrb[0].mxu0
      %v1310 = vadd.f32 %v1085, %v1309
      %v1311 = vpop.f32.mrb[0].mxu0
      %1312 = vmatprep.mubr.f32.mxu0 %v351
      %1313 = vmatmul.mubr.f32.gmra.mrb[0].mxu0 %v350
      %v1314 = vpop.f32.mrb[0].mxu0
      %v1315 = vadd.f32 %v1090, %v1314
      %v1316 = vpop.f32.mrb[0].mxu0
      %1317 = vmatprep.mubr.f32.mxu0 %v359
      %1318 = vmatmul.mubr.f32.gmra.mrb[0].mxu0 %v358
      %v1319 = vpop.f32.mrb[0].mxu0
      %v1320 = vadd.f32 %v1095, %v1319
      %v1321 = vpop.f32.mrb[0].mxu0
      %1322 = vmatprep.mubr.f32.mxu0 %v367
      %1323 = vmatmul.mubr.f32.gmra.mrb[0].mxu0 %v366
      %v1324 = vpop.f32.mrb[0].mxu0
      %v1325 = vadd.f32 %v1100, %v1324
      %v1326 = vpop.f32.mrb[0].mxu0
      %1327 = vmatprep.mubr.f32.mxu0 %v375
      %1328 = vmatmul.mubr.f32.gmra.mrb[0].mxu0 %v374
      %v1329 = vpop.f32.mrb[0].mxu0
      %v1330 = vadd.f32 %v1105, %v1329
      %v1331 = vpop.f32.mrb[0].mxu0
      %1332 = vmatprep.mubr.f32.mxu0 %v383
      %1333 = vmatmul.mubr.f32.gmra.mrb[0].mxu0 %v382
      %v1334 = vpop.f32.mrb[0].mxu0
      %v1335 = vadd.f32 %v1110, %v1334
      %v1336 = vpop.f32.mrb[0].mxu0
      %1337 = vmatprep.mubr.f32.mxu0 %v391
      %1338 = vmatmul.mubr.f32.gmra.mrb[0].mxu0 %v390
      %v1339 = vpop.f32.mrb[0].mxu0
      %v1340 = vadd.f32 %v1115, %v1339
      %v1341 = vpop.f32.mrb[0].mxu0
      %1342 = vmatprep.mubr.f32.mxu0 %v399
      %1343 = vmatmul.mubr.f32.gmra.mrb[0].mxu0 %v398
      %v1344 = vpop.f32.mrb[0].mxu0
      %v1345 = vadd.f32 %v1120, %v1344
      %v1346 = vpop.f32.mrb[0].mxu0
      %1347 = vmatprep.mubr.f32.mxu0 %v407
      %1348 = vmatmul.mubr.f32.gmra.mrb[0].mxu0 %v406
      %v1349 = vpop.f32.mrb[0].mxu0
      %v1350 = vadd.f32 %v1125, %v1349
      %v1351 = vpop.f32.mrb[0].mxu0
      %1352 = vmatprep.mubr.f32.mxu0 %v415
      %1353 = vmatmul.mubr.f32.gmra.mrb[0].mxu0 %v414
      %v1354 = vpop.f32.mrb[0].mxu0
      %v1355 = vadd.f32 %v1130, %v1354
      %v1356 = vpop.f32.mrb[0].mxu0
      %1357 = vmatprep.mubr.f32.mxu0 %v423
      %1358 = vmatmul.mubr.f32.gmra.mrb[0].mxu0 %v422
      %v1359 = vpop.f32.mrb[0].mxu0
      %v1360 = vadd.f32 %v1135, %v1359
      %v1361 = vpop.f32.mrb[0].mxu0
      %1362 = vmatprep.mubr.f32.mxu0 %v431
      %1363 = vmatmul.mubr.f32.gmra.mrb[0].mxu0 %v430
      %v1364 = vpop.f32.mrb[0].mxu0
      %v1365 = vadd.f32 %v1140, %v1364
      %v1366 = vpop.f32.mrb[0].mxu0
      %1367 = vmatprep.mubr.f32.mxu0 %v439
      %1368 = vmatmul.mubr.f32.gmra.mrb[0].mxu0 %v438
      %v1369 = vpop.f32.mrb[0].mxu0
      %v1370 = vadd.f32 %v1145, %v1369
      %v1371 = vpop.f32.mrb[0].mxu0
      %1372 = vmatprep.mubr.f32.mxu0 %v447
      %1373 = vmatmul.mubr.f32.gmra.mrb[0].mxu0 %v446
      %v1374 = vpop.f32.mrb[0].mxu0
      %v1375 = vadd.f32 %v1150, %v1374
      %v1376 = vpop.f32.mrb[0].mxu0
      %1377 = vmatprep.mubr.f32.mxu0 %v455
      %1378 = vmatmul.mubr.f32.gmra.mrb[0].mxu0 %v454
      %v1379 = vpop.f32.mrb[0].mxu0
      %v1380 = vadd.f32 %v1155, %v1379
      %v1381 = vpop.f32.mrb[0].mxu0
      %1382 = vmatprep.mubr.f32.mxu0 %v463
      %1383 = vmatmul.mubr.f32.gmra.mrb[0].mxu0 %v462
      %v1384 = vpop.f32.mrb[0].mxu0
      %v1385 = vadd.f32 %v1160, %v1384
      %v1386 = vpop.f32.mrb[0].mxu0
      %1387 = vmatprep.mubr.f32.mxu0 %v471
      %1388 = vmatmul.mubr.f32.gmra.mrb[0].mxu0 %v470
      %v1389 = vpop.f32.mrb[0].mxu0
      %v1390 = vadd.f32 %v1165, %v1389
      %v1391 = vpop.f32.mrb[0].mxu0
      %1392 = vmatprep.mubr.f32.mxu0 %v479
      %1393 = vmatmul.mubr.f32.gmra.mrb[0].mxu0 %v478
      %v1394 = vpop.f32.mrb[0].mxu0
      %v1395 = vadd.f32 %v1170, %v1394
      %v1396 = vpop.f32.mrb[0].mxu0
      %1397 = vmatprep.mubr.f32.mxu0 %v487
      %1398 = vmatmul.mubr.f32.gmra.mrb[0].mxu0 %v486
      %v1399 = vpop.f32.mrb[0].mxu0
      %v1400 = vadd.f32 %v1175, %v1399
      %v1401 = vpop.f32.mrb[0].mxu0
      %1402 = vmatprep.mubr.f32.mxu0 %v495
      %1403 = vmatmul.mubr.f32.gmra.mrb[0].mxu0 %v494
      %v1404 = vpop.f32.mrb[0].mxu0
      %v1405 = vadd.f32 %v1180, %v1404
      %v1406 = vpop.f32.mrb[0].mxu0
      %1407 = vmatprep.mubr.f32.mxu0 %v503
      %1408 = vmatmul.mubr.f32.gmra.mrb[0].mxu0 %v502
      %v1409 = vpop.f32.mrb[0].mxu0
      %v1410 = vadd.f32 %v1185, %v1409
      %v1411 = vpop.f32.mrb[0].mxu0
      %1412 = vmatprep.mubr.f32.mxu0 %v511
      %1413 = vmatmul.mubr.f32.gmra.mrb[0].mxu0 %v510
      %v1414 = vpop.f32.mrb[0].mxu0
      %v1415 = vadd.f32 %v1190, %v1414
      %v1416 = vpop.f32.mrb[0].mxu0
      %1417 = vmatprep.mubr.f32.mxu0 %v519
      %1418 = vmatmul.mubr.f32.gmra.mrb[0].mxu0 %v518
      %v1419 = vpop.f32.mrb[0].mxu0
      %v1420 = vadd.f32 %v1195, %v1419
      %v1421 = vpop.f32.mrb[0].mxu0
      %1422 = vmatprep.mubr.f32.mxu0 %v527
      %1423 = vmatmul.mubr.f32.gmra.mrb[0].mxu0 %v526
      %v1424 = vpop.f32.mrb[0].mxu0
      %v1425 = vadd.f32 %v1200, %v1424
      %v1426 = vpop.f32.mrb[0].mxu0
      %1427 = vdwg.mxu0
      %s1428 = scalar_lea.vmem %s1, 2048
      %v1429 = vld [vmem:[%s1428] sm:$0xff]
      %v1430 = vld [vmem:[%s1428 + $0x8] sm:$0xff]
      %v1431 = vld [vmem:[%s1428 + $0x10] sm:$0xff]
      %v1432 = vld [vmem:[%s1428 + $0x18] sm:$0xff]
      %v1433 = vld [vmem:[%s1428 + $0x20] sm:$0xff]
      %v1434 = vld [vmem:[%s1428 + $0x28] sm:$0xff]
      %v1435 = vld [vmem:[%s1428 + $0x30] sm:$0xff]
      %v1436 = vld [vmem:[%s1428 + $0x38] sm:$0xff]
      %v1437 = vld [vmem:[%s1428 + $0x40] sm:$0xff]
      %v1438 = vld [vmem:[%s1428 + $0x48] sm:$0xff]
      %v1439 = vld [vmem:[%s1428 + $0x50] sm:$0xff]
      %v1440 = vld [vmem:[%s1428 + $0x58] sm:$0xff]
      %v1441 = vld [vmem:[%s1428 + $0x60] sm:$0xff]
      %v1442 = vld [vmem:[%s1428 + $0x68] sm:$0xff]
      %v1443 = vld [vmem:[%s1428 + $0x70] sm:$0xff]
      %v1444 = vld [vmem:[%s1428 + $0x78] sm:$0xff]
      %v1445 = vld [vmem:[%s1428 + $0x80] sm:$0xff]
      %v1446 = vld [vmem:[%s1428 + $0x88] sm:$0xff]
      %v1447 = vld [vmem:[%s1428 + $0x90] sm:$0xff]
      %v1448 = vld [vmem:[%s1428 + $0x98] sm:$0xff]
      %v1449 = vld [vmem:[%s1428 + $0xa0] sm:$0xff]
      %v1450 = vld [vmem:[%s1428 + $0xa8] sm:$0xff]
      %v1451 = vld [vmem:[%s1428 + $0xb0] sm:$0xff]
      %v1452 = vld [vmem:[%s1428 + $0xb8] sm:$0xff]
      %v1453 = vld [vmem:[%s1428 + $0xc0] sm:$0xff]
      %v1454 = vld [vmem:[%s1428 + $0xc8] sm:$0xff]
      %v1455 = vld [vmem:[%s1428 + $0xd0] sm:$0xff]
      %v1456 = vld [vmem:[%s1428 + $0xd8] sm:$0xff]
      %v1457 = vld [vmem:[%s1428 + $0xe0] sm:$0xff]
      %v1458 = vld [vmem:[%s1428 + $0xe8] sm:$0xff]
      %v1459 = vld [vmem:[%s1428 + $0xf0] sm:$0xff]
      %v1460 = vld [vmem:[%s1428 + $0xf8] sm:$0xff]
      %v1461 = vld [vmem:[%s1428 + $0x100] sm:$0xff]
      %v1462 = vld [vmem:[%s1428 + $0x108] sm:$0xff]
      %v1463 = vld [vmem:[%s1428 + $0x110] sm:$0xff]
      %v1464 = vld [vmem:[%s1428 + $0x118] sm:$0xff]
      %v1465 = vld [vmem:[%s1428 + $0x120] sm:$0xff]
      %v1466 = vld [vmem:[%s1428 + $0x128] sm:$0xff]
      %v1467 = vld [vmem:[%s1428 + $0x130] sm:$0xff]
      %v1468 = vld [vmem:[%s1428 + $0x138] sm:$0xff]
      %v1469 = vld [vmem:[%s1428 + $0x140] sm:$0xff]
      %v1470 = vld [vmem:[%s1428 + $0x148] sm:$0xff]
      %v1471 = vld [vmem:[%s1428 + $0x150] sm:$0xff]
      %v1472 = vld [vmem:[%s1428 + $0x158] sm:$0xff]
      %v1473 = vld [vmem:[%s1428 + $0x160] sm:$0xff]
      %v1474 = vld [vmem:[%s1428 + $0x168] sm:$0xff]
      %v1475 = vld [vmem:[%s1428 + $0x170] sm:$0xff]
      %v1476 = vld [vmem:[%s1428 + $0x178] sm:$0xff]
      %v1477 = vld [vmem:[%s1428 + $0x180] sm:$0xff]
      %v1478 = vld [vmem:[%s1428 + $0x188] sm:$0xff]
      %v1479 = vld [vmem:[%s1428 + $0x190] sm:$0xff]
      %v1480 = vld [vmem:[%s1428 + $0x198] sm:$0xff]
      %v1481 = vld [vmem:[%s1428 + $0x1a0] sm:$0xff]
      %v1482 = vld [vmem:[%s1428 + $0x1a8] sm:$0xff]
      %v1483 = vld [vmem:[%s1428 + $0x1b0] sm:$0xff]
      %v1484 = vld [vmem:[%s1428 + $0x1b8] sm:$0xff]
      %v1485 = vld [vmem:[%s1428 + $0x1c0] sm:$0xff]
      %v1486 = vld [vmem:[%s1428 + $0x1c8] sm:$0xff]
      %v1487 = vld [vmem:[%s1428 + $0x1d0] sm:$0xff]
      %v1488 = vld [vmem:[%s1428 + $0x1d8] sm:$0xff]
      %v1489 = vld [vmem:[%s1428 + $0x1e0] sm:$0xff]
      %v1490 = vld [vmem:[%s1428 + $0x1e8] sm:$0xff]
      %v1491 = vld [vmem:[%s1428 + $0x1f0] sm:$0xff]
      %v1492 = vld [vmem:[%s1428 + $0x1f8] sm:$0xff]
      %v1493 = vld [vmem:[%s1428 + $0x200] sm:$0xff]
      %v1494 = vld [vmem:[%s1428 + $0x208] sm:$0xff]
      %v1495 = vld [vmem:[%s1428 + $0x210] sm:$0xff]
      %v1496 = vld [vmem:[%s1428 + $0x218] sm:$0xff]
      %v1497 = vld [vmem:[%s1428 + $0x220] sm:$0xff]
      %v1498 = vld [vmem:[%s1428 + $0x228] sm:$0xff]
      %v1499 = vld [vmem:[%s1428 + $0x230] sm:$0xff]
      %v1500 = vld [vmem:[%s1428 + $0x238] sm:$0xff]
      %v1501 = vld [vmem:[%s1428 + $0x240] sm:$0xff]
      %v1502 = vld [vmem:[%s1428 + $0x248] sm:$0xff]
      %v1503 = vld [vmem:[%s1428 + $0x250] sm:$0xff]
      %v1504 = vld [vmem:[%s1428 + $0x258] sm:$0xff]
      %v1505 = vld [vmem:[%s1428 + $0x260] sm:$0xff]
      %v1506 = vld [vmem:[%s1428 + $0x268] sm:$0xff]
      %v1507 = vld [vmem:[%s1428 + $0x270] sm:$0xff]
      %v1508 = vld [vmem:[%s1428 + $0x278] sm:$0xff]
      %v1509 = vld [vmem:[%s1428 + $0x280] sm:$0xff]
      %v1510 = vld [vmem:[%s1428 + $0x288] sm:$0xff]
      %v1511 = vld [vmem:[%s1428 + $0x290] sm:$0xff]
      %v1512 = vld [vmem:[%s1428 + $0x298] sm:$0xff]
      %v1513 = vld [vmem:[%s1428 + $0x2a0] sm:$0xff]
      %v1514 = vld [vmem:[%s1428 + $0x2a8] sm:$0xff]
      %v1515 = vld [vmem:[%s1428 + $0x2b0] sm:$0xff]
      %v1516 = vld [vmem:[%s1428 + $0x2b8] sm:$0xff]
      %v1517 = vld [vmem:[%s1428 + $0x2c0] sm:$0xff]
      %v1518 = vld [vmem:[%s1428 + $0x2c8] sm:$0xff]
      %v1519 = vld [vmem:[%s1428 + $0x2d0] sm:$0xff]
      %v1520 = vld [vmem:[%s1428 + $0x2d8] sm:$0xff]
      %v1521 = vld [vmem:[%s1428 + $0x2e0] sm:$0xff]
      %v1522 = vld [vmem:[%s1428 + $0x2e8] sm:$0xff]
      %v1523 = vld [vmem:[%s1428 + $0x2f0] sm:$0xff]
      %v1524 = vld [vmem:[%s1428 + $0x2f8] sm:$0xff]
      %v1525 = vld [vmem:[%s1428 + $0x300] sm:$0xff]
      %v1526 = vld [vmem:[%s1428 + $0x308] sm:$0xff]
      %v1527 = vld [vmem:[%s1428 + $0x310] sm:$0xff]
      %v1528 = vld [vmem:[%s1428 + $0x318] sm:$0xff]
      %v1529 = vld [vmem:[%s1428 + $0x320] sm:$0xff]
      %v1530 = vld [vmem:[%s1428 + $0x328] sm:$0xff]
      %v1531 = vld [vmem:[%s1428 + $0x330] sm:$0xff]
      %v1532 = vld [vmem:[%s1428 + $0x338] sm:$0xff]
      %v1533 = vld [vmem:[%s1428 + $0x340] sm:$0xff]
      %v1534 = vld [vmem:[%s1428 + $0x348] sm:$0xff]
      %v1535 = vld [vmem:[%s1428 + $0x350] sm:$0xff]
      %v1536 = vld [vmem:[%s1428 + $0x358] sm:$0xff]
      %v1537 = vld [vmem:[%s1428 + $0x360] sm:$0xff]
      %v1538 = vld [vmem:[%s1428 + $0x368] sm:$0xff]
      %v1539 = vld [vmem:[%s1428 + $0x370] sm:$0xff]
      %v1540 = vld [vmem:[%s1428 + $0x378] sm:$0xff]
      %v1541 = vld [vmem:[%s1428 + $0x380] sm:$0xff]
      %v1542 = vld [vmem:[%s1428 + $0x388] sm:$0xff]
      %v1543 = vld [vmem:[%s1428 + $0x390] sm:$0xff]
      %v1544 = vld [vmem:[%s1428 + $0x398] sm:$0xff]
      %v1545 = vld [vmem:[%s1428 + $0x3a0] sm:$0xff]
      %v1546 = vld [vmem:[%s1428 + $0x3a8] sm:$0xff]
      %v1547 = vld [vmem:[%s1428 + $0x3b0] sm:$0xff]
      %v1548 = vld [vmem:[%s1428 + $0x3b8] sm:$0xff]
      %v1549 = vld [vmem:[%s1428 + $0x3c0] sm:$0xff]
      %v1550 = vld [vmem:[%s1428 + $0x3c8] sm:$0xff]
      %v1551 = vld [vmem:[%s1428 + $0x3d0] sm:$0xff]
      %v1552 = vld [vmem:[%s1428 + $0x3d8] sm:$0xff]
      %v1553 = vld [vmem:[%s1428 + $0x3e0] sm:$0xff]
      %v1554 = vld [vmem:[%s1428 + $0x3e8] sm:$0xff]
      %v1555 = vld [vmem:[%s1428 + $0x3f0] sm:$0xff]
      %v1556 = vld [vmem:[%s1428 + $0x3f8] sm:$0xff]
      %v1557 = vld [vmem:[%s1428 + $0x400] sm:$0xff]
      %v1558 = vld [vmem:[%s1428 + $0x408] sm:$0xff]
      %v1559 = vld [vmem:[%s1428 + $0x410] sm:$0xff]
      %v1560 = vld [vmem:[%s1428 + $0x418] sm:$0xff]
      %v1561 = vld [vmem:[%s1428 + $0x420] sm:$0xff]
      %v1562 = vld [vmem:[%s1428 + $0x428] sm:$0xff]
      %v1563 = vld [vmem:[%s1428 + $0x430] sm:$0xff]
      %v1564 = vld [vmem:[%s1428 + $0x438] sm:$0xff]
      %v1565 = vld [vmem:[%s1428 + $0x440] sm:$0xff]
      %v1566 = vld [vmem:[%s1428 + $0x448] sm:$0xff]
      %v1567 = vld [vmem:[%s1428 + $0x450] sm:$0xff]
      %v1568 = vld [vmem:[%s1428 + $0x458] sm:$0xff]
      %v1569 = vld [vmem:[%s1428 + $0x460] sm:$0xff]
      %v1570 = vld [vmem:[%s1428 + $0x468] sm:$0xff]
      %v1571 = vld [vmem:[%s1428 + $0x470] sm:$0xff]
      %v1572 = vld [vmem:[%s1428 + $0x478] sm:$0xff]
      %v1573 = vld [vmem:[%s1428 + $0x480] sm:$0xff]
      %v1574 = vld [vmem:[%s1428 + $0x488] sm:$0xff]
      %v1575 = vld [vmem:[%s1428 + $0x490] sm:$0xff]
      %v1576 = vld [vmem:[%s1428 + $0x498] sm:$0xff]
      %v1577 = vld [vmem:[%s1428 + $0x4a0] sm:$0xff]
      %v1578 = vld [vmem:[%s1428 + $0x4a8] sm:$0xff]
      %v1579 = vld [vmem:[%s1428 + $0x4b0] sm:$0xff]
      %v1580 = vld [vmem:[%s1428 + $0x4b8] sm:$0xff]
      %v1581 = vld [vmem:[%s1428 + $0x4c0] sm:$0xff]
      %v1582 = vld [vmem:[%s1428 + $0x4c8] sm:$0xff]
      %v1583 = vld [vmem:[%s1428 + $0x4d0] sm:$0xff]
      %v1584 = vld [vmem:[%s1428 + $0x4d8] sm:$0xff]
      %v1585 = vld [vmem:[%s1428 + $0x4e0] sm:$0xff]
      %v1586 = vld [vmem:[%s1428 + $0x4e8] sm:$0xff]
      %v1587 = vld [vmem:[%s1428 + $0x4f0] sm:$0xff]
      %v1588 = vld [vmem:[%s1428 + $0x4f8] sm:$0xff]
      %v1589 = vld [vmem:[%s1428 + $0x500] sm:$0xff]
      %v1590 = vld [vmem:[%s1428 + $0x508] sm:$0xff]
      %v1591 = vld [vmem:[%s1428 + $0x510] sm:$0xff]
      %v1592 = vld [vmem:[%s1428 + $0x518] sm:$0xff]
      %v1593 = vld [vmem:[%s1428 + $0x520] sm:$0xff]
      %v1594 = vld [vmem:[%s1428 + $0x528] sm:$0xff]
      %v1595 = vld [vmem:[%s1428 + $0x530] sm:$0xff]
      %v1596 = vld [vmem:[%s1428 + $0x538] sm:$0xff]
      %v1597 = vld [vmem:[%s1428 + $0x540] sm:$0xff]
      %v1598 = vld [vmem:[%s1428 + $0x548] sm:$0xff]
      %v1599 = vld [vmem:[%s1428 + $0x550] sm:$0xff]
      %v1600 = vld [vmem:[%s1428 + $0x558] sm:$0xff]
      %v1601 = vld [vmem:[%s1428 + $0x560] sm:$0xff]
      %v1602 = vld [vmem:[%s1428 + $0x568] sm:$0xff]
      %v1603 = vld [vmem:[%s1428 + $0x570] sm:$0xff]
      %v1604 = vld [vmem:[%s1428 + $0x578] sm:$0xff]
      %v1605 = vld [vmem:[%s1428 + $0x580] sm:$0xff]
      %v1606 = vld [vmem:[%s1428 + $0x588] sm:$0xff]
      %v1607 = vld [vmem:[%s1428 + $0x590] sm:$0xff]
      %v1608 = vld [vmem:[%s1428 + $0x598] sm:$0xff]
      %v1609 = vld [vmem:[%s1428 + $0x5a0] sm:$0xff]
      %v1610 = vld [vmem:[%s1428 + $0x5a8] sm:$0xff]
      %v1611 = vld [vmem:[%s1428 + $0x5b0] sm:$0xff]
      %v1612 = vld [vmem:[%s1428 + $0x5b8] sm:$0xff]
      %v1613 = vld [vmem:[%s1428 + $0x5c0] sm:$0xff]
      %v1614 = vld [vmem:[%s1428 + $0x5c8] sm:$0xff]
      %v1615 = vld [vmem:[%s1428 + $0x5d0] sm:$0xff]
      %v1616 = vld [vmem:[%s1428 + $0x5d8] sm:$0xff]
      %v1617 = vld [vmem:[%s1428 + $0x5e0] sm:$0xff]
      %v1618 = vld [vmem:[%s1428 + $0x5e8] sm:$0xff]
      %v1619 = vld [vmem:[%s1428 + $0x5f0] sm:$0xff]
      %v1620 = vld [vmem:[%s1428 + $0x5f8] sm:$0xff]
      %v1621 = vld [vmem:[%s1428 + $0x600] sm:$0xff]
      %v1622 = vld [vmem:[%s1428 + $0x608] sm:$0xff]
      %v1623 = vld [vmem:[%s1428 + $0x610] sm:$0xff]
      %v1624 = vld [vmem:[%s1428 + $0x618] sm:$0xff]
      %v1625 = vld [vmem:[%s1428 + $0x620] sm:$0xff]
      %v1626 = vld [vmem:[%s1428 + $0x628] sm:$0xff]
      %v1627 = vld [vmem:[%s1428 + $0x630] sm:$0xff]
      %v1628 = vld [vmem:[%s1428 + $0x638] sm:$0xff]
      %v1629 = vld [vmem:[%s1428 + $0x640] sm:$0xff]
      %v1630 = vld [vmem:[%s1428 + $0x648] sm:$0xff]
      %v1631 = vld [vmem:[%s1428 + $0x650] sm:$0xff]
      %v1632 = vld [vmem:[%s1428 + $0x658] sm:$0xff]
      %v1633 = vld [vmem:[%s1428 + $0x660] sm:$0xff]
      %v1634 = vld [vmem:[%s1428 + $0x668] sm:$0xff]
      %v1635 = vld [vmem:[%s1428 + $0x670] sm:$0xff]
      %v1636 = vld [vmem:[%s1428 + $0x678] sm:$0xff]
      %v1637 = vld [vmem:[%s1428 + $0x680] sm:$0xff]
      %v1638 = vld [vmem:[%s1428 + $0x688] sm:$0xff]
      %v1639 = vld [vmem:[%s1428 + $0x690] sm:$0xff]
      %v1640 = vld [vmem:[%s1428 + $0x698] sm:$0xff]
      %v1641 = vld [vmem:[%s1428 + $0x6a0] sm:$0xff]
      %v1642 = vld [vmem:[%s1428 + $0x6a8] sm:$0xff]
      %v1643 = vld [vmem:[%s1428 + $0x6b0] sm:$0xff]
      %v1644 = vld [vmem:[%s1428 + $0x6b8] sm:$0xff]
      %v1645 = vld [vmem:[%s1428 + $0x6c0] sm:$0xff]
      %v1646 = vld [vmem:[%s1428 + $0x6c8] sm:$0xff]
      %v1647 = vld [vmem:[%s1428 + $0x6d0] sm:$0xff]
      %v1648 = vld [vmem:[%s1428 + $0x6d8] sm:$0xff]
      %v1649 = vld [vmem:[%s1428 + $0x6e0] sm:$0xff]
      %v1650 = vld [vmem:[%s1428 + $0x6e8] sm:$0xff]
      %v1651 = vld [vmem:[%s1428 + $0x6f0] sm:$0xff]
      %v1652 = vld [vmem:[%s1428 + $0x6f8] sm:$0xff]
      %v1653 = vld [vmem:[%s1428 + $0x700] sm:$0xff]
      %v1654 = vld [vmem:[%s1428 + $0x708] sm:$0xff]
      %v1655 = vld [vmem:[%s1428 + $0x710] sm:$0xff]
      %v1656 = vld [vmem:[%s1428 + $0x718] sm:$0xff]
      %v1657 = vld [vmem:[%s1428 + $0x720] sm:$0xff]
      %v1658 = vld [vmem:[%s1428 + $0x728] sm:$0xff]
      %v1659 = vld [vmem:[%s1428 + $0x730] sm:$0xff]
      %v1660 = vld [vmem:[%s1428 + $0x738] sm:$0xff]
      %v1661 = vld [vmem:[%s1428 + $0x740] sm:$0xff]
      %v1662 = vld [vmem:[%s1428 + $0x748] sm:$0xff]
      %v1663 = vld [vmem:[%s1428 + $0x750] sm:$0xff]
      %v1664 = vld [vmem:[%s1428 + $0x758] sm:$0xff]
      %v1665 = vld [vmem:[%s1428 + $0x760] sm:$0xff]
      %v1666 = vld [vmem:[%s1428 + $0x768] sm:$0xff]
      %v1667 = vld [vmem:[%s1428 + $0x770] sm:$0xff]
      %v1668 = vld [vmem:[%s1428 + $0x778] sm:$0xff]
      %v1669 = vld [vmem:[%s1428 + $0x780] sm:$0xff]
      %v1670 = vld [vmem:[%s1428 + $0x788] sm:$0xff]
      %v1671 = vld [vmem:[%s1428 + $0x790] sm:$0xff]
      %v1672 = vld [vmem:[%s1428 + $0x798] sm:$0xff]
      %v1673 = vld [vmem:[%s1428 + $0x7a0] sm:$0xff]
      %v1674 = vld [vmem:[%s1428 + $0x7a8] sm:$0xff]
      %v1675 = vld [vmem:[%s1428 + $0x7b0] sm:$0xff]
      %v1676 = vld [vmem:[%s1428 + $0x7b8] sm:$0xff]
      %v1677 = vld [vmem:[%s1428 + $0x7c0] sm:$0xff]
      %v1678 = vld [vmem:[%s1428 + $0x7c8] sm:$0xff]
      %v1679 = vld [vmem:[%s1428 + $0x7d0] sm:$0xff]
      %v1680 = vld [vmem:[%s1428 + $0x7d8] sm:$0xff]
      %v1681 = vld [vmem:[%s1428 + $0x7e0] sm:$0xff]
      %v1682 = vld [vmem:[%s1428 + $0x7e8] sm:$0xff]
      %v1683 = vld [vmem:[%s1428 + $0x7f0] sm:$0xff]
      %v1684 = vld [vmem:[%s1428 + $0x7f8] sm:$0xff]
      %1685 = vmatprep.subr.mxu0 0.0
      %1686 = vmatpush1.msra.mxu0 %v144
      %1687 = vmatprep.subr.mxu0 0.0
      %1688 = vmatpush1.msra.mxu0 %v145
      %1689 = vmatprep.subr.mxu0 0.0
      %1690 = vmatpush1.msra.mxu0 %v146
      %1691 = vmatprep.subr.mxu0 0.0
      %1692 = vmatpush1.msra.mxu0 %v147
      %1693 = vmatprep.subr.mxu0 0.0
      %1694 = vmatpush1.msra.mxu0 %v148
      %1695 = vmatprep.subr.mxu0 0.0
      %1696 = vmatpush1.msra.mxu0 %v149
      %1697 = vmatprep.subr.mxu0 0.0
      %1698 = vmatpush1.msra.mxu0 %v150
      %1699 = vmatprep.subr.mxu0 0.0
      %1700 = vmatpush1.msra.mxu0 %v151
      %1701 = vmatprep.subr.mxu0 0.0
      %1702 = vmatpush1.msra.mxu0 %v152
      %1703 = vmatprep.subr.mxu0 0.0
      %1704 = vmatpush1.msra.mxu0 %v153
      %1705 = vmatprep.subr.mxu0 0.0
      %1706 = vmatpush1.msra.mxu0 %v154
      %1707 = vmatprep.subr.mxu0 0.0
      %1708 = vmatpush1.msra.mxu0 %v155
      %1709 = vmatprep.subr.mxu0 0.0
      %1710 = vmatpush1.msra.mxu0 %v156
      %1711 = vmatprep.subr.mxu0 0.0
      %1712 = vmatpush1.msra.mxu0 %v157
      %1713 = vmatprep.subr.mxu0 0.0
      %1714 = vmatpush1.msra.mxu0 %v158
      %1715 = vmatprep.subr.mxu0 0.0
      %1716 = vmatpush1.msra.mxu0 %v159
      %1717 = vmatprep.subr.mxu0 0.0
      %1718 = vmatpush1.msra.mxu0 %v160
      %1719 = vmatprep.subr.mxu0 0.0
      %1720 = vmatpush1.msra.mxu0 %v161
      %1721 = vmatprep.subr.mxu0 0.0
      %1722 = vmatpush1.msra.mxu0 %v162
      %1723 = vmatprep.subr.mxu0 0.0
      %1724 = vmatpush1.msra.mxu0 %v163
      %1725 = vmatprep.subr.mxu0 0.0
      %1726 = vmatpush1.msra.mxu0 %v164
      %1727 = vmatprep.subr.mxu0 0.0
      %1728 = vmatpush1.msra.mxu0 %v165
      %1729 = vmatprep.subr.mxu0 0.0
      %1730 = vmatpush1.msra.mxu0 %v166
      %1731 = vmatprep.subr.mxu0 0.0
      %1732 = vmatpush1.msra.mxu0 %v167
      %1733 = vmatprep.subr.mxu0 0.0
      %1734 = vmatpush1.msra.mxu0 %v168
      %1735 = vmatprep.subr.mxu0 0.0
      %1736 = vmatpush1.msra.mxu0 %v169
      %1737 = vmatprep.subr.mxu0 0.0
      %1738 = vmatpush1.msra.mxu0 %v170
      %1739 = vmatprep.subr.mxu0 0.0
      %1740 = vmatpush1.msra.mxu0 %v171
      %1741 = vmatprep.subr.mxu0 0.0
      %1742 = vmatpush1.msra.mxu0 %v172
      %1743 = vmatprep.subr.mxu0 0.0
      %1744 = vmatpush1.msra.mxu0 %v173
      %1745 = vmatprep.subr.mxu0 0.0
      %1746 = vmatpush1.msra.mxu0 %v174
      %1747 = vmatprep.subr.mxu0 0.0
      %1748 = vmatpush1.msra.mxu0 %v175
      %1749 = vmatprep.mubr.f32.mxu0 %v1430
      %1750 = vmatmul.mubr.f32.gmra.mrb[0].mxu0 %v1429
      %v1751 = vpop.f32.mrb[0].mxu0
      %v1752 = vadd.f32 0.0, %v1751
      %v1753 = vpop.f32.mrb[0].mxu0
      %1754 = vmatprep.mubr.f32.mxu0 %v1438
      %1755 = vmatmul.mubr.f32.gmra.mrb[0].mxu0 %v1437
      %v1756 = vpop.f32.mrb[0].mxu0
      %v1757 = vadd.f32 0.0, %v1756
      %v1758 = vpop.f32.mrb[0].mxu0
      %1759 = vmatprep.mubr.f32.mxu0 %v1446
      %1760 = vmatmul.mubr.f32.gmra.mrb[0].mxu0 %v1445
      %v1761 = vpop.f32.mrb[0].mxu0
      %v1762 = vadd.f32 0.0, %v1761
      %v1763 = vpop.f32.mrb[0].mxu0
      %1764 = vmatprep.mubr.f32.mxu0 %v1454
      %1765 = vmatmul.mubr.f32.gmra.mrb[0].mxu0 %v1453
      %v1766 = vpop.f32.mrb[0].mxu0
      %v1767 = vadd.f32 0.0, %v1766
      %v1768 = vpop.f32.mrb[0].mxu0
      %1769 = vmatprep.mubr.f32.mxu0 %v1462
      %1770 = vmatmul.mubr.f32.gmra.mrb[0].mxu0 %v1461
      %v1771 = vpop.f32.mrb[0].mxu0
      %v1772 = vadd.f32 0.0, %v1771
      %v1773 = vpop.f32.mrb[0].mxu0
      %1774 = vmatprep.mubr.f32.mxu0 %v1470
      %1775 = vmatmul.mubr.f32.gmra.mrb[0].mxu0 %v1469
      %v1776 = vpop.f32.mrb[0].mxu0
      %v1777 = vadd.f32 0.0, %v1776
      %v1778 = vpop.f32.mrb[0].mxu0
      %1779 = vmatprep.mubr.f32.mxu0 %v1478
      %1780 = vmatmul.mubr.f32.gmra.mrb[0].mxu0 %v1477
      %v1781 = vpop.f32.mrb[0].mxu0
      %v1782 = vadd.f32 0.0, %v1781
      %v1783 = vpop.f32.mrb[0].mxu0
      %1784 = vmatprep.mubr.f32.mxu0 %v1486
      %1785 = vmatmul.mubr.f32.gmra.mrb[0].mxu0 %v1485
      %v1786 = vpop.f32.mrb[0].mxu0
      %v1787 = vadd.f32 0.0, %v1786
      %v1788 = vpop.f32.mrb[0].mxu0
      %1789 = vmatprep.mubr.f32.mxu0 %v1494
      %1790 = vmatmul.mubr.f32.gmra.mrb[0].mxu0 %v1493
      %v1791 = vpop.f32.mrb[0].mxu0
      %v1792 = vadd.f32 0.0, %v1791
      %v1793 = vpop.f32.mrb[0].mxu0
      %1794 = vmatprep.mubr.f32.mxu0 %v1502
      %1795 = vmatmul.mubr.f32.gmra.mrb[0].mxu0 %v1501
      %v1796 = vpop.f32.mrb[0].mxu0
      %v1797 = vadd.f32 0.0, %v1796
      %v1798 = vpop.f32.mrb[0].mxu0
      %1799 = vmatprep.mubr.f32.mxu0 %v1510
      %1800 = vmatmul.mubr.f32.gmra.mrb[0].mxu0 %v1509
      %v1801 = vpop.f32.mrb[0].mxu0
      %v1802 = vadd.f32 0.0, %v1801
      %v1803 = vpop.f32.mrb[0].mxu0
      %1804 = vmatprep.mubr.f32.mxu0 %v1518
      %1805 = vmatmul.mubr.f32.gmra.mrb[0].mxu0 %v1517
      %v1806 = vpop.f32.mrb[0].mxu0
      %v1807 = vadd.f32 0.0, %v1806
      %v1808 = vpop.f32.mrb[0].mxu0
      %1809 = vmatprep.mubr.f32.mxu0 %v1526
      %1810 = vmatmul.mubr.f32.gmra.mrb[0].mxu0 %v1525
      %v1811 = vpop.f32.mrb[0].mxu0
      %v1812 = vadd.f32 0.0, %v1811
      %v1813 = vpop.f32.mrb[0].mxu0
      %1814 = vmatprep.mubr.f32.mxu0 %v1534
      %1815 = vmatmul.mubr.f32.gmra.mrb[0].mxu0 %v1533
      %v1816 = vpop.f32.mrb[0].mxu0
      %v1817 = vadd.f32 0.0, %v1816
      %v1818 = vpop.f32.mrb[0].mxu0
      %1819 = vmatprep.mubr.f32.mxu0 %v1542
      %1820 = vmatmul.mubr.f32.gmra.mrb[0].mxu0 %v1541
      %v1821 = vpop.f32.mrb[0].mxu0
      %v1822 = vadd.f32 0.0, %v1821
      %v1823 = vpop.f32.mrb[0].mxu0
      %1824 = vmatprep.mubr.f32.mxu0 %v1550
      %1825 = vmatmul.mubr.f32.gmra.mrb[0].mxu0 %v1549
      %v1826 = vpop.f32.mrb[0].mxu0
      %v1827 = vadd.f32 0.0, %v1826
      %v1828 = vpop.f32.mrb[0].mxu0
      %1829 = vmatprep.mubr.f32.mxu0 %v1558
      %1830 = vmatmul.mubr.f32.gmra.mrb[0].mxu0 %v1557
      %v1831 = vpop.f32.mrb[0].mxu0
      %v1832 = vadd.f32 0.0, %v1831
      %v1833 = vpop.f32.mrb[0].mxu0
      %1834 = vmatprep.mubr.f32.mxu0 %v1566
      %1835 = vmatmul.mubr.f32.gmra.mrb[0].mxu0 %v1565
      %v1836 = vpop.f32.mrb[0].mxu0
      %v1837 = vadd.f32 0.0, %v1836
      %v1838 = vpop.f32.mrb[0].mxu0
      %1839 = vmatprep.mubr.f32.mxu0 %v1574
      %1840 = vmatmul.mubr.f32.gmra.mrb[0].mxu0 %v1573
      %v1841 = vpop.f32.mrb[0].mxu0
      %v1842 = vadd.f32 0.0, %v1841
      %v1843 = vpop.f32.mrb[0].mxu0
      %1844 = vmatprep.mubr.f32.mxu0 %v1582
      %1845 = vmatmul.mubr.f32.gmra.mrb[0].mxu0 %v1581
      %v1846 = vpop.f32.mrb[0].mxu0
      %v1847 = vadd.f32 0.0, %v1846
      %v1848 = vpop.f32.mrb[0].mxu0
      %1849 = vmatprep.mubr.f32.mxu0 %v1590
      %1850 = vmatmul.mubr.f32.gmra.mrb[0].mxu0 %v1589
      %v1851 = vpop.f32.mrb[0].mxu0
      %v1852 = vadd.f32 0.0, %v1851
      %v1853 = vpop.f32.mrb[0].mxu0
      %1854 = vmatprep.mubr.f32.mxu0 %v1598
      %1855 = vmatmul.mubr.f32.gmra.mrb[0].mxu0 %v1597
      %v1856 = vpop.f32.mrb[0].mxu0
      %v1857 = vadd.f32 0.0, %v1856
      %v1858 = vpop.f32.mrb[0].mxu0
      %1859 = vmatprep.mubr.f32.mxu0 %v1606
      %1860 = vmatmul.mubr.f32.gmra.mrb[0].mxu0 %v1605
      %v1861 = vpop.f32.mrb[0].mxu0
      %v1862 = vadd.f32 0.0, %v1861
      %v1863 = vpop.f32.mrb[0].mxu0
      %1864 = vmatprep.mubr.f32.mxu0 %v1614
      %1865 = vmatmul.mubr.f32.gmra.mrb[0].mxu0 %v1613
      %v1866 = vpop.f32.mrb[0].mxu0
      %v1867 = vadd.f32 0.0, %v1866
      %v1868 = vpop.f32.mrb[0].mxu0
      %1869 = vmatprep.mubr.f32.mxu0 %v1622
      %1870 = vmatmul.mubr.f32.gmra.mrb[0].mxu0 %v1621
      %v1871 = vpop.f32.mrb[0].mxu0
      %v1872 = vadd.f32 0.0, %v1871
      %v1873 = vpop.f32.mrb[0].mxu0
      %1874 = vmatprep.mubr.f32.mxu0 %v1630
      %1875 = vmatmul.mubr.f32.gmra.mrb[0].mxu0 %v1629
      %v1876 = vpop.f32.mrb[0].mxu0
      %v1877 = vadd.f32 0.0, %v1876
      %v1878 = vpop.f32.mrb[0].mxu0
      %1879 = vmatprep.mubr.f32.mxu0 %v1638
      %1880 = vmatmul.mubr.f32.gmra.mrb[0].mxu0 %v1637
      %v1881 = vpop.f32.mrb[0].mxu0
      %v1882 = vadd.f32 0.0, %v1881
      %v1883 = vpop.f32.mrb[0].mxu0
      %1884 = vmatprep.mubr.f32.mxu0 %v1646
      %1885 = vmatmul.mubr.f32.gmra.mrb[0].mxu0 %v1645
      %v1886 = vpop.f32.mrb[0].mxu0
      %v1887 = vadd.f32 0.0, %v1886
      %v1888 = vpop.f32.mrb[0].mxu0
      %1889 = vmatprep.mubr.f32.mxu0 %v1654
      %1890 = vmatmul.mubr.f32.gmra.mrb[0].mxu0 %v1653
      %v1891 = vpop.f32.mrb[0].mxu0
      %v1892 = vadd.f32 0.0, %v1891
      %v1893 = vpop.f32.mrb[0].mxu0
      %1894 = vmatprep.mubr.f32.mxu0 %v1662
      %1895 = vmatmul.mubr.f32.gmra.mrb[0].mxu0 %v1661
      %v1896 = vpop.f32.mrb[0].mxu0
      %v1897 = vadd.f32 0.0, %v1896
      %v1898 = vpop.f32.mrb[0].mxu0
      %1899 = vmatprep.mubr.f32.mxu0 %v1670
      %1900 = vmatmul.mubr.f32.gmra.mrb[0].mxu0 %v1669
      %v1901 = vpop.f32.mrb[0].mxu0
      %v1902 = vadd.f32 0.0, %v1901
      %v1903 = vpop.f32.mrb[0].mxu0
      %1904 = vmatprep.mubr.f32.mxu0 %v1678
      %1905 = vmatmul.mubr.f32.gmra.mrb[0].mxu0 %v1677
      %v1906 = vpop.f32.mrb[0].mxu0
      %v1907 = vadd.f32 0.0, %v1906
      %v1908 = vpop.f32.mrb[0].mxu0
      %1909 = vdwg.mxu0
      %1910 = vmatprep.subr.mxu0 0.0
      %1911 = vmatpush1.msra.mxu0 %v176
      %1912 = vmatprep.subr.mxu0 0.0
      %1913 = vmatpush1.msra.mxu0 %v177
      %1914 = vmatprep.subr.mxu0 0.0
      %1915 = vmatpush1.msra.mxu0 %v178
      %1916 = vmatprep.subr.mxu0 0.0
      %1917 = vmatpush1.msra.mxu0 %v179
      %1918 = vmatprep.subr.mxu0 0.0
      %1919 = vmatpush1.msra.mxu0 %v180
      %1920 = vmatprep.subr.mxu0 0.0
      %1921 = vmatpush1.msra.mxu0 %v181
      %1922 = vmatprep.subr.mxu0 0.0
      %1923 = vmatpush1.msra.mxu0 %v182
      %1924 = vmatprep.subr.mxu0 0.0
      %1925 = vmatpush1.msra.mxu0 %v183
      %1926 = vmatprep.subr.mxu0 0.0
      %1927 = vmatpush1.msra.mxu0 %v184
      %1928 = vmatprep.subr.mxu0 0.0
      %1929 = vmatpush1.msra.mxu0 %v185
      %1930 = vmatprep.subr.mxu0 0.0
      %1931 = vmatpush1.msra.mxu0 %v186
      %1932 = vmatprep.subr.mxu0 0.0
      %1933 = vmatpush1.msra.mxu0 %v187
      %1934 = vmatprep.subr.mxu0 0.0
      %1935 = vmatpush1.msra.mxu0 %v188
      %1936 = vmatprep.subr.mxu0 0.0
      %1937 = vmatpush1.msra.mxu0 %v189
      %1938 = vmatprep.subr.mxu0 0.0
      %1939 = vmatpush1.msra.mxu0 %v190
      %1940 = vmatprep.subr.mxu0 0.0
      %1941 = vmatpush1.msra.mxu0 %v191
      %1942 = vmatprep.subr.mxu0 0.0
      %1943 = vmatpush1.msra.mxu0 %v192
      %1944 = vmatprep.subr.mxu0 0.0
      %1945 = vmatpush1.msra.mxu0 %v193
      %1946 = vmatprep.subr.mxu0 0.0
      %1947 = vmatpush1.msra.mxu0 %v194
      %1948 = vmatprep.subr.mxu0 0.0
      %1949 = vmatpush1.msra.mxu0 %v195
      %1950 = vmatprep.subr.mxu0 0.0
      %1951 = vmatpush1.msra.mxu0 %v196
      %1952 = vmatprep.subr.mxu0 0.0
      %1953 = vmatpush1.msra.mxu0 %v197
      %1954 = vmatprep.subr.mxu0 0.0
      %1955 = vmatpush1.msra.mxu0 %v198
      %1956 = vmatprep.subr.mxu0 0.0
      %1957 = vmatpush1.msra.mxu0 %v199
      %1958 = vmatprep.subr.mxu0 0.0
      %1959 = vmatpush1.msra.mxu0 %v200
      %1960 = vmatprep.subr.mxu0 0.0
      %1961 = vmatpush1.msra.mxu0 %v201
      %1962 = vmatprep.subr.mxu0 0.0
      %1963 = vmatpush1.msra.mxu0 %v202
      %1964 = vmatprep.subr.mxu0 0.0
      %1965 = vmatpush1.msra.mxu0 %v203
      %1966 = vmatprep.subr.mxu0 0.0
      %1967 = vmatpush1.msra.mxu0 %v204
      %1968 = vmatprep.subr.mxu0 0.0
      %1969 = vmatpush1.msra.mxu0 %v205
      %1970 = vmatprep.subr.mxu0 0.0
      %1971 = vmatpush1.msra.mxu0 %v206
      %1972 = vmatprep.subr.mxu0 0.0
      %1973 = vmatpush1.msra.mxu0 %v207
      %1974 = vmatprep.mubr.f32.mxu0 %v1432
      %1975 = vmatmul.mubr.f32.gmra.mrb[0].mxu0 %v1431
      %v1976 = vpop.f32.mrb[0].mxu0
      %v1977 = vadd.f32 %v1752, %v1976
      %v1978 = vpop.f32.mrb[0].mxu0
      %1979 = vmatprep.mubr.f32.mxu0 %v1440
      %1980 = vmatmul.mubr.f32.gmra.mrb[0].mxu0 %v1439
      %v1981 = vpop.f32.mrb[0].mxu0
      %v1982 = vadd.f32 %v1757, %v1981
      %v1983 = vpop.f32.mrb[0].mxu0
      %1984 = vmatprep.mubr.f32.mxu0 %v1448
      %1985 = vmatmul.mubr.f32.gmra.mrb[0].mxu0 %v1447
      %v1986 = vpop.f32.mrb[0].mxu0
      %v1987 = vadd.f32 %v1762, %v1986
      %v1988 = vpop.f32.mrb[0].mxu0
      %1989 = vmatprep.mubr.f32.mxu0 %v1456
      %1990 = vmatmul.mubr.f32.gmra.mrb[0].mxu0 %v1455
      %v1991 = vpop.f32.mrb[0].mxu0
      %v1992 = vadd.f32 %v1767, %v1991
      %v1993 = vpop.f32.mrb[0].mxu0
      %1994 = vmatprep.mubr.f32.mxu0 %v1464
      %1995 = vmatmul.mubr.f32.gmra.mrb[0].mxu0 %v1463
      %v1996 = vpop.f32.mrb[0].mxu0
      %v1997 = vadd.f32 %v1772, %v1996
      %v1998 = vpop.f32.mrb[0].mxu0
      %1999 = vmatprep.mubr.f32.mxu0 %v1472
      %2000 = vmatmul.mubr.f32.gmra.mrb[0].mxu0 %v1471
      %v2001 = vpop.f32.mrb[0].mxu0
      %v2002 = vadd.f32 %v1777, %v2001
      %v2003 = vpop.f32.mrb[0].mxu0
      %2004 = vmatprep.mubr.f32.mxu0 %v1480
      %2005 = vmatmul.mubr.f32.gmra.mrb[0].mxu0 %v1479
      %v2006 = vpop.f32.mrb[0].mxu0
      %v2007 = vadd.f32 %v1782, %v2006
      %v2008 = vpop.f32.mrb[0].mxu0
      %2009 = vmatprep.mubr.f32.mxu0 %v1488
      %2010 = vmatmul.mubr.f32.gmra.mrb[0].mxu0 %v1487
      %v2011 = vpop.f32.mrb[0].mxu0
      %v2012 = vadd.f32 %v1787, %v2011
      %v2013 = vpop.f32.mrb[0].mxu0
      %2014 = vmatprep.mubr.f32.mxu0 %v1496
      %2015 = vmatmul.mubr.f32.gmra.mrb[0].mxu0 %v1495
      %v2016 = vpop.f32.mrb[0].mxu0
      %v2017 = vadd.f32 %v1792, %v2016
      %v2018 = vpop.f32.mrb[0].mxu0
      %2019 = vmatprep.mubr.f32.mxu0 %v1504
      %2020 = vmatmul.mubr.f32.gmra.mrb[0].mxu0 %v1503
      %v2021 = vpop.f32.mrb[0].mxu0
      %v2022 = vadd.f32 %v1797, %v2021
      %v2023 = vpop.f32.mrb[0].mxu0
      %2024 = vmatprep.mubr.f32.mxu0 %v1512
      %2025 = vmatmul.mubr.f32.gmra.mrb[0].mxu0 %v1511
      %v2026 = vpop.f32.mrb[0].mxu0
      %v2027 = vadd.f32 %v1802, %v2026
      %v2028 = vpop.f32.mrb[0].mxu0
      %2029 = vmatprep.mubr.f32.mxu0 %v1520
      %2030 = vmatmul.mubr.f32.gmra.mrb[0].mxu0 %v1519
      %v2031 = vpop.f32.mrb[0].mxu0
      %v2032 = vadd.f32 %v1807, %v2031
      %v2033 = vpop.f32.mrb[0].mxu0
      %2034 = vmatprep.mubr.f32.mxu0 %v1528
      %2035 = vmatmul.mubr.f32.gmra.mrb[0].mxu0 %v1527
      %v2036 = vpop.f32.mrb[0].mxu0
      %v2037 = vadd.f32 %v1812, %v2036
      %v2038 = vpop.f32.mrb[0].mxu0
      %2039 = vmatprep.mubr.f32.mxu0 %v1536
      %2040 = vmatmul.mubr.f32.gmra.mrb[0].mxu0 %v1535
      %v2041 = vpop.f32.mrb[0].mxu0
      %v2042 = vadd.f32 %v1817, %v2041
      %v2043 = vpop.f32.mrb[0].mxu0
      %2044 = vmatprep.mubr.f32.mxu0 %v1544
      %2045 = vmatmul.mubr.f32.gmra.mrb[0].mxu0 %v1543
      %v2046 = vpop.f32.mrb[0].mxu0
      %v2047 = vadd.f32 %v1822, %v2046
      %v2048 = vpop.f32.mrb[0].mxu0
      %2049 = vmatprep.mubr.f32.mxu0 %v1552
      %2050 = vmatmul.mubr.f32.gmra.mrb[0].mxu0 %v1551
      %v2051 = vpop.f32.mrb[0].mxu0
      %v2052 = vadd.f32 %v1827, %v2051
      %v2053 = vpop.f32.mrb[0].mxu0
      %2054 = vmatprep.mubr.f32.mxu0 %v1560
      %2055 = vmatmul.mubr.f32.gmra.mrb[0].mxu0 %v1559
      %v2056 = vpop.f32.mrb[0].mxu0
      %v2057 = vadd.f32 %v1832, %v2056
      %v2058 = vpop.f32.mrb[0].mxu0
      %2059 = vmatprep.mubr.f32.mxu0 %v1568
      %2060 = vmatmul.mubr.f32.gmra.mrb[0].mxu0 %v1567
      %v2061 = vpop.f32.mrb[0].mxu0
      %v2062 = vadd.f32 %v1837, %v2061
      %v2063 = vpop.f32.mrb[0].mxu0
      %2064 = vmatprep.mubr.f32.mxu0 %v1576
      %2065 = vmatmul.mubr.f32.gmra.mrb[0].mxu0 %v1575
      %v2066 = vpop.f32.mrb[0].mxu0
      %v2067 = vadd.f32 %v1842, %v2066
      %v2068 = vpop.f32.mrb[0].mxu0
      %2069 = vmatprep.mubr.f32.mxu0 %v1584
      %2070 = vmatmul.mubr.f32.gmra.mrb[0].mxu0 %v1583
      %v2071 = vpop.f32.mrb[0].mxu0
      %v2072 = vadd.f32 %v1847, %v2071
      %v2073 = vpop.f32.mrb[0].mxu0
      %2074 = vmatprep.mubr.f32.mxu0 %v1592
      %2075 = vmatmul.mubr.f32.gmra.mrb[0].mxu0 %v1591
      %v2076 = vpop.f32.mrb[0].mxu0
      %v2077 = vadd.f32 %v1852, %v2076
      %v2078 = vpop.f32.mrb[0].mxu0
      %2079 = vmatprep.mubr.f32.mxu0 %v1600
      %2080 = vmatmul.mubr.f32.gmra.mrb[0].mxu0 %v1599
      %v2081 = vpop.f32.mrb[0].mxu0
      %v2082 = vadd.f32 %v1857, %v2081
      %v2083 = vpop.f32.mrb[0].mxu0
      %2084 = vmatprep.mubr.f32.mxu0 %v1608
      %2085 = vmatmul.mubr.f32.gmra.mrb[0].mxu0 %v1607
      %v2086 = vpop.f32.mrb[0].mxu0
      %v2087 = vadd.f32 %v1862, %v2086
      %v2088 = vpop.f32.mrb[0].mxu0
      %2089 = vmatprep.mubr.f32.mxu0 %v1616
      %2090 = vmatmul.mubr.f32.gmra.mrb[0].mxu0 %v1615
      %v2091 = vpop.f32.mrb[0].mxu0
      %v2092 = vadd.f32 %v1867, %v2091
      %v2093 = vpop.f32.mrb[0].mxu0
      %2094 = vmatprep.mubr.f32.mxu0 %v1624
      %2095 = vmatmul.mubr.f32.gmra.mrb[0].mxu0 %v1623
      %v2096 = vpop.f32.mrb[0].mxu0
      %v2097 = vadd.f32 %v1872, %v2096
      %v2098 = vpop.f32.mrb[0].mxu0
      %2099 = vmatprep.mubr.f32.mxu0 %v1632
      %2100 = vmatmul.mubr.f32.gmra.mrb[0].mxu0 %v1631
      %v2101 = vpop.f32.mrb[0].mxu0
      %v2102 = vadd.f32 %v1877, %v2101
      %v2103 = vpop.f32.mrb[0].mxu0
      %2104 = vmatprep.mubr.f32.mxu0 %v1640
      %2105 = vmatmul.mubr.f32.gmra.mrb[0].mxu0 %v1639
      %v2106 = vpop.f32.mrb[0].mxu0
      %v2107 = vadd.f32 %v1882, %v2106
      %v2108 = vpop.f32.mrb[0].mxu0
      %2109 = vmatprep.mubr.f32.mxu0 %v1648
      %2110 = vmatmul.mubr.f32.gmra.mrb[0].mxu0 %v1647
      %v2111 = vpop.f32.mrb[0].mxu0
      %v2112 = vadd.f32 %v1887, %v2111
      %v2113 = vpop.f32.mrb[0].mxu0
      %2114 = vmatprep.mubr.f32.mxu0 %v1656
      %2115 = vmatmul.mubr.f32.gmra.mrb[0].mxu0 %v1655
      %v2116 = vpop.f32.mrb[0].mxu0
      %v2117 = vadd.f32 %v1892, %v2116
      %v2118 = vpop.f32.mrb[0].mxu0
      %2119 = vmatprep.mubr.f32.mxu0 %v1664
      %2120 = vmatmul.mubr.f32.gmra.mrb[0].mxu0 %v1663
      %v2121 = vpop.f32.mrb[0].mxu0
      %v2122 = vadd.f32 %v1897, %v2121
      %v2123 = vpop.f32.mrb[0].mxu0
      %2124 = vmatprep.mubr.f32.mxu0 %v1672
      %2125 = vmatmul.mubr.f32.gmra.mrb[0].mxu0 %v1671
      %v2126 = vpop.f32.mrb[0].mxu0
      %v2127 = vadd.f32 %v1902, %v2126
      %v2128 = vpop.f32.mrb[0].mxu0
      %2129 = vmatprep.mubr.f32.mxu0 %v1680
      %2130 = vmatmul.mubr.f32.gmra.mrb[0].mxu0 %v1679
      %v2131 = vpop.f32.mrb[0].mxu0
      %v2132 = vadd.f32 %v1907, %v2131
      %v2133 = vpop.f32.mrb[0].mxu0
      %2134 = vdwg.mxu0
      %2135 = vmatprep.subr.mxu0 0.0
      %2136 = vmatpush1.msra.mxu0 %v208
      %2137 = vmatprep.subr.mxu0 0.0
      %2138 = vmatpush1.msra.mxu0 %v209
      %2139 = vmatprep.subr.mxu0 0.0
      %2140 = vmatpush1.msra.mxu0 %v210
      %2141 = vmatprep.subr.mxu0 0.0
      %2142 = vmatpush1.msra.mxu0 %v211
      %2143 = vmatprep.subr.mxu0 0.0
      %2144 = vmatpush1.msra.mxu0 %v212
      %2145 = vmatprep.subr.mxu0 0.0
      %2146 = vmatpush1.msra.mxu0 %v213
      %2147 = vmatprep.subr.mxu0 0.0
      %2148 = vmatpush1.msra.mxu0 %v214
      %2149 = vmatprep.subr.mxu0 0.0
      %2150 = vmatpush1.msra.mxu0 %v215
      %2151 = vmatprep.subr.mxu0 0.0
      %2152 = vmatpush1.msra.mxu0 %v216
      %2153 = vmatprep.subr.mxu0 0.0
      %2154 = vmatpush1.msra.mxu0 %v217
      %2155 = vmatprep.subr.mxu0 0.0
      %2156 = vmatpush1.msra.mxu0 %v218
      %2157 = vmatprep.subr.mxu0 0.0
      %2158 = vmatpush1.msra.mxu0 %v219
      %2159 = vmatprep.subr.mxu0 0.0
      %2160 = vmatpush1.msra.mxu0 %v220
      %2161 = vmatprep.subr.mxu0 0.0
      %2162 = vmatpush1.msra.mxu0 %v221
      %2163 = vmatprep.subr.mxu0 0.0
      %2164 = vmatpush1.msra.mxu0 %v222
      %2165 = vmatprep.subr.mxu0 0.0
      %2166 = vmatpush1.msra.mxu0 %v223
      %2167 = vmatprep.subr.mxu0 0.0
      %2168 = vmatpush1.msra.mxu0 %v224
      %2169 = vmatprep.subr.mxu0 0.0
      %2170 = vmatpush1.msra.mxu0 %v225
      %2171 = vmatprep.subr.mxu0 0.0
      %2172 = vmatpush1.msra.mxu0 %v226
      %2173 = vmatprep.subr.mxu0 0.0
      %2174 = vmatpush1.msra.mxu0 %v227
      %2175 = vmatprep.subr.mxu0 0.0
      %2176 = vmatpush1.msra.mxu0 %v228
      %2177 = vmatprep.subr.mxu0 0.0
      %2178 = vmatpush1.msra.mxu0 %v229
      %2179 = vmatprep.subr.mxu0 0.0
      %2180 = vmatpush1.msra.mxu0 %v230
      %2181 = vmatprep.subr.mxu0 0.0
      %2182 = vmatpush1.msra.mxu0 %v231
      %2183 = vmatprep.subr.mxu0 0.0
      %2184 = vmatpush1.msra.mxu0 %v232
      %2185 = vmatprep.subr.mxu0 0.0
      %2186 = vmatpush1.msra.mxu0 %v233
      %2187 = vmatprep.subr.mxu0 0.0
      %2188 = vmatpush1.msra.mxu0 %v234
      %2189 = vmatprep.subr.mxu0 0.0
      %2190 = vmatpush1.msra.mxu0 %v235
      %2191 = vmatprep.subr.mxu0 0.0
      %2192 = vmatpush1.msra.mxu0 %v236
      %2193 = vmatprep.subr.mxu0 0.0
      %2194 = vmatpush1.msra.mxu0 %v237
      %2195 = vmatprep.subr.mxu0 0.0
      %2196 = vmatpush1.msra.mxu0 %v238
      %2197 = vmatprep.subr.mxu0 0.0
      %2198 = vmatpush1.msra.mxu0 %v239
      %2199 = vmatprep.mubr.f32.mxu0 %v1434
      %2200 = vmatmul.mubr.f32.gmra.mrb[0].mxu0 %v1433
      %v2201 = vpop.f32.mrb[0].mxu0
      %v2202 = vadd.f32 %v1977, %v2201
      %v2203 = vpop.f32.mrb[0].mxu0
      %2204 = vmatprep.mubr.f32.mxu0 %v1442
      %2205 = vmatmul.mubr.f32.gmra.mrb[0].mxu0 %v1441
      %v2206 = vpop.f32.mrb[0].mxu0
      %v2207 = vadd.f32 %v1982, %v2206
      %v2208 = vpop.f32.mrb[0].mxu0
      %2209 = vmatprep.mubr.f32.mxu0 %v1450
      %2210 = vmatmul.mubr.f32.gmra.mrb[0].mxu0 %v1449
      %v2211 = vpop.f32.mrb[0].mxu0
      %v2212 = vadd.f32 %v1987, %v2211
      %v2213 = vpop.f32.mrb[0].mxu0
      %2214 = vmatprep.mubr.f32.mxu0 %v1458
      %2215 = vmatmul.mubr.f32.gmra.mrb[0].mxu0 %v1457
      %v2216 = vpop.f32.mrb[0].mxu0
      %v2217 = vadd.f32 %v1992, %v2216
      %v2218 = vpop.f32.mrb[0].mxu0
      %2219 = vmatprep.mubr.f32.mxu0 %v1466
      %2220 = vmatmul.mubr.f32.gmra.mrb[0].mxu0 %v1465
      %v2221 = vpop.f32.mrb[0].mxu0
      %v2222 = vadd.f32 %v1997, %v2221
      %v2223 = vpop.f32.mrb[0].mxu0
      %2224 = vmatprep.mubr.f32.mxu0 %v1474
      %2225 = vmatmul.mubr.f32.gmra.mrb[0].mxu0 %v1473
      %v2226 = vpop.f32.mrb[0].mxu0
      %v2227 = vadd.f32 %v2002, %v2226
      %v2228 = vpop.f32.mrb[0].mxu0
      %2229 = vmatprep.mubr.f32.mxu0 %v1482
      %2230 = vmatmul.mubr.f32.gmra.mrb[0].mxu0 %v1481
      %v2231 = vpop.f32.mrb[0].mxu0
      %v2232 = vadd.f32 %v2007, %v2231
      %v2233 = vpop.f32.mrb[0].mxu0
      %2234 = vmatprep.mubr.f32.mxu0 %v1490
      %2235 = vmatmul.mubr.f32.gmra.mrb[0].mxu0 %v1489
      %v2236 = vpop.f32.mrb[0].mxu0
      %v2237 = vadd.f32 %v2012, %v2236
      %v2238 = vpop.f32.mrb[0].mxu0
      %2239 = vmatprep.mubr.f32.mxu0 %v1498
      %2240 = vmatmul.mubr.f32.gmra.mrb[0].mxu0 %v1497
      %v2241 = vpop.f32.mrb[0].mxu0
      %v2242 = vadd.f32 %v2017, %v2241
      %v2243 = vpop.f32.mrb[0].mxu0
      %2244 = vmatprep.mubr.f32.mxu0 %v1506
      %2245 = vmatmul.mubr.f32.gmra.mrb[0].mxu0 %v1505
      %v2246 = vpop.f32.mrb[0].mxu0
      %v2247 = vadd.f32 %v2022, %v2246
      %v2248 = vpop.f32.mrb[0].mxu0
      %2249 = vmatprep.mubr.f32.mxu0 %v1514
      %2250 = vmatmul.mubr.f32.gmra.mrb[0].mxu0 %v1513
      %v2251 = vpop.f32.mrb[0].mxu0
      %v2252 = vadd.f32 %v2027, %v2251
      %v2253 = vpop.f32.mrb[0].mxu0
      %2254 = vmatprep.mubr.f32.mxu0 %v1522
      %2255 = vmatmul.mubr.f32.gmra.mrb[0].mxu0 %v1521
      %v2256 = vpop.f32.mrb[0].mxu0
      %v2257 = vadd.f32 %v2032, %v2256
      %v2258 = vpop.f32.mrb[0].mxu0
      %2259 = vmatprep.mubr.f32.mxu0 %v1530
      %2260 = vmatmul.mubr.f32.gmra.mrb[0].mxu0 %v1529
      %v2261 = vpop.f32.mrb[0].mxu0
      %v2262 = vadd.f32 %v2037, %v2261
      %v2263 = vpop.f32.mrb[0].mxu0
      %2264 = vmatprep.mubr.f32.mxu0 %v1538
      %2265 = vmatmul.mubr.f32.gmra.mrb[0].mxu0 %v1537
      %v2266 = vpop.f32.mrb[0].mxu0
      %v2267 = vadd.f32 %v2042, %v2266
      %v2268 = vpop.f32.mrb[0].mxu0
      %2269 = vmatprep.mubr.f32.mxu0 %v1546
      %2270 = vmatmul.mubr.f32.gmra.mrb[0].mxu0 %v1545
      %v2271 = vpop.f32.mrb[0].mxu0
      %v2272 = vadd.f32 %v2047, %v2271
      %v2273 = vpop.f32.mrb[0].mxu0
      %2274 = vmatprep.mubr.f32.mxu0 %v1554
      %2275 = vmatmul.mubr.f32.gmra.mrb[0].mxu0 %v1553
      %v2276 = vpop.f32.mrb[0].mxu0
      %v2277 = vadd.f32 %v2052, %v2276
      %v2278 = vpop.f32.mrb[0].mxu0
      %2279 = vmatprep.mubr.f32.mxu0 %v1562
      %2280 = vmatmul.mubr.f32.gmra.mrb[0].mxu0 %v1561
      %v2281 = vpop.f32.mrb[0].mxu0
      %v2282 = vadd.f32 %v2057, %v2281
      %v2283 = vpop.f32.mrb[0].mxu0
      %2284 = vmatprep.mubr.f32.mxu0 %v1570
      %2285 = vmatmul.mubr.f32.gmra.mrb[0].mxu0 %v1569
      %v2286 = vpop.f32.mrb[0].mxu0
      %v2287 = vadd.f32 %v2062, %v2286
      %v2288 = vpop.f32.mrb[0].mxu0
      %2289 = vmatprep.mubr.f32.mxu0 %v1578
      %2290 = vmatmul.mubr.f32.gmra.mrb[0].mxu0 %v1577
      %v2291 = vpop.f32.mrb[0].mxu0
      %v2292 = vadd.f32 %v2067, %v2291
      %v2293 = vpop.f32.mrb[0].mxu0
      %2294 = vmatprep.mubr.f32.mxu0 %v1586
      %2295 = vmatmul.mubr.f32.gmra.mrb[0].mxu0 %v1585
      %v2296 = vpop.f32.mrb[0].mxu0
      %v2297 = vadd.f32 %v2072, %v2296
      %v2298 = vpop.f32.mrb[0].mxu0
      %2299 = vmatprep.mubr.f32.mxu0 %v1594
      %2300 = vmatmul.mubr.f32.gmra.mrb[0].mxu0 %v1593
      %v2301 = vpop.f32.mrb[0].mxu0
      %v2302 = vadd.f32 %v2077, %v2301
      %v2303 = vpop.f32.mrb[0].mxu0
      %2304 = vmatprep.mubr.f32.mxu0 %v1602
      %2305 = vmatmul.mubr.f32.gmra.mrb[0].mxu0 %v1601
      %v2306 = vpop.f32.mrb[0].mxu0
      %v2307 = vadd.f32 %v2082, %v2306
      %v2308 = vpop.f32.mrb[0].mxu0
      %2309 = vmatprep.mubr.f32.mxu0 %v1610
      %2310 = vmatmul.mubr.f32.gmra.mrb[0].mxu0 %v1609
      %v2311 = vpop.f32.mrb[0].mxu0
      %v2312 = vadd.f32 %v2087, %v2311
      %v2313 = vpop.f32.mrb[0].mxu0
      %2314 = vmatprep.mubr.f32.mxu0 %v1618
      %2315 = vmatmul.mubr.f32.gmra.mrb[0].mxu0 %v1617
      %v2316 = vpop.f32.mrb[0].mxu0
      %v2317 = vadd.f32 %v2092, %v2316
      %v2318 = vpop.f32.mrb[0].mxu0
      %2319 = vmatprep.mubr.f32.mxu0 %v1626
      %2320 = vmatmul.mubr.f32.gmra.mrb[0].mxu0 %v1625
      %v2321 = vpop.f32.mrb[0].mxu0
      %v2322 = vadd.f32 %v2097, %v2321
      %v2323 = vpop.f32.mrb[0].mxu0
      %2324 = vmatprep.mubr.f32.mxu0 %v1634
      %2325 = vmatmul.mubr.f32.gmra.mrb[0].mxu0 %v1633
      %v2326 = vpop.f32.mrb[0].mxu0
      %v2327 = vadd.f32 %v2102, %v2326
      %v2328 = vpop.f32.mrb[0].mxu0
      %2329 = vmatprep.mubr.f32.mxu0 %v1642
      %2330 = vmatmul.mubr.f32.gmra.mrb[0].mxu0 %v1641
      %v2331 = vpop.f32.mrb[0].mxu0
      %v2332 = vadd.f32 %v2107, %v2331
      %v2333 = vpop.f32.mrb[0].mxu0
      %2334 = vmatprep.mubr.f32.mxu0 %v1650
      %2335 = vmatmul.mubr.f32.gmra.mrb[0].mxu0 %v1649
      %v2336 = vpop.f32.mrb[0].mxu0
      %v2337 = vadd.f32 %v2112, %v2336
      %v2338 = vpop.f32.mrb[0].mxu0
      %2339 = vmatprep.mubr.f32.mxu0 %v1658
      %2340 = vmatmul.mubr.f32.gmra.mrb[0].mxu0 %v1657
      %v2341 = vpop.f32.mrb[0].mxu0
      %v2342 = vadd.f32 %v2117, %v2341
      %v2343 = vpop.f32.mrb[0].mxu0
      %2344 = vmatprep.mubr.f32.mxu0 %v1666
      %2345 = vmatmul.mubr.f32.gmra.mrb[0].mxu0 %v1665
      %v2346 = vpop.f32.mrb[0].mxu0
      %v2347 = vadd.f32 %v2122, %v2346
      %v2348 = vpop.f32.mrb[0].mxu0
      %2349 = vmatprep.mubr.f32.mxu0 %v1674
      %2350 = vmatmul.mubr.f32.gmra.mrb[0].mxu0 %v1673
      %v2351 = vpop.f32.mrb[0].mxu0
      %v2352 = vadd.f32 %v2127, %v2351
      %v2353 = vpop.f32.mrb[0].mxu0
      %2354 = vmatprep.mubr.f32.mxu0 %v1682
      %2355 = vmatmul.mubr.f32.gmra.mrb[0].mxu0 %v1681
      %v2356 = vpop.f32.mrb[0].mxu0
      %v2357 = vadd.f32 %v2132, %v2356
      %v2358 = vpop.f32.mrb[0].mxu0
      %2359 = vdwg.mxu0
      %2360 = vmatprep.subr.mxu0 0.0
      %2361 = vmatpush1.msra.mxu0 %v240
      %2362 = vmatprep.subr.mxu0 0.0
      %2363 = vmatpush1.msra.mxu0 %v241
      %2364 = vmatprep.subr.mxu0 0.0
      %2365 = vmatpush1.msra.mxu0 %v242
      %2366 = vmatprep.subr.mxu0 0.0
      %2367 = vmatpush1.msra.mxu0 %v243
      %2368 = vmatprep.subr.mxu0 0.0
      %2369 = vmatpush1.msra.mxu0 %v244
      %2370 = vmatprep.subr.mxu0 0.0
      %2371 = vmatpush1.msra.mxu0 %v245
      %2372 = vmatprep.subr.mxu0 0.0
      %2373 = vmatpush1.msra.mxu0 %v246
      %2374 = vmatprep.subr.mxu0 0.0
      %2375 = vmatpush1.msra.mxu0 %v247
      %2376 = vmatprep.subr.mxu0 0.0
      %2377 = vmatpush1.msra.mxu0 %v248
      %2378 = vmatprep.subr.mxu0 0.0
      %2379 = vmatpush1.msra.mxu0 %v249
      %2380 = vmatprep.subr.mxu0 0.0
      %2381 = vmatpush1.msra.mxu0 %v250
      %2382 = vmatprep.subr.mxu0 0.0
      %2383 = vmatpush1.msra.mxu0 %v251
      %2384 = vmatprep.subr.mxu0 0.0
      %2385 = vmatpush1.msra.mxu0 %v252
      %2386 = vmatprep.subr.mxu0 0.0
      %2387 = vmatpush1.msra.mxu0 %v253
      %2388 = vmatprep.subr.mxu0 0.0
      %2389 = vmatpush1.msra.mxu0 %v254
      %2390 = vmatprep.subr.mxu0 0.0
      %2391 = vmatpush1.msra.mxu0 %v255
      %2392 = vmatprep.subr.mxu0 0.0
      %2393 = vmatpush1.msra.mxu0 %v256
      %2394 = vmatprep.subr.mxu0 0.0
      %2395 = vmatpush1.msra.mxu0 %v257
      %2396 = vmatprep.subr.mxu0 0.0
      %2397 = vmatpush1.msra.mxu0 %v258
      %2398 = vmatprep.subr.mxu0 0.0
      %2399 = vmatpush1.msra.mxu0 %v259
      %2400 = vmatprep.subr.mxu0 0.0
      %2401 = vmatpush1.msra.mxu0 %v260
      %2402 = vmatprep.subr.mxu0 0.0
      %2403 = vmatpush1.msra.mxu0 %v261
      %2404 = vmatprep.subr.mxu0 0.0
      %2405 = vmatpush1.msra.mxu0 %v262
      %2406 = vmatprep.subr.mxu0 0.0
      %2407 = vmatpush1.msra.mxu0 %v263
      %2408 = vmatprep.subr.mxu0 0.0
      %2409 = vmatpush1.msra.mxu0 %v264
      %2410 = vmatprep.subr.mxu0 0.0
      %2411 = vmatpush1.msra.mxu0 %v265
      %2412 = vmatprep.subr.mxu0 0.0
      %2413 = vmatpush1.msra.mxu0 %v266
      %2414 = vmatprep.subr.mxu0 0.0
      %2415 = vmatpush1.msra.mxu0 %v267
      %2416 = vmatprep.subr.mxu0 0.0
      %2417 = vmatpush1.msra.mxu0 %v268
      %2418 = vmatprep.subr.mxu0 0.0
      %2419 = vmatpush1.msra.mxu0 %v269
      %2420 = vmatprep.subr.mxu0 0.0
      %2421 = vmatpush1.msra.mxu0 %v270
      %2422 = vmatprep.subr.mxu0 0.0
      %2423 = vmatpush1.msra.mxu0 %v271
      %2424 = vmatprep.mubr.f32.mxu0 %v1436
      %2425 = vmatmul.mubr.f32.gmra.mrb[0].mxu0 %v1435
      %v2426 = vpop.f32.mrb[0].mxu0
      %v2427 = vadd.f32 %v2202, %v2426
      %v2428 = vpop.f32.mrb[0].mxu0
      %2429 = vmatprep.mubr.f32.mxu0 %v1444
      %2430 = vmatmul.mubr.f32.gmra.mrb[0].mxu0 %v1443
      %v2431 = vpop.f32.mrb[0].mxu0
      %v2432 = vadd.f32 %v2207, %v2431
      %v2433 = vpop.f32.mrb[0].mxu0
      %2434 = vmatprep.mubr.f32.mxu0 %v1452
      %2435 = vmatmul.mubr.f32.gmra.mrb[0].mxu0 %v1451
      %v2436 = vpop.f32.mrb[0].mxu0
      %v2437 = vadd.f32 %v2212, %v2436
      %v2438 = vpop.f32.mrb[0].mxu0
      %2439 = vmatprep.mubr.f32.mxu0 %v1460
      %2440 = vmatmul.mubr.f32.gmra.mrb[0].mxu0 %v1459
      %v2441 = vpop.f32.mrb[0].mxu0
      %v2442 = vadd.f32 %v2217, %v2441
      %v2443 = vpop.f32.mrb[0].mxu0
      %2444 = vmatprep.mubr.f32.mxu0 %v1468
      %2445 = vmatmul.mubr.f32.gmra.mrb[0].mxu0 %v1467
      %v2446 = vpop.f32.mrb[0].mxu0
      %v2447 = vadd.f32 %v2222, %v2446
      %v2448 = vpop.f32.mrb[0].mxu0
      %2449 = vmatprep.mubr.f32.mxu0 %v1476
      %2450 = vmatmul.mubr.f32.gmra.mrb[0].mxu0 %v1475
      %v2451 = vpop.f32.mrb[0].mxu0
      %v2452 = vadd.f32 %v2227, %v2451
      %v2453 = vpop.f32.mrb[0].mxu0
      %2454 = vmatprep.mubr.f32.mxu0 %v1484
      %2455 = vmatmul.mubr.f32.gmra.mrb[0].mxu0 %v1483
      %v2456 = vpop.f32.mrb[0].mxu0
      %v2457 = vadd.f32 %v2232, %v2456
      %v2458 = vpop.f32.mrb[0].mxu0
      %2459 = vmatprep.mubr.f32.mxu0 %v1492
      %2460 = vmatmul.mubr.f32.gmra.mrb[0].mxu0 %v1491
      %v2461 = vpop.f32.mrb[0].mxu0
      %v2462 = vadd.f32 %v2237, %v2461
      %v2463 = vpop.f32.mrb[0].mxu0
      %2464 = vmatprep.mubr.f32.mxu0 %v1500
      %2465 = vmatmul.mubr.f32.gmra.mrb[0].mxu0 %v1499
      %v2466 = vpop.f32.mrb[0].mxu0
      %v2467 = vadd.f32 %v2242, %v2466
      %v2468 = vpop.f32.mrb[0].mxu0
      %2469 = vmatprep.mubr.f32.mxu0 %v1508
      %2470 = vmatmul.mubr.f32.gmra.mrb[0].mxu0 %v1507
      %v2471 = vpop.f32.mrb[0].mxu0
      %v2472 = vadd.f32 %v2247, %v2471
      %v2473 = vpop.f32.mrb[0].mxu0
      %2474 = vmatprep.mubr.f32.mxu0 %v1516
      %2475 = vmatmul.mubr.f32.gmra.mrb[0].mxu0 %v1515
      %v2476 = vpop.f32.mrb[0].mxu0
      %v2477 = vadd.f32 %v2252, %v2476
      %v2478 = vpop.f32.mrb[0].mxu0
      %2479 = vmatprep.mubr.f32.mxu0 %v1524
      %2480 = vmatmul.mubr.f32.gmra.mrb[0].mxu0 %v1523
      %v2481 = vpop.f32.mrb[0].mxu0
      %v2482 = vadd.f32 %v2257, %v2481
      %v2483 = vpop.f32.mrb[0].mxu0
      %2484 = vmatprep.mubr.f32.mxu0 %v1532
      %2485 = vmatmul.mubr.f32.gmra.mrb[0].mxu0 %v1531
      %v2486 = vpop.f32.mrb[0].mxu0
      %v2487 = vadd.f32 %v2262, %v2486
      %v2488 = vpop.f32.mrb[0].mxu0
      %2489 = vmatprep.mubr.f32.mxu0 %v1540
      %2490 = vmatmul.mubr.f32.gmra.mrb[0].mxu0 %v1539
      %v2491 = vpop.f32.mrb[0].mxu0
      %v2492 = vadd.f32 %v2267, %v2491
      %v2493 = vpop.f32.mrb[0].mxu0
      %2494 = vmatprep.mubr.f32.mxu0 %v1548
      %2495 = vmatmul.mubr.f32.gmra.mrb[0].mxu0 %v1547
      %v2496 = vpop.f32.mrb[0].mxu0
      %v2497 = vadd.f32 %v2272, %v2496
      %v2498 = vpop.f32.mrb[0].mxu0
      %2499 = vmatprep.mubr.f32.mxu0 %v1556
      %2500 = vmatmul.mubr.f32.gmra.mrb[0].mxu0 %v1555
      %v2501 = vpop.f32.mrb[0].mxu0
      %v2502 = vadd.f32 %v2277, %v2501
      %v2503 = vpop.f32.mrb[0].mxu0
      %2504 = vmatprep.mubr.f32.mxu0 %v1564
      %2505 = vmatmul.mubr.f32.gmra.mrb[0].mxu0 %v1563
      %v2506 = vpop.f32.mrb[0].mxu0
      %v2507 = vadd.f32 %v2282, %v2506
      %v2508 = vpop.f32.mrb[0].mxu0
      %2509 = vmatprep.mubr.f32.mxu0 %v1572
      %2510 = vmatmul.mubr.f32.gmra.mrb[0].mxu0 %v1571
      %v2511 = vpop.f32.mrb[0].mxu0
      %v2512 = vadd.f32 %v2287, %v2511
      %v2513 = vpop.f32.mrb[0].mxu0
      %2514 = vmatprep.mubr.f32.mxu0 %v1580
      %2515 = vmatmul.mubr.f32.gmra.mrb[0].mxu0 %v1579
      %v2516 = vpop.f32.mrb[0].mxu0
      %v2517 = vadd.f32 %v2292, %v2516
      %v2518 = vpop.f32.mrb[0].mxu0
      %2519 = vmatprep.mubr.f32.mxu0 %v1588
      %2520 = vmatmul.mubr.f32.gmra.mrb[0].mxu0 %v1587
      %v2521 = vpop.f32.mrb[0].mxu0
      %v2522 = vadd.f32 %v2297, %v2521
      %v2523 = vpop.f32.mrb[0].mxu0
      %2524 = vmatprep.mubr.f32.mxu0 %v1596
      %2525 = vmatmul.mubr.f32.gmra.mrb[0].mxu0 %v1595
      %v2526 = vpop.f32.mrb[0].mxu0
      %v2527 = vadd.f32 %v2302, %v2526
      %v2528 = vpop.f32.mrb[0].mxu0
      %2529 = vmatprep.mubr.f32.mxu0 %v1604
      %2530 = vmatmul.mubr.f32.gmra.mrb[0].mxu0 %v1603
      %v2531 = vpop.f32.mrb[0].mxu0
      %v2532 = vadd.f32 %v2307, %v2531
      %v2533 = vpop.f32.mrb[0].mxu0
      %2534 = vmatprep.mubr.f32.mxu0 %v1612
      %2535 = vmatmul.mubr.f32.gmra.mrb[0].mxu0 %v1611
      %v2536 = vpop.f32.mrb[0].mxu0
      %v2537 = vadd.f32 %v2312, %v2536
      %v2538 = vpop.f32.mrb[0].mxu0
      %2539 = vmatprep.mubr.f32.mxu0 %v1620
      %2540 = vmatmul.mubr.f32.gmra.mrb[0].mxu0 %v1619
      %v2541 = vpop.f32.mrb[0].mxu0
      %v2542 = vadd.f32 %v2317, %v2541
      %v2543 = vpop.f32.mrb[0].mxu0
      %2544 = vmatprep.mubr.f32.mxu0 %v1628
      %2545 = vmatmul.mubr.f32.gmra.mrb[0].mxu0 %v1627
      %v2546 = vpop.f32.mrb[0].mxu0
      %v2547 = vadd.f32 %v2322, %v2546
      %v2548 = vpop.f32.mrb[0].mxu0
      %2549 = vmatprep.mubr.f32.mxu0 %v1636
      %2550 = vmatmul.mubr.f32.gmra.mrb[0].mxu0 %v1635
      %v2551 = vpop.f32.mrb[0].mxu0
      %v2552 = vadd.f32 %v2327, %v2551
      %v2553 = vpop.f32.mrb[0].mxu0
      %2554 = vmatprep.mubr.f32.mxu0 %v1644
      %2555 = vmatmul.mubr.f32.gmra.mrb[0].mxu0 %v1643
      %v2556 = vpop.f32.mrb[0].mxu0
      %v2557 = vadd.f32 %v2332, %v2556
      %v2558 = vpop.f32.mrb[0].mxu0
      %2559 = vmatprep.mubr.f32.mxu0 %v1652
      %2560 = vmatmul.mubr.f32.gmra.mrb[0].mxu0 %v1651
      %v2561 = vpop.f32.mrb[0].mxu0
      %v2562 = vadd.f32 %v2337, %v2561
      %v2563 = vpop.f32.mrb[0].mxu0
      %2564 = vmatprep.mubr.f32.mxu0 %v1660
      %2565 = vmatmul.mubr.f32.gmra.mrb[0].mxu0 %v1659
      %v2566 = vpop.f32.mrb[0].mxu0
      %v2567 = vadd.f32 %v2342, %v2566
      %v2568 = vpop.f32.mrb[0].mxu0
      %2569 = vmatprep.mubr.f32.mxu0 %v1668
      %2570 = vmatmul.mubr.f32.gmra.mrb[0].mxu0 %v1667
      %v2571 = vpop.f32.mrb[0].mxu0
      %v2572 = vadd.f32 %v2347, %v2571
      %v2573 = vpop.f32.mrb[0].mxu0
      %2574 = vmatprep.mubr.f32.mxu0 %v1676
      %2575 = vmatmul.mubr.f32.gmra.mrb[0].mxu0 %v1675
      %v2576 = vpop.f32.mrb[0].mxu0
      %v2577 = vadd.f32 %v2352, %v2576
      %v2578 = vpop.f32.mrb[0].mxu0
      %2579 = vmatprep.mubr.f32.mxu0 %v1684
      %2580 = vmatmul.mubr.f32.gmra.mrb[0].mxu0 %v1683
      %v2581 = vpop.f32.mrb[0].mxu0
      %v2582 = vadd.f32 %v2357, %v2581
      %v2583 = vpop.f32.mrb[0].mxu0
      %2584 = vdwg.mxu0
      %v2585 = vmax.f32 %v1270, %v2427
      %v2586 = vmax.f32 %v1275, %v2432
      %v2587 = vmax.f32 %v1280, %v2437
      %v2588 = vmax.f32 %v1285, %v2442
      %v2589 = vmax.f32 %v1290, %v2447
      %v2590 = vmax.f32 %v1295, %v2452
      %v2591 = vmax.f32 %v1300, %v2457
      %v2592 = vmax.f32 %v1305, %v2462
      %v2593 = vmax.f32 %v1310, %v2467
      %v2594 = vmax.f32 %v1315, %v2472
      %v2595 = vmax.f32 %v1320, %v2477
      %v2596 = vmax.f32 %v1325, %v2482
      %v2597 = vmax.f32 %v1330, %v2487
      %v2598 = vmax.f32 %v1335, %v2492
      %v2599 = vmax.f32 %v1340, %v2497
      %v2600 = vmax.f32 %v1345, %v2502
      %v2601 = vmax.f32 %v1350, %v2507
      %v2602 = vmax.f32 %v1355, %v2512
      %v2603 = vmax.f32 %v1360, %v2517
      %v2604 = vmax.f32 %v1365, %v2522
      %v2605 = vmax.f32 %v1370, %v2527
      %v2606 = vmax.f32 %v1375, %v2532
      %v2607 = vmax.f32 %v1380, %v2537
      %v2608 = vmax.f32 %v1385, %v2542
      %v2609 = vmax.f32 %v1390, %v2547
      %v2610 = vmax.f32 %v1395, %v2552
      %v2611 = vmax.f32 %v1400, %v2557
      %v2612 = vmax.f32 %v1405, %v2562
      %v2613 = vmax.f32 %v1410, %v2567
      %v2614 = vmax.f32 %v1415, %v2572
      %v2615 = vmax.f32 %v1420, %v2577
      %v2616 = vmax.f32 %v1425, %v2582
      %s2617 = scalar_lea.vmem %s1, 4096
      %v2618 = vld [vmem:[%s2617] sm:$0xff]
      %v2619 = vld [vmem:[%s2617 + $0x8] sm:$0xff]
      %v2620 = vld [vmem:[%s2617 + $0x10] sm:$0xff]
      %v2621 = vld [vmem:[%s2617 + $0x18] sm:$0xff]
      %v2622 = vld [vmem:[%s2617 + $0x20] sm:$0xff]
      %v2623 = vld [vmem:[%s2617 + $0x28] sm:$0xff]
      %v2624 = vld [vmem:[%s2617 + $0x30] sm:$0xff]
      %v2625 = vld [vmem:[%s2617 + $0x38] sm:$0xff]
      %v2626 = vld [vmem:[%s2617 + $0x40] sm:$0xff]
      %v2627 = vld [vmem:[%s2617 + $0x48] sm:$0xff]
      %v2628 = vld [vmem:[%s2617 + $0x50] sm:$0xff]
      %v2629 = vld [vmem:[%s2617 + $0x58] sm:$0xff]
      %v2630 = vld [vmem:[%s2617 + $0x60] sm:$0xff]
      %v2631 = vld [vmem:[%s2617 + $0x68] sm:$0xff]
      %v2632 = vld [vmem:[%s2617 + $0x70] sm:$0xff]
      %v2633 = vld [vmem:[%s2617 + $0x78] sm:$0xff]
      %v2634 = vld [vmem:[%s2617 + $0x80] sm:$0xff]
      %v2635 = vld [vmem:[%s2617 + $0x88] sm:$0xff]
      %v2636 = vld [vmem:[%s2617 + $0x90] sm:$0xff]
      %v2637 = vld [vmem:[%s2617 + $0x98] sm:$0xff]
      %v2638 = vld [vmem:[%s2617 + $0xa0] sm:$0xff]
      %v2639 = vld [vmem:[%s2617 + $0xa8] sm:$0xff]
      %v2640 = vld [vmem:[%s2617 + $0xb0] sm:$0xff]
      %v2641 = vld [vmem:[%s2617 + $0xb8] sm:$0xff]
      %v2642 = vld [vmem:[%s2617 + $0xc0] sm:$0xff]
      %v2643 = vld [vmem:[%s2617 + $0xc8] sm:$0xff]
      %v2644 = vld [vmem:[%s2617 + $0xd0] sm:$0xff]
      %v2645 = vld [vmem:[%s2617 + $0xd8] sm:$0xff]
      %v2646 = vld [vmem:[%s2617 + $0xe0] sm:$0xff]
      %v2647 = vld [vmem:[%s2617 + $0xe8] sm:$0xff]
      %v2648 = vld [vmem:[%s2617 + $0xf0] sm:$0xff]
      %v2649 = vld [vmem:[%s2617 + $0xf8] sm:$0xff]
      %v2650 = vld [vmem:[%s2617 + $0x100] sm:$0xff]
      %v2651 = vld [vmem:[%s2617 + $0x108] sm:$0xff]
      %v2652 = vld [vmem:[%s2617 + $0x110] sm:$0xff]
      %v2653 = vld [vmem:[%s2617 + $0x118] sm:$0xff]
      %v2654 = vld [vmem:[%s2617 + $0x120] sm:$0xff]
      %v2655 = vld [vmem:[%s2617 + $0x128] sm:$0xff]
      %v2656 = vld [vmem:[%s2617 + $0x130] sm:$0xff]
      %v2657 = vld [vmem:[%s2617 + $0x138] sm:$0xff]
      %v2658 = vld [vmem:[%s2617 + $0x140] sm:$0xff]
      %v2659 = vld [vmem:[%s2617 + $0x148] sm:$0xff]
      %v2660 = vld [vmem:[%s2617 + $0x150] sm:$0xff]
      %v2661 = vld [vmem:[%s2617 + $0x158] sm:$0xff]
      %v2662 = vld [vmem:[%s2617 + $0x160] sm:$0xff]
      %v2663 = vld [vmem:[%s2617 + $0x168] sm:$0xff]
      %v2664 = vld [vmem:[%s2617 + $0x170] sm:$0xff]
      %v2665 = vld [vmem:[%s2617 + $0x178] sm:$0xff]
      %v2666 = vld [vmem:[%s2617 + $0x180] sm:$0xff]
      %v2667 = vld [vmem:[%s2617 + $0x188] sm:$0xff]
      %v2668 = vld [vmem:[%s2617 + $0x190] sm:$0xff]
      %v2669 = vld [vmem:[%s2617 + $0x198] sm:$0xff]
      %v2670 = vld [vmem:[%s2617 + $0x1a0] sm:$0xff]
      %v2671 = vld [vmem:[%s2617 + $0x1a8] sm:$0xff]
      %v2672 = vld [vmem:[%s2617 + $0x1b0] sm:$0xff]
      %v2673 = vld [vmem:[%s2617 + $0x1b8] sm:$0xff]
      %v2674 = vld [vmem:[%s2617 + $0x1c0] sm:$0xff]
      %v2675 = vld [vmem:[%s2617 + $0x1c8] sm:$0xff]
      %v2676 = vld [vmem:[%s2617 + $0x1d0] sm:$0xff]
      %v2677 = vld [vmem:[%s2617 + $0x1d8] sm:$0xff]
      %v2678 = vld [vmem:[%s2617 + $0x1e0] sm:$0xff]
      %v2679 = vld [vmem:[%s2617 + $0x1e8] sm:$0xff]
      %v2680 = vld [vmem:[%s2617 + $0x1f0] sm:$0xff]
      %v2681 = vld [vmem:[%s2617 + $0x1f8] sm:$0xff]
      %v2682 = vld [vmem:[%s2617 + $0x200] sm:$0xff]
      %v2683 = vld [vmem:[%s2617 + $0x208] sm:$0xff]
      %v2684 = vld [vmem:[%s2617 + $0x210] sm:$0xff]
      %v2685 = vld [vmem:[%s2617 + $0x218] sm:$0xff]
      %v2686 = vld [vmem:[%s2617 + $0x220] sm:$0xff]
      %v2687 = vld [vmem:[%s2617 + $0x228] sm:$0xff]
      %v2688 = vld [vmem:[%s2617 + $0x230] sm:$0xff]
      %v2689 = vld [vmem:[%s2617 + $0x238] sm:$0xff]
      %v2690 = vld [vmem:[%s2617 + $0x240] sm:$0xff]
      %v2691 = vld [vmem:[%s2617 + $0x248] sm:$0xff]
      %v2692 = vld [vmem:[%s2617 + $0x250] sm:$0xff]
      %v2693 = vld [vmem:[%s2617 + $0x258] sm:$0xff]
      %v2694 = vld [vmem:[%s2617 + $0x260] sm:$0xff]
      %v2695 = vld [vmem:[%s2617 + $0x268] sm:$0xff]
      %v2696 = vld [vmem:[%s2617 + $0x270] sm:$0xff]
      %v2697 = vld [vmem:[%s2617 + $0x278] sm:$0xff]
      %v2698 = vld [vmem:[%s2617 + $0x280] sm:$0xff]
      %v2699 = vld [vmem:[%s2617 + $0x288] sm:$0xff]
      %v2700 = vld [vmem:[%s2617 + $0x290] sm:$0xff]
      %v2701 = vld [vmem:[%s2617 + $0x298] sm:$0xff]
      %v2702 = vld [vmem:[%s2617 + $0x2a0] sm:$0xff]
      %v2703 = vld [vmem:[%s2617 + $0x2a8] sm:$0xff]
      %v2704 = vld [vmem:[%s2617 + $0x2b0] sm:$0xff]
      %v2705 = vld [vmem:[%s2617 + $0x2b8] sm:$0xff]
      %v2706 = vld [vmem:[%s2617 + $0x2c0] sm:$0xff]
      %v2707 = vld [vmem:[%s2617 + $0x2c8] sm:$0xff]
      %v2708 = vld [vmem:[%s2617 + $0x2d0] sm:$0xff]
      %v2709 = vld [vmem:[%s2617 + $0x2d8] sm:$0xff]
      %v2710 = vld [vmem:[%s2617 + $0x2e0] sm:$0xff]
      %v2711 = vld [vmem:[%s2617 + $0x2e8] sm:$0xff]
      %v2712 = vld [vmem:[%s2617 + $0x2f0] sm:$0xff]
      %v2713 = vld [vmem:[%s2617 + $0x2f8] sm:$0xff]
      %v2714 = vld [vmem:[%s2617 + $0x300] sm:$0xff]
      %v2715 = vld [vmem:[%s2617 + $0x308] sm:$0xff]
      %v2716 = vld [vmem:[%s2617 + $0x310] sm:$0xff]
      %v2717 = vld [vmem:[%s2617 + $0x318] sm:$0xff]
      %v2718 = vld [vmem:[%s2617 + $0x320] sm:$0xff]
      %v2719 = vld [vmem:[%s2617 + $0x328] sm:$0xff]
      %v2720 = vld [vmem:[%s2617 + $0x330] sm:$0xff]
      %v2721 = vld [vmem:[%s2617 + $0x338] sm:$0xff]
      %v2722 = vld [vmem:[%s2617 + $0x340] sm:$0xff]
      %v2723 = vld [vmem:[%s2617 + $0x348] sm:$0xff]
      %v2724 = vld [vmem:[%s2617 + $0x350] sm:$0xff]
      %v2725 = vld [vmem:[%s2617 + $0x358] sm:$0xff]
      %v2726 = vld [vmem:[%s2617 + $0x360] sm:$0xff]
      %v2727 = vld [vmem:[%s2617 + $0x368] sm:$0xff]
      %v2728 = vld [vmem:[%s2617 + $0x370] sm:$0xff]
      %v2729 = vld [vmem:[%s2617 + $0x378] sm:$0xff]
      %v2730 = vld [vmem:[%s2617 + $0x380] sm:$0xff]
      %v2731 = vld [vmem:[%s2617 + $0x388] sm:$0xff]
      %v2732 = vld [vmem:[%s2617 + $0x390] sm:$0xff]
      %v2733 = vld [vmem:[%s2617 + $0x398] sm:$0xff]
      %v2734 = vld [vmem:[%s2617 + $0x3a0] sm:$0xff]
      %v2735 = vld [vmem:[%s2617 + $0x3a8] sm:$0xff]
      %v2736 = vld [vmem:[%s2617 + $0x3b0] sm:$0xff]
      %v2737 = vld [vmem:[%s2617 + $0x3b8] sm:$0xff]
      %v2738 = vld [vmem:[%s2617 + $0x3c0] sm:$0xff]
      %v2739 = vld [vmem:[%s2617 + $0x3c8] sm:$0xff]
      %v2740 = vld [vmem:[%s2617 + $0x3d0] sm:$0xff]
      %v2741 = vld [vmem:[%s2617 + $0x3d8] sm:$0xff]
      %v2742 = vld [vmem:[%s2617 + $0x3e0] sm:$0xff]
      %v2743 = vld [vmem:[%s2617 + $0x3e8] sm:$0xff]
      %v2744 = vld [vmem:[%s2617 + $0x3f0] sm:$0xff]
      %v2745 = vld [vmem:[%s2617 + $0x3f8] sm:$0xff]
      %v2746 = vld [vmem:[%s2617 + $0x400] sm:$0xff]
      %v2747 = vld [vmem:[%s2617 + $0x408] sm:$0xff]
      %v2748 = vld [vmem:[%s2617 + $0x410] sm:$0xff]
      %v2749 = vld [vmem:[%s2617 + $0x418] sm:$0xff]
      %v2750 = vld [vmem:[%s2617 + $0x420] sm:$0xff]
      %v2751 = vld [vmem:[%s2617 + $0x428] sm:$0xff]
      %v2752 = vld [vmem:[%s2617 + $0x430] sm:$0xff]
      %v2753 = vld [vmem:[%s2617 + $0x438] sm:$0xff]
      %v2754 = vld [vmem:[%s2617 + $0x440] sm:$0xff]
      %v2755 = vld [vmem:[%s2617 + $0x448] sm:$0xff]
      %v2756 = vld [vmem:[%s2617 + $0x450] sm:$0xff]
      %v2757 = vld [vmem:[%s2617 + $0x458] sm:$0xff]
      %v2758 = vld [vmem:[%s2617 + $0x460] sm:$0xff]
      %v2759 = vld [vmem:[%s2617 + $0x468] sm:$0xff]
      %v2760 = vld [vmem:[%s2617 + $0x470] sm:$0xff]
      %v2761 = vld [vmem:[%s2617 + $0x478] sm:$0xff]
      %v2762 = vld [vmem:[%s2617 + $0x480] sm:$0xff]
      %v2763 = vld [vmem:[%s2617 + $0x488] sm:$0xff]
      %v2764 = vld [vmem:[%s2617 + $0x490] sm:$0xff]
      %v2765 = vld [vmem:[%s2617 + $0x498] sm:$0xff]
      %v2766 = vld [vmem:[%s2617 + $0x4a0] sm:$0xff]
      %v2767 = vld [vmem:[%s2617 + $0x4a8] sm:$0xff]
      %v2768 = vld [vmem:[%s2617 + $0x4b0] sm:$0xff]
      %v2769 = vld [vmem:[%s2617 + $0x4b8] sm:$0xff]
      %v2770 = vld [vmem:[%s2617 + $0x4c0] sm:$0xff]
      %v2771 = vld [vmem:[%s2617 + $0x4c8] sm:$0xff]
      %v2772 = vld [vmem:[%s2617 + $0x4d0] sm:$0xff]
      %v2773 = vld [vmem:[%s2617 + $0x4d8] sm:$0xff]
      %v2774 = vld [vmem:[%s2617 + $0x4e0] sm:$0xff]
      %v2775 = vld [vmem:[%s2617 + $0x4e8] sm:$0xff]
      %v2776 = vld [vmem:[%s2617 + $0x4f0] sm:$0xff]
      %v2777 = vld [vmem:[%s2617 + $0x4f8] sm:$0xff]
      %v2778 = vld [vmem:[%s2617 + $0x500] sm:$0xff]
      %v2779 = vld [vmem:[%s2617 + $0x508] sm:$0xff]
      %v2780 = vld [vmem:[%s2617 + $0x510] sm:$0xff]
      %v2781 = vld [vmem:[%s2617 + $0x518] sm:$0xff]
      %v2782 = vld [vmem:[%s2617 + $0x520] sm:$0xff]
      %v2783 = vld [vmem:[%s2617 + $0x528] sm:$0xff]
      %v2784 = vld [vmem:[%s2617 + $0x530] sm:$0xff]
      %v2785 = vld [vmem:[%s2617 + $0x538] sm:$0xff]
      %v2786 = vld [vmem:[%s2617 + $0x540] sm:$0xff]
      %v2787 = vld [vmem:[%s2617 + $0x548] sm:$0xff]
      %v2788 = vld [vmem:[%s2617 + $0x550] sm:$0xff]
      %v2789 = vld [vmem:[%s2617 + $0x558] sm:$0xff]
      %v2790 = vld [vmem:[%s2617 + $0x560] sm:$0xff]
      %v2791 = vld [vmem:[%s2617 + $0x568] sm:$0xff]
      %v2792 = vld [vmem:[%s2617 + $0x570] sm:$0xff]
      %v2793 = vld [vmem:[%s2617 + $0x578] sm:$0xff]
      %v2794 = vld [vmem:[%s2617 + $0x580] sm:$0xff]
      %v2795 = vld [vmem:[%s2617 + $0x588] sm:$0xff]
      %v2796 = vld [vmem:[%s2617 + $0x590] sm:$0xff]
      %v2797 = vld [vmem:[%s2617 + $0x598] sm:$0xff]
      %v2798 = vld [vmem:[%s2617 + $0x5a0] sm:$0xff]
      %v2799 = vld [vmem:[%s2617 + $0x5a8] sm:$0xff]
      %v2800 = vld [vmem:[%s2617 + $0x5b0] sm:$0xff]
      %v2801 = vld [vmem:[%s2617 + $0x5b8] sm:$0xff]
      %v2802 = vld [vmem:[%s2617 + $0x5c0] sm:$0xff]
      %v2803 = vld [vmem:[%s2617 + $0x5c8] sm:$0xff]
      %v2804 = vld [vmem:[%s2617 + $0x5d0] sm:$0xff]
      %v2805 = vld [vmem:[%s2617 + $0x5d8] sm:$0xff]
      %v2806 = vld [vmem:[%s2617 + $0x5e0] sm:$0xff]
      %v2807 = vld [vmem:[%s2617 + $0x5e8] sm:$0xff]
      %v2808 = vld [vmem:[%s2617 + $0x5f0] sm:$0xff]
      %v2809 = vld [vmem:[%s2617 + $0x5f8] sm:$0xff]
      %v2810 = vld [vmem:[%s2617 + $0x600] sm:$0xff]
      %v2811 = vld [vmem:[%s2617 + $0x608] sm:$0xff]
      %v2812 = vld [vmem:[%s2617 + $0x610] sm:$0xff]
      %v2813 = vld [vmem:[%s2617 + $0x618] sm:$0xff]
      %v2814 = vld [vmem:[%s2617 + $0x620] sm:$0xff]
      %v2815 = vld [vmem:[%s2617 + $0x628] sm:$0xff]
      %v2816 = vld [vmem:[%s2617 + $0x630] sm:$0xff]
      %v2817 = vld [vmem:[%s2617 + $0x638] sm:$0xff]
      %v2818 = vld [vmem:[%s2617 + $0x640] sm:$0xff]
      %v2819 = vld [vmem:[%s2617 + $0x648] sm:$0xff]
      %v2820 = vld [vmem:[%s2617 + $0x650] sm:$0xff]
      %v2821 = vld [vmem:[%s2617 + $0x658] sm:$0xff]
      %v2822 = vld [vmem:[%s2617 + $0x660] sm:$0xff]
      %v2823 = vld [vmem:[%s2617 + $0x668] sm:$0xff]
      %v2824 = vld [vmem:[%s2617 + $0x670] sm:$0xff]
      %v2825 = vld [vmem:[%s2617 + $0x678] sm:$0xff]
      %v2826 = vld [vmem:[%s2617 + $0x680] sm:$0xff]
      %v2827 = vld [vmem:[%s2617 + $0x688] sm:$0xff]
      %v2828 = vld [vmem:[%s2617 + $0x690] sm:$0xff]
      %v2829 = vld [vmem:[%s2617 + $0x698] sm:$0xff]
      %v2830 = vld [vmem:[%s2617 + $0x6a0] sm:$0xff]
      %v2831 = vld [vmem:[%s2617 + $0x6a8] sm:$0xff]
      %v2832 = vld [vmem:[%s2617 + $0x6b0] sm:$0xff]
      %v2833 = vld [vmem:[%s2617 + $0x6b8] sm:$0xff]
      %v2834 = vld [vmem:[%s2617 + $0x6c0] sm:$0xff]
      %v2835 = vld [vmem:[%s2617 + $0x6c8] sm:$0xff]
      %v2836 = vld [vmem:[%s2617 + $0x6d0] sm:$0xff]
      %v2837 = vld [vmem:[%s2617 + $0x6d8] sm:$0xff]
      %v2838 = vld [vmem:[%s2617 + $0x6e0] sm:$0xff]
      %v2839 = vld [vmem:[%s2617 + $0x6e8] sm:$0xff]
      %v2840 = vld [vmem:[%s2617 + $0x6f0] sm:$0xff]
      %v2841 = vld [vmem:[%s2617 + $0x6f8] sm:$0xff]
      %v2842 = vld [vmem:[%s2617 + $0x700] sm:$0xff]
      %v2843 = vld [vmem:[%s2617 + $0x708] sm:$0xff]
      %v2844 = vld [vmem:[%s2617 + $0x710] sm:$0xff]
      %v2845 = vld [vmem:[%s2617 + $0x718] sm:$0xff]
      %v2846 = vld [vmem:[%s2617 + $0x720] sm:$0xff]
      %v2847 = vld [vmem:[%s2617 + $0x728] sm:$0xff]
      %v2848 = vld [vmem:[%s2617 + $0x730] sm:$0xff]
      %v2849 = vld [vmem:[%s2617 + $0x738] sm:$0xff]
      %v2850 = vld [vmem:[%s2617 + $0x740] sm:$0xff]
      %v2851 = vld [vmem:[%s2617 + $0x748] sm:$0xff]
      %v2852 = vld [vmem:[%s2617 + $0x750] sm:$0xff]
      %v2853 = vld [vmem:[%s2617 + $0x758] sm:$0xff]
      %v2854 = vld [vmem:[%s2617 + $0x760] sm:$0xff]
      %v2855 = vld [vmem:[%s2617 + $0x768] sm:$0xff]
      %v2856 = vld [vmem:[%s2617 + $0x770] sm:$0xff]
      %v2857 = vld [vmem:[%s2617 + $0x778] sm:$0xff]
      %v2858 = vld [vmem:[%s2617 + $0x780] sm:$0xff]
      %v2859 = vld [vmem:[%s2617 + $0x788] sm:$0xff]
      %v2860 = vld [vmem:[%s2617 + $0x790] sm:$0xff]
      %v2861 = vld [vmem:[%s2617 + $0x798] sm:$0xff]
      %v2862 = vld [vmem:[%s2617 + $0x7a0] sm:$0xff]
      %v2863 = vld [vmem:[%s2617 + $0x7a8] sm:$0xff]
      %v2864 = vld [vmem:[%s2617 + $0x7b0] sm:$0xff]
      %v2865 = vld [vmem:[%s2617 + $0x7b8] sm:$0xff]
      %v2866 = vld [vmem:[%s2617 + $0x7c0] sm:$0xff]
      %v2867 = vld [vmem:[%s2617 + $0x7c8] sm:$0xff]
      %v2868 = vld [vmem:[%s2617 + $0x7d0] sm:$0xff]
      %v2869 = vld [vmem:[%s2617 + $0x7d8] sm:$0xff]
      %v2870 = vld [vmem:[%s2617 + $0x7e0] sm:$0xff]
      %v2871 = vld [vmem:[%s2617 + $0x7e8] sm:$0xff]
      %v2872 = vld [vmem:[%s2617 + $0x7f0] sm:$0xff]
      %v2873 = vld [vmem:[%s2617 + $0x7f8] sm:$0xff]
      %2874 = vmatprep.subr.mxu0 0.0
      %2875 = vmatpush1.msra.mxu0 %v144
      %2876 = vmatprep.subr.mxu0 0.0
      %2877 = vmatpush1.msra.mxu0 %v145
      %2878 = vmatprep.subr.mxu0 0.0
      %2879 = vmatpush1.msra.mxu0 %v146
      %2880 = vmatprep.subr.mxu0 0.0
      %2881 = vmatpush1.msra.mxu0 %v147
      %2882 = vmatprep.subr.mxu0 0.0
      %2883 = vmatpush1.msra.mxu0 %v148
      %2884 = vmatprep.subr.mxu0 0.0
      %2885 = vmatpush1.msra.mxu0 %v149
      %2886 = vmatprep.subr.mxu0 0.0
      %2887 = vmatpush1.msra.mxu0 %v150
      %2888 = vmatprep.subr.mxu0 0.0
      %2889 = vmatpush1.msra.mxu0 %v151
      %2890 = vmatprep.subr.mxu0 0.0
      %2891 = vmatpush1.msra.mxu0 %v152
      %2892 = vmatprep.subr.mxu0 0.0
      %2893 = vmatpush1.msra.mxu0 %v153
      %2894 = vmatprep.subr.mxu0 0.0
      %2895 = vmatpush1.msra.mxu0 %v154
      %2896 = vmatprep.subr.mxu0 0.0
      %2897 = vmatpush1.msra.mxu0 %v155
      %2898 = vmatprep.subr.mxu0 0.0
      %2899 = vmatpush1.msra.mxu0 %v156
      %2900 = vmatprep.subr.mxu0 0.0
      %2901 = vmatpush1.msra.mxu0 %v157
      %2902 = vmatprep.subr.mxu0 0.0
      %2903 = vmatpush1.msra.mxu0 %v158
      %2904 = vmatprep.subr.mxu0 0.0
      %2905 = vmatpush1.msra.mxu0 %v159
      %2906 = vmatprep.subr.mxu0 0.0
      %2907 = vmatpush1.msra.mxu0 %v160
      %2908 = vmatprep.subr.mxu0 0.0
      %2909 = vmatpush1.msra.mxu0 %v161
      %2910 = vmatprep.subr.mxu0 0.0
      %2911 = vmatpush1.msra.mxu0 %v162
      %2912 = vmatprep.subr.mxu0 0.0
      %2913 = vmatpush1.msra.mxu0 %v163
      %2914 = vmatprep.subr.mxu0 0.0
      %2915 = vmatpush1.msra.mxu0 %v164
      %2916 = vmatprep.subr.mxu0 0.0
      %2917 = vmatpush1.msra.mxu0 %v165
      %2918 = vmatprep.subr.mxu0 0.0
      %2919 = vmatpush1.msra.mxu0 %v166
      %2920 = vmatprep.subr.mxu0 0.0
      %2921 = vmatpush1.msra.mxu0 %v167
      %2922 = vmatprep.subr.mxu0 0.0
      %2923 = vmatpush1.msra.mxu0 %v168
      %2924 = vmatprep.subr.mxu0 0.0
      %2925 = vmatpush1.msra.mxu0 %v169
      %2926 = vmatprep.subr.mxu0 0.0
      %2927 = vmatpush1.msra.mxu0 %v170
      %2928 = vmatprep.subr.mxu0 0.0
      %2929 = vmatpush1.msra.mxu0 %v171
      %2930 = vmatprep.subr.mxu0 0.0
      %2931 = vmatpush1.msra.mxu0 %v172
      %2932 = vmatprep.subr.mxu0 0.0
      %2933 = vmatpush1.msra.mxu0 %v173
      %2934 = vmatprep.subr.mxu0 0.0
      %2935 = vmatpush1.msra.mxu0 %v174
      %2936 = vmatprep.subr.mxu0 0.0
      %2937 = vmatpush1.msra.mxu0 %v175
      %2938 = vmatprep.mubr.f32.mxu0 %v2619
      %2939 = vmatmul.mubr.f32.gmra.mrb[0].mxu0 %v2618
      %v2940 = vpop.f32.mrb[0].mxu0
      %v2941 = vadd.f32 0.0, %v2940
      %v2942 = vpop.f32.mrb[0].mxu0
      %2943 = vmatprep.mubr.f32.mxu0 %v2627
      %2944 = vmatmul.mubr.f32.gmra.mrb[0].mxu0 %v2626
      %v2945 = vpop.f32.mrb[0].mxu0
      %v2946 = vadd.f32 0.0, %v2945
      %v2947 = vpop.f32.mrb[0].mxu0
      %2948 = vmatprep.mubr.f32.mxu0 %v2635
      %2949 = vmatmul.mubr.f32.gmra.mrb[0].mxu0 %v2634
      %v2950 = vpop.f32.mrb[0].mxu0
      %v2951 = vadd.f32 0.0, %v2950
      %v2952 = vpop.f32.mrb[0].mxu0
      %2953 = vmatprep.mubr.f32.mxu0 %v2643
      %2954 = vmatmul.mubr.f32.gmra.mrb[0].mxu0 %v2642
      %v2955 = vpop.f32.mrb[0].mxu0
      %v2956 = vadd.f32 0.0, %v2955
      %v2957 = vpop.f32.mrb[0].mxu0
      %2958 = vmatprep.mubr.f32.mxu0 %v2651
      %2959 = vmatmul.mubr.f32.gmra.mrb[0].mxu0 %v2650
      %v2960 = vpop.f32.mrb[0].mxu0
      %v2961 = vadd.f32 0.0, %v2960
      %v2962 = vpop.f32.mrb[0].mxu0
      %2963 = vmatprep.mubr.f32.mxu0 %v2659
      %2964 = vmatmul.mubr.f32.gmra.mrb[0].mxu0 %v2658
      %v2965 = vpop.f32.mrb[0].mxu0
      %v2966 = vadd.f32 0.0, %v2965
      %v2967 = vpop.f32.mrb[0].mxu0
      %2968 = vmatprep.mubr.f32.mxu0 %v2667
      %2969 = vmatmul.mubr.f32.gmra.mrb[0].mxu0 %v2666
      %v2970 = vpop.f32.mrb[0].mxu0
      %v2971 = vadd.f32 0.0, %v2970
      %v2972 = vpop.f32.mrb[0].mxu0
      %2973 = vmatprep.mubr.f32.mxu0 %v2675
      %2974 = vmatmul.mubr.f32.gmra.mrb[0].mxu0 %v2674
      %v2975 = vpop.f32.mrb[0].mxu0
      %v2976 = vadd.f32 0.0, %v2975
      %v2977 = vpop.f32.mrb[0].mxu0
      %2978 = vmatprep.mubr.f32.mxu0 %v2683
      %2979 = vmatmul.mubr.f32.gmra.mrb[0].mxu0 %v2682
      %v2980 = vpop.f32.mrb[0].mxu0
      %v2981 = vadd.f32 0.0, %v2980
      %v2982 = vpop.f32.mrb[0].mxu0
      %2983 = vmatprep.mubr.f32.mxu0 %v2691
      %2984 = vmatmul.mubr.f32.gmra.mrb[0].mxu0 %v2690
      %v2985 = vpop.f32.mrb[0].mxu0
      %v2986 = vadd.f32 0.0, %v2985
      %v2987 = vpop.f32.mrb[0].mxu0
      %2988 = vmatprep.mubr.f32.mxu0 %v2699
      %2989 = vmatmul.mubr.f32.gmra.mrb[0].mxu0 %v2698
      %v2990 = vpop.f32.mrb[0].mxu0
      %v2991 = vadd.f32 0.0, %v2990
      %v2992 = vpop.f32.mrb[0].mxu0
      %2993 = vmatprep.mubr.f32.mxu0 %v2707
      %2994 = vmatmul.mubr.f32.gmra.mrb[0].mxu0 %v2706
      %v2995 = vpop.f32.mrb[0].mxu0
      %v2996 = vadd.f32 0.0, %v2995
      %v2997 = vpop.f32.mrb[0].mxu0
      %2998 = vmatprep.mubr.f32.mxu0 %v2715
      %2999 = vmatmul.mubr.f32.gmra.mrb[0].mxu0 %v2714
      %v3000 = vpop.f32.mrb[0].mxu0
      %v3001 = vadd.f32 0.0, %v3000
      %v3002 = vpop.f32.mrb[0].mxu0
      %3003 = vmatprep.mubr.f32.mxu0 %v2723
      %3004 = vmatmul.mubr.f32.gmra.mrb[0].mxu0 %v2722
      %v3005 = vpop.f32.mrb[0].mxu0
      %v3006 = vadd.f32 0.0, %v3005
      %v3007 = vpop.f32.mrb[0].mxu0
      %3008 = vmatprep.mubr.f32.mxu0 %v2731
      %3009 = vmatmul.mubr.f32.gmra.mrb[0].mxu0 %v2730
      %v3010 = vpop.f32.mrb[0].mxu0
      %v3011 = vadd.f32 0.0, %v3010
      %v3012 = vpop.f32.mrb[0].mxu0
      %3013 = vmatprep.mubr.f32.mxu0 %v2739
      %3014 = vmatmul.mubr.f32.gmra.mrb[0].mxu0 %v2738
      %v3015 = vpop.f32.mrb[0].mxu0
      %v3016 = vadd.f32 0.0, %v3015
      %v3017 = vpop.f32.mrb[0].mxu0
      %3018 = vmatprep.mubr.f32.mxu0 %v2747
      %3019 = vmatmul.mubr.f32.gmra.mrb[0].mxu0 %v2746
      %v3020 = vpop.f32.mrb[0].mxu0
      %v3021 = vadd.f32 0.0, %v3020
      %v3022 = vpop.f32.mrb[0].mxu0
      %3023 = vmatprep.mubr.f32.mxu0 %v2755
      %3024 = vmatmul.mubr.f32.gmra.mrb[0].mxu0 %v2754
      %v3025 = vpop.f32.mrb[0].mxu0
      %v3026 = vadd.f32 0.0, %v3025
      %v3027 = vpop.f32.mrb[0].mxu0
      %3028 = vmatprep.mubr.f32.mxu0 %v2763
      %3029 = vmatmul.mubr.f32.gmra.mrb[0].mxu0 %v2762
      %v3030 = vpop.f32.mrb[0].mxu0
      %v3031 = vadd.f32 0.0, %v3030
      %v3032 = vpop.f32.mrb[0].mxu0
      %3033 = vmatprep.mubr.f32.mxu0 %v2771
      %3034 = vmatmul.mubr.f32.gmra.mrb[0].mxu0 %v2770
      %v3035 = vpop.f32.mrb[0].mxu0
      %v3036 = vadd.f32 0.0, %v3035
      %v3037 = vpop.f32.mrb[0].mxu0
      %3038 = vmatprep.mubr.f32.mxu0 %v2779
      %3039 = vmatmul.mubr.f32.gmra.mrb[0].mxu0 %v2778
      %v3040 = vpop.f32.mrb[0].mxu0
      %v3041 = vadd.f32 0.0, %v3040
      %v3042 = vpop.f32.mrb[0].mxu0
      %3043 = vmatprep.mubr.f32.mxu0 %v2787
      %3044 = vmatmul.mubr.f32.gmra.mrb[0].mxu0 %v2786
      %v3045 = vpop.f32.mrb[0].mxu0
      %v3046 = vadd.f32 0.0, %v3045
      %v3047 = vpop.f32.mrb[0].mxu0
      %3048 = vmatprep.mubr.f32.mxu0 %v2795
      %3049 = vmatmul.mubr.f32.gmra.mrb[0].mxu0 %v2794
      %v3050 = vpop.f32.mrb[0].mxu0
      %v3051 = vadd.f32 0.0, %v3050
      %v3052 = vpop.f32.mrb[0].mxu0
      %3053 = vmatprep.mubr.f32.mxu0 %v2803
      %3054 = vmatmul.mubr.f32.gmra.mrb[0].mxu0 %v2802
      %v3055 = vpop.f32.mrb[0].mxu0
      %v3056 = vadd.f32 0.0, %v3055
      %v3057 = vpop.f32.mrb[0].mxu0
      %3058 = vmatprep.mubr.f32.mxu0 %v2811
      %3059 = vmatmul.mubr.f32.gmra.mrb[0].mxu0 %v2810
      %v3060 = vpop.f32.mrb[0].mxu0
      %v3061 = vadd.f32 0.0, %v3060
      %v3062 = vpop.f32.mrb[0].mxu0
      %3063 = vmatprep.mubr.f32.mxu0 %v2819
      %3064 = vmatmul.mubr.f32.gmra.mrb[0].mxu0 %v2818
      %v3065 = vpop.f32.mrb[0].mxu0
      %v3066 = vadd.f32 0.0, %v3065
      %v3067 = vpop.f32.mrb[0].mxu0
      %3068 = vmatprep.mubr.f32.mxu0 %v2827
      %3069 = vmatmul.mubr.f32.gmra.mrb[0].mxu0 %v2826
      %v3070 = vpop.f32.mrb[0].mxu0
      %v3071 = vadd.f32 0.0, %v3070
      %v3072 = vpop.f32.mrb[0].mxu0
      %3073 = vmatprep.mubr.f32.mxu0 %v2835
      %3074 = vmatmul.mubr.f32.gmra.mrb[0].mxu0 %v2834
      %v3075 = vpop.f32.mrb[0].mxu0
      %v3076 = vadd.f32 0.0, %v3075
      %v3077 = vpop.f32.mrb[0].mxu0
      %3078 = vmatprep.mubr.f32.mxu0 %v2843
      %3079 = vmatmul.mubr.f32.gmra.mrb[0].mxu0 %v2842
      %v3080 = vpop.f32.mrb[0].mxu0
      %v3081 = vadd.f32 0.0, %v3080
      %v3082 = vpop.f32.mrb[0].mxu0
      %3083 = vmatprep.mubr.f32.mxu0 %v2851
      %3084 = vmatmul.mubr.f32.gmra.mrb[0].mxu0 %v2850
      %v3085 = vpop.f32.mrb[0].mxu0
      %v3086 = vadd.f32 0.0, %v3085
      %v3087 = vpop.f32.mrb[0].mxu0
      %3088 = vmatprep.mubr.f32.mxu0 %v2859
      %3089 = vmatmul.mubr.f32.gmra.mrb[0].mxu0 %v2858
      %v3090 = vpop.f32.mrb[0].mxu0
      %v3091 = vadd.f32 0.0, %v3090
      %v3092 = vpop.f32.mrb[0].mxu0
      %3093 = vmatprep.mubr.f32.mxu0 %v2867
      %3094 = vmatmul.mubr.f32.gmra.mrb[0].mxu0 %v2866
      %v3095 = vpop.f32.mrb[0].mxu0
      %v3096 = vadd.f32 0.0, %v3095
      %v3097 = vpop.f32.mrb[0].mxu0
      %3098 = vdwg.mxu0
      %3099 = vmatprep.subr.mxu0 0.0
      %3100 = vmatpush1.msra.mxu0 %v176
      %3101 = vmatprep.subr.mxu0 0.0
      %3102 = vmatpush1.msra.mxu0 %v177
      %3103 = vmatprep.subr.mxu0 0.0
      %3104 = vmatpush1.msra.mxu0 %v178
      %3105 = vmatprep.subr.mxu0 0.0
      %3106 = vmatpush1.msra.mxu0 %v179
      %3107 = vmatprep.subr.mxu0 0.0
      %3108 = vmatpush1.msra.mxu0 %v180
      %3109 = vmatprep.subr.mxu0 0.0
      %3110 = vmatpush1.msra.mxu0 %v181
      %3111 = vmatprep.subr.mxu0 0.0
      %3112 = vmatpush1.msra.mxu0 %v182
      %3113 = vmatprep.subr.mxu0 0.0
      %3114 = vmatpush1.msra.mxu0 %v183
      %3115 = vmatprep.subr.mxu0 0.0
      %3116 = vmatpush1.msra.mxu0 %v184
      %3117 = vmatprep.subr.mxu0 0.0
      %3118 = vmatpush1.msra.mxu0 %v185
      %3119 = vmatprep.subr.mxu0 0.0
      %3120 = vmatpush1.msra.mxu0 %v186
      %3121 = vmatprep.subr.mxu0 0.0
      %3122 = vmatpush1.msra.mxu0 %v187
      %3123 = vmatprep.subr.mxu0 0.0
      %3124 = vmatpush1.msra.mxu0 %v188
      %3125 = vmatprep.subr.mxu0 0.0
      %3126 = vmatpush1.msra.mxu0 %v189
      %3127 = vmatprep.subr.mxu0 0.0
      %3128 = vmatpush1.msra.mxu0 %v190
      %3129 = vmatprep.subr.mxu0 0.0
      %3130 = vmatpush1.msra.mxu0 %v191
      %3131 = vmatprep.subr.mxu0 0.0
      %3132 = vmatpush1.msra.mxu0 %v192
      %3133 = vmatprep.subr.mxu0 0.0
      %3134 = vmatpush1.msra.mxu0 %v193
      %3135 = vmatprep.subr.mxu0 0.0
      %3136 = vmatpush1.msra.mxu0 %v194
      %3137 = vmatprep.subr.mxu0 0.0
      %3138 = vmatpush1.msra.mxu0 %v195
      %3139 = vmatprep.subr.mxu0 0.0
      %3140 = vmatpush1.msra.mxu0 %v196
      %3141 = vmatprep.subr.mxu0 0.0
      %3142 = vmatpush1.msra.mxu0 %v197
      %3143 = vmatprep.subr.mxu0 0.0
      %3144 = vmatpush1.msra.mxu0 %v198
      %3145 = vmatprep.subr.mxu0 0.0
      %3146 = vmatpush1.msra.mxu0 %v199
      %3147 = vmatprep.subr.mxu0 0.0
      %3148 = vmatpush1.msra.mxu0 %v200
      %3149 = vmatprep.subr.mxu0 0.0
      %3150 = vmatpush1.msra.mxu0 %v201
      %3151 = vmatprep.subr.mxu0 0.0
      %3152 = vmatpush1.msra.mxu0 %v202
      %3153 = vmatprep.subr.mxu0 0.0
      %3154 = vmatpush1.msra.mxu0 %v203
      %3155 = vmatprep.subr.mxu0 0.0
      %3156 = vmatpush1.msra.mxu0 %v204
      %3157 = vmatprep.subr.mxu0 0.0
      %3158 = vmatpush1.msra.mxu0 %v205
      %3159 = vmatprep.subr.mxu0 0.0
      %3160 = vmatpush1.msra.mxu0 %v206
      %3161 = vmatprep.subr.mxu0 0.0
      %3162 = vmatpush1.msra.mxu0 %v207
      %3163 = vmatprep.mubr.f32.mxu0 %v2621
      %3164 = vmatmul.mubr.f32.gmra.mrb[0].mxu0 %v2620
      %v3165 = vpop.f32.mrb[0].mxu0
      %v3166 = vadd.f32 %v2941, %v3165
      %v3167 = vpop.f32.mrb[0].mxu0
      %3168 = vmatprep.mubr.f32.mxu0 %v2629
      %3169 = vmatmul.mubr.f32.gmra.mrb[0].mxu0 %v2628
      %v3170 = vpop.f32.mrb[0].mxu0
      %v3171 = vadd.f32 %v2946, %v3170
      %v3172 = vpop.f32.mrb[0].mxu0
      %3173 = vmatprep.mubr.f32.mxu0 %v2637
      %3174 = vmatmul.mubr.f32.gmra.mrb[0].mxu0 %v2636
      %v3175 = vpop.f32.mrb[0].mxu0
      %v3176 = vadd.f32 %v2951, %v3175
      %v3177 = vpop.f32.mrb[0].mxu0
      %3178 = vmatprep.mubr.f32.mxu0 %v2645
      %3179 = vmatmul.mubr.f32.gmra.mrb[0].mxu0 %v2644
      %v3180 = vpop.f32.mrb[0].mxu0
      %v3181 = vadd.f32 %v2956, %v3180
      %v3182 = vpop.f32.mrb[0].mxu0
      %3183 = vmatprep.mubr.f32.mxu0 %v2653
      %3184 = vmatmul.mubr.f32.gmra.mrb[0].mxu0 %v2652
      %v3185 = vpop.f32.mrb[0].mxu0
      %v3186 = vadd.f32 %v2961, %v3185
      %v3187 = vpop.f32.mrb[0].mxu0
      %3188 = vmatprep.mubr.f32.mxu0 %v2661
      %3189 = vmatmul.mubr.f32.gmra.mrb[0].mxu0 %v2660
      %v3190 = vpop.f32.mrb[0].mxu0
      %v3191 = vadd.f32 %v2966, %v3190
      %v3192 = vpop.f32.mrb[0].mxu0
      %3193 = vmatprep.mubr.f32.mxu0 %v2669
      %3194 = vmatmul.mubr.f32.gmra.mrb[0].mxu0 %v2668
      %v3195 = vpop.f32.mrb[0].mxu0
      %v3196 = vadd.f32 %v2971, %v3195
      %v3197 = vpop.f32.mrb[0].mxu0
      %3198 = vmatprep.mubr.f32.mxu0 %v2677
      %3199 = vmatmul.mubr.f32.gmra.mrb[0].mxu0 %v2676
      %v3200 = vpop.f32.mrb[0].mxu0
      %v3201 = vadd.f32 %v2976, %v3200
      %v3202 = vpop.f32.mrb[0].mxu0
      %3203 = vmatprep.mubr.f32.mxu0 %v2685
      %3204 = vmatmul.mubr.f32.gmra.mrb[0].mxu0 %v2684
      %v3205 = vpop.f32.mrb[0].mxu0
      %v3206 = vadd.f32 %v2981, %v3205
      %v3207 = vpop.f32.mrb[0].mxu0
      %3208 = vmatprep.mubr.f32.mxu0 %v2693
      %3209 = vmatmul.mubr.f32.gmra.mrb[0].mxu0 %v2692
      %v3210 = vpop.f32.mrb[0].mxu0
      %v3211 = vadd.f32 %v2986, %v3210
      %v3212 = vpop.f32.mrb[0].mxu0
      %3213 = vmatprep.mubr.f32.mxu0 %v2701
      %3214 = vmatmul.mubr.f32.gmra.mrb[0].mxu0 %v2700
      %v3215 = vpop.f32.mrb[0].mxu0
      %v3216 = vadd.f32 %v2991, %v3215
      %v3217 = vpop.f32.mrb[0].mxu0
      %3218 = vmatprep.mubr.f32.mxu0 %v2709
      %3219 = vmatmul.mubr.f32.gmra.mrb[0].mxu0 %v2708
      %v3220 = vpop.f32.mrb[0].mxu0
      %v3221 = vadd.f32 %v2996, %v3220
      %v3222 = vpop.f32.mrb[0].mxu0
      %3223 = vmatprep.mubr.f32.mxu0 %v2717
      %3224 = vmatmul.mubr.f32.gmra.mrb[0].mxu0 %v2716
      %v3225 = vpop.f32.mrb[0].mxu0
      %v3226 = vadd.f32 %v3001, %v3225
      %v3227 = vpop.f32.mrb[0].mxu0
      %3228 = vmatprep.mubr.f32.mxu0 %v2725
      %3229 = vmatmul.mubr.f32.gmra.mrb[0].mxu0 %v2724
      %v3230 = vpop.f32.mrb[0].mxu0
      %v3231 = vadd.f32 %v3006, %v3230
      %v3232 = vpop.f32.mrb[0].mxu0
      %3233 = vmatprep.mubr.f32.mxu0 %v2733
      %3234 = vmatmul.mubr.f32.gmra.mrb[0].mxu0 %v2732
      %v3235 = vpop.f32.mrb[0].mxu0
      %v3236 = vadd.f32 %v3011, %v3235
      %v3237 = vpop.f32.mrb[0].mxu0
      %3238 = vmatprep.mubr.f32.mxu0 %v2741
      %3239 = vmatmul.mubr.f32.gmra.mrb[0].mxu0 %v2740
      %v3240 = vpop.f32.mrb[0].mxu0
      %v3241 = vadd.f32 %v3016, %v3240
      %v3242 = vpop.f32.mrb[0].mxu0
      %3243 = vmatprep.mubr.f32.mxu0 %v2749
      %3244 = vmatmul.mubr.f32.gmra.mrb[0].mxu0 %v2748
      %v3245 = vpop.f32.mrb[0].mxu0
      %v3246 = vadd.f32 %v3021, %v3245
      %v3247 = vpop.f32.mrb[0].mxu0
      %3248 = vmatprep.mubr.f32.mxu0 %v2757
      %3249 = vmatmul.mubr.f32.gmra.mrb[0].mxu0 %v2756
      %v3250 = vpop.f32.mrb[0].mxu0
      %v3251 = vadd.f32 %v3026, %v3250
      %v3252 = vpop.f32.mrb[0].mxu0
      %3253 = vmatprep.mubr.f32.mxu0 %v2765
      %3254 = vmatmul.mubr.f32.gmra.mrb[0].mxu0 %v2764
      %v3255 = vpop.f32.mrb[0].mxu0
      %v3256 = vadd.f32 %v3031, %v3255
      %v3257 = vpop.f32.mrb[0].mxu0
      %3258 = vmatprep.mubr.f32.mxu0 %v2773
      %3259 = vmatmul.mubr.f32.gmra.mrb[0].mxu0 %v2772
      %v3260 = vpop.f32.mrb[0].mxu0
      %v3261 = vadd.f32 %v3036, %v3260
      %v3262 = vpop.f32.mrb[0].mxu0
      %3263 = vmatprep.mubr.f32.mxu0 %v2781
      %3264 = vmatmul.mubr.f32.gmra.mrb[0].mxu0 %v2780
      %v3265 = vpop.f32.mrb[0].mxu0
      %v3266 = vadd.f32 %v3041, %v3265
      %v3267 = vpop.f32.mrb[0].mxu0
      %3268 = vmatprep.mubr.f32.mxu0 %v2789
      %3269 = vmatmul.mubr.f32.gmra.mrb[0].mxu0 %v2788
      %v3270 = vpop.f32.mrb[0].mxu0
      %v3271 = vadd.f32 %v3046, %v3270
      %v3272 = vpop.f32.mrb[0].mxu0
      %3273 = vmatprep.mubr.f32.mxu0 %v2797
      %3274 = vmatmul.mubr.f32.gmra.mrb[0].mxu0 %v2796
      %v3275 = vpop.f32.mrb[0].mxu0
      %v3276 = vadd.f32 %v3051, %v3275
      %v3277 = vpop.f32.mrb[0].mxu0
      %3278 = vmatprep.mubr.f32.mxu0 %v2805
      %3279 = vmatmul.mubr.f32.gmra.mrb[0].mxu0 %v2804
      %v3280 = vpop.f32.mrb[0].mxu0
      %v3281 = vadd.f32 %v3056, %v3280
      %v3282 = vpop.f32.mrb[0].mxu0
      %3283 = vmatprep.mubr.f32.mxu0 %v2813
      %3284 = vmatmul.mubr.f32.gmra.mrb[0].mxu0 %v2812
      %v3285 = vpop.f32.mrb[0].mxu0
      %v3286 = vadd.f32 %v3061, %v3285
      %v3287 = vpop.f32.mrb[0].mxu0
      %3288 = vmatprep.mubr.f32.mxu0 %v2821
      %3289 = vmatmul.mubr.f32.gmra.mrb[0].mxu0 %v2820
      %v3290 = vpop.f32.mrb[0].mxu0
      %v3291 = vadd.f32 %v3066, %v3290
      %v3292 = vpop.f32.mrb[0].mxu0
      %3293 = vmatprep.mubr.f32.mxu0 %v2829
      %3294 = vmatmul.mubr.f32.gmra.mrb[0].mxu0 %v2828
      %v3295 = vpop.f32.mrb[0].mxu0
      %v3296 = vadd.f32 %v3071, %v3295
      %v3297 = vpop.f32.mrb[0].mxu0
      %3298 = vmatprep.mubr.f32.mxu0 %v2837
      %3299 = vmatmul.mubr.f32.gmra.mrb[0].mxu0 %v2836
      %v3300 = vpop.f32.mrb[0].mxu0
      %v3301 = vadd.f32 %v3076, %v3300
      %v3302 = vpop.f32.mrb[0].mxu0
      %3303 = vmatprep.mubr.f32.mxu0 %v2845
      %3304 = vmatmul.mubr.f32.gmra.mrb[0].mxu0 %v2844
      %v3305 = vpop.f32.mrb[0].mxu0
      %v3306 = vadd.f32 %v3081, %v3305
      %v3307 = vpop.f32.mrb[0].mxu0
      %3308 = vmatprep.mubr.f32.mxu0 %v2853
      %3309 = vmatmul.mubr.f32.gmra.mrb[0].mxu0 %v2852
      %v3310 = vpop.f32.mrb[0].mxu0
      %v3311 = vadd.f32 %v3086, %v3310
      %v3312 = vpop.f32.mrb[0].mxu0
      %3313 = vmatprep.mubr.f32.mxu0 %v2861
      %3314 = vmatmul.mubr.f32.gmra.mrb[0].mxu0 %v2860
      %v3315 = vpop.f32.mrb[0].mxu0
      %v3316 = vadd.f32 %v3091, %v3315
      %v3317 = vpop.f32.mrb[0].mxu0
      %3318 = vmatprep.mubr.f32.mxu0 %v2869
      %3319 = vmatmul.mubr.f32.gmra.mrb[0].mxu0 %v2868
      %v3320 = vpop.f32.mrb[0].mxu0
      %v3321 = vadd.f32 %v3096, %v3320
      %v3322 = vpop.f32.mrb[0].mxu0
      %3323 = vdwg.mxu0
      %3324 = vmatprep.subr.mxu0 0.0
      %3325 = vmatpush1.msra.mxu0 %v208
      %3326 = vmatprep.subr.mxu0 0.0
      %3327 = vmatpush1.msra.mxu0 %v209
      %3328 = vmatprep.subr.mxu0 0.0
      %3329 = vmatpush1.msra.mxu0 %v210
      %3330 = vmatprep.subr.mxu0 0.0
      %3331 = vmatpush1.msra.mxu0 %v211
      %3332 = vmatprep.subr.mxu0 0.0
      %3333 = vmatpush1.msra.mxu0 %v212
      %3334 = vmatprep.subr.mxu0 0.0
      %3335 = vmatpush1.msra.mxu0 %v213
      %3336 = vmatprep.subr.mxu0 0.0
      %3337 = vmatpush1.msra.mxu0 %v214
      %3338 = vmatprep.subr.mxu0 0.0
      %3339 = vmatpush1.msra.mxu0 %v215
      %3340 = vmatprep.subr.mxu0 0.0
      %3341 = vmatpush1.msra.mxu0 %v216
      %3342 = vmatprep.subr.mxu0 0.0
      %3343 = vmatpush1.msra.mxu0 %v217
      %3344 = vmatprep.subr.mxu0 0.0
      %3345 = vmatpush1.msra.mxu0 %v218
      %3346 = vmatprep.subr.mxu0 0.0
      %3347 = vmatpush1.msra.mxu0 %v219
      %3348 = vmatprep.subr.mxu0 0.0
      %3349 = vmatpush1.msra.mxu0 %v220
      %3350 = vmatprep.subr.mxu0 0.0
      %3351 = vmatpush1.msra.mxu0 %v221
      %3352 = vmatprep.subr.mxu0 0.0
      %3353 = vmatpush1.msra.mxu0 %v222
      %3354 = vmatprep.subr.mxu0 0.0
      %3355 = vmatpush1.msra.mxu0 %v223
      %3356 = vmatprep.subr.mxu0 0.0
      %3357 = vmatpush1.msra.mxu0 %v224
      %3358 = vmatprep.subr.mxu0 0.0
      %3359 = vmatpush1.msra.mxu0 %v225
      %3360 = vmatprep.subr.mxu0 0.0
      %3361 = vmatpush1.msra.mxu0 %v226
      %3362 = vmatprep.subr.mxu0 0.0
      %3363 = vmatpush1.msra.mxu0 %v227
      %3364 = vmatprep.subr.mxu0 0.0
      %3365 = vmatpush1.msra.mxu0 %v228
      %3366 = vmatprep.subr.mxu0 0.0
      %3367 = vmatpush1.msra.mxu0 %v229
      %3368 = vmatprep.subr.mxu0 0.0
      %3369 = vmatpush1.msra.mxu0 %v230
      %3370 = vmatprep.subr.mxu0 0.0
      %3371 = vmatpush1.msra.mxu0 %v231
      %3372 = vmatprep.subr.mxu0 0.0
      %3373 = vmatpush1.msra.mxu0 %v232
      %3374 = vmatprep.subr.mxu0 0.0
      %3375 = vmatpush1.msra.mxu0 %v233
      %3376 = vmatprep.subr.mxu0 0.0
      %3377 = vmatpush1.msra.mxu0 %v234
      %3378 = vmatprep.subr.mxu0 0.0
      %3379 = vmatpush1.msra.mxu0 %v235
      %3380 = vmatprep.subr.mxu0 0.0
      %3381 = vmatpush1.msra.mxu0 %v236
      %3382 = vmatprep.subr.mxu0 0.0
      %3383 = vmatpush1.msra.mxu0 %v237
      %3384 = vmatprep.subr.mxu0 0.0
      %3385 = vmatpush1.msra.mxu0 %v238
      %3386 = vmatprep.subr.mxu0 0.0
      %3387 = vmatpush1.msra.mxu0 %v239
      %3388 = vmatprep.mubr.f32.mxu0 %v2623
      %3389 = vmatmul.mubr.f32.gmra.mrb[0].mxu0 %v2622
      %v3390 = vpop.f32.mrb[0].mxu0
      %v3391 = vadd.f32 %v3166, %v3390
      %v3392 = vpop.f32.mrb[0].mxu0
      %3393 = vmatprep.mubr.f32.mxu0 %v2631
      %3394 = vmatmul.mubr.f32.gmra.mrb[0].mxu0 %v2630
      %v3395 = vpop.f32.mrb[0].mxu0
      %v3396 = vadd.f32 %v3171, %v3395
      %v3397 = vpop.f32.mrb[0].mxu0
      %3398 = vmatprep.mubr.f32.mxu0 %v2639
      %3399 = vmatmul.mubr.f32.gmra.mrb[0].mxu0 %v2638
      %v3400 = vpop.f32.mrb[0].mxu0
      %v3401 = vadd.f32 %v3176, %v3400
      %v3402 = vpop.f32.mrb[0].mxu0
      %3403 = vmatprep.mubr.f32.mxu0 %v2647
      %3404 = vmatmul.mubr.f32.gmra.mrb[0].mxu0 %v2646
      %v3405 = vpop.f32.mrb[0].mxu0
      %v3406 = vadd.f32 %v3181, %v3405
      %v3407 = vpop.f32.mrb[0].mxu0
      %3408 = vmatprep.mubr.f32.mxu0 %v2655
      %3409 = vmatmul.mubr.f32.gmra.mrb[0].mxu0 %v2654
      %v3410 = vpop.f32.mrb[0].mxu0
      %v3411 = vadd.f32 %v3186, %v3410
      %v3412 = vpop.f32.mrb[0].mxu0
      %3413 = vmatprep.mubr.f32.mxu0 %v2663
      %3414 = vmatmul.mubr.f32.gmra.mrb[0].mxu0 %v2662
      %v3415 = vpop.f32.mrb[0].mxu0
      %v3416 = vadd.f32 %v3191, %v3415
      %v3417 = vpop.f32.mrb[0].mxu0
      %3418 = vmatprep.mubr.f32.mxu0 %v2671
      %3419 = vmatmul.mubr.f32.gmra.mrb[0].mxu0 %v2670
      %v3420 = vpop.f32.mrb[0].mxu0
      %v3421 = vadd.f32 %v3196, %v3420
      %v3422 = vpop.f32.mrb[0].mxu0
      %3423 = vmatprep.mubr.f32.mxu0 %v2679
      %3424 = vmatmul.mubr.f32.gmra.mrb[0].mxu0 %v2678
      %v3425 = vpop.f32.mrb[0].mxu0
      %v3426 = vadd.f32 %v3201, %v3425
      %v3427 = vpop.f32.mrb[0].mxu0
      %3428 = vmatprep.mubr.f32.mxu0 %v2687
      %3429 = vmatmul.mubr.f32.gmra.mrb[0].mxu0 %v2686
      %v3430 = vpop.f32.mrb[0].mxu0
      %v3431 = vadd.f32 %v3206, %v3430
      %v3432 = vpop.f32.mrb[0].mxu0
      %3433 = vmatprep.mubr.f32.mxu0 %v2695
      %3434 = vmatmul.mubr.f32.gmra.mrb[0].mxu0 %v2694
      %v3435 = vpop.f32.mrb[0].mxu0
      %v3436 = vadd.f32 %v3211, %v3435
      %v3437 = vpop.f32.mrb[0].mxu0
      %3438 = vmatprep.mubr.f32.mxu0 %v2703
      %3439 = vmatmul.mubr.f32.gmra.mrb[0].mxu0 %v2702
      %v3440 = vpop.f32.mrb[0].mxu0
      %v3441 = vadd.f32 %v3216, %v3440
      %v3442 = vpop.f32.mrb[0].mxu0
      %3443 = vmatprep.mubr.f32.mxu0 %v2711
      %3444 = vmatmul.mubr.f32.gmra.mrb[0].mxu0 %v2710
      %v3445 = vpop.f32.mrb[0].mxu0
      %v3446 = vadd.f32 %v3221, %v3445
      %v3447 = vpop.f32.mrb[0].mxu0
      %3448 = vmatprep.mubr.f32.mxu0 %v2719
      %3449 = vmatmul.mubr.f32.gmra.mrb[0].mxu0 %v2718
      %v3450 = vpop.f32.mrb[0].mxu0
      %v3451 = vadd.f32 %v3226, %v3450
      %v3452 = vpop.f32.mrb[0].mxu0
      %3453 = vmatprep.mubr.f32.mxu0 %v2727
      %3454 = vmatmul.mubr.f32.gmra.mrb[0].mxu0 %v2726
      %v3455 = vpop.f32.mrb[0].mxu0
      %v3456 = vadd.f32 %v3231, %v3455
      %v3457 = vpop.f32.mrb[0].mxu0
      %3458 = vmatprep.mubr.f32.mxu0 %v2735
      %3459 = vmatmul.mubr.f32.gmra.mrb[0].mxu0 %v2734
      %v3460 = vpop.f32.mrb[0].mxu0
      %v3461 = vadd.f32 %v3236, %v3460
      %v3462 = vpop.f32.mrb[0].mxu0
      %3463 = vmatprep.mubr.f32.mxu0 %v2743
      %3464 = vmatmul.mubr.f32.gmra.mrb[0].mxu0 %v2742
      %v3465 = vpop.f32.mrb[0].mxu0
      %v3466 = vadd.f32 %v3241, %v3465
      %v3467 = vpop.f32.mrb[0].mxu0
      %3468 = vmatprep.mubr.f32.mxu0 %v2751
      %3469 = vmatmul.mubr.f32.gmra.mrb[0].mxu0 %v2750
      %v3470 = vpop.f32.mrb[0].mxu0
      %v3471 = vadd.f32 %v3246, %v3470
      %v3472 = vpop.f32.mrb[0].mxu0
      %3473 = vmatprep.mubr.f32.mxu0 %v2759
      %3474 = vmatmul.mubr.f32.gmra.mrb[0].mxu0 %v2758
      %v3475 = vpop.f32.mrb[0].mxu0
      %v3476 = vadd.f32 %v3251, %v3475
      %v3477 = vpop.f32.mrb[0].mxu0
      %3478 = vmatprep.mubr.f32.mxu0 %v2767
      %3479 = vmatmul.mubr.f32.gmra.mrb[0].mxu0 %v2766
      %v3480 = vpop.f32.mrb[0].mxu0
      %v3481 = vadd.f32 %v3256, %v3480
      %v3482 = vpop.f32.mrb[0].mxu0
      %3483 = vmatprep.mubr.f32.mxu0 %v2775
      %3484 = vmatmul.mubr.f32.gmra.mrb[0].mxu0 %v2774
      %v3485 = vpop.f32.mrb[0].mxu0
      %v3486 = vadd.f32 %v3261, %v3485
      %v3487 = vpop.f32.mrb[0].mxu0
      %3488 = vmatprep.mubr.f32.mxu0 %v2783
      %3489 = vmatmul.mubr.f32.gmra.mrb[0].mxu0 %v2782
      %v3490 = vpop.f32.mrb[0].mxu0
      %v3491 = vadd.f32 %v3266, %v3490
      %v3492 = vpop.f32.mrb[0].mxu0
      %3493 = vmatprep.mubr.f32.mxu0 %v2791
      %3494 = vmatmul.mubr.f32.gmra.mrb[0].mxu0 %v2790
      %v3495 = vpop.f32.mrb[0].mxu0
      %v3496 = vadd.f32 %v3271, %v3495
      %v3497 = vpop.f32.mrb[0].mxu0
      %3498 = vmatprep.mubr.f32.mxu0 %v2799
      %3499 = vmatmul.mubr.f32.gmra.mrb[0].mxu0 %v2798
      %v3500 = vpop.f32.mrb[0].mxu0
      %v3501 = vadd.f32 %v3276, %v3500
      %v3502 = vpop.f32.mrb[0].mxu0
      %3503 = vmatprep.mubr.f32.mxu0 %v2807
      %3504 = vmatmul.mubr.f32.gmra.mrb[0].mxu0 %v2806
      %v3505 = vpop.f32.mrb[0].mxu0
      %v3506 = vadd.f32 %v3281, %v3505
      %v3507 = vpop.f32.mrb[0].mxu0
      %3508 = vmatprep.mubr.f32.mxu0 %v2815
      %3509 = vmatmul.mubr.f32.gmra.mrb[0].mxu0 %v2814
      %v3510 = vpop.f32.mrb[0].mxu0
      %v3511 = vadd.f32 %v3286, %v3510
      %v3512 = vpop.f32.mrb[0].mxu0
      %3513 = vmatprep.mubr.f32.mxu0 %v2823
      %3514 = vmatmul.mubr.f32.gmra.mrb[0].mxu0 %v2822
      %v3515 = vpop.f32.mrb[0].mxu0
      %v3516 = vadd.f32 %v3291, %v3515
      %v3517 = vpop.f32.mrb[0].mxu0
      %3518 = vmatprep.mubr.f32.mxu0 %v2831
      %3519 = vmatmul.mubr.f32.gmra.mrb[0].mxu0 %v2830
      %v3520 = vpop.f32.mrb[0].mxu0
      %v3521 = vadd.f32 %v3296, %v3520
      %v3522 = vpop.f32.mrb[0].mxu0
      %3523 = vmatprep.mubr.f32.mxu0 %v2839
      %3524 = vmatmul.mubr.f32.gmra.mrb[0].mxu0 %v2838
      %v3525 = vpop.f32.mrb[0].mxu0
      %v3526 = vadd.f32 %v3301, %v3525
      %v3527 = vpop.f32.mrb[0].mxu0
      %3528 = vmatprep.mubr.f32.mxu0 %v2847
      %3529 = vmatmul.mubr.f32.gmra.mrb[0].mxu0 %v2846
      %v3530 = vpop.f32.mrb[0].mxu0
      %v3531 = vadd.f32 %v3306, %v3530
      %v3532 = vpop.f32.mrb[0].mxu0
      %3533 = vmatprep.mubr.f32.mxu0 %v2855
      %3534 = vmatmul.mubr.f32.gmra.mrb[0].mxu0 %v2854
      %v3535 = vpop.f32.mrb[0].mxu0
      %v3536 = vadd.f32 %v3311, %v3535
      %v3537 = vpop.f32.mrb[0].mxu0
      %3538 = vmatprep.mubr.f32.mxu0 %v2863
      %3539 = vmatmul.mubr.f32.gmra.mrb[0].mxu0 %v2862
      %v3540 = vpop.f32.mrb[0].mxu0
      %v3541 = vadd.f32 %v3316, %v3540
      %v3542 = vpop.f32.mrb[0].mxu0
      %3543 = vmatprep.mubr.f32.mxu0 %v2871
      %3544 = vmatmul.mubr.f32.gmra.mrb[0].mxu0 %v2870
      %v3545 = vpop.f32.mrb[0].mxu0
      %v3546 = vadd.f32 %v3321, %v3545
      %v3547 = vpop.f32.mrb[0].mxu0
      %3548 = vdwg.mxu0
      %3549 = vmatprep.subr.mxu0 0.0
      %3550 = vmatpush1.msra.mxu0 %v240
      %3551 = vmatprep.subr.mxu0 0.0
      %3552 = vmatpush1.msra.mxu0 %v241
      %3553 = vmatprep.subr.mxu0 0.0
      %3554 = vmatpush1.msra.mxu0 %v242
      %3555 = vmatprep.subr.mxu0 0.0
      %3556 = vmatpush1.msra.mxu0 %v243
      %3557 = vmatprep.subr.mxu0 0.0
      %3558 = vmatpush1.msra.mxu0 %v244
      %3559 = vmatprep.subr.mxu0 0.0
      %3560 = vmatpush1.msra.mxu0 %v245
      %3561 = vmatprep.subr.mxu0 0.0
      %3562 = vmatpush1.msra.mxu0 %v246
      %3563 = vmatprep.subr.mxu0 0.0
      %3564 = vmatpush1.msra.mxu0 %v247
      %3565 = vmatprep.subr.mxu0 0.0
      %3566 = vmatpush1.msra.mxu0 %v248
      %3567 = vmatprep.subr.mxu0 0.0
      %3568 = vmatpush1.msra.mxu0 %v249
      %3569 = vmatprep.subr.mxu0 0.0
      %3570 = vmatpush1.msra.mxu0 %v250
      %3571 = vmatprep.subr.mxu0 0.0
      %3572 = vmatpush1.msra.mxu0 %v251
      %3573 = vmatprep.subr.mxu0 0.0
      %3574 = vmatpush1.msra.mxu0 %v252
      %3575 = vmatprep.subr.mxu0 0.0
      %3576 = vmatpush1.msra.mxu0 %v253
      %3577 = vmatprep.subr.mxu0 0.0
      %3578 = vmatpush1.msra.mxu0 %v254
      %3579 = vmatprep.subr.mxu0 0.0
      %3580 = vmatpush1.msra.mxu0 %v255
      %3581 = vmatprep.subr.mxu0 0.0
      %3582 = vmatpush1.msra.mxu0 %v256
      %3583 = vmatprep.subr.mxu0 0.0
      %3584 = vmatpush1.msra.mxu0 %v257
      %3585 = vmatprep.subr.mxu0 0.0
      %3586 = vmatpush1.msra.mxu0 %v258
      %3587 = vmatprep.subr.mxu0 0.0
      %3588 = vmatpush1.msra.mxu0 %v259
      %3589 = vmatprep.subr.mxu0 0.0
      %3590 = vmatpush1.msra.mxu0 %v260
      %3591 = vmatprep.subr.mxu0 0.0
      %3592 = vmatpush1.msra.mxu0 %v261
      %3593 = vmatprep.subr.mxu0 0.0
      %3594 = vmatpush1.msra.mxu0 %v262
      %3595 = vmatprep.subr.mxu0 0.0
      %3596 = vmatpush1.msra.mxu0 %v263
      %3597 = vmatprep.subr.mxu0 0.0
      %3598 = vmatpush1.msra.mxu0 %v264
      %3599 = vmatprep.subr.mxu0 0.0
      %3600 = vmatpush1.msra.mxu0 %v265
      %3601 = vmatprep.subr.mxu0 0.0
      %3602 = vmatpush1.msra.mxu0 %v266
      %3603 = vmatprep.subr.mxu0 0.0
      %3604 = vmatpush1.msra.mxu0 %v267
      %3605 = vmatprep.subr.mxu0 0.0
      %3606 = vmatpush1.msra.mxu0 %v268
      %3607 = vmatprep.subr.mxu0 0.0
      %3608 = vmatpush1.msra.mxu0 %v269
      %3609 = vmatprep.subr.mxu0 0.0
      %3610 = vmatpush1.msra.mxu0 %v270
      %3611 = vmatprep.subr.mxu0 0.0
      %3612 = vmatpush1.msra.mxu0 %v271
      %3613 = vmatprep.mubr.f32.mxu0 %v2625
      %3614 = vmatmul.mubr.f32.gmra.mrb[0].mxu0 %v2624
      %v3615 = vpop.f32.mrb[0].mxu0
      %v3616 = vadd.f32 %v3391, %v3615
      %v3617 = vpop.f32.mrb[0].mxu0
      %3618 = vmatprep.mubr.f32.mxu0 %v2633
      %3619 = vmatmul.mubr.f32.gmra.mrb[0].mxu0 %v2632
      %v3620 = vpop.f32.mrb[0].mxu0
      %v3621 = vadd.f32 %v3396, %v3620
      %v3622 = vpop.f32.mrb[0].mxu0
      %3623 = vmatprep.mubr.f32.mxu0 %v2641
      %3624 = vmatmul.mubr.f32.gmra.mrb[0].mxu0 %v2640
      %v3625 = vpop.f32.mrb[0].mxu0
      %v3626 = vadd.f32 %v3401, %v3625
      %v3627 = vpop.f32.mrb[0].mxu0
      %3628 = vmatprep.mubr.f32.mxu0 %v2649
      %3629 = vmatmul.mubr.f32.gmra.mrb[0].mxu0 %v2648
      %v3630 = vpop.f32.mrb[0].mxu0
      %v3631 = vadd.f32 %v3406, %v3630
      %v3632 = vpop.f32.mrb[0].mxu0
      %3633 = vmatprep.mubr.f32.mxu0 %v2657
      %3634 = vmatmul.mubr.f32.gmra.mrb[0].mxu0 %v2656
      %v3635 = vpop.f32.mrb[0].mxu0
      %v3636 = vadd.f32 %v3411, %v3635
      %v3637 = vpop.f32.mrb[0].mxu0
      %3638 = vmatprep.mubr.f32.mxu0 %v2665
      %3639 = vmatmul.mubr.f32.gmra.mrb[0].mxu0 %v2664
      %v3640 = vpop.f32.mrb[0].mxu0
      %v3641 = vadd.f32 %v3416, %v3640
      %v3642 = vpop.f32.mrb[0].mxu0
      %3643 = vmatprep.mubr.f32.mxu0 %v2673
      %3644 = vmatmul.mubr.f32.gmra.mrb[0].mxu0 %v2672
      %v3645 = vpop.f32.mrb[0].mxu0
      %v3646 = vadd.f32 %v3421, %v3645
      %v3647 = vpop.f32.mrb[0].mxu0
      %3648 = vmatprep.mubr.f32.mxu0 %v2681
      %3649 = vmatmul.mubr.f32.gmra.mrb[0].mxu0 %v2680
      %v3650 = vpop.f32.mrb[0].mxu0
      %v3651 = vadd.f32 %v3426, %v3650
      %v3652 = vpop.f32.mrb[0].mxu0
      %3653 = vmatprep.mubr.f32.mxu0 %v2689
      %3654 = vmatmul.mubr.f32.gmra.mrb[0].mxu0 %v2688
      %v3655 = vpop.f32.mrb[0].mxu0
      %v3656 = vadd.f32 %v3431, %v3655
      %v3657 = vpop.f32.mrb[0].mxu0
      %3658 = vmatprep.mubr.f32.mxu0 %v2697
      %3659 = vmatmul.mubr.f32.gmra.mrb[0].mxu0 %v2696
      %v3660 = vpop.f32.mrb[0].mxu0
      %v3661 = vadd.f32 %v3436, %v3660
      %v3662 = vpop.f32.mrb[0].mxu0
      %3663 = vmatprep.mubr.f32.mxu0 %v2705
      %3664 = vmatmul.mubr.f32.gmra.mrb[0].mxu0 %v2704
      %v3665 = vpop.f32.mrb[0].mxu0
      %v3666 = vadd.f32 %v3441, %v3665
      %v3667 = vpop.f32.mrb[0].mxu0
      %3668 = vmatprep.mubr.f32.mxu0 %v2713
      %3669 = vmatmul.mubr.f32.gmra.mrb[0].mxu0 %v2712
      %v3670 = vpop.f32.mrb[0].mxu0
      %v3671 = vadd.f32 %v3446, %v3670
      %v3672 = vpop.f32.mrb[0].mxu0
      %3673 = vmatprep.mubr.f32.mxu0 %v2721
      %3674 = vmatmul.mubr.f32.gmra.mrb[0].mxu0 %v2720
      %v3675 = vpop.f32.mrb[0].mxu0
      %v3676 = vadd.f32 %v3451, %v3675
      %v3677 = vpop.f32.mrb[0].mxu0
      %3678 = vmatprep.mubr.f32.mxu0 %v2729
      %3679 = vmatmul.mubr.f32.gmra.mrb[0].mxu0 %v2728
      %v3680 = vpop.f32.mrb[0].mxu0
      %v3681 = vadd.f32 %v3456, %v3680
      %v3682 = vpop.f32.mrb[0].mxu0
      %3683 = vmatprep.mubr.f32.mxu0 %v2737
      %3684 = vmatmul.mubr.f32.gmra.mrb[0].mxu0 %v2736
      %v3685 = vpop.f32.mrb[0].mxu0
      %v3686 = vadd.f32 %v3461, %v3685
      %v3687 = vpop.f32.mrb[0].mxu0
      %3688 = vmatprep.mubr.f32.mxu0 %v2745
      %3689 = vmatmul.mubr.f32.gmra.mrb[0].mxu0 %v2744
      %v3690 = vpop.f32.mrb[0].mxu0
      %v3691 = vadd.f32 %v3466, %v3690
      %v3692 = vpop.f32.mrb[0].mxu0
      %3693 = vmatprep.mubr.f32.mxu0 %v2753
      %3694 = vmatmul.mubr.f32.gmra.mrb[0].mxu0 %v2752
      %v3695 = vpop.f32.mrb[0].mxu0
      %v3696 = vadd.f32 %v3471, %v3695
      %v3697 = vpop.f32.mrb[0].mxu0
      %3698 = vmatprep.mubr.f32.mxu0 %v2761
      %3699 = vmatmul.mubr.f32.gmra.mrb[0].mxu0 %v2760
      %v3700 = vpop.f32.mrb[0].mxu0
      %v3701 = vadd.f32 %v3476, %v3700
      %v3702 = vpop.f32.mrb[0].mxu0
      %3703 = vmatprep.mubr.f32.mxu0 %v2769
      %3704 = vmatmul.mubr.f32.gmra.mrb[0].mxu0 %v2768
      %v3705 = vpop.f32.mrb[0].mxu0
      %v3706 = vadd.f32 %v3481, %v3705
      %v3707 = vpop.f32.mrb[0].mxu0
      %3708 = vmatprep.mubr.f32.mxu0 %v2777
      %3709 = vmatmul.mubr.f32.gmra.mrb[0].mxu0 %v2776
      %v3710 = vpop.f32.mrb[0].mxu0
      %v3711 = vadd.f32 %v3486, %v3710
      %v3712 = vpop.f32.mrb[0].mxu0
      %3713 = vmatprep.mubr.f32.mxu0 %v2785
      %3714 = vmatmul.mubr.f32.gmra.mrb[0].mxu0 %v2784
      %v3715 = vpop.f32.mrb[0].mxu0
      %v3716 = vadd.f32 %v3491, %v3715
      %v3717 = vpop.f32.mrb[0].mxu0
      %3718 = vmatprep.mubr.f32.mxu0 %v2793
      %3719 = vmatmul.mubr.f32.gmra.mrb[0].mxu0 %v2792
      %v3720 = vpop.f32.mrb[0].mxu0
      %v3721 = vadd.f32 %v3496, %v3720
      %v3722 = vpop.f32.mrb[0].mxu0
      %3723 = vmatprep.mubr.f32.mxu0 %v2801
      %3724 = vmatmul.mubr.f32.gmra.mrb[0].mxu0 %v2800
      %v3725 = vpop.f32.mrb[0].mxu0
      %v3726 = vadd.f32 %v3501, %v3725
      %v3727 = vpop.f32.mrb[0].mxu0
      %3728 = vmatprep.mubr.f32.mxu0 %v2809
      %3729 = vmatmul.mubr.f32.gmra.mrb[0].mxu0 %v2808
      %v3730 = vpop.f32.mrb[0].mxu0
      %v3731 = vadd.f32 %v3506, %v3730
      %v3732 = vpop.f32.mrb[0].mxu0
      %3733 = vmatprep.mubr.f32.mxu0 %v2817
      %3734 = vmatmul.mubr.f32.gmra.mrb[0].mxu0 %v2816
      %v3735 = vpop.f32.mrb[0].mxu0
      %v3736 = vadd.f32 %v3511, %v3735
      %v3737 = vpop.f32.mrb[0].mxu0
      %3738 = vmatprep.mubr.f32.mxu0 %v2825
      %3739 = vmatmul.mubr.f32.gmra.mrb[0].mxu0 %v2824
      %v3740 = vpop.f32.mrb[0].mxu0
      %v3741 = vadd.f32 %v3516, %v3740
      %v3742 = vpop.f32.mrb[0].mxu0
      %3743 = vmatprep.mubr.f32.mxu0 %v2833
      %3744 = vmatmul.mubr.f32.gmra.mrb[0].mxu0 %v2832
      %v3745 = vpop.f32.mrb[0].mxu0
      %v3746 = vadd.f32 %v3521, %v3745
      %v3747 = vpop.f32.mrb[0].mxu0
      %3748 = vmatprep.mubr.f32.mxu0 %v2841
      %3749 = vmatmul.mubr.f32.gmra.mrb[0].mxu0 %v2840
      %v3750 = vpop.f32.mrb[0].mxu0
      %v3751 = vadd.f32 %v3526, %v3750
      %v3752 = vpop.f32.mrb[0].mxu0
      %3753 = vmatprep.mubr.f32.mxu0 %v2849
      %3754 = vmatmul.mubr.f32.gmra.mrb[0].mxu0 %v2848
      %v3755 = vpop.f32.mrb[0].mxu0
      %v3756 = vadd.f32 %v3531, %v3755
      %v3757 = vpop.f32.mrb[0].mxu0
      %3758 = vmatprep.mubr.f32.mxu0 %v2857
      %3759 = vmatmul.mubr.f32.gmra.mrb[0].mxu0 %v2856
      %v3760 = vpop.f32.mrb[0].mxu0
      %v3761 = vadd.f32 %v3536, %v3760
      %v3762 = vpop.f32.mrb[0].mxu0
      %3763 = vmatprep.mubr.f32.mxu0 %v2865
      %3764 = vmatmul.mubr.f32.gmra.mrb[0].mxu0 %v2864
      %v3765 = vpop.f32.mrb[0].mxu0
      %v3766 = vadd.f32 %v3541, %v3765
      %v3767 = vpop.f32.mrb[0].mxu0
      %3768 = vmatprep.mubr.f32.mxu0 %v2873
      %3769 = vmatmul.mubr.f32.gmra.mrb[0].mxu0 %v2872
      %v3770 = vpop.f32.mrb[0].mxu0
      %v3771 = vadd.f32 %v3546, %v3770
      %v3772 = vpop.f32.mrb[0].mxu0
      %3773 = vdwg.mxu0
      %v3774 = vmax.f32 %v2585, %v3616
      %v3775 = vmax.f32 %v2586, %v3621
      %v3776 = vmax.f32 %v2587, %v3626
      %v3777 = vmax.f32 %v2588, %v3631
      %v3778 = vmax.f32 %v2589, %v3636
      %v3779 = vmax.f32 %v2590, %v3641
      %v3780 = vmax.f32 %v2591, %v3646
      %v3781 = vmax.f32 %v2592, %v3651
      %v3782 = vmax.f32 %v2593, %v3656
      %v3783 = vmax.f32 %v2594, %v3661
      %v3784 = vmax.f32 %v2595, %v3666
      %v3785 = vmax.f32 %v2596, %v3671
      %v3786 = vmax.f32 %v2597, %v3676
      %v3787 = vmax.f32 %v2598, %v3681
      %v3788 = vmax.f32 %v2599, %v3686
      %v3789 = vmax.f32 %v2600, %v3691
      %v3790 = vmax.f32 %v2601, %v3696
      %v3791 = vmax.f32 %v2602, %v3701
      %v3792 = vmax.f32 %v2603, %v3706
      %v3793 = vmax.f32 %v2604, %v3711
      %v3794 = vmax.f32 %v2605, %v3716
      %v3795 = vmax.f32 %v2606, %v3721
      %v3796 = vmax.f32 %v2607, %v3726
      %v3797 = vmax.f32 %v2608, %v3731
      %v3798 = vmax.f32 %v2609, %v3736
      %v3799 = vmax.f32 %v2610, %v3741
      %v3800 = vmax.f32 %v2611, %v3746
      %v3801 = vmax.f32 %v2612, %v3751
      %v3802 = vmax.f32 %v2613, %v3756
      %v3803 = vmax.f32 %v2614, %v3761
      %v3804 = vmax.f32 %v2615, %v3766
      %v3805 = vmax.f32 %v2616, %v3771
      %s3806 = scalar_lea.vmem %s1, 6144
      %v3807 = vld [vmem:[%s3806] sm:$0xff]
      %v3808 = vld [vmem:[%s3806 + $0x8] sm:$0xff]
      %v3809 = vld [vmem:[%s3806 + $0x10] sm:$0xff]
      %v3810 = vld [vmem:[%s3806 + $0x18] sm:$0xff]
      %v3811 = vld [vmem:[%s3806 + $0x20] sm:$0xff]
      %v3812 = vld [vmem:[%s3806 + $0x28] sm:$0xff]
      %v3813 = vld [vmem:[%s3806 + $0x30] sm:$0xff]
      %v3814 = vld [vmem:[%s3806 + $0x38] sm:$0xff]
      %v3815 = vld [vmem:[%s3806 + $0x40] sm:$0xff]
      %v3816 = vld [vmem:[%s3806 + $0x48] sm:$0xff]
      %v3817 = vld [vmem:[%s3806 + $0x50] sm:$0xff]
      %v3818 = vld [vmem:[%s3806 + $0x58] sm:$0xff]
      %v3819 = vld [vmem:[%s3806 + $0x60] sm:$0xff]
      %v3820 = vld [vmem:[%s3806 + $0x68] sm:$0xff]
      %v3821 = vld [vmem:[%s3806 + $0x70] sm:$0xff]
      %v3822 = vld [vmem:[%s3806 + $0x78] sm:$0xff]
      %v3823 = vld [vmem:[%s3806 + $0x80] sm:$0xff]
      %v3824 = vld [vmem:[%s3806 + $0x88] sm:$0xff]
      %v3825 = vld [vmem:[%s3806 + $0x90] sm:$0xff]
      %v3826 = vld [vmem:[%s3806 + $0x98] sm:$0xff]
      %v3827 = vld [vmem:[%s3806 + $0xa0] sm:$0xff]
      %v3828 = vld [vmem:[%s3806 + $0xa8] sm:$0xff]
      %v3829 = vld [vmem:[%s3806 + $0xb0] sm:$0xff]
      %v3830 = vld [vmem:[%s3806 + $0xb8] sm:$0xff]
      %v3831 = vld [vmem:[%s3806 + $0xc0] sm:$0xff]
      %v3832 = vld [vmem:[%s3806 + $0xc8] sm:$0xff]
      %v3833 = vld [vmem:[%s3806 + $0xd0] sm:$0xff]
      %v3834 = vld [vmem:[%s3806 + $0xd8] sm:$0xff]
      %v3835 = vld [vmem:[%s3806 + $0xe0] sm:$0xff]
      %v3836 = vld [vmem:[%s3806 + $0xe8] sm:$0xff]
      %v3837 = vld [vmem:[%s3806 + $0xf0] sm:$0xff]
      %v3838 = vld [vmem:[%s3806 + $0xf8] sm:$0xff]
      %v3839 = vld [vmem:[%s3806 + $0x100] sm:$0xff]
      %v3840 = vld [vmem:[%s3806 + $0x108] sm:$0xff]
      %v3841 = vld [vmem:[%s3806 + $0x110] sm:$0xff]
      %v3842 = vld [vmem:[%s3806 + $0x118] sm:$0xff]
      %v3843 = vld [vmem:[%s3806 + $0x120] sm:$0xff]
      %v3844 = vld [vmem:[%s3806 + $0x128] sm:$0xff]
      %v3845 = vld [vmem:[%s3806 + $0x130] sm:$0xff]
      %v3846 = vld [vmem:[%s3806 + $0x138] sm:$0xff]
      %v3847 = vld [vmem:[%s3806 + $0x140] sm:$0xff]
      %v3848 = vld [vmem:[%s3806 + $0x148] sm:$0xff]
      %v3849 = vld [vmem:[%s3806 + $0x150] sm:$0xff]
      %v3850 = vld [vmem:[%s3806 + $0x158] sm:$0xff]
      %v3851 = vld [vmem:[%s3806 + $0x160] sm:$0xff]
      %v3852 = vld [vmem:[%s3806 + $0x168] sm:$0xff]
      %v3853 = vld [vmem:[%s3806 + $0x170] sm:$0xff]
      %v3854 = vld [vmem:[%s3806 + $0x178] sm:$0xff]
      %v3855 = vld [vmem:[%s3806 + $0x180] sm:$0xff]
      %v3856 = vld [vmem:[%s3806 + $0x188] sm:$0xff]
      %v3857 = vld [vmem:[%s3806 + $0x190] sm:$0xff]
      %v3858 = vld [vmem:[%s3806 + $0x198] sm:$0xff]
      %v3859 = vld [vmem:[%s3806 + $0x1a0] sm:$0xff]
      %v3860 = vld [vmem:[%s3806 + $0x1a8] sm:$0xff]
      %v3861 = vld [vmem:[%s3806 + $0x1b0] sm:$0xff]
      %v3862 = vld [vmem:[%s3806 + $0x1b8] sm:$0xff]
      %v3863 = vld [vmem:[%s3806 + $0x1c0] sm:$0xff]
      %v3864 = vld [vmem:[%s3806 + $0x1c8] sm:$0xff]
      %v3865 = vld [vmem:[%s3806 + $0x1d0] sm:$0xff]
      %v3866 = vld [vmem:[%s3806 + $0x1d8] sm:$0xff]
      %v3867 = vld [vmem:[%s3806 + $0x1e0] sm:$0xff]
      %v3868 = vld [vmem:[%s3806 + $0x1e8] sm:$0xff]
      %v3869 = vld [vmem:[%s3806 + $0x1f0] sm:$0xff]
      %v3870 = vld [vmem:[%s3806 + $0x1f8] sm:$0xff]
      %v3871 = vld [vmem:[%s3806 + $0x200] sm:$0xff]
      %v3872 = vld [vmem:[%s3806 + $0x208] sm:$0xff]
      %v3873 = vld [vmem:[%s3806 + $0x210] sm:$0xff]
      %v3874 = vld [vmem:[%s3806 + $0x218] sm:$0xff]
      %v3875 = vld [vmem:[%s3806 + $0x220] sm:$0xff]
      %v3876 = vld [vmem:[%s3806 + $0x228] sm:$0xff]
      %v3877 = vld [vmem:[%s3806 + $0x230] sm:$0xff]
      %v3878 = vld [vmem:[%s3806 + $0x238] sm:$0xff]
      %v3879 = vld [vmem:[%s3806 + $0x240] sm:$0xff]
      %v3880 = vld [vmem:[%s3806 + $0x248] sm:$0xff]
      %v3881 = vld [vmem:[%s3806 + $0x250] sm:$0xff]
      %v3882 = vld [vmem:[%s3806 + $0x258] sm:$0xff]
      %v3883 = vld [vmem:[%s3806 + $0x260] sm:$0xff]
      %v3884 = vld [vmem:[%s3806 + $0x268] sm:$0xff]
      %v3885 = vld [vmem:[%s3806 + $0x270] sm:$0xff]
      %v3886 = vld [vmem:[%s3806 + $0x278] sm:$0xff]
      %v3887 = vld [vmem:[%s3806 + $0x280] sm:$0xff]
      %v3888 = vld [vmem:[%s3806 + $0x288] sm:$0xff]
      %v3889 = vld [vmem:[%s3806 + $0x290] sm:$0xff]
      %v3890 = vld [vmem:[%s3806 + $0x298] sm:$0xff]
      %v3891 = vld [vmem:[%s3806 + $0x2a0] sm:$0xff]
      %v3892 = vld [vmem:[%s3806 + $0x2a8] sm:$0xff]
      %v3893 = vld [vmem:[%s3806 + $0x2b0] sm:$0xff]
      %v3894 = vld [vmem:[%s3806 + $0x2b8] sm:$0xff]
      %v3895 = vld [vmem:[%s3806 + $0x2c0] sm:$0xff]
      %v3896 = vld [vmem:[%s3806 + $0x2c8] sm:$0xff]
      %v3897 = vld [vmem:[%s3806 + $0x2d0] sm:$0xff]
      %v3898 = vld [vmem:[%s3806 + $0x2d8] sm:$0xff]
      %v3899 = vld [vmem:[%s3806 + $0x2e0] sm:$0xff]
      %v3900 = vld [vmem:[%s3806 + $0x2e8] sm:$0xff]
      %v3901 = vld [vmem:[%s3806 + $0x2f0] sm:$0xff]
      %v3902 = vld [vmem:[%s3806 + $0x2f8] sm:$0xff]
      %v3903 = vld [vmem:[%s3806 + $0x300] sm:$0xff]
      %v3904 = vld [vmem:[%s3806 + $0x308] sm:$0xff]
      %v3905 = vld [vmem:[%s3806 + $0x310] sm:$0xff]
      %v3906 = vld [vmem:[%s3806 + $0x318] sm:$0xff]
      %v3907 = vld [vmem:[%s3806 + $0x320] sm:$0xff]
      %v3908 = vld [vmem:[%s3806 + $0x328] sm:$0xff]
      %v3909 = vld [vmem:[%s3806 + $0x330] sm:$0xff]
      %v3910 = vld [vmem:[%s3806 + $0x338] sm:$0xff]
      %v3911 = vld [vmem:[%s3806 + $0x340] sm:$0xff]
      %v3912 = vld [vmem:[%s3806 + $0x348] sm:$0xff]
      %v3913 = vld [vmem:[%s3806 + $0x350] sm:$0xff]
      %v3914 = vld [vmem:[%s3806 + $0x358] sm:$0xff]
      %v3915 = vld [vmem:[%s3806 + $0x360] sm:$0xff]
      %v3916 = vld [vmem:[%s3806 + $0x368] sm:$0xff]
      %v3917 = vld [vmem:[%s3806 + $0x370] sm:$0xff]
      %v3918 = vld [vmem:[%s3806 + $0x378] sm:$0xff]
      %v3919 = vld [vmem:[%s3806 + $0x380] sm:$0xff]
      %v3920 = vld [vmem:[%s3806 + $0x388] sm:$0xff]
      %v3921 = vld [vmem:[%s3806 + $0x390] sm:$0xff]
      %v3922 = vld [vmem:[%s3806 + $0x398] sm:$0xff]
      %v3923 = vld [vmem:[%s3806 + $0x3a0] sm:$0xff]
      %v3924 = vld [vmem:[%s3806 + $0x3a8] sm:$0xff]
      %v3925 = vld [vmem:[%s3806 + $0x3b0] sm:$0xff]
      %v3926 = vld [vmem:[%s3806 + $0x3b8] sm:$0xff]
      %v3927 = vld [vmem:[%s3806 + $0x3c0] sm:$0xff]
      %v3928 = vld [vmem:[%s3806 + $0x3c8] sm:$0xff]
      %v3929 = vld [vmem:[%s3806 + $0x3d0] sm:$0xff]
      %v3930 = vld [vmem:[%s3806 + $0x3d8] sm:$0xff]
      %v3931 = vld [vmem:[%s3806 + $0x3e0] sm:$0xff]
      %v3932 = vld [vmem:[%s3806 + $0x3e8] sm:$0xff]
      %v3933 = vld [vmem:[%s3806 + $0x3f0] sm:$0xff]
      %v3934 = vld [vmem:[%s3806 + $0x3f8] sm:$0xff]
      %v3935 = vld [vmem:[%s3806 + $0x400] sm:$0xff]
      %v3936 = vld [vmem:[%s3806 + $0x408] sm:$0xff]
      %v3937 = vld [vmem:[%s3806 + $0x410] sm:$0xff]
      %v3938 = vld [vmem:[%s3806 + $0x418] sm:$0xff]
      %v3939 = vld [vmem:[%s3806 + $0x420] sm:$0xff]
      %v3940 = vld [vmem:[%s3806 + $0x428] sm:$0xff]
      %v3941 = vld [vmem:[%s3806 + $0x430] sm:$0xff]
      %v3942 = vld [vmem:[%s3806 + $0x438] sm:$0xff]
      %v3943 = vld [vmem:[%s3806 + $0x440] sm:$0xff]
      %v3944 = vld [vmem:[%s3806 + $0x448] sm:$0xff]
      %v3945 = vld [vmem:[%s3806 + $0x450] sm:$0xff]
      %v3946 = vld [vmem:[%s3806 + $0x458] sm:$0xff]
      %v3947 = vld [vmem:[%s3806 + $0x460] sm:$0xff]
      %v3948 = vld [vmem:[%s3806 + $0x468] sm:$0xff]
      %v3949 = vld [vmem:[%s3806 + $0x470] sm:$0xff]
      %v3950 = vld [vmem:[%s3806 + $0x478] sm:$0xff]
      %v3951 = vld [vmem:[%s3806 + $0x480] sm:$0xff]
      %v3952 = vld [vmem:[%s3806 + $0x488] sm:$0xff]
      %v3953 = vld [vmem:[%s3806 + $0x490] sm:$0xff]
      %v3954 = vld [vmem:[%s3806 + $0x498] sm:$0xff]
      %v3955 = vld [vmem:[%s3806 + $0x4a0] sm:$0xff]
      %v3956 = vld [vmem:[%s3806 + $0x4a8] sm:$0xff]
      %v3957 = vld [vmem:[%s3806 + $0x4b0] sm:$0xff]
      %v3958 = vld [vmem:[%s3806 + $0x4b8] sm:$0xff]
      %v3959 = vld [vmem:[%s3806 + $0x4c0] sm:$0xff]
      %v3960 = vld [vmem:[%s3806 + $0x4c8] sm:$0xff]
      %v3961 = vld [vmem:[%s3806 + $0x4d0] sm:$0xff]
      %v3962 = vld [vmem:[%s3806 + $0x4d8] sm:$0xff]
      %v3963 = vld [vmem:[%s3806 + $0x4e0] sm:$0xff]
      %v3964 = vld [vmem:[%s3806 + $0x4e8] sm:$0xff]
      %v3965 = vld [vmem:[%s3806 + $0x4f0] sm:$0xff]
      %v3966 = vld [vmem:[%s3806 + $0x4f8] sm:$0xff]
      %v3967 = vld [vmem:[%s3806 + $0x500] sm:$0xff]
      %v3968 = vld [vmem:[%s3806 + $0x508] sm:$0xff]
      %v3969 = vld [vmem:[%s3806 + $0x510] sm:$0xff]
      %v3970 = vld [vmem:[%s3806 + $0x518] sm:$0xff]
      %v3971 = vld [vmem:[%s3806 + $0x520] sm:$0xff]
      %v3972 = vld [vmem:[%s3806 + $0x528] sm:$0xff]
      %v3973 = vld [vmem:[%s3806 + $0x530] sm:$0xff]
      %v3974 = vld [vmem:[%s3806 + $0x538] sm:$0xff]
      %v3975 = vld [vmem:[%s3806 + $0x540] sm:$0xff]
      %v3976 = vld [vmem:[%s3806 + $0x548] sm:$0xff]
      %v3977 = vld [vmem:[%s3806 + $0x550] sm:$0xff]
      %v3978 = vld [vmem:[%s3806 + $0x558] sm:$0xff]
      %v3979 = vld [vmem:[%s3806 + $0x560] sm:$0xff]
      %v3980 = vld [vmem:[%s3806 + $0x568] sm:$0xff]
      %v3981 = vld [vmem:[%s3806 + $0x570] sm:$0xff]
      %v3982 = vld [vmem:[%s3806 + $0x578] sm:$0xff]
      %v3983 = vld [vmem:[%s3806 + $0x580] sm:$0xff]
      %v3984 = vld [vmem:[%s3806 + $0x588] sm:$0xff]
      %v3985 = vld [vmem:[%s3806 + $0x590] sm:$0xff]
      %v3986 = vld [vmem:[%s3806 + $0x598] sm:$0xff]
      %v3987 = vld [vmem:[%s3806 + $0x5a0] sm:$0xff]
      %v3988 = vld [vmem:[%s3806 + $0x5a8] sm:$0xff]
      %v3989 = vld [vmem:[%s3806 + $0x5b0] sm:$0xff]
      %v3990 = vld [vmem:[%s3806 + $0x5b8] sm:$0xff]
      %v3991 = vld [vmem:[%s3806 + $0x5c0] sm:$0xff]
      %v3992 = vld [vmem:[%s3806 + $0x5c8] sm:$0xff]
      %v3993 = vld [vmem:[%s3806 + $0x5d0] sm:$0xff]
      %v3994 = vld [vmem:[%s3806 + $0x5d8] sm:$0xff]
      %v3995 = vld [vmem:[%s3806 + $0x5e0] sm:$0xff]
      %v3996 = vld [vmem:[%s3806 + $0x5e8] sm:$0xff]
      %v3997 = vld [vmem:[%s3806 + $0x5f0] sm:$0xff]
      %v3998 = vld [vmem:[%s3806 + $0x5f8] sm:$0xff]
      %v3999 = vld [vmem:[%s3806 + $0x600] sm:$0xff]
      %v4000 = vld [vmem:[%s3806 + $0x608] sm:$0xff]
      %v4001 = vld [vmem:[%s3806 + $0x610] sm:$0xff]
      %v4002 = vld [vmem:[%s3806 + $0x618] sm:$0xff]
      %v4003 = vld [vmem:[%s3806 + $0x620] sm:$0xff]
      %v4004 = vld [vmem:[%s3806 + $0x628] sm:$0xff]
      %v4005 = vld [vmem:[%s3806 + $0x630] sm:$0xff]
      %v4006 = vld [vmem:[%s3806 + $0x638] sm:$0xff]
      %v4007 = vld [vmem:[%s3806 + $0x640] sm:$0xff]
      %v4008 = vld [vmem:[%s3806 + $0x648] sm:$0xff]
      %v4009 = vld [vmem:[%s3806 + $0x650] sm:$0xff]
      %v4010 = vld [vmem:[%s3806 + $0x658] sm:$0xff]
      %v4011 = vld [vmem:[%s3806 + $0x660] sm:$0xff]
      %v4012 = vld [vmem:[%s3806 + $0x668] sm:$0xff]
      %v4013 = vld [vmem:[%s3806 + $0x670] sm:$0xff]
      %v4014 = vld [vmem:[%s3806 + $0x678] sm:$0xff]
      %v4015 = vld [vmem:[%s3806 + $0x680] sm:$0xff]
      %v4016 = vld [vmem:[%s3806 + $0x688] sm:$0xff]
      %v4017 = vld [vmem:[%s3806 + $0x690] sm:$0xff]
      %v4018 = vld [vmem:[%s3806 + $0x698] sm:$0xff]
      %v4019 = vld [vmem:[%s3806 + $0x6a0] sm:$0xff]
      %v4020 = vld [vmem:[%s3806 + $0x6a8] sm:$0xff]
      %v4021 = vld [vmem:[%s3806 + $0x6b0] sm:$0xff]
      %v4022 = vld [vmem:[%s3806 + $0x6b8] sm:$0xff]
      %v4023 = vld [vmem:[%s3806 + $0x6c0] sm:$0xff]
      %v4024 = vld [vmem:[%s3806 + $0x6c8] sm:$0xff]
      %v4025 = vld [vmem:[%s3806 + $0x6d0] sm:$0xff]
      %v4026 = vld [vmem:[%s3806 + $0x6d8] sm:$0xff]
      %v4027 = vld [vmem:[%s3806 + $0x6e0] sm:$0xff]
      %v4028 = vld [vmem:[%s3806 + $0x6e8] sm:$0xff]
      %v4029 = vld [vmem:[%s3806 + $0x6f0] sm:$0xff]
      %v4030 = vld [vmem:[%s3806 + $0x6f8] sm:$0xff]
      %v4031 = vld [vmem:[%s3806 + $0x700] sm:$0xff]
      %v4032 = vld [vmem:[%s3806 + $0x708] sm:$0xff]
      %v4033 = vld [vmem:[%s3806 + $0x710] sm:$0xff]
      %v4034 = vld [vmem:[%s3806 + $0x718] sm:$0xff]
      %v4035 = vld [vmem:[%s3806 + $0x720] sm:$0xff]
      %v4036 = vld [vmem:[%s3806 + $0x728] sm:$0xff]
      %v4037 = vld [vmem:[%s3806 + $0x730] sm:$0xff]
      %v4038 = vld [vmem:[%s3806 + $0x738] sm:$0xff]
      %v4039 = vld [vmem:[%s3806 + $0x740] sm:$0xff]
      %v4040 = vld [vmem:[%s3806 + $0x748] sm:$0xff]
      %v4041 = vld [vmem:[%s3806 + $0x750] sm:$0xff]
      %v4042 = vld [vmem:[%s3806 + $0x758] sm:$0xff]
      %v4043 = vld [vmem:[%s3806 + $0x760] sm:$0xff]
      %v4044 = vld [vmem:[%s3806 + $0x768] sm:$0xff]
      %v4045 = vld [vmem:[%s3806 + $0x770] sm:$0xff]
      %v4046 = vld [vmem:[%s3806 + $0x778] sm:$0xff]
      %v4047 = vld [vmem:[%s3806 + $0x780] sm:$0xff]
      %v4048 = vld [vmem:[%s3806 + $0x788] sm:$0xff]
      %v4049 = vld [vmem:[%s3806 + $0x790] sm:$0xff]
      %v4050 = vld [vmem:[%s3806 + $0x798] sm:$0xff]
      %v4051 = vld [vmem:[%s3806 + $0x7a0] sm:$0xff]
      %v4052 = vld [vmem:[%s3806 + $0x7a8] sm:$0xff]
      %v4053 = vld [vmem:[%s3806 + $0x7b0] sm:$0xff]
      %v4054 = vld [vmem:[%s3806 + $0x7b8] sm:$0xff]
      %v4055 = vld [vmem:[%s3806 + $0x7c0] sm:$0xff]
      %v4056 = vld [vmem:[%s3806 + $0x7c8] sm:$0xff]
      %v4057 = vld [vmem:[%s3806 + $0x7d0] sm:$0xff]
      %v4058 = vld [vmem:[%s3806 + $0x7d8] sm:$0xff]
      %v4059 = vld [vmem:[%s3806 + $0x7e0] sm:$0xff]
      %v4060 = vld [vmem:[%s3806 + $0x7e8] sm:$0xff]
      %v4061 = vld [vmem:[%s3806 + $0x7f0] sm:$0xff]
      %v4062 = vld [vmem:[%s3806 + $0x7f8] sm:$0xff]
      %4063 = vmatprep.subr.mxu0 0.0
      %4064 = vmatpush1.msra.mxu0 %v144
      %4065 = vmatprep.subr.mxu0 0.0
      %4066 = vmatpush1.msra.mxu0 %v145
      %4067 = vmatprep.subr.mxu0 0.0
      %4068 = vmatpush1.msra.mxu0 %v146
      %4069 = vmatprep.subr.mxu0 0.0
      %4070 = vmatpush1.msra.mxu0 %v147
      %4071 = vmatprep.subr.mxu0 0.0
      %4072 = vmatpush1.msra.mxu0 %v148
      %4073 = vmatprep.subr.mxu0 0.0
      %4074 = vmatpush1.msra.mxu0 %v149
      %4075 = vmatprep.subr.mxu0 0.0
      %4076 = vmatpush1.msra.mxu0 %v150
      %4077 = vmatprep.subr.mxu0 0.0
      %4078 = vmatpush1.msra.mxu0 %v151
      %4079 = vmatprep.subr.mxu0 0.0
      %4080 = vmatpush1.msra.mxu0 %v152
      %4081 = vmatprep.subr.mxu0 0.0
      %4082 = vmatpush1.msra.mxu0 %v153
      %4083 = vmatprep.subr.mxu0 0.0
      %4084 = vmatpush1.msra.mxu0 %v154
      %4085 = vmatprep.subr.mxu0 0.0
      %4086 = vmatpush1.msra.mxu0 %v155
      %4087 = vmatprep.subr.mxu0 0.0
      %4088 = vmatpush1.msra.mxu0 %v156
      %4089 = vmatprep.subr.mxu0 0.0
      %4090 = vmatpush1.msra.mxu0 %v157
      %4091 = vmatprep.subr.mxu0 0.0
      %4092 = vmatpush1.msra.mxu0 %v158
      %4093 = vmatprep.subr.mxu0 0.0
      %4094 = vmatpush1.msra.mxu0 %v159
      %4095 = vmatprep.subr.mxu0 0.0
      %4096 = vmatpush1.msra.mxu0 %v160
      %4097 = vmatprep.subr.mxu0 0.0
      %4098 = vmatpush1.msra.mxu0 %v161
      %4099 = vmatprep.subr.mxu0 0.0
      %4100 = vmatpush1.msra.mxu0 %v162
      %4101 = vmatprep.subr.mxu0 0.0
      %4102 = vmatpush1.msra.mxu0 %v163
      %4103 = vmatprep.subr.mxu0 0.0
      %4104 = vmatpush1.msra.mxu0 %v164
      %4105 = vmatprep.subr.mxu0 0.0
      %4106 = vmatpush1.msra.mxu0 %v165
      %4107 = vmatprep.subr.mxu0 0.0
      %4108 = vmatpush1.msra.mxu0 %v166
      %4109 = vmatprep.subr.mxu0 0.0
      %4110 = vmatpush1.msra.mxu0 %v167
      %4111 = vmatprep.subr.mxu0 0.0
      %4112 = vmatpush1.msra.mxu0 %v168
      %4113 = vmatprep.subr.mxu0 0.0
      %4114 = vmatpush1.msra.mxu0 %v169
      %4115 = vmatprep.subr.mxu0 0.0
      %4116 = vmatpush1.msra.mxu0 %v170
      %4117 = vmatprep.subr.mxu0 0.0
      %4118 = vmatpush1.msra.mxu0 %v171
      %4119 = vmatprep.subr.mxu0 0.0
      %4120 = vmatpush1.msra.mxu0 %v172
      %4121 = vmatprep.subr.mxu0 0.0
      %4122 = vmatpush1.msra.mxu0 %v173
      %4123 = vmatprep.subr.mxu0 0.0
      %4124 = vmatpush1.msra.mxu0 %v174
      %4125 = vmatprep.subr.mxu0 0.0
      %4126 = vmatpush1.msra.mxu0 %v175
      %4127 = vmatprep.mubr.f32.mxu0 %v3808
      %4128 = vmatmul.mubr.f32.gmra.mrb[0].mxu0 %v3807
      %v4129 = vpop.f32.mrb[0].mxu0
      %v4130 = vadd.f32 0.0, %v4129
      %v4131 = vpop.f32.mrb[0].mxu0
      %4132 = vmatprep.mubr.f32.mxu0 %v3816
      %4133 = vmatmul.mubr.f32.gmra.mrb[0].mxu0 %v3815
      %v4134 = vpop.f32.mrb[0].mxu0
      %v4135 = vadd.f32 0.0, %v4134
      %v4136 = vpop.f32.mrb[0].mxu0
      %4137 = vmatprep.mubr.f32.mxu0 %v3824
      %4138 = vmatmul.mubr.f32.gmra.mrb[0].mxu0 %v3823
      %v4139 = vpop.f32.mrb[0].mxu0
      %v4140 = vadd.f32 0.0, %v4139
      %v4141 = vpop.f32.mrb[0].mxu0
      %4142 = vmatprep.mubr.f32.mxu0 %v3832
      %4143 = vmatmul.mubr.f32.gmra.mrb[0].mxu0 %v3831
      %v4144 = vpop.f32.mrb[0].mxu0
      %v4145 = vadd.f32 0.0, %v4144
      %v4146 = vpop.f32.mrb[0].mxu0
      %4147 = vmatprep.mubr.f32.mxu0 %v3840
      %4148 = vmatmul.mubr.f32.gmra.mrb[0].mxu0 %v3839
      %v4149 = vpop.f32.mrb[0].mxu0
      %v4150 = vadd.f32 0.0, %v4149
      %v4151 = vpop.f32.mrb[0].mxu0
      %4152 = vmatprep.mubr.f32.mxu0 %v3848
      %4153 = vmatmul.mubr.f32.gmra.mrb[0].mxu0 %v3847
      %v4154 = vpop.f32.mrb[0].mxu0
      %v4155 = vadd.f32 0.0, %v4154
      %v4156 = vpop.f32.mrb[0].mxu0
      %4157 = vmatprep.mubr.f32.mxu0 %v3856
      %4158 = vmatmul.mubr.f32.gmra.mrb[0].mxu0 %v3855
      %v4159 = vpop.f32.mrb[0].mxu0
      %v4160 = vadd.f32 0.0, %v4159
      %v4161 = vpop.f32.mrb[0].mxu0
      %4162 = vmatprep.mubr.f32.mxu0 %v3864
      %4163 = vmatmul.mubr.f32.gmra.mrb[0].mxu0 %v3863
      %v4164 = vpop.f32.mrb[0].mxu0
      %v4165 = vadd.f32 0.0, %v4164
      %v4166 = vpop.f32.mrb[0].mxu0
      %4167 = vmatprep.mubr.f32.mxu0 %v3872
      %4168 = vmatmul.mubr.f32.gmra.mrb[0].mxu0 %v3871
      %v4169 = vpop.f32.mrb[0].mxu0
      %v4170 = vadd.f32 0.0, %v4169
      %v4171 = vpop.f32.mrb[0].mxu0
      %4172 = vmatprep.mubr.f32.mxu0 %v3880
      %4173 = vmatmul.mubr.f32.gmra.mrb[0].mxu0 %v3879
      %v4174 = vpop.f32.mrb[0].mxu0
      %v4175 = vadd.f32 0.0, %v4174
      %v4176 = vpop.f32.mrb[0].mxu0
      %4177 = vmatprep.mubr.f32.mxu0 %v3888
      %4178 = vmatmul.mubr.f32.gmra.mrb[0].mxu0 %v3887
      %v4179 = vpop.f32.mrb[0].mxu0
      %v4180 = vadd.f32 0.0, %v4179
      %v4181 = vpop.f32.mrb[0].mxu0
      %4182 = vmatprep.mubr.f32.mxu0 %v3896
      %4183 = vmatmul.mubr.f32.gmra.mrb[0].mxu0 %v3895
      %v4184 = vpop.f32.mrb[0].mxu0
      %v4185 = vadd.f32 0.0, %v4184
      %v4186 = vpop.f32.mrb[0].mxu0
      %4187 = vmatprep.mubr.f32.mxu0 %v3904
      %4188 = vmatmul.mubr.f32.gmra.mrb[0].mxu0 %v3903
      %v4189 = vpop.f32.mrb[0].mxu0
      %v4190 = vadd.f32 0.0, %v4189
      %v4191 = vpop.f32.mrb[0].mxu0
      %4192 = vmatprep.mubr.f32.mxu0 %v3912
      %4193 = vmatmul.mubr.f32.gmra.mrb[0].mxu0 %v3911
      %v4194 = vpop.f32.mrb[0].mxu0
      %v4195 = vadd.f32 0.0, %v4194
      %v4196 = vpop.f32.mrb[0].mxu0
      %4197 = vmatprep.mubr.f32.mxu0 %v3920
      %4198 = vmatmul.mubr.f32.gmra.mrb[0].mxu0 %v3919
      %v4199 = vpop.f32.mrb[0].mxu0
      %v4200 = vadd.f32 0.0, %v4199
      %v4201 = vpop.f32.mrb[0].mxu0
      %4202 = vmatprep.mubr.f32.mxu0 %v3928
      %4203 = vmatmul.mubr.f32.gmra.mrb[0].mxu0 %v3927
      %v4204 = vpop.f32.mrb[0].mxu0
      %v4205 = vadd.f32 0.0, %v4204
      %v4206 = vpop.f32.mrb[0].mxu0
      %4207 = vmatprep.mubr.f32.mxu0 %v3936
      %4208 = vmatmul.mubr.f32.gmra.mrb[0].mxu0 %v3935
      %v4209 = vpop.f32.mrb[0].mxu0
      %v4210 = vadd.f32 0.0, %v4209
      %v4211 = vpop.f32.mrb[0].mxu0
      %4212 = vmatprep.mubr.f32.mxu0 %v3944
      %4213 = vmatmul.mubr.f32.gmra.mrb[0].mxu0 %v3943
      %v4214 = vpop.f32.mrb[0].mxu0
      %v4215 = vadd.f32 0.0, %v4214
      %v4216 = vpop.f32.mrb[0].mxu0
      %4217 = vmatprep.mubr.f32.mxu0 %v3952
      %4218 = vmatmul.mubr.f32.gmra.mrb[0].mxu0 %v3951
      %v4219 = vpop.f32.mrb[0].mxu0
      %v4220 = vadd.f32 0.0, %v4219
      %v4221 = vpop.f32.mrb[0].mxu0
      %4222 = vmatprep.mubr.f32.mxu0 %v3960
      %4223 = vmatmul.mubr.f32.gmra.mrb[0].mxu0 %v3959
      %v4224 = vpop.f32.mrb[0].mxu0
      %v4225 = vadd.f32 0.0, %v4224
      %v4226 = vpop.f32.mrb[0].mxu0
      %4227 = vmatprep.mubr.f32.mxu0 %v3968
      %4228 = vmatmul.mubr.f32.gmra.mrb[0].mxu0 %v3967
      %v4229 = vpop.f32.mrb[0].mxu0
      %v4230 = vadd.f32 0.0, %v4229
      %v4231 = vpop.f32.mrb[0].mxu0
      %4232 = vmatprep.mubr.f32.mxu0 %v3976
      %4233 = vmatmul.mubr.f32.gmra.mrb[0].mxu0 %v3975
      %v4234 = vpop.f32.mrb[0].mxu0
      %v4235 = vadd.f32 0.0, %v4234
      %v4236 = vpop.f32.mrb[0].mxu0
      %4237 = vmatprep.mubr.f32.mxu0 %v3984
      %4238 = vmatmul.mubr.f32.gmra.mrb[0].mxu0 %v3983
      %v4239 = vpop.f32.mrb[0].mxu0
      %v4240 = vadd.f32 0.0, %v4239
      %v4241 = vpop.f32.mrb[0].mxu0
      %4242 = vmatprep.mubr.f32.mxu0 %v3992
      %4243 = vmatmul.mubr.f32.gmra.mrb[0].mxu0 %v3991
      %v4244 = vpop.f32.mrb[0].mxu0
      %v4245 = vadd.f32 0.0, %v4244
      %v4246 = vpop.f32.mrb[0].mxu0
      %4247 = vmatprep.mubr.f32.mxu0 %v4000
      %4248 = vmatmul.mubr.f32.gmra.mrb[0].mxu0 %v3999
      %v4249 = vpop.f32.mrb[0].mxu0
      %v4250 = vadd.f32 0.0, %v4249
      %v4251 = vpop.f32.mrb[0].mxu0
      %4252 = vmatprep.mubr.f32.mxu0 %v4008
      %4253 = vmatmul.mubr.f32.gmra.mrb[0].mxu0 %v4007
      %v4254 = vpop.f32.mrb[0].mxu0
      %v4255 = vadd.f32 0.0, %v4254
      %v4256 = vpop.f32.mrb[0].mxu0
      %4257 = vmatprep.mubr.f32.mxu0 %v4016
      %4258 = vmatmul.mubr.f32.gmra.mrb[0].mxu0 %v4015
      %v4259 = vpop.f32.mrb[0].mxu0
      %v4260 = vadd.f32 0.0, %v4259
      %v4261 = vpop.f32.mrb[0].mxu0
      %4262 = vmatprep.mubr.f32.mxu0 %v4024
      %4263 = vmatmul.mubr.f32.gmra.mrb[0].mxu0 %v4023
      %v4264 = vpop.f32.mrb[0].mxu0
      %v4265 = vadd.f32 0.0, %v4264
      %v4266 = vpop.f32.mrb[0].mxu0
      %4267 = vmatprep.mubr.f32.mxu0 %v4032
      %4268 = vmatmul.mubr.f32.gmra.mrb[0].mxu0 %v4031
      %v4269 = vpop.f32.mrb[0].mxu0
      %v4270 = vadd.f32 0.0, %v4269
      %v4271 = vpop.f32.mrb[0].mxu0
      %4272 = vmatprep.mubr.f32.mxu0 %v4040
      %4273 = vmatmul.mubr.f32.gmra.mrb[0].mxu0 %v4039
      %v4274 = vpop.f32.mrb[0].mxu0
      %v4275 = vadd.f32 0.0, %v4274
      %v4276 = vpop.f32.mrb[0].mxu0
      %4277 = vmatprep.mubr.f32.mxu0 %v4048
      %4278 = vmatmul.mubr.f32.gmra.mrb[0].mxu0 %v4047
      %v4279 = vpop.f32.mrb[0].mxu0
      %v4280 = vadd.f32 0.0, %v4279
      %v4281 = vpop.f32.mrb[0].mxu0
      %4282 = vmatprep.mubr.f32.mxu0 %v4056
      %4283 = vmatmul.mubr.f32.gmra.mrb[0].mxu0 %v4055
      %v4284 = vpop.f32.mrb[0].mxu0
      %v4285 = vadd.f32 0.0, %v4284
      %v4286 = vpop.f32.mrb[0].mxu0
      %4287 = vdwg.mxu0
      %4288 = vmatprep.subr.mxu0 0.0
      %4289 = vmatpush1.msra.mxu0 %v176
      %4290 = vmatprep.subr.mxu0 0.0
      %4291 = vmatpush1.msra.mxu0 %v177
      %4292 = vmatprep.subr.mxu0 0.0
      %4293 = vmatpush1.msra.mxu0 %v178
      %4294 = vmatprep.subr.mxu0 0.0
      %4295 = vmatpush1.msra.mxu0 %v179
      %4296 = vmatprep.subr.mxu0 0.0
      %4297 = vmatpush1.msra.mxu0 %v180
      %4298 = vmatprep.subr.mxu0 0.0
      %4299 = vmatpush1.msra.mxu0 %v181
      %4300 = vmatprep.subr.mxu0 0.0
      %4301 = vmatpush1.msra.mxu0 %v182
      %4302 = vmatprep.subr.mxu0 0.0
      %4303 = vmatpush1.msra.mxu0 %v183
      %4304 = vmatprep.subr.mxu0 0.0
      %4305 = vmatpush1.msra.mxu0 %v184
      %4306 = vmatprep.subr.mxu0 0.0
      %4307 = vmatpush1.msra.mxu0 %v185
      %4308 = vmatprep.subr.mxu0 0.0
      %4309 = vmatpush1.msra.mxu0 %v186
      %4310 = vmatprep.subr.mxu0 0.0
      %4311 = vmatpush1.msra.mxu0 %v187
      %4312 = vmatprep.subr.mxu0 0.0
      %4313 = vmatpush1.msra.mxu0 %v188
      %4314 = vmatprep.subr.mxu0 0.0
      %4315 = vmatpush1.msra.mxu0 %v189
      %4316 = vmatprep.subr.mxu0 0.0
      %4317 = vmatpush1.msra.mxu0 %v190
      %4318 = vmatprep.subr.mxu0 0.0
      %4319 = vmatpush1.msra.mxu0 %v191
      %4320 = vmatprep.subr.mxu0 0.0
      %4321 = vmatpush1.msra.mxu0 %v192
      %4322 = vmatprep.subr.mxu0 0.0
      %4323 = vmatpush1.msra.mxu0 %v193
      %4324 = vmatprep.subr.mxu0 0.0
      %4325 = vmatpush1.msra.mxu0 %v194
      %4326 = vmatprep.subr.mxu0 0.0
      %4327 = vmatpush1.msra.mxu0 %v195
      %4328 = vmatprep.subr.mxu0 0.0
      %4329 = vmatpush1.msra.mxu0 %v196
      %4330 = vmatprep.subr.mxu0 0.0
      %4331 = vmatpush1.msra.mxu0 %v197
      %4332 = vmatprep.subr.mxu0 0.0
      %4333 = vmatpush1.msra.mxu0 %v198
      %4334 = vmatprep.subr.mxu0 0.0
      %4335 = vmatpush1.msra.mxu0 %v199
      %4336 = vmatprep.subr.mxu0 0.0
      %4337 = vmatpush1.msra.mxu0 %v200
      %4338 = vmatprep.subr.mxu0 0.0
      %4339 = vmatpush1.msra.mxu0 %v201
      %4340 = vmatprep.subr.mxu0 0.0
      %4341 = vmatpush1.msra.mxu0 %v202
      %4342 = vmatprep.subr.mxu0 0.0
      %4343 = vmatpush1.msra.mxu0 %v203
      %4344 = vmatprep.subr.mxu0 0.0
      %4345 = vmatpush1.msra.mxu0 %v204
      %4346 = vmatprep.subr.mxu0 0.0
      %4347 = vmatpush1.msra.mxu0 %v205
      %4348 = vmatprep.subr.mxu0 0.0
      %4349 = vmatpush1.msra.mxu0 %v206
      %4350 = vmatprep.subr.mxu0 0.0
      %4351 = vmatpush1.msra.mxu0 %v207
      %4352 = vmatprep.mubr.f32.mxu0 %v3810
      %4353 = vmatmul.mubr.f32.gmra.mrb[0].mxu0 %v3809
      %v4354 = vpop.f32.mrb[0].mxu0
      %v4355 = vadd.f32 %v4130, %v4354
      %v4356 = vpop.f32.mrb[0].mxu0
      %4357 = vmatprep.mubr.f32.mxu0 %v3818
      %4358 = vmatmul.mubr.f32.gmra.mrb[0].mxu0 %v3817
      %v4359 = vpop.f32.mrb[0].mxu0
      %v4360 = vadd.f32 %v4135, %v4359
      %v4361 = vpop.f32.mrb[0].mxu0
      %4362 = vmatprep.mubr.f32.mxu0 %v3826
      %4363 = vmatmul.mubr.f32.gmra.mrb[0].mxu0 %v3825
      %v4364 = vpop.f32.mrb[0].mxu0
      %v4365 = vadd.f32 %v4140, %v4364
      %v4366 = vpop.f32.mrb[0].mxu0
      %4367 = vmatprep.mubr.f32.mxu0 %v3834
      %4368 = vmatmul.mubr.f32.gmra.mrb[0].mxu0 %v3833
      %v4369 = vpop.f32.mrb[0].mxu0
      %v4370 = vadd.f32 %v4145, %v4369
      %v4371 = vpop.f32.mrb[0].mxu0
      %4372 = vmatprep.mubr.f32.mxu0 %v3842
      %4373 = vmatmul.mubr.f32.gmra.mrb[0].mxu0 %v3841
      %v4374 = vpop.f32.mrb[0].mxu0
      %v4375 = vadd.f32 %v4150, %v4374
      %v4376 = vpop.f32.mrb[0].mxu0
      %4377 = vmatprep.mubr.f32.mxu0 %v3850
      %4378 = vmatmul.mubr.f32.gmra.mrb[0].mxu0 %v3849
      %v4379 = vpop.f32.mrb[0].mxu0
      %v4380 = vadd.f32 %v4155, %v4379
      %v4381 = vpop.f32.mrb[0].mxu0
      %4382 = vmatprep.mubr.f32.mxu0 %v3858
      %4383 = vmatmul.mubr.f32.gmra.mrb[0].mxu0 %v3857
      %v4384 = vpop.f32.mrb[0].mxu0
      %v4385 = vadd.f32 %v4160, %v4384
      %v4386 = vpop.f32.mrb[0].mxu0
      %4387 = vmatprep.mubr.f32.mxu0 %v3866
      %4388 = vmatmul.mubr.f32.gmra.mrb[0].mxu0 %v3865
      %v4389 = vpop.f32.mrb[0].mxu0
      %v4390 = vadd.f32 %v4165, %v4389
      %v4391 = vpop.f32.mrb[0].mxu0
      %4392 = vmatprep.mubr.f32.mxu0 %v3874
      %4393 = vmatmul.mubr.f32.gmra.mrb[0].mxu0 %v3873
      %v4394 = vpop.f32.mrb[0].mxu0
      %v4395 = vadd.f32 %v4170, %v4394
      %v4396 = vpop.f32.mrb[0].mxu0
      %4397 = vmatprep.mubr.f32.mxu0 %v3882
      %4398 = vmatmul.mubr.f32.gmra.mrb[0].mxu0 %v3881
      %v4399 = vpop.f32.mrb[0].mxu0
      %v4400 = vadd.f32 %v4175, %v4399
      %v4401 = vpop.f32.mrb[0].mxu0
      %4402 = vmatprep.mubr.f32.mxu0 %v3890
      %4403 = vmatmul.mubr.f32.gmra.mrb[0].mxu0 %v3889
      %v4404 = vpop.f32.mrb[0].mxu0
      %v4405 = vadd.f32 %v4180, %v4404
      %v4406 = vpop.f32.mrb[0].mxu0
      %4407 = vmatprep.mubr.f32.mxu0 %v3898
      %4408 = vmatmul.mubr.f32.gmra.mrb[0].mxu0 %v3897
      %v4409 = vpop.f32.mrb[0].mxu0
      %v4410 = vadd.f32 %v4185, %v4409
      %v4411 = vpop.f32.mrb[0].mxu0
      %4412 = vmatprep.mubr.f32.mxu0 %v3906
      %4413 = vmatmul.mubr.f32.gmra.mrb[0].mxu0 %v3905
      %v4414 = vpop.f32.mrb[0].mxu0
      %v4415 = vadd.f32 %v4190, %v4414
      %v4416 = vpop.f32.mrb[0].mxu0
      %4417 = vmatprep.mubr.f32.mxu0 %v3914
      %4418 = vmatmul.mubr.f32.gmra.mrb[0].mxu0 %v3913
      %v4419 = vpop.f32.mrb[0].mxu0
      %v4420 = vadd.f32 %v4195, %v4419
      %v4421 = vpop.f32.mrb[0].mxu0
      %4422 = vmatprep.mubr.f32.mxu0 %v3922
      %4423 = vmatmul.mubr.f32.gmra.mrb[0].mxu0 %v3921
      %v4424 = vpop.f32.mrb[0].mxu0
      %v4425 = vadd.f32 %v4200, %v4424
      %v4426 = vpop.f32.mrb[0].mxu0
      %4427 = vmatprep.mubr.f32.mxu0 %v3930
      %4428 = vmatmul.mubr.f32.gmra.mrb[0].mxu0 %v3929
      %v4429 = vpop.f32.mrb[0].mxu0
      %v4430 = vadd.f32 %v4205, %v4429
      %v4431 = vpop.f32.mrb[0].mxu0
      %4432 = vmatprep.mubr.f32.mxu0 %v3938
      %4433 = vmatmul.mubr.f32.gmra.mrb[0].mxu0 %v3937
      %v4434 = vpop.f32.mrb[0].mxu0
      %v4435 = vadd.f32 %v4210, %v4434
      %v4436 = vpop.f32.mrb[0].mxu0
      %4437 = vmatprep.mubr.f32.mxu0 %v3946
      %4438 = vmatmul.mubr.f32.gmra.mrb[0].mxu0 %v3945
      %v4439 = vpop.f32.mrb[0].mxu0
      %v4440 = vadd.f32 %v4215, %v4439
      %v4441 = vpop.f32.mrb[0].mxu0
      %4442 = vmatprep.mubr.f32.mxu0 %v3954
      %4443 = vmatmul.mubr.f32.gmra.mrb[0].mxu0 %v3953
      %v4444 = vpop.f32.mrb[0].mxu0
      %v4445 = vadd.f32 %v4220, %v4444
      %v4446 = vpop.f32.mrb[0].mxu0
      %4447 = vmatprep.mubr.f32.mxu0 %v3962
      %4448 = vmatmul.mubr.f32.gmra.mrb[0].mxu0 %v3961
      %v4449 = vpop.f32.mrb[0].mxu0
      %v4450 = vadd.f32 %v4225, %v4449
      %v4451 = vpop.f32.mrb[0].mxu0
      %4452 = vmatprep.mubr.f32.mxu0 %v3970
      %4453 = vmatmul.mubr.f32.gmra.mrb[0].mxu0 %v3969
      %v4454 = vpop.f32.mrb[0].mxu0
      %v4455 = vadd.f32 %v4230, %v4454
      %v4456 = vpop.f32.mrb[0].mxu0
      %4457 = vmatprep.mubr.f32.mxu0 %v3978
      %4458 = vmatmul.mubr.f32.gmra.mrb[0].mxu0 %v3977
      %v4459 = vpop.f32.mrb[0].mxu0
      %v4460 = vadd.f32 %v4235, %v4459
      %v4461 = vpop.f32.mrb[0].mxu0
      %4462 = vmatprep.mubr.f32.mxu0 %v3986
      %4463 = vmatmul.mubr.f32.gmra.mrb[0].mxu0 %v3985
      %v4464 = vpop.f32.mrb[0].mxu0
      %v4465 = vadd.f32 %v4240, %v4464
      %v4466 = vpop.f32.mrb[0].mxu0
      %4467 = vmatprep.mubr.f32.mxu0 %v3994
      %4468 = vmatmul.mubr.f32.gmra.mrb[0].mxu0 %v3993
      %v4469 = vpop.f32.mrb[0].mxu0
      %v4470 = vadd.f32 %v4245, %v4469
      %v4471 = vpop.f32.mrb[0].mxu0
      %4472 = vmatprep.mubr.f32.mxu0 %v4002
      %4473 = vmatmul.mubr.f32.gmra.mrb[0].mxu0 %v4001
      %v4474 = vpop.f32.mrb[0].mxu0
      %v4475 = vadd.f32 %v4250, %v4474
      %v4476 = vpop.f32.mrb[0].mxu0
      %4477 = vmatprep.mubr.f32.mxu0 %v4010
      %4478 = vmatmul.mubr.f32.gmra.mrb[0].mxu0 %v4009
      %v4479 = vpop.f32.mrb[0].mxu0
      %v4480 = vadd.f32 %v4255, %v4479
      %v4481 = vpop.f32.mrb[0].mxu0
      %4482 = vmatprep.mubr.f32.mxu0 %v4018
      %4483 = vmatmul.mubr.f32.gmra.mrb[0].mxu0 %v4017
      %v4484 = vpop.f32.mrb[0].mxu0
      %v4485 = vadd.f32 %v4260, %v4484
      %v4486 = vpop.f32.mrb[0].mxu0
      %4487 = vmatprep.mubr.f32.mxu0 %v4026
      %4488 = vmatmul.mubr.f32.gmra.mrb[0].mxu0 %v4025
      %v4489 = vpop.f32.mrb[0].mxu0
      %v4490 = vadd.f32 %v4265, %v4489
      %v4491 = vpop.f32.mrb[0].mxu0
      %4492 = vmatprep.mubr.f32.mxu0 %v4034
      %4493 = vmatmul.mubr.f32.gmra.mrb[0].mxu0 %v4033
      %v4494 = vpop.f32.mrb[0].mxu0
      %v4495 = vadd.f32 %v4270, %v4494
      %v4496 = vpop.f32.mrb[0].mxu0
      %4497 = vmatprep.mubr.f32.mxu0 %v4042
      %4498 = vmatmul.mubr.f32.gmra.mrb[0].mxu0 %v4041
      %v4499 = vpop.f32.mrb[0].mxu0
      %v4500 = vadd.f32 %v4275, %v4499
      %v4501 = vpop.f32.mrb[0].mxu0
      %4502 = vmatprep.mubr.f32.mxu0 %v4050
      %4503 = vmatmul.mubr.f32.gmra.mrb[0].mxu0 %v4049
      %v4504 = vpop.f32.mrb[0].mxu0
      %v4505 = vadd.f32 %v4280, %v4504
      %v4506 = vpop.f32.mrb[0].mxu0
      %4507 = vmatprep.mubr.f32.mxu0 %v4058
      %4508 = vmatmul.mubr.f32.gmra.mrb[0].mxu0 %v4057
      %v4509 = vpop.f32.mrb[0].mxu0
      %v4510 = vadd.f32 %v4285, %v4509
      %v4511 = vpop.f32.mrb[0].mxu0
      %4512 = vdwg.mxu0
      %4513 = vmatprep.subr.mxu0 0.0
      %4514 = vmatpush1.msra.mxu0 %v208
      %4515 = vmatprep.subr.mxu0 0.0
      %4516 = vmatpush1.msra.mxu0 %v209
      %4517 = vmatprep.subr.mxu0 0.0
      %4518 = vmatpush1.msra.mxu0 %v210
      %4519 = vmatprep.subr.mxu0 0.0
      %4520 = vmatpush1.msra.mxu0 %v211
      %4521 = vmatprep.subr.mxu0 0.0
      %4522 = vmatpush1.msra.mxu0 %v212
      %4523 = vmatprep.subr.mxu0 0.0
      %4524 = vmatpush1.msra.mxu0 %v213
      %4525 = vmatprep.subr.mxu0 0.0
      %4526 = vmatpush1.msra.mxu0 %v214
      %4527 = vmatprep.subr.mxu0 0.0
      %4528 = vmatpush1.msra.mxu0 %v215
      %4529 = vmatprep.subr.mxu0 0.0
      %4530 = vmatpush1.msra.mxu0 %v216
      %4531 = vmatprep.subr.mxu0 0.0
      %4532 = vmatpush1.msra.mxu0 %v217
      %4533 = vmatprep.subr.mxu0 0.0
      %4534 = vmatpush1.msra.mxu0 %v218
      %4535 = vmatprep.subr.mxu0 0.0
      %4536 = vmatpush1.msra.mxu0 %v219
      %4537 = vmatprep.subr.mxu0 0.0
      %4538 = vmatpush1.msra.mxu0 %v220
      %4539 = vmatprep.subr.mxu0 0.0
      %4540 = vmatpush1.msra.mxu0 %v221
      %4541 = vmatprep.subr.mxu0 0.0
      %4542 = vmatpush1.msra.mxu0 %v222
      %4543 = vmatprep.subr.mxu0 0.0
      %4544 = vmatpush1.msra.mxu0 %v223
      %4545 = vmatprep.subr.mxu0 0.0
      %4546 = vmatpush1.msra.mxu0 %v224
      %4547 = vmatprep.subr.mxu0 0.0
      %4548 = vmatpush1.msra.mxu0 %v225
      %4549 = vmatprep.subr.mxu0 0.0
      %4550 = vmatpush1.msra.mxu0 %v226
      %4551 = vmatprep.subr.mxu0 0.0
      %4552 = vmatpush1.msra.mxu0 %v227
      %4553 = vmatprep.subr.mxu0 0.0
      %4554 = vmatpush1.msra.mxu0 %v228
      %4555 = vmatprep.subr.mxu0 0.0
      %4556 = vmatpush1.msra.mxu0 %v229
      %4557 = vmatprep.subr.mxu0 0.0
      %4558 = vmatpush1.msra.mxu0 %v230
      %4559 = vmatprep.subr.mxu0 0.0
      %4560 = vmatpush1.msra.mxu0 %v231
      %4561 = vmatprep.subr.mxu0 0.0
      %4562 = vmatpush1.msra.mxu0 %v232
      %4563 = vmatprep.subr.mxu0 0.0
      %4564 = vmatpush1.msra.mxu0 %v233
      %4565 = vmatprep.subr.mxu0 0.0
      %4566 = vmatpush1.msra.mxu0 %v234
      %4567 = vmatprep.subr.mxu0 0.0
      %4568 = vmatpush1.msra.mxu0 %v235
      %4569 = vmatprep.subr.mxu0 0.0
      %4570 = vmatpush1.msra.mxu0 %v236
      %4571 = vmatprep.subr.mxu0 0.0
      %4572 = vmatpush1.msra.mxu0 %v237
      %4573 = vmatprep.subr.mxu0 0.0
      %4574 = vmatpush1.msra.mxu0 %v238
      %4575 = vmatprep.subr.mxu0 0.0
      %4576 = vmatpush1.msra.mxu0 %v239
      %4577 = vmatprep.mubr.f32.mxu0 %v3812
      %4578 = vmatmul.mubr.f32.gmra.mrb[0].mxu0 %v3811
      %v4579 = vpop.f32.mrb[0].mxu0
      %v4580 = vadd.f32 %v4355, %v4579
      %v4581 = vpop.f32.mrb[0].mxu0
      %4582 = vmatprep.mubr.f32.mxu0 %v3820
      %4583 = vmatmul.mubr.f32.gmra.mrb[0].mxu0 %v3819
      %v4584 = vpop.f32.mrb[0].mxu0
      %v4585 = vadd.f32 %v4360, %v4584
      %v4586 = vpop.f32.mrb[0].mxu0
      %4587 = vmatprep.mubr.f32.mxu0 %v3828
      %4588 = vmatmul.mubr.f32.gmra.mrb[0].mxu0 %v3827
      %v4589 = vpop.f32.mrb[0].mxu0
      %v4590 = vadd.f32 %v4365, %v4589
      %v4591 = vpop.f32.mrb[0].mxu0
      %4592 = vmatprep.mubr.f32.mxu0 %v3836
      %4593 = vmatmul.mubr.f32.gmra.mrb[0].mxu0 %v3835
      %v4594 = vpop.f32.mrb[0].mxu0
      %v4595 = vadd.f32 %v4370, %v4594
      %v4596 = vpop.f32.mrb[0].mxu0
      %4597 = vmatprep.mubr.f32.mxu0 %v3844
      %4598 = vmatmul.mubr.f32.gmra.mrb[0].mxu0 %v3843
      %v4599 = vpop.f32.mrb[0].mxu0
      %v4600 = vadd.f32 %v4375, %v4599
      %v4601 = vpop.f32.mrb[0].mxu0
      %4602 = vmatprep.mubr.f32.mxu0 %v3852
      %4603 = vmatmul.mubr.f32.gmra.mrb[0].mxu0 %v3851
      %v4604 = vpop.f32.mrb[0].mxu0
      %v4605 = vadd.f32 %v4380, %v4604
      %v4606 = vpop.f32.mrb[0].mxu0
      %4607 = vmatprep.mubr.f32.mxu0 %v3860
      %4608 = vmatmul.mubr.f32.gmra.mrb[0].mxu0 %v3859
      %v4609 = vpop.f32.mrb[0].mxu0
      %v4610 = vadd.f32 %v4385, %v4609
      %v4611 = vpop.f32.mrb[0].mxu0
      %4612 = vmatprep.mubr.f32.mxu0 %v3868
      %4613 = vmatmul.mubr.f32.gmra.mrb[0].mxu0 %v3867
      %v4614 = vpop.f32.mrb[0].mxu0
      %v4615 = vadd.f32 %v4390, %v4614
      %v4616 = vpop.f32.mrb[0].mxu0
      %4617 = vmatprep.mubr.f32.mxu0 %v3876
      %4618 = vmatmul.mubr.f32.gmra.mrb[0].mxu0 %v3875
      %v4619 = vpop.f32.mrb[0].mxu0
      %v4620 = vadd.f32 %v4395, %v4619
      %v4621 = vpop.f32.mrb[0].mxu0
      %4622 = vmatprep.mubr.f32.mxu0 %v3884
      %4623 = vmatmul.mubr.f32.gmra.mrb[0].mxu0 %v3883
      %v4624 = vpop.f32.mrb[0].mxu0
      %v4625 = vadd.f32 %v4400, %v4624
      %v4626 = vpop.f32.mrb[0].mxu0
      %4627 = vmatprep.mubr.f32.mxu0 %v3892
      %4628 = vmatmul.mubr.f32.gmra.mrb[0].mxu0 %v3891
      %v4629 = vpop.f32.mrb[0].mxu0
      %v4630 = vadd.f32 %v4405, %v4629
      %v4631 = vpop.f32.mrb[0].mxu0
      %4632 = vmatprep.mubr.f32.mxu0 %v3900
      %4633 = vmatmul.mubr.f32.gmra.mrb[0].mxu0 %v3899
      %v4634 = vpop.f32.mrb[0].mxu0
      %v4635 = vadd.f32 %v4410, %v4634
      %v4636 = vpop.f32.mrb[0].mxu0
      %4637 = vmatprep.mubr.f32.mxu0 %v3908
      %4638 = vmatmul.mubr.f32.gmra.mrb[0].mxu0 %v3907
      %v4639 = vpop.f32.mrb[0].mxu0
      %v4640 = vadd.f32 %v4415, %v4639
      %v4641 = vpop.f32.mrb[0].mxu0
      %4642 = vmatprep.mubr.f32.mxu0 %v3916
      %4643 = vmatmul.mubr.f32.gmra.mrb[0].mxu0 %v3915
      %v4644 = vpop.f32.mrb[0].mxu0
      %v4645 = vadd.f32 %v4420, %v4644
      %v4646 = vpop.f32.mrb[0].mxu0
      %4647 = vmatprep.mubr.f32.mxu0 %v3924
      %4648 = vmatmul.mubr.f32.gmra.mrb[0].mxu0 %v3923
      %v4649 = vpop.f32.mrb[0].mxu0
      %v4650 = vadd.f32 %v4425, %v4649
      %v4651 = vpop.f32.mrb[0].mxu0
      %4652 = vmatprep.mubr.f32.mxu0 %v3932
      %4653 = vmatmul.mubr.f32.gmra.mrb[0].mxu0 %v3931
      %v4654 = vpop.f32.mrb[0].mxu0
      %v4655 = vadd.f32 %v4430, %v4654
      %v4656 = vpop.f32.mrb[0].mxu0
      %4657 = vmatprep.mubr.f32.mxu0 %v3940
      %4658 = vmatmul.mubr.f32.gmra.mrb[0].mxu0 %v3939
      %v4659 = vpop.f32.mrb[0].mxu0
      %v4660 = vadd.f32 %v4435, %v4659
      %v4661 = vpop.f32.mrb[0].mxu0
      %4662 = vmatprep.mubr.f32.mxu0 %v3948
      %4663 = vmatmul.mubr.f32.gmra.mrb[0].mxu0 %v3947
      %v4664 = vpop.f32.mrb[0].mxu0
      %v4665 = vadd.f32 %v4440, %v4664
      %v4666 = vpop.f32.mrb[0].mxu0
      %4667 = vmatprep.mubr.f32.mxu0 %v3956
      %4668 = vmatmul.mubr.f32.gmra.mrb[0].mxu0 %v3955
      %v4669 = vpop.f32.mrb[0].mxu0
      %v4670 = vadd.f32 %v4445, %v4669
      %v4671 = vpop.f32.mrb[0].mxu0
      %4672 = vmatprep.mubr.f32.mxu0 %v3964
      %4673 = vmatmul.mubr.f32.gmra.mrb[0].mxu0 %v3963
      %v4674 = vpop.f32.mrb[0].mxu0
      %v4675 = vadd.f32 %v4450, %v4674
      %v4676 = vpop.f32.mrb[0].mxu0
      %4677 = vmatprep.mubr.f32.mxu0 %v3972
      %4678 = vmatmul.mubr.f32.gmra.mrb[0].mxu0 %v3971
      %v4679 = vpop.f32.mrb[0].mxu0
      %v4680 = vadd.f32 %v4455, %v4679
      %v4681 = vpop.f32.mrb[0].mxu0
      %4682 = vmatprep.mubr.f32.mxu0 %v3980
      %4683 = vmatmul.mubr.f32.gmra.mrb[0].mxu0 %v3979
      %v4684 = vpop.f32.mrb[0].mxu0
      %v4685 = vadd.f32 %v4460, %v4684
      %v4686 = vpop.f32.mrb[0].mxu0
      %4687 = vmatprep.mubr.f32.mxu0 %v3988
      %4688 = vmatmul.mubr.f32.gmra.mrb[0].mxu0 %v3987
      %v4689 = vpop.f32.mrb[0].mxu0
      %v4690 = vadd.f32 %v4465, %v4689
      %v4691 = vpop.f32.mrb[0].mxu0
      %4692 = vmatprep.mubr.f32.mxu0 %v3996
      %4693 = vmatmul.mubr.f32.gmra.mrb[0].mxu0 %v3995
      %v4694 = vpop.f32.mrb[0].mxu0
      %v4695 = vadd.f32 %v4470, %v4694
      %v4696 = vpop.f32.mrb[0].mxu0
      %4697 = vmatprep.mubr.f32.mxu0 %v4004
      %4698 = vmatmul.mubr.f32.gmra.mrb[0].mxu0 %v4003
      %v4699 = vpop.f32.mrb[0].mxu0
      %v4700 = vadd.f32 %v4475, %v4699
      %v4701 = vpop.f32.mrb[0].mxu0
      %4702 = vmatprep.mubr.f32.mxu0 %v4012
      %4703 = vmatmul.mubr.f32.gmra.mrb[0].mxu0 %v4011
      %v4704 = vpop.f32.mrb[0].mxu0
      %v4705 = vadd.f32 %v4480, %v4704
      %v4706 = vpop.f32.mrb[0].mxu0
      %4707 = vmatprep.mubr.f32.mxu0 %v4020
      %4708 = vmatmul.mubr.f32.gmra.mrb[0].mxu0 %v4019
      %v4709 = vpop.f32.mrb[0].mxu0
      %v4710 = vadd.f32 %v4485, %v4709
      %v4711 = vpop.f32.mrb[0].mxu0
      %4712 = vmatprep.mubr.f32.mxu0 %v4028
      %4713 = vmatmul.mubr.f32.gmra.mrb[0].mxu0 %v4027
      %v4714 = vpop.f32.mrb[0].mxu0
      %v4715 = vadd.f32 %v4490, %v4714
      %v4716 = vpop.f32.mrb[0].mxu0
      %4717 = vmatprep.mubr.f32.mxu0 %v4036
      %4718 = vmatmul.mubr.f32.gmra.mrb[0].mxu0 %v4035
      %v4719 = vpop.f32.mrb[0].mxu0
      %v4720 = vadd.f32 %v4495, %v4719
      %v4721 = vpop.f32.mrb[0].mxu0
      %4722 = vmatprep.mubr.f32.mxu0 %v4044
      %4723 = vmatmul.mubr.f32.gmra.mrb[0].mxu0 %v4043
      %v4724 = vpop.f32.mrb[0].mxu0
      %v4725 = vadd.f32 %v4500, %v4724
      %v4726 = vpop.f32.mrb[0].mxu0
      %4727 = vmatprep.mubr.f32.mxu0 %v4052
      %4728 = vmatmul.mubr.f32.gmra.mrb[0].mxu0 %v4051
      %v4729 = vpop.f32.mrb[0].mxu0
      %v4730 = vadd.f32 %v4505, %v4729
      %v4731 = vpop.f32.mrb[0].mxu0
      %4732 = vmatprep.mubr.f32.mxu0 %v4060
      %4733 = vmatmul.mubr.f32.gmra.mrb[0].mxu0 %v4059
      %v4734 = vpop.f32.mrb[0].mxu0
      %v4735 = vadd.f32 %v4510, %v4734
      %v4736 = vpop.f32.mrb[0].mxu0
      %4737 = vdwg.mxu0
      %4738 = vmatprep.subr.mxu0 0.0
      %4739 = vmatpush1.msra.mxu0 %v240
      %4740 = vmatprep.subr.mxu0 0.0
      %4741 = vmatpush1.msra.mxu0 %v241
      %4742 = vmatprep.subr.mxu0 0.0
      %4743 = vmatpush1.msra.mxu0 %v242
      %4744 = vmatprep.subr.mxu0 0.0
      %4745 = vmatpush1.msra.mxu0 %v243
      %4746 = vmatprep.subr.mxu0 0.0
      %4747 = vmatpush1.msra.mxu0 %v244
      %4748 = vmatprep.subr.mxu0 0.0
      %4749 = vmatpush1.msra.mxu0 %v245
      %4750 = vmatprep.subr.mxu0 0.0
      %4751 = vmatpush1.msra.mxu0 %v246
      %4752 = vmatprep.subr.mxu0 0.0
      %4753 = vmatpush1.msra.mxu0 %v247
      %4754 = vmatprep.subr.mxu0 0.0
      %4755 = vmatpush1.msra.mxu0 %v248
      %4756 = vmatprep.subr.mxu0 0.0
      %4757 = vmatpush1.msra.mxu0 %v249
      %4758 = vmatprep.subr.mxu0 0.0
      %4759 = vmatpush1.msra.mxu0 %v250
      %4760 = vmatprep.subr.mxu0 0.0
      %4761 = vmatpush1.msra.mxu0 %v251
      %4762 = vmatprep.subr.mxu0 0.0
      %4763 = vmatpush1.msra.mxu0 %v252
      %4764 = vmatprep.subr.mxu0 0.0
      %4765 = vmatpush1.msra.mxu0 %v253
      %4766 = vmatprep.subr.mxu0 0.0
      %4767 = vmatpush1.msra.mxu0 %v254
      %4768 = vmatprep.subr.mxu0 0.0
      %4769 = vmatpush1.msra.mxu0 %v255
      %4770 = vmatprep.subr.mxu0 0.0
      %4771 = vmatpush1.msra.mxu0 %v256
      %4772 = vmatprep.subr.mxu0 0.0
      %4773 = vmatpush1.msra.mxu0 %v257
      %4774 = vmatprep.subr.mxu0 0.0
      %4775 = vmatpush1.msra.mxu0 %v258
      %4776 = vmatprep.subr.mxu0 0.0
      %4777 = vmatpush1.msra.mxu0 %v259
      %4778 = vmatprep.subr.mxu0 0.0
      %4779 = vmatpush1.msra.mxu0 %v260
      %4780 = vmatprep.subr.mxu0 0.0
      %4781 = vmatpush1.msra.mxu0 %v261
      %4782 = vmatprep.subr.mxu0 0.0
      %4783 = vmatpush1.msra.mxu0 %v262
      %4784 = vmatprep.subr.mxu0 0.0
      %4785 = vmatpush1.msra.mxu0 %v263
      %4786 = vmatprep.subr.mxu0 0.0
      %4787 = vmatpush1.msra.mxu0 %v264
      %4788 = vmatprep.subr.mxu0 0.0
      %4789 = vmatpush1.msra.mxu0 %v265
      %4790 = vmatprep.subr.mxu0 0.0
      %4791 = vmatpush1.msra.mxu0 %v266
      %4792 = vmatprep.subr.mxu0 0.0
      %4793 = vmatpush1.msra.mxu0 %v267
      %4794 = vmatprep.subr.mxu0 0.0
      %4795 = vmatpush1.msra.mxu0 %v268
      %4796 = vmatprep.subr.mxu0 0.0
      %4797 = vmatpush1.msra.mxu0 %v269
      %4798 = vmatprep.subr.mxu0 0.0
      %4799 = vmatpush1.msra.mxu0 %v270
      %4800 = vmatprep.subr.mxu0 0.0
      %4801 = vmatpush1.msra.mxu0 %v271
      %4802 = vmatprep.mubr.f32.mxu0 %v3814
      %4803 = vmatmul.mubr.f32.gmra.mrb[0].mxu0 %v3813
      %v4804 = vpop.f32.mrb[0].mxu0
      %v4805 = vadd.f32 %v4580, %v4804
      %v4806 = vpop.f32.mrb[0].mxu0
      %4807 = vmatprep.mubr.f32.mxu0 %v3822
      %4808 = vmatmul.mubr.f32.gmra.mrb[0].mxu0 %v3821
      %v4809 = vpop.f32.mrb[0].mxu0
      %v4810 = vadd.f32 %v4585, %v4809
      %v4811 = vpop.f32.mrb[0].mxu0
      %4812 = vmatprep.mubr.f32.mxu0 %v3830
      %4813 = vmatmul.mubr.f32.gmra.mrb[0].mxu0 %v3829
      %v4814 = vpop.f32.mrb[0].mxu0
      %v4815 = vadd.f32 %v4590, %v4814
      %v4816 = vpop.f32.mrb[0].mxu0
      %4817 = vmatprep.mubr.f32.mxu0 %v3838
      %4818 = vmatmul.mubr.f32.gmra.mrb[0].mxu0 %v3837
      %v4819 = vpop.f32.mrb[0].mxu0
      %v4820 = vadd.f32 %v4595, %v4819
      %v4821 = vpop.f32.mrb[0].mxu0
      %4822 = vmatprep.mubr.f32.mxu0 %v3846
      %4823 = vmatmul.mubr.f32.gmra.mrb[0].mxu0 %v3845
      %v4824 = vpop.f32.mrb[0].mxu0
      %v4825 = vadd.f32 %v4600, %v4824
      %v4826 = vpop.f32.mrb[0].mxu0
      %4827 = vmatprep.mubr.f32.mxu0 %v3854
      %4828 = vmatmul.mubr.f32.gmra.mrb[0].mxu0 %v3853
      %v4829 = vpop.f32.mrb[0].mxu0
      %v4830 = vadd.f32 %v4605, %v4829
      %v4831 = vpop.f32.mrb[0].mxu0
      %4832 = vmatprep.mubr.f32.mxu0 %v3862
      %4833 = vmatmul.mubr.f32.gmra.mrb[0].mxu0 %v3861
      %v4834 = vpop.f32.mrb[0].mxu0
      %v4835 = vadd.f32 %v4610, %v4834
      %v4836 = vpop.f32.mrb[0].mxu0
      %4837 = vmatprep.mubr.f32.mxu0 %v3870
      %4838 = vmatmul.mubr.f32.gmra.mrb[0].mxu0 %v3869
      %v4839 = vpop.f32.mrb[0].mxu0
      %v4840 = vadd.f32 %v4615, %v4839
      %v4841 = vpop.f32.mrb[0].mxu0
      %4842 = vmatprep.mubr.f32.mxu0 %v3878
      %4843 = vmatmul.mubr.f32.gmra.mrb[0].mxu0 %v3877
      %v4844 = vpop.f32.mrb[0].mxu0
      %v4845 = vadd.f32 %v4620, %v4844
      %v4846 = vpop.f32.mrb[0].mxu0
      %4847 = vmatprep.mubr.f32.mxu0 %v3886
      %4848 = vmatmul.mubr.f32.gmra.mrb[0].mxu0 %v3885
      %v4849 = vpop.f32.mrb[0].mxu0
      %v4850 = vadd.f32 %v4625, %v4849
      %v4851 = vpop.f32.mrb[0].mxu0
      %4852 = vmatprep.mubr.f32.mxu0 %v3894
      %4853 = vmatmul.mubr.f32.gmra.mrb[0].mxu0 %v3893
      %v4854 = vpop.f32.mrb[0].mxu0
      %v4855 = vadd.f32 %v4630, %v4854
      %v4856 = vpop.f32.mrb[0].mxu0
      %4857 = vmatprep.mubr.f32.mxu0 %v3902
      %4858 = vmatmul.mubr.f32.gmra.mrb[0].mxu0 %v3901
      %v4859 = vpop.f32.mrb[0].mxu0
      %v4860 = vadd.f32 %v4635, %v4859
      %v4861 = vpop.f32.mrb[0].mxu0
      %4862 = vmatprep.mubr.f32.mxu0 %v3910
      %4863 = vmatmul.mubr.f32.gmra.mrb[0].mxu0 %v3909
      %v4864 = vpop.f32.mrb[0].mxu0
      %v4865 = vadd.f32 %v4640, %v4864
      %v4866 = vpop.f32.mrb[0].mxu0
      %4867 = vmatprep.mubr.f32.mxu0 %v3918
      %4868 = vmatmul.mubr.f32.gmra.mrb[0].mxu0 %v3917
      %v4869 = vpop.f32.mrb[0].mxu0
      %v4870 = vadd.f32 %v4645, %v4869
      %v4871 = vpop.f32.mrb[0].mxu0
      %4872 = vmatprep.mubr.f32.mxu0 %v3926
      %4873 = vmatmul.mubr.f32.gmra.mrb[0].mxu0 %v3925
      %v4874 = vpop.f32.mrb[0].mxu0
      %v4875 = vadd.f32 %v4650, %v4874
      %v4876 = vpop.f32.mrb[0].mxu0
      %4877 = vmatprep.mubr.f32.mxu0 %v3934
      %4878 = vmatmul.mubr.f32.gmra.mrb[0].mxu0 %v3933
      %v4879 = vpop.f32.mrb[0].mxu0
      %v4880 = vadd.f32 %v4655, %v4879
      %v4881 = vpop.f32.mrb[0].mxu0
      %4882 = vmatprep.mubr.f32.mxu0 %v3942
      %4883 = vmatmul.mubr.f32.gmra.mrb[0].mxu0 %v3941
      %v4884 = vpop.f32.mrb[0].mxu0
      %v4885 = vadd.f32 %v4660, %v4884
      %v4886 = vpop.f32.mrb[0].mxu0
      %4887 = vmatprep.mubr.f32.mxu0 %v3950
      %4888 = vmatmul.mubr.f32.gmra.mrb[0].mxu0 %v3949
      %v4889 = vpop.f32.mrb[0].mxu0
      %v4890 = vadd.f32 %v4665, %v4889
      %v4891 = vpop.f32.mrb[0].mxu0
      %4892 = vmatprep.mubr.f32.mxu0 %v3958
      %4893 = vmatmul.mubr.f32.gmra.mrb[0].mxu0 %v3957
      %v4894 = vpop.f32.mrb[0].mxu0
      %v4895 = vadd.f32 %v4670, %v4894
      %v4896 = vpop.f32.mrb[0].mxu0
      %4897 = vmatprep.mubr.f32.mxu0 %v3966
      %4898 = vmatmul.mubr.f32.gmra.mrb[0].mxu0 %v3965
      %v4899 = vpop.f32.mrb[0].mxu0
      %v4900 = vadd.f32 %v4675, %v4899
      %v4901 = vpop.f32.mrb[0].mxu0
      %4902 = vmatprep.mubr.f32.mxu0 %v3974
      %4903 = vmatmul.mubr.f32.gmra.mrb[0].mxu0 %v3973
      %v4904 = vpop.f32.mrb[0].mxu0
      %v4905 = vadd.f32 %v4680, %v4904
      %v4906 = vpop.f32.mrb[0].mxu0
      %4907 = vmatprep.mubr.f32.mxu0 %v3982
      %4908 = vmatmul.mubr.f32.gmra.mrb[0].mxu0 %v3981
      %v4909 = vpop.f32.mrb[0].mxu0
      %v4910 = vadd.f32 %v4685, %v4909
      %v4911 = vpop.f32.mrb[0].mxu0
      %4912 = vmatprep.mubr.f32.mxu0 %v3990
      %4913 = vmatmul.mubr.f32.gmra.mrb[0].mxu0 %v3989
      %v4914 = vpop.f32.mrb[0].mxu0
      %v4915 = vadd.f32 %v4690, %v4914
      %v4916 = vpop.f32.mrb[0].mxu0
      %4917 = vmatprep.mubr.f32.mxu0 %v3998
      %4918 = vmatmul.mubr.f32.gmra.mrb[0].mxu0 %v3997
      %v4919 = vpop.f32.mrb[0].mxu0
      %v4920 = vadd.f32 %v4695, %v4919
      %v4921 = vpop.f32.mrb[0].mxu0
      %4922 = vmatprep.mubr.f32.mxu0 %v4006
      %4923 = vmatmul.mubr.f32.gmra.mrb[0].mxu0 %v4005
      %v4924 = vpop.f32.mrb[0].mxu0
      %v4925 = vadd.f32 %v4700, %v4924
      %v4926 = vpop.f32.mrb[0].mxu0
      %4927 = vmatprep.mubr.f32.mxu0 %v4014
      %4928 = vmatmul.mubr.f32.gmra.mrb[0].mxu0 %v4013
      %v4929 = vpop.f32.mrb[0].mxu0
      %v4930 = vadd.f32 %v4705, %v4929
      %v4931 = vpop.f32.mrb[0].mxu0
      %4932 = vmatprep.mubr.f32.mxu0 %v4022
      %4933 = vmatmul.mubr.f32.gmra.mrb[0].mxu0 %v4021
      %v4934 = vpop.f32.mrb[0].mxu0
      %v4935 = vadd.f32 %v4710, %v4934
      %v4936 = vpop.f32.mrb[0].mxu0
      %4937 = vmatprep.mubr.f32.mxu0 %v4030
      %4938 = vmatmul.mubr.f32.gmra.mrb[0].mxu0 %v4029
      %v4939 = vpop.f32.mrb[0].mxu0
      %v4940 = vadd.f32 %v4715, %v4939
      %v4941 = vpop.f32.mrb[0].mxu0
      %4942 = vmatprep.mubr.f32.mxu0 %v4038
      %4943 = vmatmul.mubr.f32.gmra.mrb[0].mxu0 %v4037
      %v4944 = vpop.f32.mrb[0].mxu0
      %v4945 = vadd.f32 %v4720, %v4944
      %v4946 = vpop.f32.mrb[0].mxu0
      %4947 = vmatprep.mubr.f32.mxu0 %v4046
      %4948 = vmatmul.mubr.f32.gmra.mrb[0].mxu0 %v4045
      %v4949 = vpop.f32.mrb[0].mxu0
      %v4950 = vadd.f32 %v4725, %v4949
      %v4951 = vpop.f32.mrb[0].mxu0
      %4952 = vmatprep.mubr.f32.mxu0 %v4054
      %4953 = vmatmul.mubr.f32.gmra.mrb[0].mxu0 %v4053
      %v4954 = vpop.f32.mrb[0].mxu0
      %v4955 = vadd.f32 %v4730, %v4954
      %v4956 = vpop.f32.mrb[0].mxu0
      %4957 = vmatprep.mubr.f32.mxu0 %v4062
      %4958 = vmatmul.mubr.f32.gmra.mrb[0].mxu0 %v4061
      %v4959 = vpop.f32.mrb[0].mxu0
      %v4960 = vadd.f32 %v4735, %v4959
      %v4961 = vpop.f32.mrb[0].mxu0
      %4962 = vdwg.mxu0
      %v4963 = vmax.f32 %v3774, %v4805
      %v4964 = vmax.f32 %v3775, %v4810
      %v4965 = vmax.f32 %v3776, %v4815
      %v4966 = vmax.f32 %v3777, %v4820
      %v4967 = vmax.f32 %v3778, %v4825
      %v4968 = vmax.f32 %v3779, %v4830
      %v4969 = vmax.f32 %v3780, %v4835
      %v4970 = vmax.f32 %v3781, %v4840
      %v4971 = vmax.f32 %v3782, %v4845
      %v4972 = vmax.f32 %v3783, %v4850
      %v4973 = vmax.f32 %v3784, %v4855
      %v4974 = vmax.f32 %v3785, %v4860
      %v4975 = vmax.f32 %v3786, %v4865
      %v4976 = vmax.f32 %v3787, %v4870
      %v4977 = vmax.f32 %v3788, %v4875
      %v4978 = vmax.f32 %v3789, %v4880
      %v4979 = vmax.f32 %v3790, %v4885
      %v4980 = vmax.f32 %v3791, %v4890
      %v4981 = vmax.f32 %v3792, %v4895
      %v4982 = vmax.f32 %v3793, %v4900
      %v4983 = vmax.f32 %v3794, %v4905
      %v4984 = vmax.f32 %v3795, %v4910
      %v4985 = vmax.f32 %v3796, %v4915
      %v4986 = vmax.f32 %v3797, %v4920
      %v4987 = vmax.f32 %v3798, %v4925
      %v4988 = vmax.f32 %v3799, %v4930
      %v4989 = vmax.f32 %v3800, %v4935
      %v4990 = vmax.f32 %v3801, %v4940
      %v4991 = vmax.f32 %v3802, %v4945
      %v4992 = vmax.f32 %v3803, %v4950
      %v4993 = vmax.f32 %v3804, %v4955
      %v4994 = vmax.f32 %v3805, %v4960
      %4995 = vst [vmem:[%s143] sm:$0xff] %v4963
      %4996 = vst [vmem:[%s143 + $0x8] sm:$0xff] %v4964
      %4997 = vst [vmem:[%s143 + $0x10] sm:$0xff] %v4965
      %4998 = vst [vmem:[%s143 + $0x18] sm:$0xff] %v4966
      %4999 = vst [vmem:[%s143 + $0x20] sm:$0xff] %v4967
      %5000 = vst [vmem:[%s143 + $0x28] sm:$0xff] %v4968
      %5001 = vst [vmem:[%s143 + $0x30] sm:$0xff] %v4969
      %5002 = vst [vmem:[%s143 + $0x38] sm:$0xff] %v4970
      %5003 = vst [vmem:[%s143 + $0x40] sm:$0xff] %v4971
      %5004 = vst [vmem:[%s143 + $0x48] sm:$0xff] %v4972
      %5005 = vst [vmem:[%s143 + $0x50] sm:$0xff] %v4973
      %5006 = vst [vmem:[%s143 + $0x58] sm:$0xff] %v4974
      %5007 = vst [vmem:[%s143 + $0x60] sm:$0xff] %v4975
      %5008 = vst [vmem:[%s143 + $0x68] sm:$0xff] %v4976
      %5009 = vst [vmem:[%s143 + $0x70] sm:$0xff] %v4977
      %5010 = vst [vmem:[%s143 + $0x78] sm:$0xff] %v4978
      %5011 = vst [vmem:[%s143 + $0x80] sm:$0xff] %v4979
      %5012 = vst [vmem:[%s143 + $0x88] sm:$0xff] %v4980
      %5013 = vst [vmem:[%s143 + $0x90] sm:$0xff] %v4981
      %5014 = vst [vmem:[%s143 + $0x98] sm:$0xff] %v4982
      %5015 = vst [vmem:[%s143 + $0xa0] sm:$0xff] %v4983
      %5016 = vst [vmem:[%s143 + $0xa8] sm:$0xff] %v4984
      %5017 = vst [vmem:[%s143 + $0xb0] sm:$0xff] %v4985
      %5018 = vst [vmem:[%s143 + $0xb8] sm:$0xff] %v4986
      %5019 = vst [vmem:[%s143 + $0xc0] sm:$0xff] %v4987
      %5020 = vst [vmem:[%s143 + $0xc8] sm:$0xff] %v4988
      %5021 = vst [vmem:[%s143 + $0xd0] sm:$0xff] %v4989
      %5022 = vst [vmem:[%s143 + $0xd8] sm:$0xff] %v4990
      %5023 = vst [vmem:[%s143 + $0xe0] sm:$0xff] %v4991
      %5024 = vst [vmem:[%s143 + $0xe8] sm:$0xff] %v4992
      %5025 = vst [vmem:[%s143 + $0xf0] sm:$0xff] %v4993
      %5026 = vst [vmem:[%s143 + $0xf8] sm:$0xff] %v4994
      %p5027 = scmp.lt.s32.totalorder %s13, 1
      %s5028 = scalar_select %p5027, %s13, 1
      %s5029 = smul.addr %s5028, 32
      %s5030 = smul.addr %s5029, 8
      %s5031 = scalar_lea.vmem %s2, %s5030
      // Predicated region
      $region29: #{student_forward.7} parent=27 // pred_check
        %p5032 = pneg %p78
      $region30: #{student_forward.7} parent=27 // pred_check_branch
        %5034 = sbr.rel (%p5032) target = $region32
      $region31: #{student_forward.7} parent=27 // pred_region
        _
      $region32: #{student_forward.7} parent=27 // pred_fallthru
        _
    $region28: #{student_forward.7} parent=5 // pred_fallthru
      _
    %p5035 = scmp.le.s32.totalorder 2, %s8
    // Predicated region
    $region33: #{student_forward.7} parent=5 // pred_check
      %p5036 = pneg %p5035
    $region34: #{student_forward.7} parent=5 // pred_check_branch
      %5038 = sbr.rel (%p5036) target = $region36
    $region35: #{student_forward.7} parent=5 // pred_region
      %s5039 = ssub.s32 %s8, 2
      // Predicated region
      $region37: #{student_forward.7} parent=35 // pred_check
        %p5040 = pneg %p84
      $region38: #{student_forward.7} parent=35 // pred_check_branch
        %5042 = sbr.rel (%p5040) target = $region40
      $region39: #{student_forward.7} parent=35 // pred_region
        %p5043 = scmp.lt.s32.totalorder %s14, 1
        %s5044 = scalar_select %p5043, %s14, 1
        %s5045 = smul.addr %s5044, 32
        %s5046 = smul.addr %s5045, 8
        %s5047 = scalar_lea.vmem %s2, %s5046
      $region40: #{student_forward.7} parent=35 // pred_fallthru
        _
    $region36: #{student_forward.7} parent=5 // pred_fallthru
      _
  $region6: #{student_forward.7} parent=0 // loop_footer
    %s12 = sadd.s32 1, %s8
  $region7: #{student_forward.7} parent=0 // loop_footer_branch
    %7 = sbr.rel target = $region3
  $region8: #{student_forward.7} parent=0 // loop_exit
    _

</llo_original>
